<compile_context>
chip_gen: v7x
topology: tpu7x:2x2x1
jax: 0.10.0
libtpu: 0.0.40
codegen_flags: <defaults>
</compile_context>

<pallas_src>
import numpy as np

import jax
import jax.numpy as jnp
from jax.experimental import pallas as pl
from jax.experimental.pallas import tpu as pltpu


# ----------------------------- fused kernel --------------------------------

def _fused_disc_kernel(a0_ref, w0_ref, b0_ref, s1_ref, w1_ref, b1_ref,
                       r2_ref, w2_ref, b2_ref, r3_ref, w3_ref, b3_ref,
                       w4_ref, b4_ref, wc_ref, bc_ref, o_ref):
    f32 = jnp.float32
    bf16 = jnp.bfloat16

    def lrelu(v):
        return jnp.where(v > 0, v, 0.2 * v)

    # ---- Layer 0: Conv(1->32) s2 + BN + LReLU -------------------------------
    # a0 rows = (b, 4^3 blocks), lanes = (8 phases x 32 taps).  Block-diagonal
    # weight -> output is already in the block layout layer 1 consumes.
    y0 = lrelu(jnp.dot(a0_ref[...], w0_ref[...], preferred_element_type=f32)
               + b0_ref[...]).astype(bf16)                       # (64B, 256)
    m1 = y0.shape[0]

    # ---- Layer 1: Conv(32->64) s2 + BN + LReLU ------------------------------
    # 8 shift+zero-pad selection matmuls over the block layout, then the
    # per-shift folded weight blocks (taps placed at the right phase rows).
    acc1 = jnp.zeros((m1, 64), f32) + b1_ref[...]
    for j in range(8):
        zj = jnp.dot(s1_ref[j * m1:(j + 1) * m1, :], y0,
                     preferred_element_type=f32).astype(bf16)    # (64B, 256)
        acc1 = acc1 + jnp.dot(zj, w1_ref[j * 256:(j + 1) * 256, :],
                              preferred_element_type=f32)
    y1 = lrelu(acc1).astype(bf16)                                # (64B, 64)

    # ---- Layer 2: Conv(64->128) s2 + BN + LReLU -----------------------------
    # 27 stacked tap-selection rows (zero rows encode the padding), one gather
    # matmul, 27 accumulating tap matmuls against the im2col weight blocks.
    m2 = r2_ref.shape[0] // 27
    p2 = jnp.dot(r2_ref[...], y1, preferred_element_type=f32).astype(bf16)
    acc2 = jnp.zeros((m2, 128), f32) + b2_ref[...]
    for k in range(27):
        acc2 = acc2 + jnp.dot(p2[k * m2:(k + 1) * m2, :],
                              w2_ref[k * 64:(k + 1) * 64, :],
                              preferred_element_type=f32)
    y2 = lrelu(acc2).astype(bf16)                                # (8B, 128)

    # ---- Layer 3: Conv(128->256) s2 on a 2^3 map -> 1^3 ---------------------
    # Only the 8 data-carrying taps exist; select each spatial position across
    # the batch (rows padded to 8) and accumulate against its weight block.
    q3 = jnp.dot(r3_ref[...], y2, preferred_element_type=f32)    # (64, 128)
    acc3 = jnp.zeros((8, 256), f32) + b3_ref[...]
    for p in range(8):
        acc3 = acc3 + jnp.dot(q3[p * 8:(p + 1) * 8, :].astype(bf16),
                              w3_ref[p * 128:(p + 1) * 128, :],
                              preferred_element_type=f32)
    y3 = lrelu(acc3).astype(bf16)                                # (8, 256)

    # ---- Layer 4 (center tap), classifier, avg_pool(1)=identity, sigmoid ----
    y4 = lrelu(jnp.dot(y3, w4_ref[...], preferred_element_type=f32)
               + b4_ref[...]).astype(bf16)                       # (8, 512)
    logits = jnp.dot(y4, wc_ref[...], preferred_element_type=f32) + bc_ref[...]
    o_ref[...] = jax.nn.sigmoid(logits)                          # (8, 128)


# -------------------- init-time constant construction ----------------------

def _fold_bn(w, b, gamma, beta, mean, var, eps=1e-5):
    scale = gamma / np.sqrt(var + eps)
    return w * scale[None, :], (b - mean) * scale + beta


def _build_shift1(batch):
    """8 row-shift + zero-pad selection matrices over the (b, 4^3-block) rows."""
    n = batch * 64
    s = np.zeros((8, n, n), np.float32)
    for j, (sd, sh, sw) in enumerate(np.ndindex(2, 2, 2)):
        for b in range(batch):
            for qd in range(4):
                for qh in range(4):
                    for qw in range(4):
                        r = ((b * 4 + qd) * 4 + qh) * 4 + qw
                        qd2, qh2, qw2 = qd - sd, qh - sh, qw - sw
                        if qd2 >= 0 and qh2 >= 0 and qw2 >= 0:
                            c = ((b * 4 + qd2) * 4 + qh2) * 4 + qw2
                            s[j, r, c] = 1.0
    return s.reshape(8 * n, n)


def _build_w1big(w1):
    """Place layer-1 im2col tap blocks (27x32 rows) at the (shift, phase) rows."""
    out = np.zeros((8 * 256, 64), np.float32)
    for j, (sd, sh, sw) in enumerate(np.ndindex(2, 2, 2)):
        for p, (pd, ph, pw) in enumerate(np.ndindex(2, 2, 2)):
            ks, ok = [], True
            for s_, p_ in ((sd, pd), (sh, ph), (sw, pw)):
                if s_ == 1:
                    if p_ == 1:
                        ks.append(0)
                    else:
                        ok = False
                        break
                else:
                    ks.append(1 if p_ == 0 else 2)
            if not ok:
                continue
            kidx = (ks[0] * 3 + ks[1]) * 3 + ks[2]
            out[j * 256 + p * 32: j * 256 + p * 32 + 32, :] = \
                w1[kidx * 32:(kidx + 1) * 32, :]
    return out


def _build_r2(batch):
    """27 tap-selection matrices mapping 4^3 raster rows -> 2^3 output rows."""
    rows, cols = batch * 8, batch * 64
    r = np.zeros((27, rows, cols), np.float32)
    for kidx, (kd, kh, kw) in enumerate(np.ndindex(3, 3, 3)):
        for b in range(batch):
            for qd in range(2):
                for qh in range(2):
                    for qw in range(2):
                        rr = b * 8 + (qd * 2 + qh) * 2 + qw
                        dd, hh, ww = 2 * qd + kd - 1, 2 * qh + kh - 1, 2 * qw + kw - 1
                        if 0 <= dd < 4 and 0 <= hh < 4 and 0 <= ww < 4:
                            cc = ((b * 4 + dd) * 4 + hh) * 4 + ww
                            r[kidx, rr, cc] = 1.0
    return r.reshape(27 * rows, cols)


def _build_r3(batch):
    """8 per-position selection matrices over the (b, 2^3 position) rows."""
    r = np.zeros((8, 8, 8 * batch), np.float32)
    for phi in range(8):
        for b in range(min(batch, 8)):
            r[phi, b, b * 8 + phi] = 1.0
    return r.reshape(64, 8 * batch)


def _build_w3(w3):
    """Keep only the 8 data-carrying taps of the 2^3 -> 1^3 conv."""
    out = np.zeros((8 * 128, 256), np.float32)
    for p, (pd, ph, pw) in enumerate(np.ndindex(2, 2, 2)):
        kidx = ((pd + 1) * 3 + (ph + 1)) * 3 + (pw + 1)
        out[p * 128:(p + 1) * 128, :] = w3[kidx * 128:(kidx + 1) * 128, :]
    return out


def init_params(key, batch=2, in_channels=1, features=(32, 64, 128, 256, 512)):
    assert in_channels == 1 and tuple(features) == (32, 64, 128, 256, 512)
    assert 1 <= batch <= 8
    keys = jax.random.split(key, 6)

    def conv_w(k, cin, cout):
        fan_in = 27 * cin
        w = jax.random.normal(k, (27 * cin, cout), jnp.float32) * (2.0 / fan_in) ** 0.5
        return np.asarray(w)  # im2col layout: tap-major, cin-minor

    folded = []
    cin = in_channels
    for i, f in enumerate(features):
        w = conv_w(keys[i], cin, f)
        b = np.zeros((f,), np.float32)
        gamma, beta = np.ones((f,), np.float32), np.zeros((f,), np.float32)
        mean, var = np.zeros((f,), np.float32), np.ones((f,), np.float32)
        folded.append(_fold_bn(w, b, gamma, beta, mean, var))
        cin = f

    p = {}
    # Layer 0: block-diagonal (8 phases) of the 32x32 (tap-padded) weight.
    w0f, b0f = folded[0]
    w0p = np.zeros((32, 32), np.float32)
    w0p[:27, :] = w0f
    w0blk = np.zeros((256, 256), np.float32)
    for ph in range(8):
        w0blk[ph * 32:(ph + 1) * 32, ph * 32:(ph + 1) * 32] = w0p
    p["w0"] = jnp.asarray(w0blk, jnp.bfloat16)
    p["b0"] = jnp.asarray(np.tile(b0f, 8).reshape(1, 256), jnp.float32)

    # Layer 1
    w1f, b1f = folded[1]
    p["s1"] = jnp.asarray(_build_shift1(batch), jnp.bfloat16)
    p["w1"] = jnp.asarray(_build_w1big(w1f), jnp.bfloat16)
    p["b1"] = jnp.asarray(b1f.reshape(1, 64), jnp.float32)

    # Layer 2
    w2f, b2f = folded[2]
    p["r2"] = jnp.asarray(_build_r2(batch), jnp.bfloat16)
    p["w2"] = jnp.asarray(w2f, jnp.bfloat16)                     # (1728, 128)
    p["b2"] = jnp.asarray(b2f.reshape(1, 128), jnp.float32)

    # Layer 3 (2^3 -> 1^3: valid taps only)
    w3f, b3f = folded[3]
    p["r3"] = jnp.asarray(_build_r3(batch), jnp.bfloat16)
    p["w3"] = jnp.asarray(_build_w3(w3f), jnp.bfloat16)          # (1024, 256)
    p["b3"] = jnp.asarray(b3f.reshape(1, 256), jnp.float32)

    # Layer 4 (1^3 input: center tap only)
    w4f, b4f = folded[4]
    p["w4"] = jnp.asarray(w4f[13 * 256:14 * 256, :], jnp.bfloat16)  # (256, 512)
    p["b4"] = jnp.asarray(b4f.reshape(1, 512), jnp.float32)

    # Classifier Conv3d(512 -> 1): center tap, N padded 1 -> 128.
    wc = conv_w(keys[5], 512, 1)
    wcc = np.zeros((512, 128), np.float32)
    wcc[:, :1] = wc[13 * 512:14 * 512, :]
    p["wc"] = jnp.asarray(wcc, jnp.bfloat16)
    p["bc"] = jnp.asarray(np.zeros((1, 128), np.float32), jnp.float32)
    return p


# ------------------------------ forward pass --------------------------------

def _prep_l0_patches(x):
    """Layer-0 im2col (C_in=1) in XLA, rows grouped by 2x2x2 output blocks."""
    b = x.shape[0]
    xp = jnp.pad(x[..., 0], ((0, 0), (1, 1), (1, 1), (1, 1)))     # (B,18,18,18)
    cols = []
    for kd in range(3):
        for kh in range(3):
            for kw in range(3):
                cols.append(xp[:, kd:kd + 16:2, kh:kh + 16:2, kw:kw + 16:2])
    pt = jnp.stack(cols, axis=-1)                                 # (B,8,8,8,27)
    pt = jnp.pad(pt, ((0, 0),) * 4 + ((0, 5),))                   # (B,8,8,8,32)
    pt = pt.reshape(b, 4, 2, 4, 2, 4, 2, 32)
    pt = jnp.transpose(pt, (0, 1, 3, 5, 2, 4, 6, 7))              # (B,4,4,4,2,2,2,32)
    return pt.reshape(b * 64, 256).astype(jnp.bfloat16)


def discriminator_forward(x, p):
    """x: NDHWC (B, 16, 16, 16, 1)  ->  (B, 1) probabilities."""
    a0 = _prep_l0_patches(x)
    out = pl.pallas_call(
        _fused_disc_kernel,
        out_shape=jax.ShapeDtypeStruct((8, 128), jnp.float32),
    )(a0, p["w0"], p["b0"], p["s1"], p["w1"], p["b1"],
      p["r2"], p["w2"], p["b2"], p["r3"], p["w3"], p["b3"],
      p["w4"], p["b4"], p["wc"], p["bc"])
    return out[:x.shape[0], :1]


if __name__ == "__main__":
    key = jax.random.PRNGKey(0)
    pkey, xkey = jax.random.split(key)
    B = 2
    params = init_params(pkey, batch=B)
    # PyTorch input would be NCDHW (2, 1, 16, 16, 16); this kernel uses NDHWC.
    x = jax.random.normal(xkey, (B, 16, 16, 16, 1), jnp.float32)
    fwd = jax.jit(discriminator_forward)
    out = jax.block_until_ready(fwd(x, params))
    assert out.shape == (B, 1), out.shape
    assert bool(jnp.all(jnp.isfinite(out)))
    assert bool(jnp.all((out > 0.0) & (out < 1.0)))
    print("KERNEL_OK")
</pallas_src>

<mosaic_0001>
module attributes {stable_mosaic.version = 11 : i64} {
  func.func @_fused_disc_kernel(%arg0: memref<128x256xbf16, #tpu.memory_space<vmem>>, %arg1: memref<256x256xbf16, #tpu.memory_space<vmem>>, %arg2: memref<1x256xf32, #tpu.memory_space<vmem>>, %arg3: memref<1024x128xbf16, #tpu.memory_space<vmem>>, %arg4: memref<2048x64xbf16, #tpu.memory_space<vmem>>, %arg5: memref<1x64xf32, #tpu.memory_space<vmem>>, %arg6: memref<432x128xbf16, #tpu.memory_space<vmem>>, %arg7: memref<1728x128xbf16, #tpu.memory_space<vmem>>, %arg8: memref<1x128xf32, #tpu.memory_space<vmem>>, %arg9: memref<64x16xbf16, #tpu.memory_space<vmem>>, %arg10: memref<1024x256xbf16, #tpu.memory_space<vmem>>, %arg11: memref<1x256xf32, #tpu.memory_space<vmem>>, %arg12: memref<256x512xbf16, #tpu.memory_space<vmem>>, %arg13: memref<1x512xf32, #tpu.memory_space<vmem>>, %arg14: memref<512x128xbf16, #tpu.memory_space<vmem>>, %arg15: memref<1x128xf32, #tpu.memory_space<vmem>>, %arg16: memref<8x128xf32, #tpu.memory_space<vmem>>) attributes {dimension_semantics = [], scalar_prefetch = 0 : i64, scratch_operands = 0 : i64, tpu.core_type = #tpu.core_type<tc>} {
    %c0 = arith.constant 0 : index
    %c0_0 = arith.constant 0 : index
    %0 = vector.load %arg0[%c0, %c0_0] : memref<128x256xbf16, #tpu.memory_space<vmem>>, vector<128x256xbf16>
    %c0_1 = arith.constant 0 : index
    %c0_2 = arith.constant 0 : index
    %1 = vector.load %arg1[%c0_1, %c0_2] : memref<256x256xbf16, #tpu.memory_space<vmem>>, vector<256x256xbf16>
    %cst = arith.constant dense<0.000000e+00> : vector<128x256xf32>
    %2 = tpu.matmul %0, %1, %cst {dimension_numbers = #tpu.dot_dimension_numbers<[1], [0], [0], [1], [0, 0, 1, 1], [], []>} : vector<128x256xbf16>, vector<256x256xbf16>, vector<128x256xf32> -> vector<128x256xf32>
    %c0_3 = arith.constant 0 : index
    %c0_4 = arith.constant 0 : index
    %3 = vector.load %arg2[%c0_3, %c0_4] : memref<1x256xf32, #tpu.memory_space<vmem>>, vector<1x256xf32>
    %4 = vector.broadcast %3 : vector<1x256xf32> to vector<128x256xf32>
    %5 = arith.addf %2, %4 : vector<128x256xf32>
    %cst_5 = arith.constant 0.000000e+00 : f32
    %6 = vector.broadcast %cst_5 : f32 to vector<128x256xf32>
    %7 = arith.cmpf ogt, %5, %6 : vector<128x256xf32>
    %cst_6 = arith.constant 2.000000e-01 : f32
    %8 = vector.broadcast %cst_6 : f32 to vector<128x256xf32>
    %9 = arith.mulf %8, %5 : vector<128x256xf32>
    %10 = arith.select %7, %5, %9 : vector<128x256xi1>, vector<128x256xf32>
    %11 = arith.truncf %10 : vector<128x256xf32> to vector<128x256xbf16>
    %cst_7 = arith.constant 0.000000e+00 : f32
    %12 = vector.broadcast %cst_7 : f32 to vector<128x64xf32>
    %c0_8 = arith.constant 0 : index
    %c0_9 = arith.constant 0 : index
    %13 = vector.load %arg5[%c0_8, %c0_9] : memref<1x64xf32, #tpu.memory_space<vmem>>, vector<1x64xf32>
    %14 = vector.broadcast %13 : vector<1x64xf32> to vector<128x64xf32>
    %15 = arith.addf %12, %14 : vector<128x64xf32>
    %c0_10 = arith.constant 0 : index
    %c0_11 = arith.constant 0 : index
    %16 = vector.load %arg3[%c0_10, %c0_11] : memref<1024x128xbf16, #tpu.memory_space<vmem>>, vector<128x128xbf16>
    %cst_12 = arith.constant dense<0.000000e+00> : vector<128x256xf32>
    %17 = tpu.matmul %16, %11, %cst_12 {dimension_numbers = #tpu.dot_dimension_numbers<[1], [0], [0], [1], [0, 0, 1, 1], [], []>} : vector<128x128xbf16>, vector<128x256xbf16>, vector<128x256xf32> -> vector<128x256xf32>
    %18 = arith.truncf %17 : vector<128x256xf32> to vector<128x256xbf16>
    %c0_13 = arith.constant 0 : index
    %c0_14 = arith.constant 0 : index
    %19 = vector.load %arg4[%c0_13, %c0_14] : memref<2048x64xbf16, #tpu.memory_space<vmem>>, vector<256x64xbf16>
    %cst_15 = arith.constant dense<0.000000e+00> : vector<128x64xf32>
    %20 = tpu.matmul %18, %19, %cst_15 {dimension_numbers = #tpu.dot_dimension_numbers<[1], [0], [0], [1], [0, 0, 1, 1], [], []>} : vector<128x256xbf16>, vector<256x64xbf16>, vector<128x64xf32> -> vector<128x64xf32>
    %21 = arith.addf %15, %20 : vector<128x64xf32>
    %c128 = arith.constant 128 : index
    %c0_16 = arith.constant 0 : index
    %22 = vector.load %arg3[%c128, %c0_16] : memref<1024x128xbf16, #tpu.memory_space<vmem>>, vector<128x128xbf16>
    %cst_17 = arith.constant dense<0.000000e+00> : vector<128x256xf32>
    %23 = tpu.matmul %22, %11, %cst_17 {dimension_numbers = #tpu.dot_dimension_numbers<[1], [0], [0], [1], [0, 0, 1, 1], [], []>} : vector<128x128xbf16>, vector<128x256xbf16>, vector<128x256xf32> -> vector<128x256xf32>
    %24 = arith.truncf %23 : vector<128x256xf32> to vector<128x256xbf16>
    %c256 = arith.constant 256 : index
    %c0_18 = arith.constant 0 : index
    %25 = vector.load %arg4[%c256, %c0_18] : memref<2048x64xbf16, #tpu.memory_space<vmem>>, vector<256x64xbf16>
    %cst_19 = arith.constant dense<0.000000e+00> : vector<128x64xf32>
    %26 = tpu.matmul %24, %25, %cst_19 {dimension_numbers = #tpu.dot_dimension_numbers<[1], [0], [0], [1], [0, 0, 1, 1], [], []>} : vector<128x256xbf16>, vector<256x64xbf16>, vector<128x64xf32> -> vector<128x64xf32>
    %27 = arith.addf %21, %26 : vector<128x64xf32>
    %c256_20 = arith.constant 256 : index
    %c0_21 = arith.constant 0 : index
    %28 = vector.load %arg3[%c256_20, %c0_21] : memref<1024x128xbf16, #tpu.memory_space<vmem>>, vector<128x128xbf16>
    %cst_22 = arith.constant dense<0.000000e+00> : vector<128x256xf32>
    %29 = tpu.matmul %28, %11, %cst_22 {dimension_numbers = #tpu.dot_dimension_numbers<[1], [0], [0], [1], [0, 0, 1, 1], [], []>} : vector<128x128xbf16>, vector<128x256xbf16>, vector<128x256xf32> -> vector<128x256xf32>
    %30 = arith.truncf %29 : vector<128x256xf32> to vector<128x256xbf16>
    %c512 = arith.constant 512 : index
    %c0_23 = arith.constant 0 : index
    %31 = vector.load %arg4[%c512, %c0_23] : memref<2048x64xbf16, #tpu.memory_space<vmem>>, vector<256x64xbf16>
    %cst_24 = arith.constant dense<0.000000e+00> : vector<128x64xf32>
    %32 = tpu.matmul %30, %31, %cst_24 {dimension_numbers = #tpu.dot_dimension_numbers<[1], [0], [0], [1], [0, 0, 1, 1], [], []>} : vector<128x256xbf16>, vector<256x64xbf16>, vector<128x64xf32> -> vector<128x64xf32>
    %33 = arith.addf %27, %32 : vector<128x64xf32>
    %c384 = arith.constant 384 : index
    %c0_25 = arith.constant 0 : index
    %34 = vector.load %arg3[%c384, %c0_25] : memref<1024x128xbf16, #tpu.memory_space<vmem>>, vector<128x128xbf16>
    %cst_26 = arith.constant dense<0.000000e+00> : vector<128x256xf32>
    %35 = tpu.matmul %34, %11, %cst_26 {dimension_numbers = #tpu.dot_dimension_numbers<[1], [0], [0], [1], [0, 0, 1, 1], [], []>} : vector<128x128xbf16>, vector<128x256xbf16>, vector<128x256xf32> -> vector<128x256xf32>
    %36 = arith.truncf %35 : vector<128x256xf32> to vector<128x256xbf16>
    %c768 = arith.constant 768 : index
    %c0_27 = arith.constant 0 : index
    %37 = vector.load %arg4[%c768, %c0_27] : memref<2048x64xbf16, #tpu.memory_space<vmem>>, vector<256x64xbf16>
    %cst_28 = arith.constant dense<0.000000e+00> : vector<128x64xf32>
    %38 = tpu.matmul %36, %37, %cst_28 {dimension_numbers = #tpu.dot_dimension_numbers<[1], [0], [0], [1], [0, 0, 1, 1], [], []>} : vector<128x256xbf16>, vector<256x64xbf16>, vector<128x64xf32> -> vector<128x64xf32>
    %39 = arith.addf %33, %38 : vector<128x64xf32>
    %c512_29 = arith.constant 512 : index
    %c0_30 = arith.constant 0 : index
    %40 = vector.load %arg3[%c512_29, %c0_30] : memref<1024x128xbf16, #tpu.memory_space<vmem>>, vector<128x128xbf16>
    %cst_31 = arith.constant dense<0.000000e+00> : vector<128x256xf32>
    %41 = tpu.matmul %40, %11, %cst_31 {dimension_numbers = #tpu.dot_dimension_numbers<[1], [0], [0], [1], [0, 0, 1, 1], [], []>} : vector<128x128xbf16>, vector<128x256xbf16>, vector<128x256xf32> -> vector<128x256xf32>
    %42 = arith.truncf %41 : vector<128x256xf32> to vector<128x256xbf16>
    %c1024 = arith.constant 1024 : index
    %c0_32 = arith.constant 0 : index
    %43 = vector.load %arg4[%c1024, %c0_32] : memref<2048x64xbf16, #tpu.memory_space<vmem>>, vector<256x64xbf16>
    %cst_33 = arith.constant dense<0.000000e+00> : vector<128x64xf32>
    %44 = tpu.matmul %42, %43, %cst_33 {dimension_numbers = #tpu.dot_dimension_numbers<[1], [0], [0], [1], [0, 0, 1, 1], [], []>} : vector<128x256xbf16>, vector<256x64xbf16>, vector<128x64xf32> -> vector<128x64xf32>
    %45 = arith.addf %39, %44 : vector<128x64xf32>
    %c640 = arith.constant 640 : index
    %c0_34 = arith.constant 0 : index
    %46 = vector.load %arg3[%c640, %c0_34] : memref<1024x128xbf16, #tpu.memory_space<vmem>>, vector<128x128xbf16>
    %cst_35 = arith.constant dense<0.000000e+00> : vector<128x256xf32>
    %47 = tpu.matmul %46, %11, %cst_35 {dimension_numbers = #tpu.dot_dimension_numbers<[1], [0], [0], [1], [0, 0, 1, 1], [], []>} : vector<128x128xbf16>, vector<128x256xbf16>, vector<128x256xf32> -> vector<128x256xf32>
    %48 = arith.truncf %47 : vector<128x256xf32> to vector<128x256xbf16>
    %c1280 = arith.constant 1280 : index
    %c0_36 = arith.constant 0 : index
    %49 = vector.load %arg4[%c1280, %c0_36] : memref<2048x64xbf16, #tpu.memory_space<vmem>>, vector<256x64xbf16>
    %cst_37 = arith.constant dense<0.000000e+00> : vector<128x64xf32>
    %50 = tpu.matmul %48, %49, %cst_37 {dimension_numbers = #tpu.dot_dimension_numbers<[1], [0], [0], [1], [0, 0, 1, 1], [], []>} : vector<128x256xbf16>, vector<256x64xbf16>, vector<128x64xf32> -> vector<128x64xf32>
    %51 = arith.addf %45, %50 : vector<128x64xf32>
    %c768_38 = arith.constant 768 : index
    %c0_39 = arith.constant 0 : index
    %52 = vector.load %arg3[%c768_38, %c0_39] : memref<1024x128xbf16, #tpu.memory_space<vmem>>, vector<128x128xbf16>
    %cst_40 = arith.constant dense<0.000000e+00> : vector<128x256xf32>
    %53 = tpu.matmul %52, %11, %cst_40 {dimension_numbers = #tpu.dot_dimension_numbers<[1], [0], [0], [1], [0, 0, 1, 1], [], []>} : vector<128x128xbf16>, vector<128x256xbf16>, vector<128x256xf32> -> vector<128x256xf32>
    %54 = arith.truncf %53 : vector<128x256xf32> to vector<128x256xbf16>
    %c1536 = arith.constant 1536 : index
    %c0_41 = arith.constant 0 : index
    %55 = vector.load %arg4[%c1536, %c0_41] : memref<2048x64xbf16, #tpu.memory_space<vmem>>, vector<256x64xbf16>
    %cst_42 = arith.constant dense<0.000000e+00> : vector<128x64xf32>
    %56 = tpu.matmul %54, %55, %cst_42 {dimension_numbers = #tpu.dot_dimension_numbers<[1], [0], [0], [1], [0, 0, 1, 1], [], []>} : vector<128x256xbf16>, vector<256x64xbf16>, vector<128x64xf32> -> vector<128x64xf32>
    %57 = arith.addf %51, %56 : vector<128x64xf32>
    %c896 = arith.constant 896 : index
    %c0_43 = arith.constant 0 : index
    %58 = vector.load %arg3[%c896, %c0_43] : memref<1024x128xbf16, #tpu.memory_space<vmem>>, vector<128x128xbf16>
    %cst_44 = arith.constant dense<0.000000e+00> : vector<128x256xf32>
    %59 = tpu.matmul %58, %11, %cst_44 {dimension_numbers = #tpu.dot_dimension_numbers<[1], [0], [0], [1], [0, 0, 1, 1], [], []>} : vector<128x128xbf16>, vector<128x256xbf16>, vector<128x256xf32> -> vector<128x256xf32>
    %60 = arith.truncf %59 : vector<128x256xf32> to vector<128x256xbf16>
    %c1792 = arith.constant 1792 : index
    %c0_45 = arith.constant 0 : index
    %61 = vector.load %arg4[%c1792, %c0_45] : memref<2048x64xbf16, #tpu.memory_space<vmem>>, vector<256x64xbf16>
    %cst_46 = arith.constant dense<0.000000e+00> : vector<128x64xf32>
    %62 = tpu.matmul %60, %61, %cst_46 {dimension_numbers = #tpu.dot_dimension_numbers<[1], [0], [0], [1], [0, 0, 1, 1], [], []>} : vector<128x256xbf16>, vector<256x64xbf16>, vector<128x64xf32> -> vector<128x64xf32>
    %63 = arith.addf %57, %62 : vector<128x64xf32>
    %cst_47 = arith.constant 0.000000e+00 : f32
    %64 = vector.broadcast %cst_47 : f32 to vector<128x64xf32>
    %65 = arith.cmpf ogt, %63, %64 : vector<128x64xf32>
    %cst_48 = arith.constant 2.000000e-01 : f32
    %66 = vector.broadcast %cst_48 : f32 to vector<128x64xf32>
    %67 = arith.mulf %66, %63 : vector<128x64xf32>
    %68 = arith.select %65, %63, %67 : vector<128x64xi1>, vector<128x64xf32>
    %69 = arith.truncf %68 : vector<128x64xf32> to vector<128x64xbf16>
    %c0_49 = arith.constant 0 : index
    %c0_50 = arith.constant 0 : index
    %70 = vector.load %arg6[%c0_49, %c0_50] : memref<432x128xbf16, #tpu.memory_space<vmem>>, vector<432x128xbf16>
    %cst_51 = arith.constant dense<0.000000e+00> : vector<432x64xf32>
    %71 = tpu.matmul %70, %69, %cst_51 {dimension_numbers = #tpu.dot_dimension_numbers<[1], [0], [0], [1], [0, 0, 1, 1], [], []>} : vector<432x128xbf16>, vector<128x64xbf16>, vector<432x64xf32> -> vector<432x64xf32>
    %72 = arith.truncf %71 : vector<432x64xf32> to vector<432x64xbf16>
    %cst_52 = arith.constant 0.000000e+00 : f32
    %73 = vector.broadcast %cst_52 : f32 to vector<16x128xf32>
    %c0_53 = arith.constant 0 : index
    %c0_54 = arith.constant 0 : index
    %74 = vector.load %arg8[%c0_53, %c0_54] : memref<1x128xf32, #tpu.memory_space<vmem>>, vector<1x128xf32>
    %75 = vector.broadcast %74 : vector<1x128xf32> to vector<16x128xf32>
    %76 = arith.addf %73, %75 : vector<16x128xf32>
    %77 = vector.extract_strided_slice %72 {offsets = [0, 0], sizes = [16, 64], strides = [1, 1]} : vector<432x64xbf16> to vector<16x64xbf16>
    %c0_55 = arith.constant 0 : index
    %c0_56 = arith.constant 0 : index
    %78 = vector.load %arg7[%c0_55, %c0_56] : memref<1728x128xbf16, #tpu.memory_space<vmem>>, vector<64x128xbf16>
    %cst_57 = arith.constant dense<0.000000e+00> : vector<16x128xf32>
    %79 = tpu.matmul %77, %78, %cst_57 {dimension_numbers = #tpu.dot_dimension_numbers<[1], [0], [0], [1], [0, 0, 1, 1], [], []>} : vector<16x64xbf16>, vector<64x128xbf16>, vector<16x128xf32> -> vector<16x128xf32>
    %80 = arith.addf %76, %79 : vector<16x128xf32>
    %81 = vector.extract_strided_slice %72 {offsets = [16, 0], sizes = [16, 64], strides = [1, 1]} : vector<432x64xbf16> to vector<16x64xbf16>
    %c64 = arith.constant 64 : index
    %c0_58 = arith.constant 0 : index
    %82 = vector.load %arg7[%c64, %c0_58] : memref<1728x128xbf16, #tpu.memory_space<vmem>>, vector<64x128xbf16>
    %cst_59 = arith.constant dense<0.000000e+00> : vector<16x128xf32>
    %83 = tpu.matmul %81, %82, %cst_59 {dimension_numbers = #tpu.dot_dimension_numbers<[1], [0], [0], [1], [0, 0, 1, 1], [], []>} : vector<16x64xbf16>, vector<64x128xbf16>, vector<16x128xf32> -> vector<16x128xf32>
    %84 = arith.addf %80, %83 : vector<16x128xf32>
    %85 = vector.extract_strided_slice %72 {offsets = [32, 0], sizes = [16, 64], strides = [1, 1]} : vector<432x64xbf16> to vector<16x64xbf16>
    %c128_60 = arith.constant 128 : index
    %c0_61 = arith.constant 0 : index
    %86 = vector.load %arg7[%c128_60, %c0_61] : memref<1728x128xbf16, #tpu.memory_space<vmem>>, vector<64x128xbf16>
    %cst_62 = arith.constant dense<0.000000e+00> : vector<16x128xf32>
    %87 = tpu.matmul %85, %86, %cst_62 {dimension_numbers = #tpu.dot_dimension_numbers<[1], [0], [0], [1], [0, 0, 1, 1], [], []>} : vector<16x64xbf16>, vector<64x128xbf16>, vector<16x128xf32> -> vector<16x128xf32>
    %88 = arith.addf %84, %87 : vector<16x128xf32>
    %89 = vector.extract_strided_slice %72 {offsets = [48, 0], sizes = [16, 64], strides = [1, 1]} : vector<432x64xbf16> to vector<16x64xbf16>
    %c192 = arith.constant 192 : index
    %c0_63 = arith.constant 0 : index
    %90 = vector.load %arg7[%c192, %c0_63] : memref<1728x128xbf16, #tpu.memory_space<vmem>>, vector<64x128xbf16>
    %cst_64 = arith.constant dense<0.000000e+00> : vector<16x128xf32>
    %91 = tpu.matmul %89, %90, %cst_64 {dimension_numbers = #tpu.dot_dimension_numbers<[1], [0], [0], [1], [0, 0, 1, 1], [], []>} : vector<16x64xbf16>, vector<64x128xbf16>, vector<16x128xf32> -> vector<16x128xf32>
    %92 = arith.addf %88, %91 : vector<16x128xf32>
    %93 = vector.extract_strided_slice %72 {offsets = [64, 0], sizes = [16, 64], strides = [1, 1]} : vector<432x64xbf16> to vector<16x64xbf16>
    %c256_65 = arith.constant 256 : index
    %c0_66 = arith.constant 0 : index
    %94 = vector.load %arg7[%c256_65, %c0_66] : memref<1728x128xbf16, #tpu.memory_space<vmem>>, vector<64x128xbf16>
    %cst_67 = arith.constant dense<0.000000e+00> : vector<16x128xf32>
    %95 = tpu.matmul %93, %94, %cst_67 {dimension_numbers = #tpu.dot_dimension_numbers<[1], [0], [0], [1], [0, 0, 1, 1], [], []>} : vector<16x64xbf16>, vector<64x128xbf16>, vector<16x128xf32> -> vector<16x128xf32>
    %96 = arith.addf %92, %95 : vector<16x128xf32>
    %97 = vector.extract_strided_slice %72 {offsets = [80, 0], sizes = [16, 64], strides = [1, 1]} : vector<432x64xbf16> to vector<16x64xbf16>
    %c320 = arith.constant 320 : index
    %c0_68 = arith.constant 0 : index
    %98 = vector.load %arg7[%c320, %c0_68] : memref<1728x128xbf16, #tpu.memory_space<vmem>>, vector<64x128xbf16>
    %cst_69 = arith.constant dense<0.000000e+00> : vector<16x128xf32>
    %99 = tpu.matmul %97, %98, %cst_69 {dimension_numbers = #tpu.dot_dimension_numbers<[1], [0], [0], [1], [0, 0, 1, 1], [], []>} : vector<16x64xbf16>, vector<64x128xbf16>, vector<16x128xf32> -> vector<16x128xf32>
    %100 = arith.addf %96, %99 : vector<16x128xf32>
    %101 = vector.extract_strided_slice %72 {offsets = [96, 0], sizes = [16, 64], strides = [1, 1]} : vector<432x64xbf16> to vector<16x64xbf16>
    %c384_70 = arith.constant 384 : index
    %c0_71 = arith.constant 0 : index
    %102 = vector.load %arg7[%c384_70, %c0_71] : memref<1728x128xbf16, #tpu.memory_space<vmem>>, vector<64x128xbf16>
    %cst_72 = arith.constant dense<0.000000e+00> : vector<16x128xf32>
    %103 = tpu.matmul %101, %102, %cst_72 {dimension_numbers = #tpu.dot_dimension_numbers<[1], [0], [0], [1], [0, 0, 1, 1], [], []>} : vector<16x64xbf16>, vector<64x128xbf16>, vector<16x128xf32> -> vector<16x128xf32>
    %104 = arith.addf %100, %103 : vector<16x128xf32>
    %105 = vector.extract_strided_slice %72 {offsets = [112, 0], sizes = [16, 64], strides = [1, 1]} : vector<432x64xbf16> to vector<16x64xbf16>
    %c448 = arith.constant 448 : index
    %c0_73 = arith.constant 0 : index
    %106 = vector.load %arg7[%c448, %c0_73] : memref<1728x128xbf16, #tpu.memory_space<vmem>>, vector<64x128xbf16>
    %cst_74 = arith.constant dense<0.000000e+00> : vector<16x128xf32>
    %107 = tpu.matmul %105, %106, %cst_74 {dimension_numbers = #tpu.dot_dimension_numbers<[1], [0], [0], [1], [0, 0, 1, 1], [], []>} : vector<16x64xbf16>, vector<64x128xbf16>, vector<16x128xf32> -> vector<16x128xf32>
    %108 = arith.addf %104, %107 : vector<16x128xf32>
    %109 = vector.extract_strided_slice %72 {offsets = [128, 0], sizes = [16, 64], strides = [1, 1]} : vector<432x64xbf16> to vector<16x64xbf16>
    %c512_75 = arith.constant 512 : index
    %c0_76 = arith.constant 0 : index
    %110 = vector.load %arg7[%c512_75, %c0_76] : memref<1728x128xbf16, #tpu.memory_space<vmem>>, vector<64x128xbf16>
    %cst_77 = arith.constant dense<0.000000e+00> : vector<16x128xf32>
    %111 = tpu.matmul %109, %110, %cst_77 {dimension_numbers = #tpu.dot_dimension_numbers<[1], [0], [0], [1], [0, 0, 1, 1], [], []>} : vector<16x64xbf16>, vector<64x128xbf16>, vector<16x128xf32> -> vector<16x128xf32>
    %112 = arith.addf %108, %111 : vector<16x128xf32>
    %113 = vector.extract_strided_slice %72 {offsets = [144, 0], sizes = [16, 64], strides = [1, 1]} : vector<432x64xbf16> to vector<16x64xbf16>
    %c576 = arith.constant 576 : index
    %c0_78 = arith.constant 0 : index
    %114 = vector.load %arg7[%c576, %c0_78] : memref<1728x128xbf16, #tpu.memory_space<vmem>>, vector<64x128xbf16>
    %cst_79 = arith.constant dense<0.000000e+00> : vector<16x128xf32>
    %115 = tpu.matmul %113, %114, %cst_79 {dimension_numbers = #tpu.dot_dimension_numbers<[1], [0], [0], [1], [0, 0, 1, 1], [], []>} : vector<16x64xbf16>, vector<64x128xbf16>, vector<16x128xf32> -> vector<16x128xf32>
    %116 = arith.addf %112, %115 : vector<16x128xf32>
    %117 = vector.extract_strided_slice %72 {offsets = [160, 0], sizes = [16, 64], strides = [1, 1]} : vector<432x64xbf16> to vector<16x64xbf16>
    %c640_80 = arith.constant 640 : index
    %c0_81 = arith.constant 0 : index
    %118 = vector.load %arg7[%c640_80, %c0_81] : memref<1728x128xbf16, #tpu.memory_space<vmem>>, vector<64x128xbf16>
    %cst_82 = arith.constant dense<0.000000e+00> : vector<16x128xf32>
    %119 = tpu.matmul %117, %118, %cst_82 {dimension_numbers = #tpu.dot_dimension_numbers<[1], [0], [0], [1], [0, 0, 1, 1], [], []>} : vector<16x64xbf16>, vector<64x128xbf16>, vector<16x128xf32> -> vector<16x128xf32>
    %120 = arith.addf %116, %119 : vector<16x128xf32>
    %121 = vector.extract_strided_slice %72 {offsets = [176, 0], sizes = [16, 64], strides = [1, 1]} : vector<432x64xbf16> to vector<16x64xbf16>
    %c704 = arith.constant 704 : index
    %c0_83 = arith.constant 0 : index
    %122 = vector.load %arg7[%c704, %c0_83] : memref<1728x128xbf16, #tpu.memory_space<vmem>>, vector<64x128xbf16>
    %cst_84 = arith.constant dense<0.000000e+00> : vector<16x128xf32>
    %123 = tpu.matmul %121, %122, %cst_84 {dimension_numbers = #tpu.dot_dimension_numbers<[1], [0], [0], [1], [0, 0, 1, 1], [], []>} : vector<16x64xbf16>, vector<64x128xbf16>, vector<16x128xf32> -> vector<16x128xf32>
    %124 = arith.addf %120, %123 : vector<16x128xf32>
    %125 = vector.extract_strided_slice %72 {offsets = [192, 0], sizes = [16, 64], strides = [1, 1]} : vector<432x64xbf16> to vector<16x64xbf16>
    %c768_85 = arith.constant 768 : index
    %c0_86 = arith.constant 0 : index
    %126 = vector.load %arg7[%c768_85, %c0_86] : memref<1728x128xbf16, #tpu.memory_space<vmem>>, vector<64x128xbf16>
    %cst_87 = arith.constant dense<0.000000e+00> : vector<16x128xf32>
    %127 = tpu.matmul %125, %126, %cst_87 {dimension_numbers = #tpu.dot_dimension_numbers<[1], [0], [0], [1], [0, 0, 1, 1], [], []>} : vector<16x64xbf16>, vector<64x128xbf16>, vector<16x128xf32> -> vector<16x128xf32>
    %128 = arith.addf %124, %127 : vector<16x128xf32>
    %129 = vector.extract_strided_slice %72 {offsets = [208, 0], sizes = [16, 64], strides = [1, 1]} : vector<432x64xbf16> to vector<16x64xbf16>
    %c832 = arith.constant 832 : index
    %c0_88 = arith.constant 0 : index
    %130 = vector.load %arg7[%c832, %c0_88] : memref<1728x128xbf16, #tpu.memory_space<vmem>>, vector<64x128xbf16>
    %cst_89 = arith.constant dense<0.000000e+00> : vector<16x128xf32>
    %131 = tpu.matmul %129, %130, %cst_89 {dimension_numbers = #tpu.dot_dimension_numbers<[1], [0], [0], [1], [0, 0, 1, 1], [], []>} : vector<16x64xbf16>, vector<64x128xbf16>, vector<16x128xf32> -> vector<16x128xf32>
    %132 = arith.addf %128, %131 : vector<16x128xf32>
    %133 = vector.extract_strided_slice %72 {offsets = [224, 0], sizes = [16, 64], strides = [1, 1]} : vector<432x64xbf16> to vector<16x64xbf16>
    %c896_90 = arith.constant 896 : index
    %c0_91 = arith.constant 0 : index
    %134 = vector.load %arg7[%c896_90, %c0_91] : memref<1728x128xbf16, #tpu.memory_space<vmem>>, vector<64x128xbf16>
    %cst_92 = arith.constant dense<0.000000e+00> : vector<16x128xf32>
    %135 = tpu.matmul %133, %134, %cst_92 {dimension_numbers = #tpu.dot_dimension_numbers<[1], [0], [0], [1], [0, 0, 1, 1], [], []>} : vector<16x64xbf16>, vector<64x128xbf16>, vector<16x128xf32> -> vector<16x128xf32>
    %136 = arith.addf %132, %135 : vector<16x128xf32>
    %137 = vector.extract_strided_slice %72 {offsets = [240, 0], sizes = [16, 64], strides = [1, 1]} : vector<432x64xbf16> to vector<16x64xbf16>
    %c960 = arith.constant 960 : index
    %c0_93 = arith.constant 0 : index
    %138 = vector.load %arg7[%c960, %c0_93] : memref<1728x128xbf16, #tpu.memory_space<vmem>>, vector<64x128xbf16>
    %cst_94 = arith.constant dense<0.000000e+00> : vector<16x128xf32>
    %139 = tpu.matmul %137, %138, %cst_94 {dimension_numbers = #tpu.dot_dimension_numbers<[1], [0], [0], [1], [0, 0, 1, 1], [], []>} : vector<16x64xbf16>, vector<64x128xbf16>, vector<16x128xf32> -> vector<16x128xf32>
    %140 = arith.addf %136, %139 : vector<16x128xf32>
    %141 = vector.extract_strided_slice %72 {offsets = [256, 0], sizes = [16, 64], strides = [1, 1]} : vector<432x64xbf16> to vector<16x64xbf16>
    %c1024_95 = arith.constant 1024 : index
    %c0_96 = arith.constant 0 : index
    %142 = vector.load %arg7[%c1024_95, %c0_96] : memref<1728x128xbf16, #tpu.memory_space<vmem>>, vector<64x128xbf16>
    %cst_97 = arith.constant dense<0.000000e+00> : vector<16x128xf32>
    %143 = tpu.matmul %141, %142, %cst_97 {dimension_numbers = #tpu.dot_dimension_numbers<[1], [0], [0], [1], [0, 0, 1, 1], [], []>} : vector<16x64xbf16>, vector<64x128xbf16>, vector<16x128xf32> -> vector<16x128xf32>
    %144 = arith.addf %140, %143 : vector<16x128xf32>
    %145 = vector.extract_strided_slice %72 {offsets = [272, 0], sizes = [16, 64], strides = [1, 1]} : vector<432x64xbf16> to vector<16x64xbf16>
    %c1088 = arith.constant 1088 : index
    %c0_98 = arith.constant 0 : index
    %146 = vector.load %arg7[%c1088, %c0_98] : memref<1728x128xbf16, #tpu.memory_space<vmem>>, vector<64x128xbf16>
    %cst_99 = arith.constant dense<0.000000e+00> : vector<16x128xf32>
    %147 = tpu.matmul %145, %146, %cst_99 {dimension_numbers = #tpu.dot_dimension_numbers<[1], [0], [0], [1], [0, 0, 1, 1], [], []>} : vector<16x64xbf16>, vector<64x128xbf16>, vector<16x128xf32> -> vector<16x128xf32>
    %148 = arith.addf %144, %147 : vector<16x128xf32>
    %149 = vector.extract_strided_slice %72 {offsets = [288, 0], sizes = [16, 64], strides = [1, 1]} : vector<432x64xbf16> to vector<16x64xbf16>
    %c1152 = arith.constant 1152 : index
    %c0_100 = arith.constant 0 : index
    %150 = vector.load %arg7[%c1152, %c0_100] : memref<1728x128xbf16, #tpu.memory_space<vmem>>, vector<64x128xbf16>
    %cst_101 = arith.constant dense<0.000000e+00> : vector<16x128xf32>
    %151 = tpu.matmul %149, %150, %cst_101 {dimension_numbers = #tpu.dot_dimension_numbers<[1], [0], [0], [1], [0, 0, 1, 1], [], []>} : vector<16x64xbf16>, vector<64x128xbf16>, vector<16x128xf32> -> vector<16x128xf32>
    %152 = arith.addf %148, %151 : vector<16x128xf32>
    %153 = vector.extract_strided_slice %72 {offsets = [304, 0], sizes = [16, 64], strides = [1, 1]} : vector<432x64xbf16> to vector<16x64xbf16>
    %c1216 = arith.constant 1216 : index
    %c0_102 = arith.constant 0 : index
    %154 = vector.load %arg7[%c1216, %c0_102] : memref<1728x128xbf16, #tpu.memory_space<vmem>>, vector<64x128xbf16>
    %cst_103 = arith.constant dense<0.000000e+00> : vector<16x128xf32>
    %155 = tpu.matmul %153, %154, %cst_103 {dimension_numbers = #tpu.dot_dimension_numbers<[1], [0], [0], [1], [0, 0, 1, 1], [], []>} : vector<16x64xbf16>, vector<64x128xbf16>, vector<16x128xf32> -> vector<16x128xf32>
    %156 = arith.addf %152, %155 : vector<16x128xf32>
    %157 = vector.extract_strided_slice %72 {offsets = [320, 0], sizes = [16, 64], strides = [1, 1]} : vector<432x64xbf16> to vector<16x64xbf16>
    %c1280_104 = arith.constant 1280 : index
    %c0_105 = arith.constant 0 : index
    %158 = vector.load %arg7[%c1280_104, %c0_105] : memref<1728x128xbf16, #tpu.memory_space<vmem>>, vector<64x128xbf16>
    %cst_106 = arith.constant dense<0.000000e+00> : vector<16x128xf32>
    %159 = tpu.matmul %157, %158, %cst_106 {dimension_numbers = #tpu.dot_dimension_numbers<[1], [0], [0], [1], [0, 0, 1, 1], [], []>} : vector<16x64xbf16>, vector<64x128xbf16>, vector<16x128xf32> -> vector<16x128xf32>
    %160 = arith.addf %156, %159 : vector<16x128xf32>
    %161 = vector.extract_strided_slice %72 {offsets = [336, 0], sizes = [16, 64], strides = [1, 1]} : vector<432x64xbf16> to vector<16x64xbf16>
    %c1344 = arith.constant 1344 : index
    %c0_107 = arith.constant 0 : index
    %162 = vector.load %arg7[%c1344, %c0_107] : memref<1728x128xbf16, #tpu.memory_space<vmem>>, vector<64x128xbf16>
    %cst_108 = arith.constant dense<0.000000e+00> : vector<16x128xf32>
    %163 = tpu.matmul %161, %162, %cst_108 {dimension_numbers = #tpu.dot_dimension_numbers<[1], [0], [0], [1], [0, 0, 1, 1], [], []>} : vector<16x64xbf16>, vector<64x128xbf16>, vector<16x128xf32> -> vector<16x128xf32>
    %164 = arith.addf %160, %163 : vector<16x128xf32>
    %165 = vector.extract_strided_slice %72 {offsets = [352, 0], sizes = [16, 64], strides = [1, 1]} : vector<432x64xbf16> to vector<16x64xbf16>
    %c1408 = arith.constant 1408 : index
    %c0_109 = arith.constant 0 : index
    %166 = vector.load %arg7[%c1408, %c0_109] : memref<1728x128xbf16, #tpu.memory_space<vmem>>, vector<64x128xbf16>
    %cst_110 = arith.constant dense<0.000000e+00> : vector<16x128xf32>
    %167 = tpu.matmul %165, %166, %cst_110 {dimension_numbers = #tpu.dot_dimension_numbers<[1], [0], [0], [1], [0, 0, 1, 1], [], []>} : vector<16x64xbf16>, vector<64x128xbf16>, vector<16x128xf32> -> vector<16x128xf32>
    %168 = arith.addf %164, %167 : vector<16x128xf32>
    %169 = vector.extract_strided_slice %72 {offsets = [368, 0], sizes = [16, 64], strides = [1, 1]} : vector<432x64xbf16> to vector<16x64xbf16>
    %c1472 = arith.constant 1472 : index
    %c0_111 = arith.constant 0 : index
    %170 = vector.load %arg7[%c1472, %c0_111] : memref<1728x128xbf16, #tpu.memory_space<vmem>>, vector<64x128xbf16>
    %cst_112 = arith.constant dense<0.000000e+00> : vector<16x128xf32>
    %171 = tpu.matmul %169, %170, %cst_112 {dimension_numbers = #tpu.dot_dimension_numbers<[1], [0], [0], [1], [0, 0, 1, 1], [], []>} : vector<16x64xbf16>, vector<64x128xbf16>, vector<16x128xf32> -> vector<16x128xf32>
    %172 = arith.addf %168, %171 : vector<16x128xf32>
    %173 = vector.extract_strided_slice %72 {offsets = [384, 0], sizes = [16, 64], strides = [1, 1]} : vector<432x64xbf16> to vector<16x64xbf16>
    %c1536_113 = arith.constant 1536 : index
    %c0_114 = arith.constant 0 : index
    %174 = vector.load %arg7[%c1536_113, %c0_114] : memref<1728x128xbf16, #tpu.memory_space<vmem>>, vector<64x128xbf16>
    %cst_115 = arith.constant dense<0.000000e+00> : vector<16x128xf32>
    %175 = tpu.matmul %173, %174, %cst_115 {dimension_numbers = #tpu.dot_dimension_numbers<[1], [0], [0], [1], [0, 0, 1, 1], [], []>} : vector<16x64xbf16>, vector<64x128xbf16>, vector<16x128xf32> -> vector<16x128xf32>
    %176 = arith.addf %172, %175 : vector<16x128xf32>
    %177 = vector.extract_strided_slice %72 {offsets = [400, 0], sizes = [16, 64], strides = [1, 1]} : vector<432x64xbf16> to vector<16x64xbf16>
    %c1600 = arith.constant 1600 : index
    %c0_116 = arith.constant 0 : index
    %178 = vector.load %arg7[%c1600, %c0_116] : memref<1728x128xbf16, #tpu.memory_space<vmem>>, vector<64x128xbf16>
    %cst_117 = arith.constant dense<0.000000e+00> : vector<16x128xf32>
    %179 = tpu.matmul %177, %178, %cst_117 {dimension_numbers = #tpu.dot_dimension_numbers<[1], [0], [0], [1], [0, 0, 1, 1], [], []>} : vector<16x64xbf16>, vector<64x128xbf16>, vector<16x128xf32> -> vector<16x128xf32>
    %180 = arith.addf %176, %179 : vector<16x128xf32>
    %181 = vector.extract_strided_slice %72 {offsets = [416, 0], sizes = [16, 64], strides = [1, 1]} : vector<432x64xbf16> to vector<16x64xbf16>
    %c1664 = arith.constant 1664 : index
    %c0_118 = arith.constant 0 : index
    %182 = vector.load %arg7[%c1664, %c0_118] : memref<1728x128xbf16, #tpu.memory_space<vmem>>, vector<64x128xbf16>
    %cst_119 = arith.constant dense<0.000000e+00> : vector<16x128xf32>
    %183 = tpu.matmul %181, %182, %cst_119 {dimension_numbers = #tpu.dot_dimension_numbers<[1], [0], [0], [1], [0, 0, 1, 1], [], []>} : vector<16x64xbf16>, vector<64x128xbf16>, vector<16x128xf32> -> vector<16x128xf32>
    %184 = arith.addf %180, %183 : vector<16x128xf32>
    %cst_120 = arith.constant 0.000000e+00 : f32
    %185 = vector.broadcast %cst_120 : f32 to vector<16x128xf32>
    %186 = arith.cmpf ogt, %184, %185 : vector<16x128xf32>
    %cst_121 = arith.constant 2.000000e-01 : f32
    %187 = vector.broadcast %cst_121 : f32 to vector<16x128xf32>
    %188 = arith.mulf %187, %184 : vector<16x128xf32>
    %189 = arith.select %186, %184, %188 : vector<16x128xi1>, vector<16x128xf32>
    %190 = arith.truncf %189 : vector<16x128xf32> to vector<16x128xbf16>
    %c0_122 = arith.constant 0 : index
    %c0_123 = arith.constant 0 : index
    %191 = vector.load %arg9[%c0_122, %c0_123] : memref<64x16xbf16, #tpu.memory_space<vmem>>, vector<64x16xbf16>
    %cst_124 = arith.constant dense<0.000000e+00> : vector<64x128xf32>
    %192 = tpu.matmul %191, %190, %cst_124 {dimension_numbers = #tpu.dot_dimension_numbers<[1], [0], [0], [1], [0, 0, 1, 1], [], []>} : vector<64x16xbf16>, vector<16x128xbf16>, vector<64x128xf32> -> vector<64x128xf32>
    %cst_125 = arith.constant 0.000000e+00 : f32
    %193 = vector.broadcast %cst_125 : f32 to vector<8x256xf32>
    %c0_126 = arith.constant 0 : index
    %c0_127 = arith.constant 0 : index
    %194 = vector.load %arg11[%c0_126, %c0_127] : memref<1x256xf32, #tpu.memory_space<vmem>>, vector<1x256xf32>
    %195 = vector.broadcast %194 : vector<1x256xf32> to vector<8x256xf32>
    %196 = arith.addf %193, %195 : vector<8x256xf32>
    %197 = vector.extract_strided_slice %192 {offsets = [0, 0], sizes = [8, 128], strides = [1, 1]} : vector<64x128xf32> to vector<8x128xf32>
    %198 = arith.truncf %197 : vector<8x128xf32> to vector<8x128xbf16>
    %c0_128 = arith.constant 0 : index
    %c0_129 = arith.constant 0 : index
    %199 = vector.load %arg10[%c0_128, %c0_129] : memref<1024x256xbf16, #tpu.memory_space<vmem>>, vector<128x256xbf16>
    %cst_130 = arith.constant dense<0.000000e+00> : vector<8x256xf32>
    %200 = tpu.matmul %198, %199, %cst_130 {dimension_numbers = #tpu.dot_dimension_numbers<[1], [0], [0], [1], [0, 0, 1, 1], [], []>} : vector<8x128xbf16>, vector<128x256xbf16>, vector<8x256xf32> -> vector<8x256xf32>
    %201 = arith.addf %196, %200 : vector<8x256xf32>
    %202 = vector.extract_strided_slice %192 {offsets = [8, 0], sizes = [8, 128], strides = [1, 1]} : vector<64x128xf32> to vector<8x128xf32>
    %203 = arith.truncf %202 : vector<8x128xf32> to vector<8x128xbf16>
    %c128_131 = arith.constant 128 : index
    %c0_132 = arith.constant 0 : index
    %204 = vector.load %arg10[%c128_131, %c0_132] : memref<1024x256xbf16, #tpu.memory_space<vmem>>, vector<128x256xbf16>
    %cst_133 = arith.constant dense<0.000000e+00> : vector<8x256xf32>
    %205 = tpu.matmul %203, %204, %cst_133 {dimension_numbers = #tpu.dot_dimension_numbers<[1], [0], [0], [1], [0, 0, 1, 1], [], []>} : vector<8x128xbf16>, vector<128x256xbf16>, vector<8x256xf32> -> vector<8x256xf32>
    %206 = arith.addf %201, %205 : vector<8x256xf32>
    %207 = vector.extract_strided_slice %192 {offsets = [16, 0], sizes = [8, 128], strides = [1, 1]} : vector<64x128xf32> to vector<8x128xf32>
    %208 = arith.truncf %207 : vector<8x128xf32> to vector<8x128xbf16>
    %c256_134 = arith.constant 256 : index
    %c0_135 = arith.constant 0 : index
    %209 = vector.load %arg10[%c256_134, %c0_135] : memref<1024x256xbf16, #tpu.memory_space<vmem>>, vector<128x256xbf16>
    %cst_136 = arith.constant dense<0.000000e+00> : vector<8x256xf32>
    %210 = tpu.matmul %208, %209, %cst_136 {dimension_numbers = #tpu.dot_dimension_numbers<[1], [0], [0], [1], [0, 0, 1, 1], [], []>} : vector<8x128xbf16>, vector<128x256xbf16>, vector<8x256xf32> -> vector<8x256xf32>
    %211 = arith.addf %206, %210 : vector<8x256xf32>
    %212 = vector.extract_strided_slice %192 {offsets = [24, 0], sizes = [8, 128], strides = [1, 1]} : vector<64x128xf32> to vector<8x128xf32>
    %213 = arith.truncf %212 : vector<8x128xf32> to vector<8x128xbf16>
    %c384_137 = arith.constant 384 : index
    %c0_138 = arith.constant 0 : index
    %214 = vector.load %arg10[%c384_137, %c0_138] : memref<1024x256xbf16, #tpu.memory_space<vmem>>, vector<128x256xbf16>
    %cst_139 = arith.constant dense<0.000000e+00> : vector<8x256xf32>
    %215 = tpu.matmul %213, %214, %cst_139 {dimension_numbers = #tpu.dot_dimension_numbers<[1], [0], [0], [1], [0, 0, 1, 1], [], []>} : vector<8x128xbf16>, vector<128x256xbf16>, vector<8x256xf32> -> vector<8x256xf32>
    %216 = arith.addf %211, %215 : vector<8x256xf32>
    %217 = vector.extract_strided_slice %192 {offsets = [32, 0], sizes = [8, 128], strides = [1, 1]} : vector<64x128xf32> to vector<8x128xf32>
    %218 = arith.truncf %217 : vector<8x128xf32> to vector<8x128xbf16>
    %c512_140 = arith.constant 512 : index
    %c0_141 = arith.constant 0 : index
    %219 = vector.load %arg10[%c512_140, %c0_141] : memref<1024x256xbf16, #tpu.memory_space<vmem>>, vector<128x256xbf16>
    %cst_142 = arith.constant dense<0.000000e+00> : vector<8x256xf32>
    %220 = tpu.matmul %218, %219, %cst_142 {dimension_numbers = #tpu.dot_dimension_numbers<[1], [0], [0], [1], [0, 0, 1, 1], [], []>} : vector<8x128xbf16>, vector<128x256xbf16>, vector<8x256xf32> -> vector<8x256xf32>
    %221 = arith.addf %216, %220 : vector<8x256xf32>
    %222 = vector.extract_strided_slice %192 {offsets = [40, 0], sizes = [8, 128], strides = [1, 1]} : vector<64x128xf32> to vector<8x128xf32>
    %223 = arith.truncf %222 : vector<8x128xf32> to vector<8x128xbf16>
    %c640_143 = arith.constant 640 : index
    %c0_144 = arith.constant 0 : index
    %224 = vector.load %arg10[%c640_143, %c0_144] : memref<1024x256xbf16, #tpu.memory_space<vmem>>, vector<128x256xbf16>
    %cst_145 = arith.constant dense<0.000000e+00> : vector<8x256xf32>
    %225 = tpu.matmul %223, %224, %cst_145 {dimension_numbers = #tpu.dot_dimension_numbers<[1], [0], [0], [1], [0, 0, 1, 1], [], []>} : vector<8x128xbf16>, vector<128x256xbf16>, vector<8x256xf32> -> vector<8x256xf32>
    %226 = arith.addf %221, %225 : vector<8x256xf32>
    %227 = vector.extract_strided_slice %192 {offsets = [48, 0], sizes = [8, 128], strides = [1, 1]} : vector<64x128xf32> to vector<8x128xf32>
    %228 = arith.truncf %227 : vector<8x128xf32> to vector<8x128xbf16>
    %c768_146 = arith.constant 768 : index
    %c0_147 = arith.constant 0 : index
    %229 = vector.load %arg10[%c768_146, %c0_147] : memref<1024x256xbf16, #tpu.memory_space<vmem>>, vector<128x256xbf16>
    %cst_148 = arith.constant dense<0.000000e+00> : vector<8x256xf32>
    %230 = tpu.matmul %228, %229, %cst_148 {dimension_numbers = #tpu.dot_dimension_numbers<[1], [0], [0], [1], [0, 0, 1, 1], [], []>} : vector<8x128xbf16>, vector<128x256xbf16>, vector<8x256xf32> -> vector<8x256xf32>
    %231 = arith.addf %226, %230 : vector<8x256xf32>
    %232 = vector.extract_strided_slice %192 {offsets = [56, 0], sizes = [8, 128], strides = [1, 1]} : vector<64x128xf32> to vector<8x128xf32>
    %233 = arith.truncf %232 : vector<8x128xf32> to vector<8x128xbf16>
    %c896_149 = arith.constant 896 : index
    %c0_150 = arith.constant 0 : index
    %234 = vector.load %arg10[%c896_149, %c0_150] : memref<1024x256xbf16, #tpu.memory_space<vmem>>, vector<128x256xbf16>
    %cst_151 = arith.constant dense<0.000000e+00> : vector<8x256xf32>
    %235 = tpu.matmul %233, %234, %cst_151 {dimension_numbers = #tpu.dot_dimension_numbers<[1], [0], [0], [1], [0, 0, 1, 1], [], []>} : vector<8x128xbf16>, vector<128x256xbf16>, vector<8x256xf32> -> vector<8x256xf32>
    %236 = arith.addf %231, %235 : vector<8x256xf32>
    %cst_152 = arith.constant 0.000000e+00 : f32
    %237 = vector.broadcast %cst_152 : f32 to vector<8x256xf32>
    %238 = arith.cmpf ogt, %236, %237 : vector<8x256xf32>
    %cst_153 = arith.constant 2.000000e-01 : f32
    %239 = vector.broadcast %cst_153 : f32 to vector<8x256xf32>
    %240 = arith.mulf %239, %236 : vector<8x256xf32>
    %241 = arith.select %238, %236, %240 : vector<8x256xi1>, vector<8x256xf32>
    %242 = arith.truncf %241 : vector<8x256xf32> to vector<8x256xbf16>
    %c0_154 = arith.constant 0 : index
    %c0_155 = arith.constant 0 : index
    %243 = vector.load %arg12[%c0_154, %c0_155] : memref<256x512xbf16, #tpu.memory_space<vmem>>, vector<256x512xbf16>
    %cst_156 = arith.constant dense<0.000000e+00> : vector<8x512xf32>
    %244 = tpu.matmul %242, %243, %cst_156 {dimension_numbers = #tpu.dot_dimension_numbers<[1], [0], [0], [1], [0, 0, 1, 1], [], []>} : vector<8x256xbf16>, vector<256x512xbf16>, vector<8x512xf32> -> vector<8x512xf32>
    %c0_157 = arith.constant 0 : index
    %c0_158 = arith.constant 0 : index
    %245 = vector.load %arg13[%c0_157, %c0_158] : memref<1x512xf32, #tpu.memory_space<vmem>>, vector<1x512xf32>
    %246 = vector.broadcast %245 : vector<1x512xf32> to vector<8x512xf32>
    %247 = arith.addf %244, %246 : vector<8x512xf32>
    %cst_159 = arith.constant 0.000000e+00 : f32
    %248 = vector.broadcast %cst_159 : f32 to vector<8x512xf32>
    %249 = arith.cmpf ogt, %247, %248 : vector<8x512xf32>
    %cst_160 = arith.constant 2.000000e-01 : f32
    %250 = vector.broadcast %cst_160 : f32 to vector<8x512xf32>
    %251 = arith.mulf %250, %247 : vector<8x512xf32>
    %252 = arith.select %249, %247, %251 : vector<8x512xi1>, vector<8x512xf32>
    %253 = arith.truncf %252 : vector<8x512xf32> to vector<8x512xbf16>
    %c0_161 = arith.constant 0 : index
    %c0_162 = arith.constant 0 : index
    %254 = vector.load %arg14[%c0_161, %c0_162] : memref<512x128xbf16, #tpu.memory_space<vmem>>, vector<512x128xbf16>
    %cst_163 = arith.constant dense<0.000000e+00> : vector<8x128xf32>
    %255 = tpu.matmul %253, %254, %cst_163 {dimension_numbers = #tpu.dot_dimension_numbers<[1], [0], [0], [1], [0, 0, 1, 1], [], []>} : vector<8x512xbf16>, vector<512x128xbf16>, vector<8x128xf32> -> vector<8x128xf32>
    %c0_164 = arith.constant 0 : index
    %c0_165 = arith.constant 0 : index
    %256 = vector.load %arg15[%c0_164, %c0_165] : memref<1x128xf32, #tpu.memory_space<vmem>>, vector<1x128xf32>
    %257 = vector.broadcast %256 : vector<1x128xf32> to vector<8x128xf32>
    %258 = arith.addf %255, %257 : vector<8x128xf32>
    %259 = arith.negf %258 : vector<8x128xf32>
    %260 = math.exp %259 : vector<8x128xf32>
    %cst_166 = arith.constant 1.000000e+00 : f32
    %261 = vector.broadcast %cst_166 : f32 to vector<8x128xf32>
    %262 = arith.addf %261, %260 : vector<8x128xf32>
    %263 = arith.divf %261, %262 : vector<8x128xf32>
    %c0_167 = arith.constant 0 : index
    %c0_168 = arith.constant 0 : index
    %264 = vector.load %arg16[%c0_167, %c0_168] : memref<8x128xf32, #tpu.memory_space<vmem>>, vector<8x128xf32>
    tpu.vector_store %arg16[%c0_167, %c0_168], %263 {strides = array<i32>} : memref<8x128xf32, #tpu.memory_space<vmem>>, vector<8x128xf32>,
    return
  }
}

</mosaic_0001>

<llo_original>
// kernel: discriminator_forward.1
$region0: #{discriminator_forward.1}
  #allocation0 [shape = 'u32[]', space=smem, size = 0x4, offset = 0x4, fixed_abs, tag = 'smem constant byte address 0x4 - core index']
  #allocation1 [shape = 'u32[144,128]{1,0:T(1,128)}', space=vmem, size = 0x12000, scoped, tag = 'internal scratch']
  %s0 = inlined_call_operand.vmem [shape: bf16[128,256], index: 0, kind: input, shape index: {}]
  %s1 = inlined_call_operand.vmem [shape: bf16[256,256], index: 1, kind: input, shape index: {}]
  %s2 = inlined_call_operand.vmem [shape: f32[1,256], index: 2, kind: input, shape index: {}]
  %s3 = inlined_call_operand.vmem [shape: bf16[1024,128], index: 3, kind: input, shape index: {}]
  %s4 = inlined_call_operand.vmem [shape: bf16[2048,64], index: 4, kind: input, shape index: {}]
  %s5 = inlined_call_operand.vmem [shape: f32[1,64], index: 5, kind: input, shape index: {}]
  %s6 = inlined_call_operand.vmem [shape: bf16[432,128], index: 6, kind: input, shape index: {}]
  %s7 = inlined_call_operand.vmem [shape: bf16[1728,128], index: 7, kind: input, shape index: {}]
  %s8 = inlined_call_operand.vmem [shape: f32[1,128], index: 8, kind: input, shape index: {}]
  %s9 = inlined_call_operand.vmem [shape: bf16[64,16], index: 9, kind: input, shape index: {}]
  %s10 = inlined_call_operand.vmem [shape: bf16[1024,256], index: 10, kind: input, shape index: {}]
  %s11 = inlined_call_operand.vmem [shape: f32[1,256], index: 11, kind: input, shape index: {}]
  %s12 = inlined_call_operand.vmem [shape: bf16[256,512], index: 12, kind: input, shape index: {}]
  %s13 = inlined_call_operand.vmem [shape: f32[1,512], index: 13, kind: input, shape index: {}]
  %s14 = inlined_call_operand.vmem [shape: bf16[512,128], index: 14, kind: input, shape index: {}]
  %s15 = inlined_call_operand.vmem [shape: f32[1,128], index: 15, kind: input, shape index: {}]
  %s16 = inlined_call_operand.vmem [shape: f32[8,128], index: 16, kind: output, shape index: {}]
  %s17 = sld [smem:[#allocation0]]
  $region74: #{discriminator_forward.1} parent=0
    _
  %s19 = ssub.s32 1, %s17
  %s20 = scalar_select 0, %s19, %s17
  // Predicated region
  $region2: #{discriminator_forward.1} parent=0 // pred_check
    _
  $region3: #{discriminator_forward.1} parent=0 // pred_check_branch
    %22 = sbr.rel (0) target = $region5
  $region4: #{discriminator_forward.1} parent=0 // pred_region
    _
  $region5: #{discriminator_forward.1} parent=0 // pred_fallthru
    _
  // Predicated region
  $region6: #{discriminator_forward.1} parent=0 // pred_check
    _
  $region7: #{discriminator_forward.1} parent=0 // pred_check_branch
    %24 = sbr.rel (0) target = $region9
  $region8: #{discriminator_forward.1} parent=0 // pred_region
    _
  $region9: #{discriminator_forward.1} parent=0 // pred_fallthru
    _
  // Predicated region
  $region10: #{discriminator_forward.1} parent=0 // pred_check
    _
  $region11: #{discriminator_forward.1} parent=0 // pred_check_branch
    %26 = sbr.rel (0) target = $region13
  $region12: #{discriminator_forward.1} parent=0 // pred_region
    _
  $region13: #{discriminator_forward.1} parent=0 // pred_fallthru
    _
  // Predicated region
  $region14: #{discriminator_forward.1} parent=0 // pred_check
    _
  $region15: #{discriminator_forward.1} parent=0 // pred_check_branch
    %28 = sbr.rel (0) target = $region17
  $region16: #{discriminator_forward.1} parent=0 // pred_region
    _
  $region17: #{discriminator_forward.1} parent=0 // pred_fallthru
    _
  // Predicated region
  $region18: #{discriminator_forward.1} parent=0 // pred_check
    _
  $region19: #{discriminator_forward.1} parent=0 // pred_check_branch
    %30 = sbr.rel (0) target = $region21
  $region20: #{discriminator_forward.1} parent=0 // pred_region
    _
  $region21: #{discriminator_forward.1} parent=0 // pred_fallthru
    _
  // Predicated region
  $region22: #{discriminator_forward.1} parent=0 // pred_check
    _
  $region23: #{discriminator_forward.1} parent=0 // pred_check_branch
    %32 = sbr.rel (0) target = $region25
  $region24: #{discriminator_forward.1} parent=0 // pred_region
    _
  $region25: #{discriminator_forward.1} parent=0 // pred_fallthru
    _
  // Predicated region
  $region26: #{discriminator_forward.1} parent=0 // pred_check
    _
  $region27: #{discriminator_forward.1} parent=0 // pred_check_branch
    %34 = sbr.rel (0) target = $region29
  $region28: #{discriminator_forward.1} parent=0 // pred_region
    _
  $region29: #{discriminator_forward.1} parent=0 // pred_fallthru
    _
  // Predicated region
  $region30: #{discriminator_forward.1} parent=0 // pred_check
    _
  $region31: #{discriminator_forward.1} parent=0 // pred_check_branch
    %36 = sbr.rel (0) target = $region33
  $region32: #{discriminator_forward.1} parent=0 // pred_region
    _
  $region33: #{discriminator_forward.1} parent=0 // pred_fallthru
    _
  // Predicated region
  $region34: #{discriminator_forward.1} parent=0 // pred_check
    _
  $region35: #{discriminator_forward.1} parent=0 // pred_check_branch
    %38 = sbr.rel (0) target = $region37
  $region36: #{discriminator_forward.1} parent=0 // pred_region
    _
  $region37: #{discriminator_forward.1} parent=0 // pred_fallthru
    _
  // Predicated region
  $region38: #{discriminator_forward.1} parent=0 // pred_check
    _
  $region39: #{discriminator_forward.1} parent=0 // pred_check_branch
    %40 = sbr.rel (0) target = $region41
  $region40: #{discriminator_forward.1} parent=0 // pred_region
    _
  $region41: #{discriminator_forward.1} parent=0 // pred_fallthru
    _
  // Predicated region
  $region42: #{discriminator_forward.1} parent=0 // pred_check
    _
  $region43: #{discriminator_forward.1} parent=0 // pred_check_branch
    %42 = sbr.rel (0) target = $region45
  $region44: #{discriminator_forward.1} parent=0 // pred_region
    _
  $region45: #{discriminator_forward.1} parent=0 // pred_fallthru
    _
  // Predicated region
  $region46: #{discriminator_forward.1} parent=0 // pred_check
    _
  $region47: #{discriminator_forward.1} parent=0 // pred_check_branch
    %44 = sbr.rel (0) target = $region49
  $region48: #{discriminator_forward.1} parent=0 // pred_region
    _
  $region49: #{discriminator_forward.1} parent=0 // pred_fallthru
    _
  // Predicated region
  $region50: #{discriminator_forward.1} parent=0 // pred_check
    _
  $region51: #{discriminator_forward.1} parent=0 // pred_check_branch
    %46 = sbr.rel (0) target = $region53
  $region52: #{discriminator_forward.1} parent=0 // pred_region
    _
  $region53: #{discriminator_forward.1} parent=0 // pred_fallthru
    _
  // Predicated region
  $region54: #{discriminator_forward.1} parent=0 // pred_check
    _
  $region55: #{discriminator_forward.1} parent=0 // pred_check_branch
    %48 = sbr.rel (0) target = $region57
  $region56: #{discriminator_forward.1} parent=0 // pred_region
    _
  $region57: #{discriminator_forward.1} parent=0 // pred_fallthru
    _
  // Predicated region
  $region58: #{discriminator_forward.1} parent=0 // pred_check
    _
  $region59: #{discriminator_forward.1} parent=0 // pred_check_branch
    %50 = sbr.rel (0) target = $region61
  $region60: #{discriminator_forward.1} parent=0 // pred_region
    _
  $region61: #{discriminator_forward.1} parent=0 // pred_fallthru
    _
  // Predicated region
  $region62: #{discriminator_forward.1} parent=0 // pred_check
    _
  $region63: #{discriminator_forward.1} parent=0 // pred_check_branch
    %52 = sbr.rel (0) target = $region65
  $region64: #{discriminator_forward.1} parent=0 // pred_region
    _
  $region65: #{discriminator_forward.1} parent=0 // pred_fallthru
    _
  %v54 = vld [vmem:[%s0] sm:$0xff]
  %v55 = vld [vmem:[%s0 + $0x8] sm:$0xff]
  %v56 = vld [vmem:[%s0 + $0x10] sm:$0xff]
  %v57 = vld [vmem:[%s0 + $0x18] sm:$0xff]
  %v58 = vld [vmem:[%s0 + $0x20] sm:$0xff]
  %v59 = vld [vmem:[%s0 + $0x28] sm:$0xff]
  %v60 = vld [vmem:[%s0 + $0x30] sm:$0xff]
  %v61 = vld [vmem:[%s0 + $0x38] sm:$0xff]
  %v62 = vld [vmem:[%s0 + $0x40] sm:$0xff]
  %v63 = vld [vmem:[%s0 + $0x48] sm:$0xff]
  %v64 = vld [vmem:[%s0 + $0x50] sm:$0xff]
  %v65 = vld [vmem:[%s0 + $0x58] sm:$0xff]
  %v66 = vld [vmem:[%s0 + $0x60] sm:$0xff]
  %v67 = vld [vmem:[%s0 + $0x68] sm:$0xff]
  %v68 = vld [vmem:[%s0 + $0x70] sm:$0xff]
  %v69 = vld [vmem:[%s0 + $0x78] sm:$0xff]
  %v70 = vld [vmem:[%s1] sm:$0xff]
  %v71 = vld [vmem:[%s1 + $0x8] sm:$0xff]
  %v72 = vld [vmem:[%s1 + $0x10] sm:$0xff]
  %v73 = vld [vmem:[%s1 + $0x18] sm:$0xff]
  %v74 = vld [vmem:[%s1 + $0x20] sm:$0xff]
  %v75 = vld [vmem:[%s1 + $0x28] sm:$0xff]
  %v76 = vld [vmem:[%s1 + $0x30] sm:$0xff]
  %v77 = vld [vmem:[%s1 + $0x38] sm:$0xff]
  %v78 = vld [vmem:[%s1 + $0x40] sm:$0xff]
  %v79 = vld [vmem:[%s1 + $0x48] sm:$0xff]
  %v80 = vld [vmem:[%s1 + $0x50] sm:$0xff]
  %v81 = vld [vmem:[%s1 + $0x58] sm:$0xff]
  %v82 = vld [vmem:[%s1 + $0x60] sm:$0xff]
  %v83 = vld [vmem:[%s1 + $0x68] sm:$0xff]
  %v84 = vld [vmem:[%s1 + $0x70] sm:$0xff]
  %v85 = vld [vmem:[%s1 + $0x78] sm:$0xff]
  %v86 = vld [vmem:[%s1 + $0x80] sm:$0xff]
  %v87 = vld [vmem:[%s1 + $0x88] sm:$0xff]
  %v88 = vld [vmem:[%s1 + $0x90] sm:$0xff]
  %v89 = vld [vmem:[%s1 + $0x98] sm:$0xff]
  %v90 = vld [vmem:[%s1 + $0xa0] sm:$0xff]
  %v91 = vld [vmem:[%s1 + $0xa8] sm:$0xff]
  %v92 = vld [vmem:[%s1 + $0xb0] sm:$0xff]
  %v93 = vld [vmem:[%s1 + $0xb8] sm:$0xff]
  %v94 = vld [vmem:[%s1 + $0xc0] sm:$0xff]
  %v95 = vld [vmem:[%s1 + $0xc8] sm:$0xff]
  %v96 = vld [vmem:[%s1 + $0xd0] sm:$0xff]
  %v97 = vld [vmem:[%s1 + $0xd8] sm:$0xff]
  %v98 = vld [vmem:[%s1 + $0xe0] sm:$0xff]
  %v99 = vld [vmem:[%s1 + $0xe8] sm:$0xff]
  %v100 = vld [vmem:[%s1 + $0xf0] sm:$0xff]
  %v101 = vld [vmem:[%s1 + $0xf8] sm:$0xff]
  %v102 = vld [vmem:[%s2] sm:$0x3]
  %v104 = vlaneseq
  %v105 = vshrl.u32 %v104, 7
  %v106 = vsub.s32 0, %v105
  %v107 = vrot.slane %v102, %v106
  %v108 = vlaneseq
  %v109 = vshrl.u32 %v108, 7
  %v110 = vsub.s32 1, %v109
  %v111 = vrot.slane %v102, %v110
  %v130 = vunpack.c.l.b16 %v54
  %v131 = vunpack.c.h.b16 %v54
  %v132 = vunpack.c.l.b16 %v55
  %v133 = vunpack.c.h.b16 %v55
  %v134 = vunpack.c.l.b16 %v56
  %v135 = vunpack.c.h.b16 %v56
  %v136 = vunpack.c.l.b16 %v57
  %v137 = vunpack.c.h.b16 %v57
  %v138 = vunpack.c.l.b16 %v58
  %v139 = vunpack.c.h.b16 %v58
  %v140 = vunpack.c.l.b16 %v59
  %v141 = vunpack.c.h.b16 %v59
  %v142 = vunpack.c.l.b16 %v60
  %v143 = vunpack.c.h.b16 %v60
  %v144 = vunpack.c.l.b16 %v61
  %v145 = vunpack.c.h.b16 %v61
  %v146 = vunpack.c.l.b16 %v62
  %v147 = vunpack.c.h.b16 %v62
  %v148 = vunpack.c.l.b16 %v63
  %v149 = vunpack.c.h.b16 %v63
  %v150 = vunpack.c.l.b16 %v64
  %v151 = vunpack.c.h.b16 %v64
  %v152 = vunpack.c.l.b16 %v65
  %v153 = vunpack.c.h.b16 %v65
  %v154 = vunpack.c.l.b16 %v66
  %v155 = vunpack.c.h.b16 %v66
  %v156 = vunpack.c.l.b16 %v67
  %v157 = vunpack.c.h.b16 %v67
  %v158 = vunpack.c.l.b16 %v68
  %v159 = vunpack.c.h.b16 %v68
  %v160 = vunpack.c.l.b16 %v69
  %v161 = vunpack.c.h.b16 %v69
  %v162 = vpack.c.b16 %v132, %v130
  %v163 = vpack.c.b16 %v133, %v131
  %v164 = vpack.c.b16 %v136, %v134
  %v165 = vpack.c.b16 %v137, %v135
  %v166 = vpack.c.b16 %v140, %v138
  %v167 = vpack.c.b16 %v141, %v139
  %v168 = vpack.c.b16 %v144, %v142
  %v169 = vpack.c.b16 %v145, %v143
  %v170 = vpack.c.b16 %v148, %v146
  %v171 = vpack.c.b16 %v149, %v147
  %v172 = vpack.c.b16 %v152, %v150
  %v173 = vpack.c.b16 %v153, %v151
  %v174 = vpack.c.b16 %v156, %v154
  %v175 = vpack.c.b16 %v157, %v155
  %v176 = vpack.c.b16 %v160, %v158
  %v177 = vpack.c.b16 %v161, %v159
  %v226 = vunpack.c.l.b16 %v70
  %v227 = vunpack.c.h.b16 %v70
  %v228 = vunpack.c.l.b16 %v71
  %v229 = vunpack.c.h.b16 %v71
  %v230 = vunpack.c.l.b16 %v72
  %v231 = vunpack.c.h.b16 %v72
  %v232 = vunpack.c.l.b16 %v73
  %v233 = vunpack.c.h.b16 %v73
  %v234 = vunpack.c.l.b16 %v74
  %v235 = vunpack.c.h.b16 %v74
  %v236 = vunpack.c.l.b16 %v75
  %v237 = vunpack.c.h.b16 %v75
  %v238 = vunpack.c.l.b16 %v76
  %v239 = vunpack.c.h.b16 %v76
  %v240 = vunpack.c.l.b16 %v77
  %v241 = vunpack.c.h.b16 %v77
  %v242 = vunpack.c.l.b16 %v78
  %v243 = vunpack.c.h.b16 %v78
  %v244 = vunpack.c.l.b16 %v79
  %v245 = vunpack.c.h.b16 %v79
  %v246 = vunpack.c.l.b16 %v80
  %v247 = vunpack.c.h.b16 %v80
  %v248 = vunpack.c.l.b16 %v81
  %v249 = vunpack.c.h.b16 %v81
  %v250 = vunpack.c.l.b16 %v82
  %v251 = vunpack.c.h.b16 %v82
  %v252 = vunpack.c.l.b16 %v83
  %v253 = vunpack.c.h.b16 %v83
  %v254 = vunpack.c.l.b16 %v84
  %v255 = vunpack.c.h.b16 %v84
  %v256 = vunpack.c.l.b16 %v85
  %v257 = vunpack.c.h.b16 %v85
  %v258 = vunpack.c.l.b16 %v86
  %v259 = vunpack.c.h.b16 %v86
  %v260 = vunpack.c.l.b16 %v87
  %v261 = vunpack.c.h.b16 %v87
  %v262 = vunpack.c.l.b16 %v88
  %v263 = vunpack.c.h.b16 %v88
  %v264 = vunpack.c.l.b16 %v89
  %v265 = vunpack.c.h.b16 %v89
  %v266 = vunpack.c.l.b16 %v90
  %v267 = vunpack.c.h.b16 %v90
  %v268 = vunpack.c.l.b16 %v91
  %v269 = vunpack.c.h.b16 %v91
  %v270 = vunpack.c.l.b16 %v92
  %v271 = vunpack.c.h.b16 %v92
  %v272 = vunpack.c.l.b16 %v93
  %v273 = vunpack.c.h.b16 %v93
  %v274 = vunpack.c.l.b16 %v94
  %v275 = vunpack.c.h.b16 %v94
  %v276 = vunpack.c.l.b16 %v95
  %v277 = vunpack.c.h.b16 %v95
  %v278 = vunpack.c.l.b16 %v96
  %v279 = vunpack.c.h.b16 %v96
  %v280 = vunpack.c.l.b16 %v97
  %v281 = vunpack.c.h.b16 %v97
  %v282 = vunpack.c.l.b16 %v98
  %v283 = vunpack.c.h.b16 %v98
  %v284 = vunpack.c.l.b16 %v99
  %v285 = vunpack.c.h.b16 %v99
  %v286 = vunpack.c.l.b16 %v100
  %v287 = vunpack.c.h.b16 %v100
  %v288 = vunpack.c.l.b16 %v101
  %v289 = vunpack.c.h.b16 %v101
  %v290 = vpack.c.b16 %v228, %v226
  %v291 = vpack.c.b16 %v229, %v227
  %v292 = vpack.c.b16 %v232, %v230
  %v293 = vpack.c.b16 %v233, %v231
  %v294 = vpack.c.b16 %v236, %v234
  %v295 = vpack.c.b16 %v237, %v235
  %v296 = vpack.c.b16 %v240, %v238
  %v297 = vpack.c.b16 %v241, %v239
  %v298 = vpack.c.b16 %v244, %v242
  %v299 = vpack.c.b16 %v245, %v243
  %v300 = vpack.c.b16 %v248, %v246
  %v301 = vpack.c.b16 %v249, %v247
  %v302 = vpack.c.b16 %v252, %v250
  %v303 = vpack.c.b16 %v253, %v251
  %v304 = vpack.c.b16 %v256, %v254
  %v305 = vpack.c.b16 %v257, %v255
  %v306 = vpack.c.b16 %v260, %v258
  %v307 = vpack.c.b16 %v261, %v259
  %v308 = vpack.c.b16 %v264, %v262
  %v309 = vpack.c.b16 %v265, %v263
  %v310 = vpack.c.b16 %v268, %v266
  %v311 = vpack.c.b16 %v269, %v267
  %v312 = vpack.c.b16 %v272, %v270
  %v313 = vpack.c.b16 %v273, %v271
  %v314 = vpack.c.b16 %v276, %v274
  %v315 = vpack.c.b16 %v277, %v275
  %v316 = vpack.c.b16 %v280, %v278
  %v317 = vpack.c.b16 %v281, %v279
  %v318 = vpack.c.b16 %v284, %v282
  %v319 = vpack.c.b16 %v285, %v283
  %v320 = vpack.c.b16 %v288, %v286
  %v321 = vpack.c.b16 %v289, %v287
  %354 = vmatprep.subr.bf16.mxu0 %v291
  %355 = vmatpush1.bf16.msra.mxu0 %v290
  %356 = vmatprep.subr.bf16.mxu0 %v293
  %357 = vmatpush1.bf16.msra.mxu0 %v292
  %358 = vmatprep.subr.bf16.mxu0 %v295
  %359 = vmatpush1.bf16.msra.mxu0 %v294
  %360 = vmatprep.subr.bf16.mxu0 %v297
  %361 = vmatpush1.bf16.msra.mxu0 %v296
  %362 = vmatprep.subr.bf16.mxu0 %v299
  %363 = vmatpush1.bf16.msra.mxu0 %v298
  %364 = vmatprep.subr.bf16.mxu0 %v301
  %365 = vmatpush1.bf16.msra.mxu0 %v300
  %366 = vmatprep.subr.bf16.mxu0 %v303
  %367 = vmatpush1.bf16.msra.mxu0 %v302
  %368 = vmatprep.subr.bf16.mxu0 %v305
  %369 = vmatpush1.bf16.msra.mxu0 %v304
  %370 = vmatprep.subr.bf16.mxu0 %v307
  %371 = vmatpush1.bf16.msra.mxu0 %v306
  %372 = vmatprep.subr.bf16.mxu0 %v309
  %373 = vmatpush1.bf16.msra.mxu0 %v308
  %374 = vmatprep.subr.bf16.mxu0 %v311
  %375 = vmatpush1.bf16.msra.mxu0 %v310
  %376 = vmatprep.subr.bf16.mxu0 %v313
  %377 = vmatpush1.bf16.msra.mxu0 %v312
  %378 = vmatprep.subr.bf16.mxu0 %v315
  %379 = vmatpush1.bf16.msra.mxu0 %v314
  %380 = vmatprep.subr.bf16.mxu0 %v317
  %381 = vmatpush1.bf16.msra.mxu0 %v316
  %382 = vmatprep.subr.bf16.mxu0 %v319
  %383 = vmatpush1.bf16.msra.mxu0 %v318
  %384 = vmatprep.subr.bf16.mxu0 %v321
  %385 = vmatpush1.bf16.msra.mxu0 %v320
  %386 = vmatprep.mubr.bf16.mxu0 %v163
  %387 = vmatmul.mubr.bf16.gmra.mrb[0].mxu0 %v162
  %v388 = vpop.f32.mrb[0].mxu0
  %v389 = vadd.f32 %v107, %v388
  %v390 = vpop.f32.mrb[0].mxu0
  %v391 = vadd.f32 %v111, %v390
  %v392 = vpop.f32.mrb[0].mxu0
  %v393 = vadd.f32 %v107, %v392
  %v394 = vpop.f32.mrb[0].mxu0
  %v395 = vadd.f32 %v111, %v394
  %396 = vmatprep.mubr.bf16.mxu0 %v165
  %397 = vmatmul.mubr.bf16.gmra.mrb[0].mxu0 %v164
  %v398 = vpop.f32.mrb[0].mxu0
  %v399 = vadd.f32 %v107, %v398
  %v400 = vpop.f32.mrb[0].mxu0
  %v401 = vadd.f32 %v111, %v400
  %v402 = vpop.f32.mrb[0].mxu0
  %v403 = vadd.f32 %v107, %v402
  %v404 = vpop.f32.mrb[0].mxu0
  %v405 = vadd.f32 %v111, %v404
  %406 = vmatprep.mubr.bf16.mxu0 %v167
  %407 = vmatmul.mubr.bf16.gmra.mrb[0].mxu0 %v166
  %v408 = vpop.f32.mrb[0].mxu0
  %v409 = vadd.f32 %v107, %v408
  %v410 = vpop.f32.mrb[0].mxu0
  %v411 = vadd.f32 %v111, %v410
  %v412 = vpop.f32.mrb[0].mxu0
  %v413 = vadd.f32 %v107, %v412
  %v414 = vpop.f32.mrb[0].mxu0
  %v415 = vadd.f32 %v111, %v414
  %416 = vmatprep.mubr.bf16.mxu0 %v169
  %417 = vmatmul.mubr.bf16.gmra.mrb[0].mxu0 %v168
  %v418 = vpop.f32.mrb[0].mxu0
  %v419 = vadd.f32 %v107, %v418
  %v420 = vpop.f32.mrb[0].mxu0
  %v421 = vadd.f32 %v111, %v420
  %v422 = vpop.f32.mrb[0].mxu0
  %v423 = vadd.f32 %v107, %v422
  %v424 = vpop.f32.mrb[0].mxu0
  %v425 = vadd.f32 %v111, %v424
  %426 = vmatprep.mubr.bf16.mxu0 %v171
  %427 = vmatmul.mubr.bf16.gmra.mrb[0].mxu0 %v170
  %v428 = vpop.f32.mrb[0].mxu0
  %v429 = vadd.f32 %v107, %v428
  %v430 = vpop.f32.mrb[0].mxu0
  %v431 = vadd.f32 %v111, %v430
  %v432 = vpop.f32.mrb[0].mxu0
  %v433 = vadd.f32 %v107, %v432
  %v434 = vpop.f32.mrb[0].mxu0
  %v435 = vadd.f32 %v111, %v434
  %436 = vmatprep.mubr.bf16.mxu0 %v173
  %437 = vmatmul.mubr.bf16.gmra.mrb[0].mxu0 %v172
  %v438 = vpop.f32.mrb[0].mxu0
  %v439 = vadd.f32 %v107, %v438
  %v440 = vpop.f32.mrb[0].mxu0
  %v441 = vadd.f32 %v111, %v440
  %v442 = vpop.f32.mrb[0].mxu0
  %v443 = vadd.f32 %v107, %v442
  %v444 = vpop.f32.mrb[0].mxu0
  %v445 = vadd.f32 %v111, %v444
  %446 = vmatprep.mubr.bf16.mxu0 %v175
  %447 = vmatmul.mubr.bf16.gmra.mrb[0].mxu0 %v174
  %v448 = vpop.f32.mrb[0].mxu0
  %v449 = vadd.f32 %v107, %v448
  %v450 = vpop.f32.mrb[0].mxu0
  %v451 = vadd.f32 %v111, %v450
  %v452 = vpop.f32.mrb[0].mxu0
  %v453 = vadd.f32 %v107, %v452
  %v454 = vpop.f32.mrb[0].mxu0
  %v455 = vadd.f32 %v111, %v454
  %456 = vmatprep.mubr.bf16.mxu0 %v177
  %457 = vmatmul.mubr.bf16.gmra.mrb[0].mxu0 %v176
  %v458 = vpop.f32.mrb[0].mxu0
  %v459 = vadd.f32 %v107, %v458
  %v460 = vpop.f32.mrb[0].mxu0
  %v461 = vadd.f32 %v111, %v460
  %v462 = vpop.f32.mrb[0].mxu0
  %v463 = vadd.f32 %v107, %v462
  %v464 = vpop.f32.mrb[0].mxu0
  %v465 = vadd.f32 %v111, %v464
  %466 = vdwg.mxu0
  %vm467 = vcmp.gt.f32.partialorder %v389, 0.0
  %vm468 = vcmp.gt.f32.partialorder %v391, 0.0
  %vm469 = vcmp.gt.f32.partialorder %v393, 0.0
  %vm470 = vcmp.gt.f32.partialorder %v395, 0.0
  %vm471 = vcmp.gt.f32.partialorder %v399, 0.0
  %vm472 = vcmp.gt.f32.partialorder %v401, 0.0
  %vm473 = vcmp.gt.f32.partialorder %v403, 0.0
  %vm474 = vcmp.gt.f32.partialorder %v405, 0.0
  %vm475 = vcmp.gt.f32.partialorder %v409, 0.0
  %vm476 = vcmp.gt.f32.partialorder %v411, 0.0
  %vm477 = vcmp.gt.f32.partialorder %v413, 0.0
  %vm478 = vcmp.gt.f32.partialorder %v415, 0.0
  %vm479 = vcmp.gt.f32.partialorder %v419, 0.0
  %vm480 = vcmp.gt.f32.partialorder %v421, 0.0
  %vm481 = vcmp.gt.f32.partialorder %v423, 0.0
  %vm482 = vcmp.gt.f32.partialorder %v425, 0.0
  %vm483 = vcmp.gt.f32.partialorder %v429, 0.0
  %vm484 = vcmp.gt.f32.partialorder %v431, 0.0
  %vm485 = vcmp.gt.f32.partialorder %v433, 0.0
  %vm486 = vcmp.gt.f32.partialorder %v435, 0.0
  %vm487 = vcmp.gt.f32.partialorder %v439, 0.0
  %vm488 = vcmp.gt.f32.partialorder %v441, 0.0
  %vm489 = vcmp.gt.f32.partialorder %v443, 0.0
  %vm490 = vcmp.gt.f32.partialorder %v445, 0.0
  %vm491 = vcmp.gt.f32.partialorder %v449, 0.0
  %vm492 = vcmp.gt.f32.partialorder %v451, 0.0
  %vm493 = vcmp.gt.f32.partialorder %v453, 0.0
  %vm494 = vcmp.gt.f32.partialorder %v455, 0.0
  %vm495 = vcmp.gt.f32.partialorder %v459, 0.0
  %vm496 = vcmp.gt.f32.partialorder %v461, 0.0
  %vm497 = vcmp.gt.f32.partialorder %v463, 0.0
  %vm498 = vcmp.gt.f32.partialorder %v465, 0.0
  %v499 = vmul.f32 %v389, 0.2
  %v500 = vmul.f32 %v391, 0.2
  %v501 = vmul.f32 %v393, 0.2
  %v502 = vmul.f32 %v395, 0.2
  %v503 = vmul.f32 %v399, 0.2
  %v504 = vmul.f32 %v401, 0.2
  %v505 = vmul.f32 %v403, 0.2
  %v506 = vmul.f32 %v405, 0.2
  %v507 = vmul.f32 %v409, 0.2
  %v508 = vmul.f32 %v411, 0.2
  %v509 = vmul.f32 %v413, 0.2
  %v510 = vmul.f32 %v415, 0.2
  %v511 = vmul.f32 %v419, 0.2
  %v512 = vmul.f32 %v421, 0.2
  %v513 = vmul.f32 %v423, 0.2
  %v514 = vmul.f32 %v425, 0.2
  %v515 = vmul.f32 %v429, 0.2
  %v516 = vmul.f32 %v431, 0.2
  %v517 = vmul.f32 %v433, 0.2
  %v518 = vmul.f32 %v435, 0.2
  %v519 = vmul.f32 %v439, 0.2
  %v520 = vmul.f32 %v441, 0.2
  %v521 = vmul.f32 %v443, 0.2
  %v522 = vmul.f32 %v445, 0.2
  %v523 = vmul.f32 %v449, 0.2
  %v524 = vmul.f32 %v451, 0.2
  %v525 = vmul.f32 %v453, 0.2
  %v526 = vmul.f32 %v455, 0.2
  %v527 = vmul.f32 %v459, 0.2
  %v528 = vmul.f32 %v461, 0.2
  %v529 = vmul.f32 %v463, 0.2
  %v530 = vmul.f32 %v465, 0.2
  %v531 = vsel %vm467, %v389, %v499
  %v532 = vsel %vm468, %v391, %v500
  %v533 = vsel %vm469, %v393, %v501
  %v534 = vsel %vm470, %v395, %v502
  %v535 = vsel %vm471, %v399, %v503
  %v536 = vsel %vm472, %v401, %v504
  %v537 = vsel %vm473, %v403, %v505
  %v538 = vsel %vm474, %v405, %v506
  %v539 = vsel %vm475, %v409, %v507
  %v540 = vsel %vm476, %v411, %v508
  %v541 = vsel %vm477, %v413, %v509
  %v542 = vsel %vm478, %v415, %v510
  %v543 = vsel %vm479, %v419, %v511
  %v544 = vsel %vm480, %v421, %v512
  %v545 = vsel %vm481, %v423, %v513
  %v546 = vsel %vm482, %v425, %v514
  %v547 = vsel %vm483, %v429, %v515
  %v548 = vsel %vm484, %v431, %v516
  %v549 = vsel %vm485, %v433, %v517
  %v550 = vsel %vm486, %v435, %v518
  %v551 = vsel %vm487, %v439, %v519
  %v552 = vsel %vm488, %v441, %v520
  %v553 = vsel %vm489, %v443, %v521
  %v554 = vsel %vm490, %v445, %v522
  %v555 = vsel %vm491, %v449, %v523
  %v556 = vsel %vm492, %v451, %v524
  %v557 = vsel %vm493, %v453, %v525
  %v558 = vsel %vm494, %v455, %v526
  %v559 = vsel %vm495, %v459, %v527
  %v560 = vsel %vm496, %v461, %v528
  %v561 = vsel %vm497, %v463, %v529
  %v562 = vsel %vm498, %v465, %v530
  %v563 = vpack.c.bf16 %v533, %v531
  %v564 = vpack.c.bf16 %v534, %v532
  %v565 = vpack.c.bf16 %v537, %v535
  %v566 = vpack.c.bf16 %v538, %v536
  %v567 = vpack.c.bf16 %v541, %v539
  %v568 = vpack.c.bf16 %v542, %v540
  %v569 = vpack.c.bf16 %v545, %v543
  %v570 = vpack.c.bf16 %v546, %v544
  %v571 = vpack.c.bf16 %v549, %v547
  %v572 = vpack.c.bf16 %v550, %v548
  %v573 = vpack.c.bf16 %v553, %v551
  %v574 = vpack.c.bf16 %v554, %v552
  %v575 = vpack.c.bf16 %v557, %v555
  %v576 = vpack.c.bf16 %v558, %v556
  %v577 = vpack.c.bf16 %v561, %v559
  %v578 = vpack.c.bf16 %v562, %v560
  %v579 = vld [vmem:[%s5] sm:$0x1]
  %v581 = vlaneseq
  %v582 = vshrl.u32 %v581, 7
  %v583 = vsub.s32 0, %v582
  %v584 = vrot.slane %v579, %v583
  %v586 = vadd.f32 %v584, 0.0
  %v587 = vld [vmem:[%s3] sm:$0xf]
  %v588 = vld [vmem:[%s3 + $0x4] sm:$0xf]
  %v589 = vld [vmem:[%s3 + $0x8] sm:$0xf]
  %v590 = vld [vmem:[%s3 + $0xc] sm:$0xf]
  %v591 = vld [vmem:[%s3 + $0x10] sm:$0xf]
  %v592 = vld [vmem:[%s3 + $0x14] sm:$0xf]
  %v593 = vld [vmem:[%s3 + $0x18] sm:$0xf]
  %v594 = vld [vmem:[%s3 + $0x1c] sm:$0xf]
  %v595 = vld [vmem:[%s3 + $0x20] sm:$0xf]
  %v596 = vld [vmem:[%s3 + $0x24] sm:$0xf]
  %v597 = vld [vmem:[%s3 + $0x28] sm:$0xf]
  %v598 = vld [vmem:[%s3 + $0x2c] sm:$0xf]
  %v599 = vld [vmem:[%s3 + $0x30] sm:$0xf]
  %v600 = vld [vmem:[%s3 + $0x34] sm:$0xf]
  %v601 = vld [vmem:[%s3 + $0x38] sm:$0xf]
  %v602 = vld [vmem:[%s3 + $0x3c] sm:$0xf]
  %v619 = vunpack.c.l.b16 %v587
  %v620 = vunpack.c.l.b16 %v588
  %v621 = vunpack.c.l.b16 %v589
  %v622 = vunpack.c.l.b16 %v590
  %v623 = vunpack.c.l.b16 %v591
  %v624 = vunpack.c.l.b16 %v592
  %v625 = vunpack.c.l.b16 %v593
  %v626 = vunpack.c.l.b16 %v594
  %v627 = vunpack.c.l.b16 %v595
  %v628 = vunpack.c.l.b16 %v596
  %v629 = vunpack.c.l.b16 %v597
  %v630 = vunpack.c.l.b16 %v598
  %v631 = vunpack.c.l.b16 %v599
  %v632 = vunpack.c.l.b16 %v600
  %v633 = vunpack.c.l.b16 %v601
  %v634 = vunpack.c.l.b16 %v602
  %v635 = vpack.c.b16 %v620, %v619
  %v636 = vpack.c.b16 %v622, %v621
  %v637 = vpack.c.b16 %v624, %v623
  %v638 = vpack.c.b16 %v626, %v625
  %v639 = vpack.c.b16 %v628, %v627
  %v640 = vpack.c.b16 %v630, %v629
  %v641 = vpack.c.b16 %v632, %v631
  %v642 = vpack.c.b16 %v634, %v633
  %651 = vmatprep.subr.bf16.mxu0 %v564
  %652 = vmatpush1.bf16.msra.mxu0 %v563
  %653 = vmatprep.subr.bf16.mxu0 %v566
  %654 = vmatpush1.bf16.msra.mxu0 %v565
  %655 = vmatprep.subr.bf16.mxu0 %v568
  %656 = vmatpush1.bf16.msra.mxu0 %v567
  %657 = vmatprep.subr.bf16.mxu0 %v570
  %658 = vmatpush1.bf16.msra.mxu0 %v569
  %659 = vmatprep.subr.bf16.mxu0 %v572
  %660 = vmatpush1.bf16.msra.mxu0 %v571
  %661 = vmatprep.subr.bf16.mxu0 %v574
  %662 = vmatpush1.bf16.msra.mxu0 %v573
  %663 = vmatprep.subr.bf16.mxu0 %v576
  %664 = vmatpush1.bf16.msra.mxu0 %v575
  %665 = vmatprep.subr.bf16.mxu0 %v578
  %666 = vmatpush1.bf16.msra.mxu0 %v577
  %667 = vmatprep.subr.bf16.mxu0 0
  %668 = vmatpush1.bf16.msra.mxu0 0
  %669 = vmatprep.subr.bf16.mxu0 0
  %670 = vmatpush1.bf16.msra.mxu0 0
  %671 = vmatprep.subr.bf16.mxu0 0
  %672 = vmatpush1.bf16.msra.mxu0 0
  %673 = vmatprep.subr.bf16.mxu0 0
  %674 = vmatpush1.bf16.msra.mxu0 0
  %675 = vmatprep.subr.bf16.mxu0 0
  %676 = vmatpush1.bf16.msra.mxu0 0
  %677 = vmatprep.subr.bf16.mxu0 0
  %678 = vmatpush1.bf16.msra.mxu0 0
  %679 = vmatprep.subr.bf16.mxu0 0
  %680 = vmatpush1.bf16.msra.mxu0 0
  %681 = vmatprep.subr.bf16.mxu0 0
  %682 = vmatpush1.bf16.msra.mxu0 0
  %683 = vmatprep.mubr.bf16.mxu0 0
  %684 = vmatmul.mubr.bf16.gmra.mrb[0].mxu0 %v635
  %v685 = vpop.f32.mrb[0].mxu0
  %v686 = vadd.f32 0.0, %v685
  %v687 = vpop.f32.mrb[0].mxu0
  %v688 = vadd.f32 0.0, %v687
  %v689 = vpop.f32.mrb[0].mxu0
  %v690 = vadd.f32 0.0, %v689
  %v691 = vpop.f32.mrb[0].mxu0
  %v692 = vadd.f32 0.0, %v691
  %693 = vmatprep.mubr.bf16.mxu0 0
  %694 = vmatmul.mubr.bf16.gmra.mrb[0].mxu0 %v636
  %v695 = vpop.f32.mrb[0].mxu0
  %v696 = vadd.f32 0.0, %v695
  %v697 = vpop.f32.mrb[0].mxu0
  %v698 = vadd.f32 0.0, %v697
  %v699 = vpop.f32.mrb[0].mxu0
  %v700 = vadd.f32 0.0, %v699
  %v701 = vpop.f32.mrb[0].mxu0
  %v702 = vadd.f32 0.0, %v701
  %703 = vmatprep.mubr.bf16.mxu0 0
  %704 = vmatmul.mubr.bf16.gmra.mrb[0].mxu0 %v637
  %v705 = vpop.f32.mrb[0].mxu0
  %v706 = vadd.f32 0.0, %v705
  %v707 = vpop.f32.mrb[0].mxu0
  %v708 = vadd.f32 0.0, %v707
  %v709 = vpop.f32.mrb[0].mxu0
  %v710 = vadd.f32 0.0, %v709
  %v711 = vpop.f32.mrb[0].mxu0
  %v712 = vadd.f32 0.0, %v711
  %713 = vmatprep.mubr.bf16.mxu0 0
  %714 = vmatmul.mubr.bf16.gmra.mrb[0].mxu0 %v638
  %v715 = vpop.f32.mrb[0].mxu0
  %v716 = vadd.f32 0.0, %v715
  %v717 = vpop.f32.mrb[0].mxu0
  %v718 = vadd.f32 0.0, %v717
  %v719 = vpop.f32.mrb[0].mxu0
  %v720 = vadd.f32 0.0, %v719
  %v721 = vpop.f32.mrb[0].mxu0
  %v722 = vadd.f32 0.0, %v721
  %723 = vmatprep.mubr.bf16.mxu0 0
  %724 = vmatmul.mubr.bf16.gmra.mrb[0].mxu0 %v639
  %v725 = vpop.f32.mrb[0].mxu0
  %v726 = vadd.f32 0.0, %v725
  %v727 = vpop.f32.mrb[0].mxu0
  %v728 = vadd.f32 0.0, %v727
  %v729 = vpop.f32.mrb[0].mxu0
  %v730 = vadd.f32 0.0, %v729
  %v731 = vpop.f32.mrb[0].mxu0
  %v732 = vadd.f32 0.0, %v731
  %733 = vmatprep.mubr.bf16.mxu0 0
  %734 = vmatmul.mubr.bf16.gmra.mrb[0].mxu0 %v640
  %v735 = vpop.f32.mrb[0].mxu0
  %v736 = vadd.f32 0.0, %v735
  %v737 = vpop.f32.mrb[0].mxu0
  %v738 = vadd.f32 0.0, %v737
  %v739 = vpop.f32.mrb[0].mxu0
  %v740 = vadd.f32 0.0, %v739
  %v741 = vpop.f32.mrb[0].mxu0
  %v742 = vadd.f32 0.0, %v741
  %743 = vmatprep.mubr.bf16.mxu0 0
  %744 = vmatmul.mubr.bf16.gmra.mrb[0].mxu0 %v641
  %v745 = vpop.f32.mrb[0].mxu0
  %v746 = vadd.f32 0.0, %v745
  %v747 = vpop.f32.mrb[0].mxu0
  %v748 = vadd.f32 0.0, %v747
  %v749 = vpop.f32.mrb[0].mxu0
  %v750 = vadd.f32 0.0, %v749
  %v751 = vpop.f32.mrb[0].mxu0
  %v752 = vadd.f32 0.0, %v751
  %753 = vmatprep.mubr.bf16.mxu0 0
  %754 = vmatmul.mubr.bf16.gmra.mrb[0].mxu0 %v642
  %v755 = vpop.f32.mrb[0].mxu0
  %v756 = vadd.f32 0.0, %v755
  %v757 = vpop.f32.mrb[0].mxu0
  %v758 = vadd.f32 0.0, %v757
  %v759 = vpop.f32.mrb[0].mxu0
  %v760 = vadd.f32 0.0, %v759
  %v761 = vpop.f32.mrb[0].mxu0
  %v762 = vadd.f32 0.0, %v761
  %763 = vdwg.mxu0
  %v764 = vpack.c.bf16 %v690, %v686
  %v765 = vpack.c.bf16 %v692, %v688
  %v766 = vpack.c.bf16 %v700, %v696
  %v767 = vpack.c.bf16 %v702, %v698
  %v768 = vpack.c.bf16 %v710, %v706
  %v769 = vpack.c.bf16 %v712, %v708
  %v770 = vpack.c.bf16 %v720, %v716
  %v771 = vpack.c.bf16 %v722, %v718
  %v772 = vpack.c.bf16 %v730, %v726
  %v773 = vpack.c.bf16 %v732, %v728
  %v774 = vpack.c.bf16 %v740, %v736
  %v775 = vpack.c.bf16 %v742, %v738
  %v776 = vpack.c.bf16 %v750, %v746
  %v777 = vpack.c.bf16 %v752, %v748
  %v778 = vpack.c.bf16 %v760, %v756
  %v779 = vpack.c.bf16 %v762, %v758
  %v780 = vld [vmem:[%s4] sm:$0xf]
  %v781 = vld [vmem:[%s4 + $0x4] sm:$0xf]
  %v782 = vld [vmem:[%s4 + $0x8] sm:$0xf]
  %v783 = vld [vmem:[%s4 + $0xc] sm:$0xf]
  %v784 = vld [vmem:[%s4 + $0x10] sm:$0xf]
  %v785 = vld [vmem:[%s4 + $0x14] sm:$0xf]
  %v786 = vld [vmem:[%s4 + $0x18] sm:$0xf]
  %v787 = vld [vmem:[%s4 + $0x1c] sm:$0xf]
  %v788 = vld [vmem:[%s4 + $0x20] sm:$0xf]
  %v789 = vld [vmem:[%s4 + $0x24] sm:$0xf]
  %v790 = vld [vmem:[%s4 + $0x28] sm:$0xf]
  %v791 = vld [vmem:[%s4 + $0x2c] sm:$0xf]
  %v792 = vld [vmem:[%s4 + $0x30] sm:$0xf]
  %v793 = vld [vmem:[%s4 + $0x34] sm:$0xf]
  %v794 = vld [vmem:[%s4 + $0x38] sm:$0xf]
  %v795 = vld [vmem:[%s4 + $0x3c] sm:$0xf]
  %v796 = vld [vmem:[%s4 + $0x40] sm:$0xf]
  %v797 = vld [vmem:[%s4 + $0x44] sm:$0xf]
  %v798 = vld [vmem:[%s4 + $0x48] sm:$0xf]
  %v799 = vld [vmem:[%s4 + $0x4c] sm:$0xf]
  %v800 = vld [vmem:[%s4 + $0x50] sm:$0xf]
  %v801 = vld [vmem:[%s4 + $0x54] sm:$0xf]
  %v802 = vld [vmem:[%s4 + $0x58] sm:$0xf]
  %v803 = vld [vmem:[%s4 + $0x5c] sm:$0xf]
  %v804 = vld [vmem:[%s4 + $0x60] sm:$0xf]
  %v805 = vld [vmem:[%s4 + $0x64] sm:$0xf]
  %v806 = vld [vmem:[%s4 + $0x68] sm:$0xf]
  %v807 = vld [vmem:[%s4 + $0x6c] sm:$0xf]
  %v808 = vld [vmem:[%s4 + $0x70] sm:$0xf]
  %v809 = vld [vmem:[%s4 + $0x74] sm:$0xf]
  %v810 = vld [vmem:[%s4 + $0x78] sm:$0xf]
  %v811 = vld [vmem:[%s4 + $0x7c] sm:$0xf]
  %v844 = vunpack.c.l.b16 %v780
  %v845 = vunpack.c.l.b16 %v781
  %v846 = vunpack.c.l.b16 %v782
  %v847 = vunpack.c.l.b16 %v783
  %v848 = vunpack.c.l.b16 %v784
  %v849 = vunpack.c.l.b16 %v785
  %v850 = vunpack.c.l.b16 %v786
  %v851 = vunpack.c.l.b16 %v787
  %v852 = vunpack.c.l.b16 %v788
  %v853 = vunpack.c.l.b16 %v789
  %v854 = vunpack.c.l.b16 %v790
  %v855 = vunpack.c.l.b16 %v791
  %v856 = vunpack.c.l.b16 %v792
  %v857 = vunpack.c.l.b16 %v793
  %v858 = vunpack.c.l.b16 %v794
  %v859 = vunpack.c.l.b16 %v795
  %v860 = vunpack.c.l.b16 %v796
  %v861 = vunpack.c.l.b16 %v797
  %v862 = vunpack.c.l.b16 %v798
  %v863 = vunpack.c.l.b16 %v799
  %v864 = vunpack.c.l.b16 %v800
  %v865 = vunpack.c.l.b16 %v801
  %v866 = vunpack.c.l.b16 %v802
  %v867 = vunpack.c.l.b16 %v803
  %v868 = vunpack.c.l.b16 %v804
  %v869 = vunpack.c.l.b16 %v805
  %v870 = vunpack.c.l.b16 %v806
  %v871 = vunpack.c.l.b16 %v807
  %v872 = vunpack.c.l.b16 %v808
  %v873 = vunpack.c.l.b16 %v809
  %v874 = vunpack.c.l.b16 %v810
  %v875 = vunpack.c.l.b16 %v811
  %v876 = vpack.c.b16 %v845, %v844
  %v877 = vpack.c.b16 %v847, %v846
  %v878 = vpack.c.b16 %v849, %v848
  %v879 = vpack.c.b16 %v851, %v850
  %v880 = vpack.c.b16 %v853, %v852
  %v881 = vpack.c.b16 %v855, %v854
  %v882 = vpack.c.b16 %v857, %v856
  %v883 = vpack.c.b16 %v859, %v858
  %v884 = vpack.c.b16 %v861, %v860
  %v885 = vpack.c.b16 %v863, %v862
  %v886 = vpack.c.b16 %v865, %v864
  %v887 = vpack.c.b16 %v867, %v866
  %v888 = vpack.c.b16 %v869, %v868
  %v889 = vpack.c.b16 %v871, %v870
  %v890 = vpack.c.b16 %v873, %v872
  %v891 = vpack.c.b16 %v875, %v874
  %908 = vmatprep.subr.bf16.mxu0 0
  %909 = vmatpush1.bf16.msra.mxu0 %v876
  %910 = vmatprep.subr.bf16.mxu0 0
  %911 = vmatpush1.bf16.msra.mxu0 %v877
  %912 = vmatprep.subr.bf16.mxu0 0
  %913 = vmatpush1.bf16.msra.mxu0 %v878
  %914 = vmatprep.subr.bf16.mxu0 0
  %915 = vmatpush1.bf16.msra.mxu0 %v879
  %916 = vmatprep.subr.bf16.mxu0 0
  %917 = vmatpush1.bf16.msra.mxu0 %v880
  %918 = vmatprep.subr.bf16.mxu0 0
  %919 = vmatpush1.bf16.msra.mxu0 %v881
  %920 = vmatprep.subr.bf16.mxu0 0
  %921 = vmatpush1.bf16.msra.mxu0 %v882
  %922 = vmatprep.subr.bf16.mxu0 0
  %923 = vmatpush1.bf16.msra.mxu0 %v883
  %924 = vmatprep.subr.bf16.mxu0 0
  %925 = vmatpush1.bf16.msra.mxu0 %v884
  %926 = vmatprep.subr.bf16.mxu0 0
  %927 = vmatpush1.bf16.msra.mxu0 %v885
  %928 = vmatprep.subr.bf16.mxu0 0
  %929 = vmatpush1.bf16.msra.mxu0 %v886
  %930 = vmatprep.subr.bf16.mxu0 0
  %931 = vmatpush1.bf16.msra.mxu0 %v887
  %932 = vmatprep.subr.bf16.mxu0 0
  %933 = vmatpush1.bf16.msra.mxu0 %v888
  %934 = vmatprep.subr.bf16.mxu0 0
  %935 = vmatpush1.bf16.msra.mxu0 %v889
  %936 = vmatprep.subr.bf16.mxu0 0
  %937 = vmatpush1.bf16.msra.mxu0 %v890
  %938 = vmatprep.subr.bf16.mxu0 0
  %939 = vmatpush1.bf16.msra.mxu0 %v891
  %940 = vmatprep.mubr.bf16.mxu0 %v765
  %941 = vmatmul.mubr.bf16.gmra.mrb[0].mxu0 %v764
  %v942 = vpop.f32.mrb[0].mxu0
  %v943 = vadd.f32 0.0, %v942
  %v944 = vpop.f32.mrb[0].mxu0
  %v945 = vpop.f32.mrb[0].mxu0
  %v946 = vadd.f32 0.0, %v945
  %v947 = vpop.f32.mrb[0].mxu0
  %948 = vmatprep.mubr.bf16.mxu0 %v767
  %949 = vmatmul.mubr.bf16.gmra.mrb[0].mxu0 %v766
  %v950 = vpop.f32.mrb[0].mxu0
  %v951 = vadd.f32 0.0, %v950
  %v952 = vpop.f32.mrb[0].mxu0
  %v953 = vpop.f32.mrb[0].mxu0
  %v954 = vadd.f32 0.0, %v953
  %v955 = vpop.f32.mrb[0].mxu0
  %956 = vmatprep.mubr.bf16.mxu0 %v769
  %957 = vmatmul.mubr.bf16.gmra.mrb[0].mxu0 %v768
  %v958 = vpop.f32.mrb[0].mxu0
  %v959 = vadd.f32 0.0, %v958
  %v960 = vpop.f32.mrb[0].mxu0
  %v961 = vpop.f32.mrb[0].mxu0
  %v962 = vadd.f32 0.0, %v961
  %v963 = vpop.f32.mrb[0].mxu0
  %964 = vmatprep.mubr.bf16.mxu0 %v771
  %965 = vmatmul.mubr.bf16.gmra.mrb[0].mxu0 %v770
  %v966 = vpop.f32.mrb[0].mxu0
  %v967 = vadd.f32 0.0, %v966
  %v968 = vpop.f32.mrb[0].mxu0
  %v969 = vpop.f32.mrb[0].mxu0
  %v970 = vadd.f32 0.0, %v969
  %v971 = vpop.f32.mrb[0].mxu0
  %972 = vmatprep.mubr.bf16.mxu0 %v773
  %973 = vmatmul.mubr.bf16.gmra.mrb[0].mxu0 %v772
  %v974 = vpop.f32.mrb[0].mxu0
  %v975 = vadd.f32 0.0, %v974
  %v976 = vpop.f32.mrb[0].mxu0
  %v977 = vpop.f32.mrb[0].mxu0
  %v978 = vadd.f32 0.0, %v977
  %v979 = vpop.f32.mrb[0].mxu0
  %980 = vmatprep.mubr.bf16.mxu0 %v775
  %981 = vmatmul.mubr.bf16.gmra.mrb[0].mxu0 %v774
  %v982 = vpop.f32.mrb[0].mxu0
  %v983 = vadd.f32 0.0, %v982
  %v984 = vpop.f32.mrb[0].mxu0
  %v985 = vpop.f32.mrb[0].mxu0
  %v986 = vadd.f32 0.0, %v985
  %v987 = vpop.f32.mrb[0].mxu0
  %988 = vmatprep.mubr.bf16.mxu0 %v777
  %989 = vmatmul.mubr.bf16.gmra.mrb[0].mxu0 %v776
  %v990 = vpop.f32.mrb[0].mxu0
  %v991 = vadd.f32 0.0, %v990
  %v992 = vpop.f32.mrb[0].mxu0
  %v993 = vpop.f32.mrb[0].mxu0
  %v994 = vadd.f32 0.0, %v993
  %v995 = vpop.f32.mrb[0].mxu0
  %996 = vmatprep.mubr.bf16.mxu0 %v779
  %997 = vmatmul.mubr.bf16.gmra.mrb[0].mxu0 %v778
  %v998 = vpop.f32.mrb[0].mxu0
  %v999 = vadd.f32 0.0, %v998
  %v1000 = vpop.f32.mrb[0].mxu0
  %v1001 = vpop.f32.mrb[0].mxu0
  %v1002 = vadd.f32 0.0, %v1001
  %v1003 = vpop.f32.mrb[0].mxu0
  %1004 = vdwg.mxu0
  %v1005 = vadd.f32 %v586, %v943
  %v1006 = vadd.f32 %v586, %v946
  %v1007 = vadd.f32 %v586, %v951
  %v1008 = vadd.f32 %v586, %v954
  %v1009 = vadd.f32 %v586, %v959
  %v1010 = vadd.f32 %v586, %v962
  %v1011 = vadd.f32 %v586, %v967
  %v1012 = vadd.f32 %v586, %v970
  %v1013 = vadd.f32 %v586, %v975
  %v1014 = vadd.f32 %v586, %v978
  %v1015 = vadd.f32 %v586, %v983
  %v1016 = vadd.f32 %v586, %v986
  %v1017 = vadd.f32 %v586, %v991
  %v1018 = vadd.f32 %v586, %v994
  %v1019 = vadd.f32 %v586, %v999
  %v1020 = vadd.f32 %v586, %v1002
  %v1021 = vld [vmem:[%s3 + $0x40] sm:$0xf]
  %v1022 = vld [vmem:[%s3 + $0x44] sm:$0xf]
  %v1023 = vld [vmem:[%s3 + $0x48] sm:$0xf]
  %v1024 = vld [vmem:[%s3 + $0x4c] sm:$0xf]
  %v1025 = vld [vmem:[%s3 + $0x50] sm:$0xf]
  %v1026 = vld [vmem:[%s3 + $0x54] sm:$0xf]
  %v1027 = vld [vmem:[%s3 + $0x58] sm:$0xf]
  %v1028 = vld [vmem:[%s3 + $0x5c] sm:$0xf]
  %v1029 = vld [vmem:[%s3 + $0x60] sm:$0xf]
  %v1030 = vld [vmem:[%s3 + $0x64] sm:$0xf]
  %v1031 = vld [vmem:[%s3 + $0x68] sm:$0xf]
  %v1032 = vld [vmem:[%s3 + $0x6c] sm:$0xf]
  %v1033 = vld [vmem:[%s3 + $0x70] sm:$0xf]
  %v1034 = vld [vmem:[%s3 + $0x74] sm:$0xf]
  %v1035 = vld [vmem:[%s3 + $0x78] sm:$0xf]
  %v1036 = vld [vmem:[%s3 + $0x7c] sm:$0xf]
  %v1053 = vunpack.c.l.b16 %v1021
  %v1054 = vunpack.c.l.b16 %v1022
  %v1055 = vunpack.c.l.b16 %v1023
  %v1056 = vunpack.c.l.b16 %v1024
  %v1057 = vunpack.c.l.b16 %v1025
  %v1058 = vunpack.c.l.b16 %v1026
  %v1059 = vunpack.c.l.b16 %v1027
  %v1060 = vunpack.c.l.b16 %v1028
  %v1061 = vunpack.c.l.b16 %v1029
  %v1062 = vunpack.c.l.b16 %v1030
  %v1063 = vunpack.c.l.b16 %v1031
  %v1064 = vunpack.c.l.b16 %v1032
  %v1065 = vunpack.c.l.b16 %v1033
  %v1066 = vunpack.c.l.b16 %v1034
  %v1067 = vunpack.c.l.b16 %v1035
  %v1068 = vunpack.c.l.b16 %v1036
  %v1069 = vpack.c.b16 %v1054, %v1053
  %v1070 = vpack.c.b16 %v1056, %v1055
  %v1071 = vpack.c.b16 %v1058, %v1057
  %v1072 = vpack.c.b16 %v1060, %v1059
  %v1073 = vpack.c.b16 %v1062, %v1061
  %v1074 = vpack.c.b16 %v1064, %v1063
  %v1075 = vpack.c.b16 %v1066, %v1065
  %v1076 = vpack.c.b16 %v1068, %v1067
  %1085 = vmatprep.subr.bf16.mxu0 %v564
  %1086 = vmatpush1.bf16.msra.mxu0 %v563
  %1087 = vmatprep.subr.bf16.mxu0 %v566
  %1088 = vmatpush1.bf16.msra.mxu0 %v565
  %1089 = vmatprep.subr.bf16.mxu0 %v568
  %1090 = vmatpush1.bf16.msra.mxu0 %v567
  %1091 = vmatprep.subr.bf16.mxu0 %v570
  %1092 = vmatpush1.bf16.msra.mxu0 %v569
  %1093 = vmatprep.subr.bf16.mxu0 %v572
  %1094 = vmatpush1.bf16.msra.mxu0 %v571
  %1095 = vmatprep.subr.bf16.mxu0 %v574
  %1096 = vmatpush1.bf16.msra.mxu0 %v573
  %1097 = vmatprep.subr.bf16.mxu0 %v576
  %1098 = vmatpush1.bf16.msra.mxu0 %v575
  %1099 = vmatprep.subr.bf16.mxu0 %v578
  %1100 = vmatpush1.bf16.msra.mxu0 %v577
  %1101 = vmatprep.subr.bf16.mxu0 0
  %1102 = vmatpush1.bf16.msra.mxu0 0
  %1103 = vmatprep.subr.bf16.mxu0 0
  %1104 = vmatpush1.bf16.msra.mxu0 0
  %1105 = vmatprep.subr.bf16.mxu0 0
  %1106 = vmatpush1.bf16.msra.mxu0 0
  %1107 = vmatprep.subr.bf16.mxu0 0
  %1108 = vmatpush1.bf16.msra.mxu0 0
  %1109 = vmatprep.subr.bf16.mxu0 0
  %1110 = vmatpush1.bf16.msra.mxu0 0
  %1111 = vmatprep.subr.bf16.mxu0 0
  %1112 = vmatpush1.bf16.msra.mxu0 0
  %1113 = vmatprep.subr.bf16.mxu0 0
  %1114 = vmatpush1.bf16.msra.mxu0 0
  %1115 = vmatprep.subr.bf16.mxu0 0
  %1116 = vmatpush1.bf16.msra.mxu0 0
  %1117 = vmatprep.mubr.bf16.mxu0 0
  %1118 = vmatmul.mubr.bf16.gmra.mrb[0].mxu0 %v1069
  %v1119 = vpop.f32.mrb[0].mxu0
  %v1120 = vadd.f32 0.0, %v1119
  %v1121 = vpop.f32.mrb[0].mxu0
  %v1122 = vadd.f32 0.0, %v1121
  %v1123 = vpop.f32.mrb[0].mxu0
  %v1124 = vadd.f32 0.0, %v1123
  %v1125 = vpop.f32.mrb[0].mxu0
  %v1126 = vadd.f32 0.0, %v1125
  %1127 = vmatprep.mubr.bf16.mxu0 0
  %1128 = vmatmul.mubr.bf16.gmra.mrb[0].mxu0 %v1070
  %v1129 = vpop.f32.mrb[0].mxu0
  %v1130 = vadd.f32 0.0, %v1129
  %v1131 = vpop.f32.mrb[0].mxu0
  %v1132 = vadd.f32 0.0, %v1131
  %v1133 = vpop.f32.mrb[0].mxu0
  %v1134 = vadd.f32 0.0, %v1133
  %v1135 = vpop.f32.mrb[0].mxu0
  %v1136 = vadd.f32 0.0, %v1135
  %1137 = vmatprep.mubr.bf16.mxu0 0
  %1138 = vmatmul.mubr.bf16.gmra.mrb[0].mxu0 %v1071
  %v1139 = vpop.f32.mrb[0].mxu0
  %v1140 = vadd.f32 0.0, %v1139
  %v1141 = vpop.f32.mrb[0].mxu0
  %v1142 = vadd.f32 0.0, %v1141
  %v1143 = vpop.f32.mrb[0].mxu0
  %v1144 = vadd.f32 0.0, %v1143
  %v1145 = vpop.f32.mrb[0].mxu0
  %v1146 = vadd.f32 0.0, %v1145
  %1147 = vmatprep.mubr.bf16.mxu0 0
  %1148 = vmatmul.mubr.bf16.gmra.mrb[0].mxu0 %v1072
  %v1149 = vpop.f32.mrb[0].mxu0
  %v1150 = vadd.f32 0.0, %v1149
  %v1151 = vpop.f32.mrb[0].mxu0
  %v1152 = vadd.f32 0.0, %v1151
  %v1153 = vpop.f32.mrb[0].mxu0
  %v1154 = vadd.f32 0.0, %v1153
  %v1155 = vpop.f32.mrb[0].mxu0
  %v1156 = vadd.f32 0.0, %v1155
  %1157 = vmatprep.mubr.bf16.mxu0 0
  %1158 = vmatmul.mubr.bf16.gmra.mrb[0].mxu0 %v1073
  %v1159 = vpop.f32.mrb[0].mxu0
  %v1160 = vadd.f32 0.0, %v1159
  %v1161 = vpop.f32.mrb[0].mxu0
  %v1162 = vadd.f32 0.0, %v1161
  %v1163 = vpop.f32.mrb[0].mxu0
  %v1164 = vadd.f32 0.0, %v1163
  %v1165 = vpop.f32.mrb[0].mxu0
  %v1166 = vadd.f32 0.0, %v1165
  %1167 = vmatprep.mubr.bf16.mxu0 0
  %1168 = vmatmul.mubr.bf16.gmra.mrb[0].mxu0 %v1074
  %v1169 = vpop.f32.mrb[0].mxu0
  %v1170 = vadd.f32 0.0, %v1169
  %v1171 = vpop.f32.mrb[0].mxu0
  %v1172 = vadd.f32 0.0, %v1171
  %v1173 = vpop.f32.mrb[0].mxu0
  %v1174 = vadd.f32 0.0, %v1173
  %v1175 = vpop.f32.mrb[0].mxu0
  %v1176 = vadd.f32 0.0, %v1175
  %1177 = vmatprep.mubr.bf16.mxu0 0
  %1178 = vmatmul.mubr.bf16.gmra.mrb[0].mxu0 %v1075
  %v1179 = vpop.f32.mrb[0].mxu0
  %v1180 = vadd.f32 0.0, %v1179
  %v1181 = vpop.f32.mrb[0].mxu0
  %v1182 = vadd.f32 0.0, %v1181
  %v1183 = vpop.f32.mrb[0].mxu0
  %v1184 = vadd.f32 0.0, %v1183
  %v1185 = vpop.f32.mrb[0].mxu0
  %v1186 = vadd.f32 0.0, %v1185
  %1187 = vmatprep.mubr.bf16.mxu0 0
  %1188 = vmatmul.mubr.bf16.gmra.mrb[0].mxu0 %v1076
  %v1189 = vpop.f32.mrb[0].mxu0
  %v1190 = vadd.f32 0.0, %v1189
  %v1191 = vpop.f32.mrb[0].mxu0
  %v1192 = vadd.f32 0.0, %v1191
  %v1193 = vpop.f32.mrb[0].mxu0
  %v1194 = vadd.f32 0.0, %v1193
  %v1195 = vpop.f32.mrb[0].mxu0
  %v1196 = vadd.f32 0.0, %v1195
  %1197 = vdwg.mxu0
  %v1198 = vpack.c.bf16 %v1124, %v1120
  %v1199 = vpack.c.bf16 %v1126, %v1122
  %v1200 = vpack.c.bf16 %v1134, %v1130
  %v1201 = vpack.c.bf16 %v1136, %v1132
  %v1202 = vpack.c.bf16 %v1144, %v1140
  %v1203 = vpack.c.bf16 %v1146, %v1142
  %v1204 = vpack.c.bf16 %v1154, %v1150
  %v1205 = vpack.c.bf16 %v1156, %v1152
  %v1206 = vpack.c.bf16 %v1164, %v1160
  %v1207 = vpack.c.bf16 %v1166, %v1162
  %v1208 = vpack.c.bf16 %v1174, %v1170
  %v1209 = vpack.c.bf16 %v1176, %v1172
  %v1210 = vpack.c.bf16 %v1184, %v1180
  %v1211 = vpack.c.bf16 %v1186, %v1182
  %v1212 = vpack.c.bf16 %v1194, %v1190
  %v1213 = vpack.c.bf16 %v1196, %v1192
  %v1214 = vld [vmem:[%s4 + $0x80] sm:$0xf]
  %v1215 = vld [vmem:[%s4 + $0x84] sm:$0xf]
  %v1216 = vld [vmem:[%s4 + $0x88] sm:$0xf]
  %v1217 = vld [vmem:[%s4 + $0x8c] sm:$0xf]
  %v1218 = vld [vmem:[%s4 + $0x90] sm:$0xf]
  %v1219 = vld [vmem:[%s4 + $0x94] sm:$0xf]
  %v1220 = vld [vmem:[%s4 + $0x98] sm:$0xf]
  %v1221 = vld [vmem:[%s4 + $0x9c] sm:$0xf]
  %v1222 = vld [vmem:[%s4 + $0xa0] sm:$0xf]
  %v1223 = vld [vmem:[%s4 + $0xa4] sm:$0xf]
  %v1224 = vld [vmem:[%s4 + $0xa8] sm:$0xf]
  %v1225 = vld [vmem:[%s4 + $0xac] sm:$0xf]
  %v1226 = vld [vmem:[%s4 + $0xb0] sm:$0xf]
  %v1227 = vld [vmem:[%s4 + $0xb4] sm:$0xf]
  %v1228 = vld [vmem:[%s4 + $0xb8] sm:$0xf]
  %v1229 = vld [vmem:[%s4 + $0xbc] sm:$0xf]
  %v1230 = vld [vmem:[%s4 + $0xc0] sm:$0xf]
  %v1231 = vld [vmem:[%s4 + $0xc4] sm:$0xf]
  %v1232 = vld [vmem:[%s4 + $0xc8] sm:$0xf]
  %v1233 = vld [vmem:[%s4 + $0xcc] sm:$0xf]
  %v1234 = vld [vmem:[%s4 + $0xd0] sm:$0xf]
  %v1235 = vld [vmem:[%s4 + $0xd4] sm:$0xf]
  %v1236 = vld [vmem:[%s4 + $0xd8] sm:$0xf]
  %v1237 = vld [vmem:[%s4 + $0xdc] sm:$0xf]
  %v1238 = vld [vmem:[%s4 + $0xe0] sm:$0xf]
  %v1239 = vld [vmem:[%s4 + $0xe4] sm:$0xf]
  %v1240 = vld [vmem:[%s4 + $0xe8] sm:$0xf]
  %v1241 = vld [vmem:[%s4 + $0xec] sm:$0xf]
  %v1242 = vld [vmem:[%s4 + $0xf0] sm:$0xf]
  %v1243 = vld [vmem:[%s4 + $0xf4] sm:$0xf]
  %v1244 = vld [vmem:[%s4 + $0xf8] sm:$0xf]
  %v1245 = vld [vmem:[%s4 + $0xfc] sm:$0xf]
  %v1278 = vunpack.c.l.b16 %v1214
  %v1279 = vunpack.c.l.b16 %v1215
  %v1280 = vunpack.c.l.b16 %v1216
  %v1281 = vunpack.c.l.b16 %v1217
  %v1282 = vunpack.c.l.b16 %v1218
  %v1283 = vunpack.c.l.b16 %v1219
  %v1284 = vunpack.c.l.b16 %v1220
  %v1285 = vunpack.c.l.b16 %v1221
  %v1286 = vunpack.c.l.b16 %v1222
  %v1287 = vunpack.c.l.b16 %v1223
  %v1288 = vunpack.c.l.b16 %v1224
  %v1289 = vunpack.c.l.b16 %v1225
  %v1290 = vunpack.c.l.b16 %v1226
  %v1291 = vunpack.c.l.b16 %v1227
  %v1292 = vunpack.c.l.b16 %v1228
  %v1293 = vunpack.c.l.b16 %v1229
  %v1294 = vunpack.c.l.b16 %v1230
  %v1295 = vunpack.c.l.b16 %v1231
  %v1296 = vunpack.c.l.b16 %v1232
  %v1297 = vunpack.c.l.b16 %v1233
  %v1298 = vunpack.c.l.b16 %v1234
  %v1299 = vunpack.c.l.b16 %v1235
  %v1300 = vunpack.c.l.b16 %v1236
  %v1301 = vunpack.c.l.b16 %v1237
  %v1302 = vunpack.c.l.b16 %v1238
  %v1303 = vunpack.c.l.b16 %v1239
  %v1304 = vunpack.c.l.b16 %v1240
  %v1305 = vunpack.c.l.b16 %v1241
  %v1306 = vunpack.c.l.b16 %v1242
  %v1307 = vunpack.c.l.b16 %v1243
  %v1308 = vunpack.c.l.b16 %v1244
  %v1309 = vunpack.c.l.b16 %v1245
  %v1310 = vpack.c.b16 %v1279, %v1278
  %v1311 = vpack.c.b16 %v1281, %v1280
  %v1312 = vpack.c.b16 %v1283, %v1282
  %v1313 = vpack.c.b16 %v1285, %v1284
  %v1314 = vpack.c.b16 %v1287, %v1286
  %v1315 = vpack.c.b16 %v1289, %v1288
  %v1316 = vpack.c.b16 %v1291, %v1290
  %v1317 = vpack.c.b16 %v1293, %v1292
  %v1318 = vpack.c.b16 %v1295, %v1294
  %v1319 = vpack.c.b16 %v1297, %v1296
  %v1320 = vpack.c.b16 %v1299, %v1298
  %v1321 = vpack.c.b16 %v1301, %v1300
  %v1322 = vpack.c.b16 %v1303, %v1302
  %v1323 = vpack.c.b16 %v1305, %v1304
  %v1324 = vpack.c.b16 %v1307, %v1306
  %v1325 = vpack.c.b16 %v1309, %v1308
  %1342 = vmatprep.subr.bf16.mxu0 0
  %1343 = vmatpush1.bf16.msra.mxu0 %v1310
  %1344 = vmatprep.subr.bf16.mxu0 0
  %1345 = vmatpush1.bf16.msra.mxu0 %v1311
  %1346 = vmatprep.subr.bf16.mxu0 0
  %1347 = vmatpush1.bf16.msra.mxu0 %v1312
  %1348 = vmatprep.subr.bf16.mxu0 0
  %1349 = vmatpush1.bf16.msra.mxu0 %v1313
  %1350 = vmatprep.subr.bf16.mxu0 0
  %1351 = vmatpush1.bf16.msra.mxu0 %v1314
  %1352 = vmatprep.subr.bf16.mxu0 0
  %1353 = vmatpush1.bf16.msra.mxu0 %v1315
  %1354 = vmatprep.subr.bf16.mxu0 0
  %1355 = vmatpush1.bf16.msra.mxu0 %v1316
  %1356 = vmatprep.subr.bf16.mxu0 0
  %1357 = vmatpush1.bf16.msra.mxu0 %v1317
  %1358 = vmatprep.subr.bf16.mxu0 0
  %1359 = vmatpush1.bf16.msra.mxu0 %v1318
  %1360 = vmatprep.subr.bf16.mxu0 0
  %1361 = vmatpush1.bf16.msra.mxu0 %v1319
  %1362 = vmatprep.subr.bf16.mxu0 0
  %1363 = vmatpush1.bf16.msra.mxu0 %v1320
  %1364 = vmatprep.subr.bf16.mxu0 0
  %1365 = vmatpush1.bf16.msra.mxu0 %v1321
  %1366 = vmatprep.subr.bf16.mxu0 0
  %1367 = vmatpush1.bf16.msra.mxu0 %v1322
  %1368 = vmatprep.subr.bf16.mxu0 0
  %1369 = vmatpush1.bf16.msra.mxu0 %v1323
  %1370 = vmatprep.subr.bf16.mxu0 0
  %1371 = vmatpush1.bf16.msra.mxu0 %v1324
  %1372 = vmatprep.subr.bf16.mxu0 0
  %1373 = vmatpush1.bf16.msra.mxu0 %v1325
  %1374 = vmatprep.mubr.bf16.mxu0 %v1199
  %1375 = vmatmul.mubr.bf16.gmra.mrb[0].mxu0 %v1198
  %v1376 = vpop.f32.mrb[0].mxu0
  %v1377 = vadd.f32 0.0, %v1376
  %v1378 = vpop.f32.mrb[0].mxu0
  %v1379 = vpop.f32.mrb[0].mxu0
  %v1380 = vadd.f32 0.0, %v1379
  %v1381 = vpop.f32.mrb[0].mxu0
  %1382 = vmatprep.mubr.bf16.mxu0 %v1201
  %1383 = vmatmul.mubr.bf16.gmra.mrb[0].mxu0 %v1200
  %v1384 = vpop.f32.mrb[0].mxu0
  %v1385 = vadd.f32 0.0, %v1384
  %v1386 = vpop.f32.mrb[0].mxu0
  %v1387 = vpop.f32.mrb[0].mxu0
  %v1388 = vadd.f32 0.0, %v1387
  %v1389 = vpop.f32.mrb[0].mxu0
  %1390 = vmatprep.mubr.bf16.mxu0 %v1203
  %1391 = vmatmul.mubr.bf16.gmra.mrb[0].mxu0 %v1202
  %v1392 = vpop.f32.mrb[0].mxu0
  %v1393 = vadd.f32 0.0, %v1392
  %v1394 = vpop.f32.mrb[0].mxu0
  %v1395 = vpop.f32.mrb[0].mxu0
  %v1396 = vadd.f32 0.0, %v1395
  %v1397 = vpop.f32.mrb[0].mxu0
  %1398 = vmatprep.mubr.bf16.mxu0 %v1205
  %1399 = vmatmul.mubr.bf16.gmra.mrb[0].mxu0 %v1204
  %v1400 = vpop.f32.mrb[0].mxu0
  %v1401 = vadd.f32 0.0, %v1400
  %v1402 = vpop.f32.mrb[0].mxu0
  %v1403 = vpop.f32.mrb[0].mxu0
  %v1404 = vadd.f32 0.0, %v1403
  %v1405 = vpop.f32.mrb[0].mxu0
  %1406 = vmatprep.mubr.bf16.mxu0 %v1207
  %1407 = vmatmul.mubr.bf16.gmra.mrb[0].mxu0 %v1206
  %v1408 = vpop.f32.mrb[0].mxu0
  %v1409 = vadd.f32 0.0, %v1408
  %v1410 = vpop.f32.mrb[0].mxu0
  %v1411 = vpop.f32.mrb[0].mxu0
  %v1412 = vadd.f32 0.0, %v1411
  %v1413 = vpop.f32.mrb[0].mxu0
  %1414 = vmatprep.mubr.bf16.mxu0 %v1209
  %1415 = vmatmul.mubr.bf16.gmra.mrb[0].mxu0 %v1208
  %v1416 = vpop.f32.mrb[0].mxu0
  %v1417 = vadd.f32 0.0, %v1416
  %v1418 = vpop.f32.mrb[0].mxu0
  %v1419 = vpop.f32.mrb[0].mxu0
  %v1420 = vadd.f32 0.0, %v1419
  %v1421 = vpop.f32.mrb[0].mxu0
  %1422 = vmatprep.mubr.bf16.mxu0 %v1211
  %1423 = vmatmul.mubr.bf16.gmra.mrb[0].mxu0 %v1210
  %v1424 = vpop.f32.mrb[0].mxu0
  %v1425 = vadd.f32 0.0, %v1424
  %v1426 = vpop.f32.mrb[0].mxu0
  %v1427 = vpop.f32.mrb[0].mxu0
  %v1428 = vadd.f32 0.0, %v1427
  %v1429 = vpop.f32.mrb[0].mxu0
  %1430 = vmatprep.mubr.bf16.mxu0 %v1213
  %1431 = vmatmul.mubr.bf16.gmra.mrb[0].mxu0 %v1212
  %v1432 = vpop.f32.mrb[0].mxu0
  %v1433 = vadd.f32 0.0, %v1432
  %v1434 = vpop.f32.mrb[0].mxu0
  %v1435 = vpop.f32.mrb[0].mxu0
  %v1436 = vadd.f32 0.0, %v1435
  %v1437 = vpop.f32.mrb[0].mxu0
  %1438 = vdwg.mxu0
  %v1439 = vadd.f32 %v1005, %v1377
  %v1440 = vadd.f32 %v1006, %v1380
  %v1441 = vadd.f32 %v1007, %v1385
  %v1442 = vadd.f32 %v1008, %v1388
  %v1443 = vadd.f32 %v1009, %v1393
  %v1444 = vadd.f32 %v1010, %v1396
  %v1445 = vadd.f32 %v1011, %v1401
  %v1446 = vadd.f32 %v1012, %v1404
  %v1447 = vadd.f32 %v1013, %v1409
  %v1448 = vadd.f32 %v1014, %v1412
  %v1449 = vadd.f32 %v1015, %v1417
  %v1450 = vadd.f32 %v1016, %v1420
  %v1451 = vadd.f32 %v1017, %v1425
  %v1452 = vadd.f32 %v1018, %v1428
  %v1453 = vadd.f32 %v1019, %v1433
  %v1454 = vadd.f32 %v1020, %v1436
  %v1455 = vld [vmem:[%s3 + $0x80] sm:$0xf]
  %v1456 = vld [vmem:[%s3 + $0x84] sm:$0xf]
  %v1457 = vld [vmem:[%s3 + $0x88] sm:$0xf]
  %v1458 = vld [vmem:[%s3 + $0x8c] sm:$0xf]
  %v1459 = vld [vmem:[%s3 + $0x90] sm:$0xf]
  %v1460 = vld [vmem:[%s3 + $0x94] sm:$0xf]
  %v1461 = vld [vmem:[%s3 + $0x98] sm:$0xf]
  %v1462 = vld [vmem:[%s3 + $0x9c] sm:$0xf]
  %v1463 = vld [vmem:[%s3 + $0xa0] sm:$0xf]
  %v1464 = vld [vmem:[%s3 + $0xa4] sm:$0xf]
  %v1465 = vld [vmem:[%s3 + $0xa8] sm:$0xf]
  %v1466 = vld [vmem:[%s3 + $0xac] sm:$0xf]
  %v1467 = vld [vmem:[%s3 + $0xb0] sm:$0xf]
  %v1468 = vld [vmem:[%s3 + $0xb4] sm:$0xf]
  %v1469 = vld [vmem:[%s3 + $0xb8] sm:$0xf]
  %v1470 = vld [vmem:[%s3 + $0xbc] sm:$0xf]
  %v1487 = vunpack.c.l.b16 %v1455
  %v1488 = vunpack.c.l.b16 %v1456
  %v1489 = vunpack.c.l.b16 %v1457
  %v1490 = vunpack.c.l.b16 %v1458
  %v1491 = vunpack.c.l.b16 %v1459
  %v1492 = vunpack.c.l.b16 %v1460
  %v1493 = vunpack.c.l.b16 %v1461
  %v1494 = vunpack.c.l.b16 %v1462
  %v1495 = vunpack.c.l.b16 %v1463
  %v1496 = vunpack.c.l.b16 %v1464
  %v1497 = vunpack.c.l.b16 %v1465
  %v1498 = vunpack.c.l.b16 %v1466
  %v1499 = vunpack.c.l.b16 %v1467
  %v1500 = vunpack.c.l.b16 %v1468
  %v1501 = vunpack.c.l.b16 %v1469
  %v1502 = vunpack.c.l.b16 %v1470
  %v1503 = vpack.c.b16 %v1488, %v1487
  %v1504 = vpack.c.b16 %v1490, %v1489
  %v1505 = vpack.c.b16 %v1492, %v1491
  %v1506 = vpack.c.b16 %v1494, %v1493
  %v1507 = vpack.c.b16 %v1496, %v1495
  %v1508 = vpack.c.b16 %v1498, %v1497
  %v1509 = vpack.c.b16 %v1500, %v1499
  %v1510 = vpack.c.b16 %v1502, %v1501
  %1519 = vmatprep.subr.bf16.mxu0 %v564
  %1520 = vmatpush1.bf16.msra.mxu0 %v563
  %1521 = vmatprep.subr.bf16.mxu0 %v566
  %1522 = vmatpush1.bf16.msra.mxu0 %v565
  %1523 = vmatprep.subr.bf16.mxu0 %v568
  %1524 = vmatpush1.bf16.msra.mxu0 %v567
  %1525 = vmatprep.subr.bf16.mxu0 %v570
  %1526 = vmatpush1.bf16.msra.mxu0 %v569
  %1527 = vmatprep.subr.bf16.mxu0 %v572
  %1528 = vmatpush1.bf16.msra.mxu0 %v571
  %1529 = vmatprep.subr.bf16.mxu0 %v574
  %1530 = vmatpush1.bf16.msra.mxu0 %v573
  %1531 = vmatprep.subr.bf16.mxu0 %v576
  %1532 = vmatpush1.bf16.msra.mxu0 %v575
  %1533 = vmatprep.subr.bf16.mxu0 %v578
  %1534 = vmatpush1.bf16.msra.mxu0 %v577
  %1535 = vmatprep.subr.bf16.mxu0 0
  %1536 = vmatpush1.bf16.msra.mxu0 0
  %1537 = vmatprep.subr.bf16.mxu0 0
  %1538 = vmatpush1.bf16.msra.mxu0 0
  %1539 = vmatprep.subr.bf16.mxu0 0
  %1540 = vmatpush1.bf16.msra.mxu0 0
  %1541 = vmatprep.subr.bf16.mxu0 0
  %1542 = vmatpush1.bf16.msra.mxu0 0
  %1543 = vmatprep.subr.bf16.mxu0 0
  %1544 = vmatpush1.bf16.msra.mxu0 0
  %1545 = vmatprep.subr.bf16.mxu0 0
  %1546 = vmatpush1.bf16.msra.mxu0 0
  %1547 = vmatprep.subr.bf16.mxu0 0
  %1548 = vmatpush1.bf16.msra.mxu0 0
  %1549 = vmatprep.subr.bf16.mxu0 0
  %1550 = vmatpush1.bf16.msra.mxu0 0
  %1551 = vmatprep.mubr.bf16.mxu0 0
  %1552 = vmatmul.mubr.bf16.gmra.mrb[0].mxu0 %v1503
  %v1553 = vpop.f32.mrb[0].mxu0
  %v1554 = vadd.f32 0.0, %v1553
  %v1555 = vpop.f32.mrb[0].mxu0
  %v1556 = vadd.f32 0.0, %v1555
  %v1557 = vpop.f32.mrb[0].mxu0
  %v1558 = vadd.f32 0.0, %v1557
  %v1559 = vpop.f32.mrb[0].mxu0
  %v1560 = vadd.f32 0.0, %v1559
  %1561 = vmatprep.mubr.bf16.mxu0 0
  %1562 = vmatmul.mubr.bf16.gmra.mrb[0].mxu0 %v1504
  %v1563 = vpop.f32.mrb[0].mxu0
  %v1564 = vadd.f32 0.0, %v1563
  %v1565 = vpop.f32.mrb[0].mxu0
  %v1566 = vadd.f32 0.0, %v1565
  %v1567 = vpop.f32.mrb[0].mxu0
  %v1568 = vadd.f32 0.0, %v1567
  %v1569 = vpop.f32.mrb[0].mxu0
  %v1570 = vadd.f32 0.0, %v1569
  %1571 = vmatprep.mubr.bf16.mxu0 0
  %1572 = vmatmul.mubr.bf16.gmra.mrb[0].mxu0 %v1505
  %v1573 = vpop.f32.mrb[0].mxu0
  %v1574 = vadd.f32 0.0, %v1573
  %v1575 = vpop.f32.mrb[0].mxu0
  %v1576 = vadd.f32 0.0, %v1575
  %v1577 = vpop.f32.mrb[0].mxu0
  %v1578 = vadd.f32 0.0, %v1577
  %v1579 = vpop.f32.mrb[0].mxu0
  %v1580 = vadd.f32 0.0, %v1579
  %1581 = vmatprep.mubr.bf16.mxu0 0
  %1582 = vmatmul.mubr.bf16.gmra.mrb[0].mxu0 %v1506
  %v1583 = vpop.f32.mrb[0].mxu0
  %v1584 = vadd.f32 0.0, %v1583
  %v1585 = vpop.f32.mrb[0].mxu0
  %v1586 = vadd.f32 0.0, %v1585
  %v1587 = vpop.f32.mrb[0].mxu0
  %v1588 = vadd.f32 0.0, %v1587
  %v1589 = vpop.f32.mrb[0].mxu0
  %v1590 = vadd.f32 0.0, %v1589
  %1591 = vmatprep.mubr.bf16.mxu0 0
  %1592 = vmatmul.mubr.bf16.gmra.mrb[0].mxu0 %v1507
  %v1593 = vpop.f32.mrb[0].mxu0
  %v1594 = vadd.f32 0.0, %v1593
  %v1595 = vpop.f32.mrb[0].mxu0
  %v1596 = vadd.f32 0.0, %v1595
  %v1597 = vpop.f32.mrb[0].mxu0
  %v1598 = vadd.f32 0.0, %v1597
  %v1599 = vpop.f32.mrb[0].mxu0
  %v1600 = vadd.f32 0.0, %v1599
  %1601 = vmatprep.mubr.bf16.mxu0 0
  %1602 = vmatmul.mubr.bf16.gmra.mrb[0].mxu0 %v1508
  %v1603 = vpop.f32.mrb[0].mxu0
  %v1604 = vadd.f32 0.0, %v1603
  %v1605 = vpop.f32.mrb[0].mxu0
  %v1606 = vadd.f32 0.0, %v1605
  %v1607 = vpop.f32.mrb[0].mxu0
  %v1608 = vadd.f32 0.0, %v1607
  %v1609 = vpop.f32.mrb[0].mxu0
  %v1610 = vadd.f32 0.0, %v1609
  %1611 = vmatprep.mubr.bf16.mxu0 0
  %1612 = vmatmul.mubr.bf16.gmra.mrb[0].mxu0 %v1509
  %v1613 = vpop.f32.mrb[0].mxu0
  %v1614 = vadd.f32 0.0, %v1613
  %v1615 = vpop.f32.mrb[0].mxu0
  %v1616 = vadd.f32 0.0, %v1615
  %v1617 = vpop.f32.mrb[0].mxu0
  %v1618 = vadd.f32 0.0, %v1617
  %v1619 = vpop.f32.mrb[0].mxu0
  %v1620 = vadd.f32 0.0, %v1619
  %1621 = vmatprep.mubr.bf16.mxu0 0
  %1622 = vmatmul.mubr.bf16.gmra.mrb[0].mxu0 %v1510
  %v1623 = vpop.f32.mrb[0].mxu0
  %v1624 = vadd.f32 0.0, %v1623
  %v1625 = vpop.f32.mrb[0].mxu0
  %v1626 = vadd.f32 0.0, %v1625
  %v1627 = vpop.f32.mrb[0].mxu0
  %v1628 = vadd.f32 0.0, %v1627
  %v1629 = vpop.f32.mrb[0].mxu0
  %v1630 = vadd.f32 0.0, %v1629
  %1631 = vdwg.mxu0
  %v1632 = vpack.c.bf16 %v1558, %v1554
  %v1633 = vpack.c.bf16 %v1560, %v1556
  %v1634 = vpack.c.bf16 %v1568, %v1564
  %v1635 = vpack.c.bf16 %v1570, %v1566
  %v1636 = vpack.c.bf16 %v1578, %v1574
  %v1637 = vpack.c.bf16 %v1580, %v1576
  %v1638 = vpack.c.bf16 %v1588, %v1584
  %v1639 = vpack.c.bf16 %v1590, %v1586
  %v1640 = vpack.c.bf16 %v1598, %v1594
  %v1641 = vpack.c.bf16 %v1600, %v1596
  %v1642 = vpack.c.bf16 %v1608, %v1604
  %v1643 = vpack.c.bf16 %v1610, %v1606
  %v1644 = vpack.c.bf16 %v1618, %v1614
  %v1645 = vpack.c.bf16 %v1620, %v1616
  %v1646 = vpack.c.bf16 %v1628, %v1624
  %v1647 = vpack.c.bf16 %v1630, %v1626
  %v1648 = vld [vmem:[%s4 + $0x100] sm:$0xf]
  %v1649 = vld [vmem:[%s4 + $0x104] sm:$0xf]
  %v1650 = vld [vmem:[%s4 + $0x108] sm:$0xf]
  %v1651 = vld [vmem:[%s4 + $0x10c] sm:$0xf]
  %v1652 = vld [vmem:[%s4 + $0x110] sm:$0xf]
  %v1653 = vld [vmem:[%s4 + $0x114] sm:$0xf]
  %v1654 = vld [vmem:[%s4 + $0x118] sm:$0xf]
  %v1655 = vld [vmem:[%s4 + $0x11c] sm:$0xf]
  %v1656 = vld [vmem:[%s4 + $0x120] sm:$0xf]
  %v1657 = vld [vmem:[%s4 + $0x124] sm:$0xf]
  %v1658 = vld [vmem:[%s4 + $0x128] sm:$0xf]
  %v1659 = vld [vmem:[%s4 + $0x12c] sm:$0xf]
  %v1660 = vld [vmem:[%s4 + $0x130] sm:$0xf]
  %v1661 = vld [vmem:[%s4 + $0x134] sm:$0xf]
  %v1662 = vld [vmem:[%s4 + $0x138] sm:$0xf]
  %v1663 = vld [vmem:[%s4 + $0x13c] sm:$0xf]
  %v1664 = vld [vmem:[%s4 + $0x140] sm:$0xf]
  %v1665 = vld [vmem:[%s4 + $0x144] sm:$0xf]
  %v1666 = vld [vmem:[%s4 + $0x148] sm:$0xf]
  %v1667 = vld [vmem:[%s4 + $0x14c] sm:$0xf]
  %v1668 = vld [vmem:[%s4 + $0x150] sm:$0xf]
  %v1669 = vld [vmem:[%s4 + $0x154] sm:$0xf]
  %v1670 = vld [vmem:[%s4 + $0x158] sm:$0xf]
  %v1671 = vld [vmem:[%s4 + $0x15c] sm:$0xf]
  %v1672 = vld [vmem:[%s4 + $0x160] sm:$0xf]
  %v1673 = vld [vmem:[%s4 + $0x164] sm:$0xf]
  %v1674 = vld [vmem:[%s4 + $0x168] sm:$0xf]
  %v1675 = vld [vmem:[%s4 + $0x16c] sm:$0xf]
  %v1676 = vld [vmem:[%s4 + $0x170] sm:$0xf]
  %v1677 = vld [vmem:[%s4 + $0x174] sm:$0xf]
  %v1678 = vld [vmem:[%s4 + $0x178] sm:$0xf]
  %v1679 = vld [vmem:[%s4 + $0x17c] sm:$0xf]
  %v1712 = vunpack.c.l.b16 %v1648
  %v1713 = vunpack.c.l.b16 %v1649
  %v1714 = vunpack.c.l.b16 %v1650
  %v1715 = vunpack.c.l.b16 %v1651
  %v1716 = vunpack.c.l.b16 %v1652
  %v1717 = vunpack.c.l.b16 %v1653
  %v1718 = vunpack.c.l.b16 %v1654
  %v1719 = vunpack.c.l.b16 %v1655
  %v1720 = vunpack.c.l.b16 %v1656
  %v1721 = vunpack.c.l.b16 %v1657
  %v1722 = vunpack.c.l.b16 %v1658
  %v1723 = vunpack.c.l.b16 %v1659
  %v1724 = vunpack.c.l.b16 %v1660
  %v1725 = vunpack.c.l.b16 %v1661
  %v1726 = vunpack.c.l.b16 %v1662
  %v1727 = vunpack.c.l.b16 %v1663
  %v1728 = vunpack.c.l.b16 %v1664
  %v1729 = vunpack.c.l.b16 %v1665
  %v1730 = vunpack.c.l.b16 %v1666
  %v1731 = vunpack.c.l.b16 %v1667
  %v1732 = vunpack.c.l.b16 %v1668
  %v1733 = vunpack.c.l.b16 %v1669
  %v1734 = vunpack.c.l.b16 %v1670
  %v1735 = vunpack.c.l.b16 %v1671
  %v1736 = vunpack.c.l.b16 %v1672
  %v1737 = vunpack.c.l.b16 %v1673
  %v1738 = vunpack.c.l.b16 %v1674
  %v1739 = vunpack.c.l.b16 %v1675
  %v1740 = vunpack.c.l.b16 %v1676
  %v1741 = vunpack.c.l.b16 %v1677
  %v1742 = vunpack.c.l.b16 %v1678
  %v1743 = vunpack.c.l.b16 %v1679
  %v1744 = vpack.c.b16 %v1713, %v1712
  %v1745 = vpack.c.b16 %v1715, %v1714
  %v1746 = vpack.c.b16 %v1717, %v1716
  %v1747 = vpack.c.b16 %v1719, %v1718
  %v1748 = vpack.c.b16 %v1721, %v1720
  %v1749 = vpack.c.b16 %v1723, %v1722
  %v1750 = vpack.c.b16 %v1725, %v1724
  %v1751 = vpack.c.b16 %v1727, %v1726
  %v1752 = vpack.c.b16 %v1729, %v1728
  %v1753 = vpack.c.b16 %v1731, %v1730
  %v1754 = vpack.c.b16 %v1733, %v1732
  %v1755 = vpack.c.b16 %v1735, %v1734
  %v1756 = vpack.c.b16 %v1737, %v1736
  %v1757 = vpack.c.b16 %v1739, %v1738
  %v1758 = vpack.c.b16 %v1741, %v1740
  %v1759 = vpack.c.b16 %v1743, %v1742
  %1776 = vmatprep.subr.bf16.mxu0 0
  %1777 = vmatpush1.bf16.msra.mxu0 %v1744
  %1778 = vmatprep.subr.bf16.mxu0 0
  %1779 = vmatpush1.bf16.msra.mxu0 %v1745
  %1780 = vmatprep.subr.bf16.mxu0 0
  %1781 = vmatpush1.bf16.msra.mxu0 %v1746
  %1782 = vmatprep.subr.bf16.mxu0 0
  %1783 = vmatpush1.bf16.msra.mxu0 %v1747
  %1784 = vmatprep.subr.bf16.mxu0 0
  %1785 = vmatpush1.bf16.msra.mxu0 %v1748
  %1786 = vmatprep.subr.bf16.mxu0 0
  %1787 = vmatpush1.bf16.msra.mxu0 %v1749
  %1788 = vmatprep.subr.bf16.mxu0 0
  %1789 = vmatpush1.bf16.msra.mxu0 %v1750
  %1790 = vmatprep.subr.bf16.mxu0 0
  %1791 = vmatpush1.bf16.msra.mxu0 %v1751
  %1792 = vmatprep.subr.bf16.mxu0 0
  %1793 = vmatpush1.bf16.msra.mxu0 %v1752
  %1794 = vmatprep.subr.bf16.mxu0 0
  %1795 = vmatpush1.bf16.msra.mxu0 %v1753
  %1796 = vmatprep.subr.bf16.mxu0 0
  %1797 = vmatpush1.bf16.msra.mxu0 %v1754
  %1798 = vmatprep.subr.bf16.mxu0 0
  %1799 = vmatpush1.bf16.msra.mxu0 %v1755
  %1800 = vmatprep.subr.bf16.mxu0 0
  %1801 = vmatpush1.bf16.msra.mxu0 %v1756
  %1802 = vmatprep.subr.bf16.mxu0 0
  %1803 = vmatpush1.bf16.msra.mxu0 %v1757
  %1804 = vmatprep.subr.bf16.mxu0 0
  %1805 = vmatpush1.bf16.msra.mxu0 %v1758
  %1806 = vmatprep.subr.bf16.mxu0 0
  %1807 = vmatpush1.bf16.msra.mxu0 %v1759
  %1808 = vmatprep.mubr.bf16.mxu0 %v1633
  %1809 = vmatmul.mubr.bf16.gmra.mrb[0].mxu0 %v1632
  %v1810 = vpop.f32.mrb[0].mxu0
  %v1811 = vadd.f32 0.0, %v1810
  %v1812 = vpop.f32.mrb[0].mxu0
  %v1813 = vpop.f32.mrb[0].mxu0
  %v1814 = vadd.f32 0.0, %v1813
  %v1815 = vpop.f32.mrb[0].mxu0
  %1816 = vmatprep.mubr.bf16.mxu0 %v1635
  %1817 = vmatmul.mubr.bf16.gmra.mrb[0].mxu0 %v1634
  %v1818 = vpop.f32.mrb[0].mxu0
  %v1819 = vadd.f32 0.0, %v1818
  %v1820 = vpop.f32.mrb[0].mxu0
  %v1821 = vpop.f32.mrb[0].mxu0
  %v1822 = vadd.f32 0.0, %v1821
  %v1823 = vpop.f32.mrb[0].mxu0
  %1824 = vmatprep.mubr.bf16.mxu0 %v1637
  %1825 = vmatmul.mubr.bf16.gmra.mrb[0].mxu0 %v1636
  %v1826 = vpop.f32.mrb[0].mxu0
  %v1827 = vadd.f32 0.0, %v1826
  %v1828 = vpop.f32.mrb[0].mxu0
  %v1829 = vpop.f32.mrb[0].mxu0
  %v1830 = vadd.f32 0.0, %v1829
  %v1831 = vpop.f32.mrb[0].mxu0
  %1832 = vmatprep.mubr.bf16.mxu0 %v1639
  %1833 = vmatmul.mubr.bf16.gmra.mrb[0].mxu0 %v1638
  %v1834 = vpop.f32.mrb[0].mxu0
  %v1835 = vadd.f32 0.0, %v1834
  %v1836 = vpop.f32.mrb[0].mxu0
  %v1837 = vpop.f32.mrb[0].mxu0
  %v1838 = vadd.f32 0.0, %v1837
  %v1839 = vpop.f32.mrb[0].mxu0
  %1840 = vmatprep.mubr.bf16.mxu0 %v1641
  %1841 = vmatmul.mubr.bf16.gmra.mrb[0].mxu0 %v1640
  %v1842 = vpop.f32.mrb[0].mxu0
  %v1843 = vadd.f32 0.0, %v1842
  %v1844 = vpop.f32.mrb[0].mxu0
  %v1845 = vpop.f32.mrb[0].mxu0
  %v1846 = vadd.f32 0.0, %v1845
  %v1847 = vpop.f32.mrb[0].mxu0
  %1848 = vmatprep.mubr.bf16.mxu0 %v1643
  %1849 = vmatmul.mubr.bf16.gmra.mrb[0].mxu0 %v1642
  %v1850 = vpop.f32.mrb[0].mxu0
  %v1851 = vadd.f32 0.0, %v1850
  %v1852 = vpop.f32.mrb[0].mxu0
  %v1853 = vpop.f32.mrb[0].mxu0
  %v1854 = vadd.f32 0.0, %v1853
  %v1855 = vpop.f32.mrb[0].mxu0
  %1856 = vmatprep.mubr.bf16.mxu0 %v1645
  %1857 = vmatmul.mubr.bf16.gmra.mrb[0].mxu0 %v1644
  %v1858 = vpop.f32.mrb[0].mxu0
  %v1859 = vadd.f32 0.0, %v1858
  %v1860 = vpop.f32.mrb[0].mxu0
  %v1861 = vpop.f32.mrb[0].mxu0
  %v1862 = vadd.f32 0.0, %v1861
  %v1863 = vpop.f32.mrb[0].mxu0
  %1864 = vmatprep.mubr.bf16.mxu0 %v1647
  %1865 = vmatmul.mubr.bf16.gmra.mrb[0].mxu0 %v1646
  %v1866 = vpop.f32.mrb[0].mxu0
  %v1867 = vadd.f32 0.0, %v1866
  %v1868 = vpop.f32.mrb[0].mxu0
  %v1869 = vpop.f32.mrb[0].mxu0
  %v1870 = vadd.f32 0.0, %v1869
  %v1871 = vpop.f32.mrb[0].mxu0
  %1872 = vdwg.mxu0
  %v1873 = vadd.f32 %v1439, %v1811
  %v1874 = vadd.f32 %v1440, %v1814
  %v1875 = vadd.f32 %v1441, %v1819
  %v1876 = vadd.f32 %v1442, %v1822
  %v1877 = vadd.f32 %v1443, %v1827
  %v1878 = vadd.f32 %v1444, %v1830
  %v1879 = vadd.f32 %v1445, %v1835
  %v1880 = vadd.f32 %v1446, %v1838
  %v1881 = vadd.f32 %v1447, %v1843
  %v1882 = vadd.f32 %v1448, %v1846
  %v1883 = vadd.f32 %v1449, %v1851
  %v1884 = vadd.f32 %v1450, %v1854
  %v1885 = vadd.f32 %v1451, %v1859
  %v1886 = vadd.f32 %v1452, %v1862
  %v1887 = vadd.f32 %v1453, %v1867
  %v1888 = vadd.f32 %v1454, %v1870
  %v1889 = vld [vmem:[%s3 + $0xc0] sm:$0xf]
  %v1890 = vld [vmem:[%s3 + $0xc4] sm:$0xf]
  %v1891 = vld [vmem:[%s3 + $0xc8] sm:$0xf]
  %v1892 = vld [vmem:[%s3 + $0xcc] sm:$0xf]
  %v1893 = vld [vmem:[%s3 + $0xd0] sm:$0xf]
  %v1894 = vld [vmem:[%s3 + $0xd4] sm:$0xf]
  %v1895 = vld [vmem:[%s3 + $0xd8] sm:$0xf]
  %v1896 = vld [vmem:[%s3 + $0xdc] sm:$0xf]
  %v1897 = vld [vmem:[%s3 + $0xe0] sm:$0xf]
  %v1898 = vld [vmem:[%s3 + $0xe4] sm:$0xf]
  %v1899 = vld [vmem:[%s3 + $0xe8] sm:$0xf]
  %v1900 = vld [vmem:[%s3 + $0xec] sm:$0xf]
  %v1901 = vld [vmem:[%s3 + $0xf0] sm:$0xf]
  %v1902 = vld [vmem:[%s3 + $0xf4] sm:$0xf]
  %v1903 = vld [vmem:[%s3 + $0xf8] sm:$0xf]
  %v1904 = vld [vmem:[%s3 + $0xfc] sm:$0xf]
  %v1921 = vunpack.c.l.b16 %v1889
  %v1922 = vunpack.c.l.b16 %v1890
  %v1923 = vunpack.c.l.b16 %v1891
  %v1924 = vunpack.c.l.b16 %v1892
  %v1925 = vunpack.c.l.b16 %v1893
  %v1926 = vunpack.c.l.b16 %v1894
  %v1927 = vunpack.c.l.b16 %v1895
  %v1928 = vunpack.c.l.b16 %v1896
  %v1929 = vunpack.c.l.b16 %v1897
  %v1930 = vunpack.c.l.b16 %v1898
  %v1931 = vunpack.c.l.b16 %v1899
  %v1932 = vunpack.c.l.b16 %v1900
  %v1933 = vunpack.c.l.b16 %v1901
  %v1934 = vunpack.c.l.b16 %v1902
  %v1935 = vunpack.c.l.b16 %v1903
  %v1936 = vunpack.c.l.b16 %v1904
  %v1937 = vpack.c.b16 %v1922, %v1921
  %v1938 = vpack.c.b16 %v1924, %v1923
  %v1939 = vpack.c.b16 %v1926, %v1925
  %v1940 = vpack.c.b16 %v1928, %v1927
  %v1941 = vpack.c.b16 %v1930, %v1929
  %v1942 = vpack.c.b16 %v1932, %v1931
  %v1943 = vpack.c.b16 %v1934, %v1933
  %v1944 = vpack.c.b16 %v1936, %v1935
  %1953 = vmatprep.subr.bf16.mxu0 %v564
  %1954 = vmatpush1.bf16.msra.mxu0 %v563
  %1955 = vmatprep.subr.bf16.mxu0 %v566
  %1956 = vmatpush1.bf16.msra.mxu0 %v565
  %1957 = vmatprep.subr.bf16.mxu0 %v568
  %1958 = vmatpush1.bf16.msra.mxu0 %v567
  %1959 = vmatprep.subr.bf16.mxu0 %v570
  %1960 = vmatpush1.bf16.msra.mxu0 %v569
  %1961 = vmatprep.subr.bf16.mxu0 %v572
  %1962 = vmatpush1.bf16.msra.mxu0 %v571
  %1963 = vmatprep.subr.bf16.mxu0 %v574
  %1964 = vmatpush1.bf16.msra.mxu0 %v573
  %1965 = vmatprep.subr.bf16.mxu0 %v576
  %1966 = vmatpush1.bf16.msra.mxu0 %v575
  %1967 = vmatprep.subr.bf16.mxu0 %v578
  %1968 = vmatpush1.bf16.msra.mxu0 %v577
  %1969 = vmatprep.subr.bf16.mxu0 0
  %1970 = vmatpush1.bf16.msra.mxu0 0
  %1971 = vmatprep.subr.bf16.mxu0 0
  %1972 = vmatpush1.bf16.msra.mxu0 0
  %1973 = vmatprep.subr.bf16.mxu0 0
  %1974 = vmatpush1.bf16.msra.mxu0 0
  %1975 = vmatprep.subr.bf16.mxu0 0
  %1976 = vmatpush1.bf16.msra.mxu0 0
  %1977 = vmatprep.subr.bf16.mxu0 0
  %1978 = vmatpush1.bf16.msra.mxu0 0
  %1979 = vmatprep.subr.bf16.mxu0 0
  %1980 = vmatpush1.bf16.msra.mxu0 0
  %1981 = vmatprep.subr.bf16.mxu0 0
  %1982 = vmatpush1.bf16.msra.mxu0 0
  %1983 = vmatprep.subr.bf16.mxu0 0
  %1984 = vmatpush1.bf16.msra.mxu0 0
  %1985 = vmatprep.mubr.bf16.mxu0 0
  %1986 = vmatmul.mubr.bf16.gmra.mrb[0].mxu0 %v1937
  %v1987 = vpop.f32.mrb[0].mxu0
  %v1988 = vadd.f32 0.0, %v1987
  %v1989 = vpop.f32.mrb[0].mxu0
  %v1990 = vadd.f32 0.0, %v1989
  %v1991 = vpop.f32.mrb[0].mxu0
  %v1992 = vadd.f32 0.0, %v1991
  %v1993 = vpop.f32.mrb[0].mxu0
  %v1994 = vadd.f32 0.0, %v1993
  %1995 = vmatprep.mubr.bf16.mxu0 0
  %1996 = vmatmul.mubr.bf16.gmra.mrb[0].mxu0 %v1938
  %v1997 = vpop.f32.mrb[0].mxu0
  %v1998 = vadd.f32 0.0, %v1997
  %v1999 = vpop.f32.mrb[0].mxu0
  %v2000 = vadd.f32 0.0, %v1999
  %v2001 = vpop.f32.mrb[0].mxu0
  %v2002 = vadd.f32 0.0, %v2001
  %v2003 = vpop.f32.mrb[0].mxu0
  %v2004 = vadd.f32 0.0, %v2003
  %2005 = vmatprep.mubr.bf16.mxu0 0
  %2006 = vmatmul.mubr.bf16.gmra.mrb[0].mxu0 %v1939
  %v2007 = vpop.f32.mrb[0].mxu0
  %v2008 = vadd.f32 0.0, %v2007
  %v2009 = vpop.f32.mrb[0].mxu0
  %v2010 = vadd.f32 0.0, %v2009
  %v2011 = vpop.f32.mrb[0].mxu0
  %v2012 = vadd.f32 0.0, %v2011
  %v2013 = vpop.f32.mrb[0].mxu0
  %v2014 = vadd.f32 0.0, %v2013
  %2015 = vmatprep.mubr.bf16.mxu0 0
  %2016 = vmatmul.mubr.bf16.gmra.mrb[0].mxu0 %v1940
  %v2017 = vpop.f32.mrb[0].mxu0
  %v2018 = vadd.f32 0.0, %v2017
  %v2019 = vpop.f32.mrb[0].mxu0
  %v2020 = vadd.f32 0.0, %v2019
  %v2021 = vpop.f32.mrb[0].mxu0
  %v2022 = vadd.f32 0.0, %v2021
  %v2023 = vpop.f32.mrb[0].mxu0
  %v2024 = vadd.f32 0.0, %v2023
  %2025 = vmatprep.mubr.bf16.mxu0 0
  %2026 = vmatmul.mubr.bf16.gmra.mrb[0].mxu0 %v1941
  %v2027 = vpop.f32.mrb[0].mxu0
  %v2028 = vadd.f32 0.0, %v2027
  %v2029 = vpop.f32.mrb[0].mxu0
  %v2030 = vadd.f32 0.0, %v2029
  %v2031 = vpop.f32.mrb[0].mxu0
  %v2032 = vadd.f32 0.0, %v2031
  %v2033 = vpop.f32.mrb[0].mxu0
  %v2034 = vadd.f32 0.0, %v2033
  %2035 = vmatprep.mubr.bf16.mxu0 0
  %2036 = vmatmul.mubr.bf16.gmra.mrb[0].mxu0 %v1942
  %v2037 = vpop.f32.mrb[0].mxu0
  %v2038 = vadd.f32 0.0, %v2037
  %v2039 = vpop.f32.mrb[0].mxu0
  %v2040 = vadd.f32 0.0, %v2039
  %v2041 = vpop.f32.mrb[0].mxu0
  %v2042 = vadd.f32 0.0, %v2041
  %v2043 = vpop.f32.mrb[0].mxu0
  %v2044 = vadd.f32 0.0, %v2043
  %2045 = vmatprep.mubr.bf16.mxu0 0
  %2046 = vmatmul.mubr.bf16.gmra.mrb[0].mxu0 %v1943
  %v2047 = vpop.f32.mrb[0].mxu0
  %v2048 = vadd.f32 0.0, %v2047
  %v2049 = vpop.f32.mrb[0].mxu0
  %v2050 = vadd.f32 0.0, %v2049
  %v2051 = vpop.f32.mrb[0].mxu0
  %v2052 = vadd.f32 0.0, %v2051
  %v2053 = vpop.f32.mrb[0].mxu0
  %v2054 = vadd.f32 0.0, %v2053
  %2055 = vmatprep.mubr.bf16.mxu0 0
  %2056 = vmatmul.mubr.bf16.gmra.mrb[0].mxu0 %v1944
  %v2057 = vpop.f32.mrb[0].mxu0
  %v2058 = vadd.f32 0.0, %v2057
  %v2059 = vpop.f32.mrb[0].mxu0
  %v2060 = vadd.f32 0.0, %v2059
  %v2061 = vpop.f32.mrb[0].mxu0
  %v2062 = vadd.f32 0.0, %v2061
  %v2063 = vpop.f32.mrb[0].mxu0
  %v2064 = vadd.f32 0.0, %v2063
  %2065 = vdwg.mxu0
  %v2066 = vpack.c.bf16 %v1992, %v1988
  %v2067 = vpack.c.bf16 %v1994, %v1990
  %v2068 = vpack.c.bf16 %v2002, %v1998
  %v2069 = vpack.c.bf16 %v2004, %v2000
  %v2070 = vpack.c.bf16 %v2012, %v2008
  %v2071 = vpack.c.bf16 %v2014, %v2010
  %v2072 = vpack.c.bf16 %v2022, %v2018
  %v2073 = vpack.c.bf16 %v2024, %v2020
  %v2074 = vpack.c.bf16 %v2032, %v2028
  %v2075 = vpack.c.bf16 %v2034, %v2030
  %v2076 = vpack.c.bf16 %v2042, %v2038
  %v2077 = vpack.c.bf16 %v2044, %v2040
  %v2078 = vpack.c.bf16 %v2052, %v2048
  %v2079 = vpack.c.bf16 %v2054, %v2050
  %v2080 = vpack.c.bf16 %v2062, %v2058
  %v2081 = vpack.c.bf16 %v2064, %v2060
  %v2082 = vld [vmem:[%s4 + $0x180] sm:$0xf]
  %v2083 = vld [vmem:[%s4 + $0x184] sm:$0xf]
  %v2084 = vld [vmem:[%s4 + $0x188] sm:$0xf]
  %v2085 = vld [vmem:[%s4 + $0x18c] sm:$0xf]
  %v2086 = vld [vmem:[%s4 + $0x190] sm:$0xf]
  %v2087 = vld [vmem:[%s4 + $0x194] sm:$0xf]
  %v2088 = vld [vmem:[%s4 + $0x198] sm:$0xf]
  %v2089 = vld [vmem:[%s4 + $0x19c] sm:$0xf]
  %v2090 = vld [vmem:[%s4 + $0x1a0] sm:$0xf]
  %v2091 = vld [vmem:[%s4 + $0x1a4] sm:$0xf]
  %v2092 = vld [vmem:[%s4 + $0x1a8] sm:$0xf]
  %v2093 = vld [vmem:[%s4 + $0x1ac] sm:$0xf]
  %v2094 = vld [vmem:[%s4 + $0x1b0] sm:$0xf]
  %v2095 = vld [vmem:[%s4 + $0x1b4] sm:$0xf]
  %v2096 = vld [vmem:[%s4 + $0x1b8] sm:$0xf]
  %v2097 = vld [vmem:[%s4 + $0x1bc] sm:$0xf]
  %v2098 = vld [vmem:[%s4 + $0x1c0] sm:$0xf]
  %v2099 = vld [vmem:[%s4 + $0x1c4] sm:$0xf]
  %v2100 = vld [vmem:[%s4 + $0x1c8] sm:$0xf]
  %v2101 = vld [vmem:[%s4 + $0x1cc] sm:$0xf]
  %v2102 = vld [vmem:[%s4 + $0x1d0] sm:$0xf]
  %v2103 = vld [vmem:[%s4 + $0x1d4] sm:$0xf]
  %v2104 = vld [vmem:[%s4 + $0x1d8] sm:$0xf]
  %v2105 = vld [vmem:[%s4 + $0x1dc] sm:$0xf]
  %v2106 = vld [vmem:[%s4 + $0x1e0] sm:$0xf]
  %v2107 = vld [vmem:[%s4 + $0x1e4] sm:$0xf]
  %v2108 = vld [vmem:[%s4 + $0x1e8] sm:$0xf]
  %v2109 = vld [vmem:[%s4 + $0x1ec] sm:$0xf]
  %v2110 = vld [vmem:[%s4 + $0x1f0] sm:$0xf]
  %v2111 = vld [vmem:[%s4 + $0x1f4] sm:$0xf]
  %v2112 = vld [vmem:[%s4 + $0x1f8] sm:$0xf]
  %v2113 = vld [vmem:[%s4 + $0x1fc] sm:$0xf]
  %v2146 = vunpack.c.l.b16 %v2082
  %v2147 = vunpack.c.l.b16 %v2083
  %v2148 = vunpack.c.l.b16 %v2084
  %v2149 = vunpack.c.l.b16 %v2085
  %v2150 = vunpack.c.l.b16 %v2086
  %v2151 = vunpack.c.l.b16 %v2087
  %v2152 = vunpack.c.l.b16 %v2088
  %v2153 = vunpack.c.l.b16 %v2089
  %v2154 = vunpack.c.l.b16 %v2090
  %v2155 = vunpack.c.l.b16 %v2091
  %v2156 = vunpack.c.l.b16 %v2092
  %v2157 = vunpack.c.l.b16 %v2093
  %v2158 = vunpack.c.l.b16 %v2094
  %v2159 = vunpack.c.l.b16 %v2095
  %v2160 = vunpack.c.l.b16 %v2096
  %v2161 = vunpack.c.l.b16 %v2097
  %v2162 = vunpack.c.l.b16 %v2098
  %v2163 = vunpack.c.l.b16 %v2099
  %v2164 = vunpack.c.l.b16 %v2100
  %v2165 = vunpack.c.l.b16 %v2101
  %v2166 = vunpack.c.l.b16 %v2102
  %v2167 = vunpack.c.l.b16 %v2103
  %v2168 = vunpack.c.l.b16 %v2104
  %v2169 = vunpack.c.l.b16 %v2105
  %v2170 = vunpack.c.l.b16 %v2106
  %v2171 = vunpack.c.l.b16 %v2107
  %v2172 = vunpack.c.l.b16 %v2108
  %v2173 = vunpack.c.l.b16 %v2109
  %v2174 = vunpack.c.l.b16 %v2110
  %v2175 = vunpack.c.l.b16 %v2111
  %v2176 = vunpack.c.l.b16 %v2112
  %v2177 = vunpack.c.l.b16 %v2113
  %v2178 = vpack.c.b16 %v2147, %v2146
  %v2179 = vpack.c.b16 %v2149, %v2148
  %v2180 = vpack.c.b16 %v2151, %v2150
  %v2181 = vpack.c.b16 %v2153, %v2152
  %v2182 = vpack.c.b16 %v2155, %v2154
  %v2183 = vpack.c.b16 %v2157, %v2156
  %v2184 = vpack.c.b16 %v2159, %v2158
  %v2185 = vpack.c.b16 %v2161, %v2160
  %v2186 = vpack.c.b16 %v2163, %v2162
  %v2187 = vpack.c.b16 %v2165, %v2164
  %v2188 = vpack.c.b16 %v2167, %v2166
  %v2189 = vpack.c.b16 %v2169, %v2168
  %v2190 = vpack.c.b16 %v2171, %v2170
  %v2191 = vpack.c.b16 %v2173, %v2172
  %v2192 = vpack.c.b16 %v2175, %v2174
  %v2193 = vpack.c.b16 %v2177, %v2176
  %2210 = vmatprep.subr.bf16.mxu0 0
  %2211 = vmatpush1.bf16.msra.mxu0 %v2178
  %2212 = vmatprep.subr.bf16.mxu0 0
  %2213 = vmatpush1.bf16.msra.mxu0 %v2179
  %2214 = vmatprep.subr.bf16.mxu0 0
  %2215 = vmatpush1.bf16.msra.mxu0 %v2180
  %2216 = vmatprep.subr.bf16.mxu0 0
  %2217 = vmatpush1.bf16.msra.mxu0 %v2181
  %2218 = vmatprep.subr.bf16.mxu0 0
  %2219 = vmatpush1.bf16.msra.mxu0 %v2182
  %2220 = vmatprep.subr.bf16.mxu0 0
  %2221 = vmatpush1.bf16.msra.mxu0 %v2183
  %2222 = vmatprep.subr.bf16.mxu0 0
  %2223 = vmatpush1.bf16.msra.mxu0 %v2184
  %2224 = vmatprep.subr.bf16.mxu0 0
  %2225 = vmatpush1.bf16.msra.mxu0 %v2185
  %2226 = vmatprep.subr.bf16.mxu0 0
  %2227 = vmatpush1.bf16.msra.mxu0 %v2186
  %2228 = vmatprep.subr.bf16.mxu0 0
  %2229 = vmatpush1.bf16.msra.mxu0 %v2187
  %2230 = vmatprep.subr.bf16.mxu0 0
  %2231 = vmatpush1.bf16.msra.mxu0 %v2188
  %2232 = vmatprep.subr.bf16.mxu0 0
  %2233 = vmatpush1.bf16.msra.mxu0 %v2189
  %2234 = vmatprep.subr.bf16.mxu0 0
  %2235 = vmatpush1.bf16.msra.mxu0 %v2190
  %2236 = vmatprep.subr.bf16.mxu0 0
  %2237 = vmatpush1.bf16.msra.mxu0 %v2191
  %2238 = vmatprep.subr.bf16.mxu0 0
  %2239 = vmatpush1.bf16.msra.mxu0 %v2192
  %2240 = vmatprep.subr.bf16.mxu0 0
  %2241 = vmatpush1.bf16.msra.mxu0 %v2193
  %2242 = vmatprep.mubr.bf16.mxu0 %v2067
  %2243 = vmatmul.mubr.bf16.gmra.mrb[0].mxu0 %v2066
  %v2244 = vpop.f32.mrb[0].mxu0
  %v2245 = vadd.f32 0.0, %v2244
  %v2246 = vpop.f32.mrb[0].mxu0
  %v2247 = vpop.f32.mrb[0].mxu0
  %v2248 = vadd.f32 0.0, %v2247
  %v2249 = vpop.f32.mrb[0].mxu0
  %2250 = vmatprep.mubr.bf16.mxu0 %v2069
  %2251 = vmatmul.mubr.bf16.gmra.mrb[0].mxu0 %v2068
  %v2252 = vpop.f32.mrb[0].mxu0
  %v2253 = vadd.f32 0.0, %v2252
  %v2254 = vpop.f32.mrb[0].mxu0
  %v2255 = vpop.f32.mrb[0].mxu0
  %v2256 = vadd.f32 0.0, %v2255
  %v2257 = vpop.f32.mrb[0].mxu0
  %2258 = vmatprep.mubr.bf16.mxu0 %v2071
  %2259 = vmatmul.mubr.bf16.gmra.mrb[0].mxu0 %v2070
  %v2260 = vpop.f32.mrb[0].mxu0
  %v2261 = vadd.f32 0.0, %v2260
  %v2262 = vpop.f32.mrb[0].mxu0
  %v2263 = vpop.f32.mrb[0].mxu0
  %v2264 = vadd.f32 0.0, %v2263
  %v2265 = vpop.f32.mrb[0].mxu0
  %2266 = vmatprep.mubr.bf16.mxu0 %v2073
  %2267 = vmatmul.mubr.bf16.gmra.mrb[0].mxu0 %v2072
  %v2268 = vpop.f32.mrb[0].mxu0
  %v2269 = vadd.f32 0.0, %v2268
  %v2270 = vpop.f32.mrb[0].mxu0
  %v2271 = vpop.f32.mrb[0].mxu0
  %v2272 = vadd.f32 0.0, %v2271
  %v2273 = vpop.f32.mrb[0].mxu0
  %2274 = vmatprep.mubr.bf16.mxu0 %v2075
  %2275 = vmatmul.mubr.bf16.gmra.mrb[0].mxu0 %v2074
  %v2276 = vpop.f32.mrb[0].mxu0
  %v2277 = vadd.f32 0.0, %v2276
  %v2278 = vpop.f32.mrb[0].mxu0
  %v2279 = vpop.f32.mrb[0].mxu0
  %v2280 = vadd.f32 0.0, %v2279
  %v2281 = vpop.f32.mrb[0].mxu0
  %2282 = vmatprep.mubr.bf16.mxu0 %v2077
  %2283 = vmatmul.mubr.bf16.gmra.mrb[0].mxu0 %v2076
  %v2284 = vpop.f32.mrb[0].mxu0
  %v2285 = vadd.f32 0.0, %v2284
  %v2286 = vpop.f32.mrb[0].mxu0
  %v2287 = vpop.f32.mrb[0].mxu0
  %v2288 = vadd.f32 0.0, %v2287
  %v2289 = vpop.f32.mrb[0].mxu0
  %2290 = vmatprep.mubr.bf16.mxu0 %v2079
  %2291 = vmatmul.mubr.bf16.gmra.mrb[0].mxu0 %v2078
  %v2292 = vpop.f32.mrb[0].mxu0
  %v2293 = vadd.f32 0.0, %v2292
  %v2294 = vpop.f32.mrb[0].mxu0
  %v2295 = vpop.f32.mrb[0].mxu0
  %v2296 = vadd.f32 0.0, %v2295
  %v2297 = vpop.f32.mrb[0].mxu0
  %2298 = vmatprep.mubr.bf16.mxu0 %v2081
  %2299 = vmatmul.mubr.bf16.gmra.mrb[0].mxu0 %v2080
  %v2300 = vpop.f32.mrb[0].mxu0
  %v2301 = vadd.f32 0.0, %v2300
  %v2302 = vpop.f32.mrb[0].mxu0
  %v2303 = vpop.f32.mrb[0].mxu0
  %v2304 = vadd.f32 0.0, %v2303
  %v2305 = vpop.f32.mrb[0].mxu0
  %2306 = vdwg.mxu0
  %v2307 = vadd.f32 %v1873, %v2245
  %v2308 = vadd.f32 %v1874, %v2248
  %v2309 = vadd.f32 %v1875, %v2253
  %v2310 = vadd.f32 %v1876, %v2256
  %v2311 = vadd.f32 %v1877, %v2261
  %v2312 = vadd.f32 %v1878, %v2264
  %v2313 = vadd.f32 %v1879, %v2269
  %v2314 = vadd.f32 %v1880, %v2272
  %v2315 = vadd.f32 %v1881, %v2277
  %v2316 = vadd.f32 %v1882, %v2280
  %v2317 = vadd.f32 %v1883, %v2285
  %v2318 = vadd.f32 %v1884, %v2288
  %v2319 = vadd.f32 %v1885, %v2293
  %v2320 = vadd.f32 %v1886, %v2296
  %v2321 = vadd.f32 %v1887, %v2301
  %v2322 = vadd.f32 %v1888, %v2304
  %v2323 = vld [vmem:[%s3 + $0x100] sm:$0xf]
  %v2324 = vld [vmem:[%s3 + $0x104] sm:$0xf]
  %v2325 = vld [vmem:[%s3 + $0x108] sm:$0xf]
  %v2326 = vld [vmem:[%s3 + $0x10c] sm:$0xf]
  %v2327 = vld [vmem:[%s3 + $0x110] sm:$0xf]
  %v2328 = vld [vmem:[%s3 + $0x114] sm:$0xf]
  %v2329 = vld [vmem:[%s3 + $0x118] sm:$0xf]
  %v2330 = vld [vmem:[%s3 + $0x11c] sm:$0xf]
  %v2331 = vld [vmem:[%s3 + $0x120] sm:$0xf]
  %v2332 = vld [vmem:[%s3 + $0x124] sm:$0xf]
  %v2333 = vld [vmem:[%s3 + $0x128] sm:$0xf]
  %v2334 = vld [vmem:[%s3 + $0x12c] sm:$0xf]
  %v2335 = vld [vmem:[%s3 + $0x130] sm:$0xf]
  %v2336 = vld [vmem:[%s3 + $0x134] sm:$0xf]
  %v2337 = vld [vmem:[%s3 + $0x138] sm:$0xf]
  %v2338 = vld [vmem:[%s3 + $0x13c] sm:$0xf]
  %v2355 = vunpack.c.l.b16 %v2323
  %v2356 = vunpack.c.l.b16 %v2324
  %v2357 = vunpack.c.l.b16 %v2325
  %v2358 = vunpack.c.l.b16 %v2326
  %v2359 = vunpack.c.l.b16 %v2327
  %v2360 = vunpack.c.l.b16 %v2328
  %v2361 = vunpack.c.l.b16 %v2329
  %v2362 = vunpack.c.l.b16 %v2330
  %v2363 = vunpack.c.l.b16 %v2331
  %v2364 = vunpack.c.l.b16 %v2332
  %v2365 = vunpack.c.l.b16 %v2333
  %v2366 = vunpack.c.l.b16 %v2334
  %v2367 = vunpack.c.l.b16 %v2335
  %v2368 = vunpack.c.l.b16 %v2336
  %v2369 = vunpack.c.l.b16 %v2337
  %v2370 = vunpack.c.l.b16 %v2338
  %v2371 = vpack.c.b16 %v2356, %v2355
  %v2372 = vpack.c.b16 %v2358, %v2357
  %v2373 = vpack.c.b16 %v2360, %v2359
  %v2374 = vpack.c.b16 %v2362, %v2361
  %v2375 = vpack.c.b16 %v2364, %v2363
  %v2376 = vpack.c.b16 %v2366, %v2365
  %v2377 = vpack.c.b16 %v2368, %v2367
  %v2378 = vpack.c.b16 %v2370, %v2369
  %2387 = vmatprep.subr.bf16.mxu0 %v564
  %2388 = vmatpush1.bf16.msra.mxu0 %v563
  %2389 = vmatprep.subr.bf16.mxu0 %v566
  %2390 = vmatpush1.bf16.msra.mxu0 %v565
  %2391 = vmatprep.subr.bf16.mxu0 %v568
  %2392 = vmatpush1.bf16.msra.mxu0 %v567
  %2393 = vmatprep.subr.bf16.mxu0 %v570
  %2394 = vmatpush1.bf16.msra.mxu0 %v569
  %2395 = vmatprep.subr.bf16.mxu0 %v572
  %2396 = vmatpush1.bf16.msra.mxu0 %v571
  %2397 = vmatprep.subr.bf16.mxu0 %v574
  %2398 = vmatpush1.bf16.msra.mxu0 %v573
  %2399 = vmatprep.subr.bf16.mxu0 %v576
  %2400 = vmatpush1.bf16.msra.mxu0 %v575
  %2401 = vmatprep.subr.bf16.mxu0 %v578
  %2402 = vmatpush1.bf16.msra.mxu0 %v577
  %2403 = vmatprep.subr.bf16.mxu0 0
  %2404 = vmatpush1.bf16.msra.mxu0 0
  %2405 = vmatprep.subr.bf16.mxu0 0
  %2406 = vmatpush1.bf16.msra.mxu0 0
  %2407 = vmatprep.subr.bf16.mxu0 0
  %2408 = vmatpush1.bf16.msra.mxu0 0
  %2409 = vmatprep.subr.bf16.mxu0 0
  %2410 = vmatpush1.bf16.msra.mxu0 0
  %2411 = vmatprep.subr.bf16.mxu0 0
  %2412 = vmatpush1.bf16.msra.mxu0 0
  %2413 = vmatprep.subr.bf16.mxu0 0
  %2414 = vmatpush1.bf16.msra.mxu0 0
  %2415 = vmatprep.subr.bf16.mxu0 0
  %2416 = vmatpush1.bf16.msra.mxu0 0
  %2417 = vmatprep.subr.bf16.mxu0 0
  %2418 = vmatpush1.bf16.msra.mxu0 0
  %2419 = vmatprep.mubr.bf16.mxu0 0
  %2420 = vmatmul.mubr.bf16.gmra.mrb[0].mxu0 %v2371
  %v2421 = vpop.f32.mrb[0].mxu0
  %v2422 = vadd.f32 0.0, %v2421
  %v2423 = vpop.f32.mrb[0].mxu0
  %v2424 = vadd.f32 0.0, %v2423
  %v2425 = vpop.f32.mrb[0].mxu0
  %v2426 = vadd.f32 0.0, %v2425
  %v2427 = vpop.f32.mrb[0].mxu0
  %v2428 = vadd.f32 0.0, %v2427
  %2429 = vmatprep.mubr.bf16.mxu0 0
  %2430 = vmatmul.mubr.bf16.gmra.mrb[0].mxu0 %v2372
  %v2431 = vpop.f32.mrb[0].mxu0
  %v2432 = vadd.f32 0.0, %v2431
  %v2433 = vpop.f32.mrb[0].mxu0
  %v2434 = vadd.f32 0.0, %v2433
  %v2435 = vpop.f32.mrb[0].mxu0
  %v2436 = vadd.f32 0.0, %v2435
  %v2437 = vpop.f32.mrb[0].mxu0
  %v2438 = vadd.f32 0.0, %v2437
  %2439 = vmatprep.mubr.bf16.mxu0 0
  %2440 = vmatmul.mubr.bf16.gmra.mrb[0].mxu0 %v2373
  %v2441 = vpop.f32.mrb[0].mxu0
  %v2442 = vadd.f32 0.0, %v2441
  %v2443 = vpop.f32.mrb[0].mxu0
  %v2444 = vadd.f32 0.0, %v2443
  %v2445 = vpop.f32.mrb[0].mxu0
  %v2446 = vadd.f32 0.0, %v2445
  %v2447 = vpop.f32.mrb[0].mxu0
  %v2448 = vadd.f32 0.0, %v2447
  %2449 = vmatprep.mubr.bf16.mxu0 0
  %2450 = vmatmul.mubr.bf16.gmra.mrb[0].mxu0 %v2374
  %v2451 = vpop.f32.mrb[0].mxu0
  %v2452 = vadd.f32 0.0, %v2451
  %v2453 = vpop.f32.mrb[0].mxu0
  %v2454 = vadd.f32 0.0, %v2453
  %v2455 = vpop.f32.mrb[0].mxu0
  %v2456 = vadd.f32 0.0, %v2455
  %v2457 = vpop.f32.mrb[0].mxu0
  %v2458 = vadd.f32 0.0, %v2457
  %2459 = vmatprep.mubr.bf16.mxu0 0
  %2460 = vmatmul.mubr.bf16.gmra.mrb[0].mxu0 %v2375
  %v2461 = vpop.f32.mrb[0].mxu0
  %v2462 = vadd.f32 0.0, %v2461
  %v2463 = vpop.f32.mrb[0].mxu0
  %v2464 = vadd.f32 0.0, %v2463
  %v2465 = vpop.f32.mrb[0].mxu0
  %v2466 = vadd.f32 0.0, %v2465
  %v2467 = vpop.f32.mrb[0].mxu0
  %v2468 = vadd.f32 0.0, %v2467
  %2469 = vmatprep.mubr.bf16.mxu0 0
  %2470 = vmatmul.mubr.bf16.gmra.mrb[0].mxu0 %v2376
  %v2471 = vpop.f32.mrb[0].mxu0
  %v2472 = vadd.f32 0.0, %v2471
  %v2473 = vpop.f32.mrb[0].mxu0
  %v2474 = vadd.f32 0.0, %v2473
  %v2475 = vpop.f32.mrb[0].mxu0
  %v2476 = vadd.f32 0.0, %v2475
  %v2477 = vpop.f32.mrb[0].mxu0
  %v2478 = vadd.f32 0.0, %v2477
  %2479 = vmatprep.mubr.bf16.mxu0 0
  %2480 = vmatmul.mubr.bf16.gmra.mrb[0].mxu0 %v2377
  %v2481 = vpop.f32.mrb[0].mxu0
  %v2482 = vadd.f32 0.0, %v2481
  %v2483 = vpop.f32.mrb[0].mxu0
  %v2484 = vadd.f32 0.0, %v2483
  %v2485 = vpop.f32.mrb[0].mxu0
  %v2486 = vadd.f32 0.0, %v2485
  %v2487 = vpop.f32.mrb[0].mxu0
  %v2488 = vadd.f32 0.0, %v2487
  %2489 = vmatprep.mubr.bf16.mxu0 0
  %2490 = vmatmul.mubr.bf16.gmra.mrb[0].mxu0 %v2378
  %v2491 = vpop.f32.mrb[0].mxu0
  %v2492 = vadd.f32 0.0, %v2491
  %v2493 = vpop.f32.mrb[0].mxu0
  %v2494 = vadd.f32 0.0, %v2493
  %v2495 = vpop.f32.mrb[0].mxu0
  %v2496 = vadd.f32 0.0, %v2495
  %v2497 = vpop.f32.mrb[0].mxu0
  %v2498 = vadd.f32 0.0, %v2497
  %2499 = vdwg.mxu0
  %v2500 = vpack.c.bf16 %v2426, %v2422
  %v2501 = vpack.c.bf16 %v2428, %v2424
  %v2502 = vpack.c.bf16 %v2436, %v2432
  %v2503 = vpack.c.bf16 %v2438, %v2434
  %v2504 = vpack.c.bf16 %v2446, %v2442
  %v2505 = vpack.c.bf16 %v2448, %v2444
  %v2506 = vpack.c.bf16 %v2456, %v2452
  %v2507 = vpack.c.bf16 %v2458, %v2454
  %v2508 = vpack.c.bf16 %v2466, %v2462
  %v2509 = vpack.c.bf16 %v2468, %v2464
  %v2510 = vpack.c.bf16 %v2476, %v2472
  %v2511 = vpack.c.bf16 %v2478, %v2474
  %v2512 = vpack.c.bf16 %v2486, %v2482
  %v2513 = vpack.c.bf16 %v2488, %v2484
  %v2514 = vpack.c.bf16 %v2496, %v2492
  %v2515 = vpack.c.bf16 %v2498, %v2494
  %v2516 = vld [vmem:[%s4 + $0x200] sm:$0xf]
  %v2517 = vld [vmem:[%s4 + $0x204] sm:$0xf]
  %v2518 = vld [vmem:[%s4 + $0x208] sm:$0xf]
  %v2519 = vld [vmem:[%s4 + $0x20c] sm:$0xf]
  %v2520 = vld [vmem:[%s4 + $0x210] sm:$0xf]
  %v2521 = vld [vmem:[%s4 + $0x214] sm:$0xf]
  %v2522 = vld [vmem:[%s4 + $0x218] sm:$0xf]
  %v2523 = vld [vmem:[%s4 + $0x21c] sm:$0xf]
  %v2524 = vld [vmem:[%s4 + $0x220] sm:$0xf]
  %v2525 = vld [vmem:[%s4 + $0x224] sm:$0xf]
  %v2526 = vld [vmem:[%s4 + $0x228] sm:$0xf]
  %v2527 = vld [vmem:[%s4 + $0x22c] sm:$0xf]
  %v2528 = vld [vmem:[%s4 + $0x230] sm:$0xf]
  %v2529 = vld [vmem:[%s4 + $0x234] sm:$0xf]
  %v2530 = vld [vmem:[%s4 + $0x238] sm:$0xf]
  %v2531 = vld [vmem:[%s4 + $0x23c] sm:$0xf]
  %v2532 = vld [vmem:[%s4 + $0x240] sm:$0xf]
  %v2533 = vld [vmem:[%s4 + $0x244] sm:$0xf]
  %v2534 = vld [vmem:[%s4 + $0x248] sm:$0xf]
  %v2535 = vld [vmem:[%s4 + $0x24c] sm:$0xf]
  %v2536 = vld [vmem:[%s4 + $0x250] sm:$0xf]
  %v2537 = vld [vmem:[%s4 + $0x254] sm:$0xf]
  %v2538 = vld [vmem:[%s4 + $0x258] sm:$0xf]
  %v2539 = vld [vmem:[%s4 + $0x25c] sm:$0xf]
  %v2540 = vld [vmem:[%s4 + $0x260] sm:$0xf]
  %v2541 = vld [vmem:[%s4 + $0x264] sm:$0xf]
  %v2542 = vld [vmem:[%s4 + $0x268] sm:$0xf]
  %v2543 = vld [vmem:[%s4 + $0x26c] sm:$0xf]
  %v2544 = vld [vmem:[%s4 + $0x270] sm:$0xf]
  %v2545 = vld [vmem:[%s4 + $0x274] sm:$0xf]
  %v2546 = vld [vmem:[%s4 + $0x278] sm:$0xf]
  %v2547 = vld [vmem:[%s4 + $0x27c] sm:$0xf]
  %v2580 = vunpack.c.l.b16 %v2516
  %v2581 = vunpack.c.l.b16 %v2517
  %v2582 = vunpack.c.l.b16 %v2518
  %v2583 = vunpack.c.l.b16 %v2519
  %v2584 = vunpack.c.l.b16 %v2520
  %v2585 = vunpack.c.l.b16 %v2521
  %v2586 = vunpack.c.l.b16 %v2522
  %v2587 = vunpack.c.l.b16 %v2523
  %v2588 = vunpack.c.l.b16 %v2524
  %v2589 = vunpack.c.l.b16 %v2525
  %v2590 = vunpack.c.l.b16 %v2526
  %v2591 = vunpack.c.l.b16 %v2527
  %v2592 = vunpack.c.l.b16 %v2528
  %v2593 = vunpack.c.l.b16 %v2529
  %v2594 = vunpack.c.l.b16 %v2530
  %v2595 = vunpack.c.l.b16 %v2531
  %v2596 = vunpack.c.l.b16 %v2532
  %v2597 = vunpack.c.l.b16 %v2533
  %v2598 = vunpack.c.l.b16 %v2534
  %v2599 = vunpack.c.l.b16 %v2535
  %v2600 = vunpack.c.l.b16 %v2536
  %v2601 = vunpack.c.l.b16 %v2537
  %v2602 = vunpack.c.l.b16 %v2538
  %v2603 = vunpack.c.l.b16 %v2539
  %v2604 = vunpack.c.l.b16 %v2540
  %v2605 = vunpack.c.l.b16 %v2541
  %v2606 = vunpack.c.l.b16 %v2542
  %v2607 = vunpack.c.l.b16 %v2543
  %v2608 = vunpack.c.l.b16 %v2544
  %v2609 = vunpack.c.l.b16 %v2545
  %v2610 = vunpack.c.l.b16 %v2546
  %v2611 = vunpack.c.l.b16 %v2547
  %v2612 = vpack.c.b16 %v2581, %v2580
  %v2613 = vpack.c.b16 %v2583, %v2582
  %v2614 = vpack.c.b16 %v2585, %v2584
  %v2615 = vpack.c.b16 %v2587, %v2586
  %v2616 = vpack.c.b16 %v2589, %v2588
  %v2617 = vpack.c.b16 %v2591, %v2590
  %v2618 = vpack.c.b16 %v2593, %v2592
  %v2619 = vpack.c.b16 %v2595, %v2594
  %v2620 = vpack.c.b16 %v2597, %v2596
  %v2621 = vpack.c.b16 %v2599, %v2598
  %v2622 = vpack.c.b16 %v2601, %v2600
  %v2623 = vpack.c.b16 %v2603, %v2602
  %v2624 = vpack.c.b16 %v2605, %v2604
  %v2625 = vpack.c.b16 %v2607, %v2606
  %v2626 = vpack.c.b16 %v2609, %v2608
  %v2627 = vpack.c.b16 %v2611, %v2610
  %2644 = vmatprep.subr.bf16.mxu0 0
  %2645 = vmatpush1.bf16.msra.mxu0 %v2612
  %2646 = vmatprep.subr.bf16.mxu0 0
  %2647 = vmatpush1.bf16.msra.mxu0 %v2613
  %2648 = vmatprep.subr.bf16.mxu0 0
  %2649 = vmatpush1.bf16.msra.mxu0 %v2614
  %2650 = vmatprep.subr.bf16.mxu0 0
  %2651 = vmatpush1.bf16.msra.mxu0 %v2615
  %2652 = vmatprep.subr.bf16.mxu0 0
  %2653 = vmatpush1.bf16.msra.mxu0 %v2616
  %2654 = vmatprep.subr.bf16.mxu0 0
  %2655 = vmatpush1.bf16.msra.mxu0 %v2617
  %2656 = vmatprep.subr.bf16.mxu0 0
  %2657 = vmatpush1.bf16.msra.mxu0 %v2618
  %2658 = vmatprep.subr.bf16.mxu0 0
  %2659 = vmatpush1.bf16.msra.mxu0 %v2619
  %2660 = vmatprep.subr.bf16.mxu0 0
  %2661 = vmatpush1.bf16.msra.mxu0 %v2620
  %2662 = vmatprep.subr.bf16.mxu0 0
  %2663 = vmatpush1.bf16.msra.mxu0 %v2621
  %2664 = vmatprep.subr.bf16.mxu0 0
  %2665 = vmatpush1.bf16.msra.mxu0 %v2622
  %2666 = vmatprep.subr.bf16.mxu0 0
  %2667 = vmatpush1.bf16.msra.mxu0 %v2623
  %2668 = vmatprep.subr.bf16.mxu0 0
  %2669 = vmatpush1.bf16.msra.mxu0 %v2624
  %2670 = vmatprep.subr.bf16.mxu0 0
  %2671 = vmatpush1.bf16.msra.mxu0 %v2625
  %2672 = vmatprep.subr.bf16.mxu0 0
  %2673 = vmatpush1.bf16.msra.mxu0 %v2626
  %2674 = vmatprep.subr.bf16.mxu0 0
  %2675 = vmatpush1.bf16.msra.mxu0 %v2627
  %2676 = vmatprep.mubr.bf16.mxu0 %v2501
  %2677 = vmatmul.mubr.bf16.gmra.mrb[0].mxu0 %v2500
  %v2678 = vpop.f32.mrb[0].mxu0
  %v2679 = vadd.f32 0.0, %v2678
  %v2680 = vpop.f32.mrb[0].mxu0
  %v2681 = vpop.f32.mrb[0].mxu0
  %v2682 = vadd.f32 0.0, %v2681
  %v2683 = vpop.f32.mrb[0].mxu0
  %2684 = vmatprep.mubr.bf16.mxu0 %v2503
  %2685 = vmatmul.mubr.bf16.gmra.mrb[0].mxu0 %v2502
  %v2686 = vpop.f32.mrb[0].mxu0
  %v2687 = vadd.f32 0.0, %v2686
  %v2688 = vpop.f32.mrb[0].mxu0
  %v2689 = vpop.f32.mrb[0].mxu0
  %v2690 = vadd.f32 0.0, %v2689
  %v2691 = vpop.f32.mrb[0].mxu0
  %2692 = vmatprep.mubr.bf16.mxu0 %v2505
  %2693 = vmatmul.mubr.bf16.gmra.mrb[0].mxu0 %v2504
  %v2694 = vpop.f32.mrb[0].mxu0
  %v2695 = vadd.f32 0.0, %v2694
  %v2696 = vpop.f32.mrb[0].mxu0
  %v2697 = vpop.f32.mrb[0].mxu0
  %v2698 = vadd.f32 0.0, %v2697
  %v2699 = vpop.f32.mrb[0].mxu0
  %2700 = vmatprep.mubr.bf16.mxu0 %v2507
  %2701 = vmatmul.mubr.bf16.gmra.mrb[0].mxu0 %v2506
  %v2702 = vpop.f32.mrb[0].mxu0
  %v2703 = vadd.f32 0.0, %v2702
  %v2704 = vpop.f32.mrb[0].mxu0
  %v2705 = vpop.f32.mrb[0].mxu0
  %v2706 = vadd.f32 0.0, %v2705
  %v2707 = vpop.f32.mrb[0].mxu0
  %2708 = vmatprep.mubr.bf16.mxu0 %v2509
  %2709 = vmatmul.mubr.bf16.gmra.mrb[0].mxu0 %v2508
  %v2710 = vpop.f32.mrb[0].mxu0
  %v2711 = vadd.f32 0.0, %v2710
  %v2712 = vpop.f32.mrb[0].mxu0
  %v2713 = vpop.f32.mrb[0].mxu0
  %v2714 = vadd.f32 0.0, %v2713
  %v2715 = vpop.f32.mrb[0].mxu0
  %2716 = vmatprep.mubr.bf16.mxu0 %v2511
  %2717 = vmatmul.mubr.bf16.gmra.mrb[0].mxu0 %v2510
  %v2718 = vpop.f32.mrb[0].mxu0
  %v2719 = vadd.f32 0.0, %v2718
  %v2720 = vpop.f32.mrb[0].mxu0
  %v2721 = vpop.f32.mrb[0].mxu0
  %v2722 = vadd.f32 0.0, %v2721
  %v2723 = vpop.f32.mrb[0].mxu0
  %2724 = vmatprep.mubr.bf16.mxu0 %v2513
  %2725 = vmatmul.mubr.bf16.gmra.mrb[0].mxu0 %v2512
  %v2726 = vpop.f32.mrb[0].mxu0
  %v2727 = vadd.f32 0.0, %v2726
  %v2728 = vpop.f32.mrb[0].mxu0
  %v2729 = vpop.f32.mrb[0].mxu0
  %v2730 = vadd.f32 0.0, %v2729
  %v2731 = vpop.f32.mrb[0].mxu0
  %2732 = vmatprep.mubr.bf16.mxu0 %v2515
  %2733 = vmatmul.mubr.bf16.gmra.mrb[0].mxu0 %v2514
  %v2734 = vpop.f32.mrb[0].mxu0
  %v2735 = vadd.f32 0.0, %v2734
  %v2736 = vpop.f32.mrb[0].mxu0
  %v2737 = vpop.f32.mrb[0].mxu0
  %v2738 = vadd.f32 0.0, %v2737
  %v2739 = vpop.f32.mrb[0].mxu0
  %2740 = vdwg.mxu0
  %v2741 = vadd.f32 %v2307, %v2679
  %v2742 = vadd.f32 %v2308, %v2682
  %v2743 = vadd.f32 %v2309, %v2687
  %v2744 = vadd.f32 %v2310, %v2690
  %v2745 = vadd.f32 %v2311, %v2695
  %v2746 = vadd.f32 %v2312, %v2698
  %v2747 = vadd.f32 %v2313, %v2703
  %v2748 = vadd.f32 %v2314, %v2706
  %v2749 = vadd.f32 %v2315, %v2711
  %v2750 = vadd.f32 %v2316, %v2714
  %v2751 = vadd.f32 %v2317, %v2719
  %v2752 = vadd.f32 %v2318, %v2722
  %v2753 = vadd.f32 %v2319, %v2727
  %v2754 = vadd.f32 %v2320, %v2730
  %v2755 = vadd.f32 %v2321, %v2735
  %v2756 = vadd.f32 %v2322, %v2738
  %v2757 = vld [vmem:[%s3 + $0x140] sm:$0xf]
  %v2758 = vld [vmem:[%s3 + $0x144] sm:$0xf]
  %v2759 = vld [vmem:[%s3 + $0x148] sm:$0xf]
  %v2760 = vld [vmem:[%s3 + $0x14c] sm:$0xf]
  %v2761 = vld [vmem:[%s3 + $0x150] sm:$0xf]
  %v2762 = vld [vmem:[%s3 + $0x154] sm:$0xf]
  %v2763 = vld [vmem:[%s3 + $0x158] sm:$0xf]
  %v2764 = vld [vmem:[%s3 + $0x15c] sm:$0xf]
  %v2765 = vld [vmem:[%s3 + $0x160] sm:$0xf]
  %v2766 = vld [vmem:[%s3 + $0x164] sm:$0xf]
  %v2767 = vld [vmem:[%s3 + $0x168] sm:$0xf]
  %v2768 = vld [vmem:[%s3 + $0x16c] sm:$0xf]
  %v2769 = vld [vmem:[%s3 + $0x170] sm:$0xf]
  %v2770 = vld [vmem:[%s3 + $0x174] sm:$0xf]
  %v2771 = vld [vmem:[%s3 + $0x178] sm:$0xf]
  %v2772 = vld [vmem:[%s3 + $0x17c] sm:$0xf]
  %v2789 = vunpack.c.l.b16 %v2757
  %v2790 = vunpack.c.l.b16 %v2758
  %v2791 = vunpack.c.l.b16 %v2759
  %v2792 = vunpack.c.l.b16 %v2760
  %v2793 = vunpack.c.l.b16 %v2761
  %v2794 = vunpack.c.l.b16 %v2762
  %v2795 = vunpack.c.l.b16 %v2763
  %v2796 = vunpack.c.l.b16 %v2764
  %v2797 = vunpack.c.l.b16 %v2765
  %v2798 = vunpack.c.l.b16 %v2766
  %v2799 = vunpack.c.l.b16 %v2767
  %v2800 = vunpack.c.l.b16 %v2768
  %v2801 = vunpack.c.l.b16 %v2769
  %v2802 = vunpack.c.l.b16 %v2770
  %v2803 = vunpack.c.l.b16 %v2771
  %v2804 = vunpack.c.l.b16 %v2772
  %v2805 = vpack.c.b16 %v2790, %v2789
  %v2806 = vpack.c.b16 %v2792, %v2791
  %v2807 = vpack.c.b16 %v2794, %v2793
  %v2808 = vpack.c.b16 %v2796, %v2795
  %v2809 = vpack.c.b16 %v2798, %v2797
  %v2810 = vpack.c.b16 %v2800, %v2799
  %v2811 = vpack.c.b16 %v2802, %v2801
  %v2812 = vpack.c.b16 %v2804, %v2803
  %2821 = vmatprep.subr.bf16.mxu0 %v564
  %2822 = vmatpush1.bf16.msra.mxu0 %v563
  %2823 = vmatprep.subr.bf16.mxu0 %v566
  %2824 = vmatpush1.bf16.msra.mxu0 %v565
  %2825 = vmatprep.subr.bf16.mxu0 %v568
  %2826 = vmatpush1.bf16.msra.mxu0 %v567
  %2827 = vmatprep.subr.bf16.mxu0 %v570
  %2828 = vmatpush1.bf16.msra.mxu0 %v569
  %2829 = vmatprep.subr.bf16.mxu0 %v572
  %2830 = vmatpush1.bf16.msra.mxu0 %v571
  %2831 = vmatprep.subr.bf16.mxu0 %v574
  %2832 = vmatpush1.bf16.msra.mxu0 %v573
  %2833 = vmatprep.subr.bf16.mxu0 %v576
  %2834 = vmatpush1.bf16.msra.mxu0 %v575
  %2835 = vmatprep.subr.bf16.mxu0 %v578
  %2836 = vmatpush1.bf16.msra.mxu0 %v577
  %2837 = vmatprep.subr.bf16.mxu0 0
  %2838 = vmatpush1.bf16.msra.mxu0 0
  %2839 = vmatprep.subr.bf16.mxu0 0
  %2840 = vmatpush1.bf16.msra.mxu0 0
  %2841 = vmatprep.subr.bf16.mxu0 0
  %2842 = vmatpush1.bf16.msra.mxu0 0
  %2843 = vmatprep.subr.bf16.mxu0 0
  %2844 = vmatpush1.bf16.msra.mxu0 0
  %2845 = vmatprep.subr.bf16.mxu0 0
  %2846 = vmatpush1.bf16.msra.mxu0 0
  %2847 = vmatprep.subr.bf16.mxu0 0
  %2848 = vmatpush1.bf16.msra.mxu0 0
  %2849 = vmatprep.subr.bf16.mxu0 0
  %2850 = vmatpush1.bf16.msra.mxu0 0
  %2851 = vmatprep.subr.bf16.mxu0 0
  %2852 = vmatpush1.bf16.msra.mxu0 0
  %2853 = vmatprep.mubr.bf16.mxu0 0
  %2854 = vmatmul.mubr.bf16.gmra.mrb[0].mxu0 %v2805
  %v2855 = vpop.f32.mrb[0].mxu0
  %v2856 = vadd.f32 0.0, %v2855
  %v2857 = vpop.f32.mrb[0].mxu0
  %v2858 = vadd.f32 0.0, %v2857
  %v2859 = vpop.f32.mrb[0].mxu0
  %v2860 = vadd.f32 0.0, %v2859
  %v2861 = vpop.f32.mrb[0].mxu0
  %v2862 = vadd.f32 0.0, %v2861
  %2863 = vmatprep.mubr.bf16.mxu0 0
  %2864 = vmatmul.mubr.bf16.gmra.mrb[0].mxu0 %v2806
  %v2865 = vpop.f32.mrb[0].mxu0
  %v2866 = vadd.f32 0.0, %v2865
  %v2867 = vpop.f32.mrb[0].mxu0
  %v2868 = vadd.f32 0.0, %v2867
  %v2869 = vpop.f32.mrb[0].mxu0
  %v2870 = vadd.f32 0.0, %v2869
  %v2871 = vpop.f32.mrb[0].mxu0
  %v2872 = vadd.f32 0.0, %v2871
  %2873 = vmatprep.mubr.bf16.mxu0 0
  %2874 = vmatmul.mubr.bf16.gmra.mrb[0].mxu0 %v2807
  %v2875 = vpop.f32.mrb[0].mxu0
  %v2876 = vadd.f32 0.0, %v2875
  %v2877 = vpop.f32.mrb[0].mxu0
  %v2878 = vadd.f32 0.0, %v2877
  %v2879 = vpop.f32.mrb[0].mxu0
  %v2880 = vadd.f32 0.0, %v2879
  %v2881 = vpop.f32.mrb[0].mxu0
  %v2882 = vadd.f32 0.0, %v2881
  %2883 = vmatprep.mubr.bf16.mxu0 0
  %2884 = vmatmul.mubr.bf16.gmra.mrb[0].mxu0 %v2808
  %v2885 = vpop.f32.mrb[0].mxu0
  %v2886 = vadd.f32 0.0, %v2885
  %v2887 = vpop.f32.mrb[0].mxu0
  %v2888 = vadd.f32 0.0, %v2887
  %v2889 = vpop.f32.mrb[0].mxu0
  %v2890 = vadd.f32 0.0, %v2889
  %v2891 = vpop.f32.mrb[0].mxu0
  %v2892 = vadd.f32 0.0, %v2891
  %2893 = vmatprep.mubr.bf16.mxu0 0
  %2894 = vmatmul.mubr.bf16.gmra.mrb[0].mxu0 %v2809
  %v2895 = vpop.f32.mrb[0].mxu0
  %v2896 = vadd.f32 0.0, %v2895
  %v2897 = vpop.f32.mrb[0].mxu0
  %v2898 = vadd.f32 0.0, %v2897
  %v2899 = vpop.f32.mrb[0].mxu0
  %v2900 = vadd.f32 0.0, %v2899
  %v2901 = vpop.f32.mrb[0].mxu0
  %v2902 = vadd.f32 0.0, %v2901
  %2903 = vmatprep.mubr.bf16.mxu0 0
  %2904 = vmatmul.mubr.bf16.gmra.mrb[0].mxu0 %v2810
  %v2905 = vpop.f32.mrb[0].mxu0
  %v2906 = vadd.f32 0.0, %v2905
  %v2907 = vpop.f32.mrb[0].mxu0
  %v2908 = vadd.f32 0.0, %v2907
  %v2909 = vpop.f32.mrb[0].mxu0
  %v2910 = vadd.f32 0.0, %v2909
  %v2911 = vpop.f32.mrb[0].mxu0
  %v2912 = vadd.f32 0.0, %v2911
  %2913 = vmatprep.mubr.bf16.mxu0 0
  %2914 = vmatmul.mubr.bf16.gmra.mrb[0].mxu0 %v2811
  %v2915 = vpop.f32.mrb[0].mxu0
  %v2916 = vadd.f32 0.0, %v2915
  %v2917 = vpop.f32.mrb[0].mxu0
  %v2918 = vadd.f32 0.0, %v2917
  %v2919 = vpop.f32.mrb[0].mxu0
  %v2920 = vadd.f32 0.0, %v2919
  %v2921 = vpop.f32.mrb[0].mxu0
  %v2922 = vadd.f32 0.0, %v2921
  %2923 = vmatprep.mubr.bf16.mxu0 0
  %2924 = vmatmul.mubr.bf16.gmra.mrb[0].mxu0 %v2812
  %v2925 = vpop.f32.mrb[0].mxu0
  %v2926 = vadd.f32 0.0, %v2925
  %v2927 = vpop.f32.mrb[0].mxu0
  %v2928 = vadd.f32 0.0, %v2927
  %v2929 = vpop.f32.mrb[0].mxu0
  %v2930 = vadd.f32 0.0, %v2929
  %v2931 = vpop.f32.mrb[0].mxu0
  %v2932 = vadd.f32 0.0, %v2931
  %2933 = vdwg.mxu0
  %v2934 = vpack.c.bf16 %v2860, %v2856
  %v2935 = vpack.c.bf16 %v2862, %v2858
  %v2936 = vpack.c.bf16 %v2870, %v2866
  %v2937 = vpack.c.bf16 %v2872, %v2868
  %v2938 = vpack.c.bf16 %v2880, %v2876
  %v2939 = vpack.c.bf16 %v2882, %v2878
  %v2940 = vpack.c.bf16 %v2890, %v2886
  %v2941 = vpack.c.bf16 %v2892, %v2888
  %v2942 = vpack.c.bf16 %v2900, %v2896
  %v2943 = vpack.c.bf16 %v2902, %v2898
  %v2944 = vpack.c.bf16 %v2910, %v2906
  %v2945 = vpack.c.bf16 %v2912, %v2908
  %v2946 = vpack.c.bf16 %v2920, %v2916
  %v2947 = vpack.c.bf16 %v2922, %v2918
  %v2948 = vpack.c.bf16 %v2930, %v2926
  %v2949 = vpack.c.bf16 %v2932, %v2928
  %v2950 = vld [vmem:[%s4 + $0x280] sm:$0xf]
  %v2951 = vld [vmem:[%s4 + $0x284] sm:$0xf]
  %v2952 = vld [vmem:[%s4 + $0x288] sm:$0xf]
  %v2953 = vld [vmem:[%s4 + $0x28c] sm:$0xf]
  %v2954 = vld [vmem:[%s4 + $0x290] sm:$0xf]
  %v2955 = vld [vmem:[%s4 + $0x294] sm:$0xf]
  %v2956 = vld [vmem:[%s4 + $0x298] sm:$0xf]
  %v2957 = vld [vmem:[%s4 + $0x29c] sm:$0xf]
  %v2958 = vld [vmem:[%s4 + $0x2a0] sm:$0xf]
  %v2959 = vld [vmem:[%s4 + $0x2a4] sm:$0xf]
  %v2960 = vld [vmem:[%s4 + $0x2a8] sm:$0xf]
  %v2961 = vld [vmem:[%s4 + $0x2ac] sm:$0xf]
  %v2962 = vld [vmem:[%s4 + $0x2b0] sm:$0xf]
  %v2963 = vld [vmem:[%s4 + $0x2b4] sm:$0xf]
  %v2964 = vld [vmem:[%s4 + $0x2b8] sm:$0xf]
  %v2965 = vld [vmem:[%s4 + $0x2bc] sm:$0xf]
  %v2966 = vld [vmem:[%s4 + $0x2c0] sm:$0xf]
  %v2967 = vld [vmem:[%s4 + $0x2c4] sm:$0xf]
  %v2968 = vld [vmem:[%s4 + $0x2c8] sm:$0xf]
  %v2969 = vld [vmem:[%s4 + $0x2cc] sm:$0xf]
  %v2970 = vld [vmem:[%s4 + $0x2d0] sm:$0xf]
  %v2971 = vld [vmem:[%s4 + $0x2d4] sm:$0xf]
  %v2972 = vld [vmem:[%s4 + $0x2d8] sm:$0xf]
  %v2973 = vld [vmem:[%s4 + $0x2dc] sm:$0xf]
  %v2974 = vld [vmem:[%s4 + $0x2e0] sm:$0xf]
  %v2975 = vld [vmem:[%s4 + $0x2e4] sm:$0xf]
  %v2976 = vld [vmem:[%s4 + $0x2e8] sm:$0xf]
  %v2977 = vld [vmem:[%s4 + $0x2ec] sm:$0xf]
  %v2978 = vld [vmem:[%s4 + $0x2f0] sm:$0xf]
  %v2979 = vld [vmem:[%s4 + $0x2f4] sm:$0xf]
  %v2980 = vld [vmem:[%s4 + $0x2f8] sm:$0xf]
  %v2981 = vld [vmem:[%s4 + $0x2fc] sm:$0xf]
  %v3014 = vunpack.c.l.b16 %v2950
  %v3015 = vunpack.c.l.b16 %v2951
  %v3016 = vunpack.c.l.b16 %v2952
  %v3017 = vunpack.c.l.b16 %v2953
  %v3018 = vunpack.c.l.b16 %v2954
  %v3019 = vunpack.c.l.b16 %v2955
  %v3020 = vunpack.c.l.b16 %v2956
  %v3021 = vunpack.c.l.b16 %v2957
  %v3022 = vunpack.c.l.b16 %v2958
  %v3023 = vunpack.c.l.b16 %v2959
  %v3024 = vunpack.c.l.b16 %v2960
  %v3025 = vunpack.c.l.b16 %v2961
  %v3026 = vunpack.c.l.b16 %v2962
  %v3027 = vunpack.c.l.b16 %v2963
  %v3028 = vunpack.c.l.b16 %v2964
  %v3029 = vunpack.c.l.b16 %v2965
  %v3030 = vunpack.c.l.b16 %v2966
  %v3031 = vunpack.c.l.b16 %v2967
  %v3032 = vunpack.c.l.b16 %v2968
  %v3033 = vunpack.c.l.b16 %v2969
  %v3034 = vunpack.c.l.b16 %v2970
  %v3035 = vunpack.c.l.b16 %v2971
  %v3036 = vunpack.c.l.b16 %v2972
  %v3037 = vunpack.c.l.b16 %v2973
  %v3038 = vunpack.c.l.b16 %v2974
  %v3039 = vunpack.c.l.b16 %v2975
  %v3040 = vunpack.c.l.b16 %v2976
  %v3041 = vunpack.c.l.b16 %v2977
  %v3042 = vunpack.c.l.b16 %v2978
  %v3043 = vunpack.c.l.b16 %v2979
  %v3044 = vunpack.c.l.b16 %v2980
  %v3045 = vunpack.c.l.b16 %v2981
  %v3046 = vpack.c.b16 %v3015, %v3014
  %v3047 = vpack.c.b16 %v3017, %v3016
  %v3048 = vpack.c.b16 %v3019, %v3018
  %v3049 = vpack.c.b16 %v3021, %v3020
  %v3050 = vpack.c.b16 %v3023, %v3022
  %v3051 = vpack.c.b16 %v3025, %v3024
  %v3052 = vpack.c.b16 %v3027, %v3026
  %v3053 = vpack.c.b16 %v3029, %v3028
  %v3054 = vpack.c.b16 %v3031, %v3030
  %v3055 = vpack.c.b16 %v3033, %v3032
  %v3056 = vpack.c.b16 %v3035, %v3034
  %v3057 = vpack.c.b16 %v3037, %v3036
  %v3058 = vpack.c.b16 %v3039, %v3038
  %v3059 = vpack.c.b16 %v3041, %v3040
  %v3060 = vpack.c.b16 %v3043, %v3042
  %v3061 = vpack.c.b16 %v3045, %v3044
  %3078 = vmatprep.subr.bf16.mxu0 0
  %3079 = vmatpush1.bf16.msra.mxu0 %v3046
  %3080 = vmatprep.subr.bf16.mxu0 0
  %3081 = vmatpush1.bf16.msra.mxu0 %v3047
  %3082 = vmatprep.subr.bf16.mxu0 0
  %3083 = vmatpush1.bf16.msra.mxu0 %v3048
  %3084 = vmatprep.subr.bf16.mxu0 0
  %3085 = vmatpush1.bf16.msra.mxu0 %v3049
  %3086 = vmatprep.subr.bf16.mxu0 0
  %3087 = vmatpush1.bf16.msra.mxu0 %v3050
  %3088 = vmatprep.subr.bf16.mxu0 0
  %3089 = vmatpush1.bf16.msra.mxu0 %v3051
  %3090 = vmatprep.subr.bf16.mxu0 0
  %3091 = vmatpush1.bf16.msra.mxu0 %v3052
  %3092 = vmatprep.subr.bf16.mxu0 0
  %3093 = vmatpush1.bf16.msra.mxu0 %v3053
  %3094 = vmatprep.subr.bf16.mxu0 0
  %3095 = vmatpush1.bf16.msra.mxu0 %v3054
  %3096 = vmatprep.subr.bf16.mxu0 0
  %3097 = vmatpush1.bf16.msra.mxu0 %v3055
  %3098 = vmatprep.subr.bf16.mxu0 0
  %3099 = vmatpush1.bf16.msra.mxu0 %v3056
  %3100 = vmatprep.subr.bf16.mxu0 0
  %3101 = vmatpush1.bf16.msra.mxu0 %v3057
  %3102 = vmatprep.subr.bf16.mxu0 0
  %3103 = vmatpush1.bf16.msra.mxu0 %v3058
  %3104 = vmatprep.subr.bf16.mxu0 0
  %3105 = vmatpush1.bf16.msra.mxu0 %v3059
  %3106 = vmatprep.subr.bf16.mxu0 0
  %3107 = vmatpush1.bf16.msra.mxu0 %v3060
  %3108 = vmatprep.subr.bf16.mxu0 0
  %3109 = vmatpush1.bf16.msra.mxu0 %v3061
  %3110 = vmatprep.mubr.bf16.mxu0 %v2935
  %3111 = vmatmul.mubr.bf16.gmra.mrb[0].mxu0 %v2934
  %v3112 = vpop.f32.mrb[0].mxu0
  %v3113 = vadd.f32 0.0, %v3112
  %v3114 = vpop.f32.mrb[0].mxu0
  %v3115 = vpop.f32.mrb[0].mxu0
  %v3116 = vadd.f32 0.0, %v3115
  %v3117 = vpop.f32.mrb[0].mxu0
  %3118 = vmatprep.mubr.bf16.mxu0 %v2937
  %3119 = vmatmul.mubr.bf16.gmra.mrb[0].mxu0 %v2936
  %v3120 = vpop.f32.mrb[0].mxu0
  %v3121 = vadd.f32 0.0, %v3120
  %v3122 = vpop.f32.mrb[0].mxu0
  %v3123 = vpop.f32.mrb[0].mxu0
  %v3124 = vadd.f32 0.0, %v3123
  %v3125 = vpop.f32.mrb[0].mxu0
  %3126 = vmatprep.mubr.bf16.mxu0 %v2939
  %3127 = vmatmul.mubr.bf16.gmra.mrb[0].mxu0 %v2938
  %v3128 = vpop.f32.mrb[0].mxu0
  %v3129 = vadd.f32 0.0, %v3128
  %v3130 = vpop.f32.mrb[0].mxu0
  %v3131 = vpop.f32.mrb[0].mxu0
  %v3132 = vadd.f32 0.0, %v3131
  %v3133 = vpop.f32.mrb[0].mxu0
  %3134 = vmatprep.mubr.bf16.mxu0 %v2941
  %3135 = vmatmul.mubr.bf16.gmra.mrb[0].mxu0 %v2940
  %v3136 = vpop.f32.mrb[0].mxu0
  %v3137 = vadd.f32 0.0, %v3136
  %v3138 = vpop.f32.mrb[0].mxu0
  %v3139 = vpop.f32.mrb[0].mxu0
  %v3140 = vadd.f32 0.0, %v3139
  %v3141 = vpop.f32.mrb[0].mxu0
  %3142 = vmatprep.mubr.bf16.mxu0 %v2943
  %3143 = vmatmul.mubr.bf16.gmra.mrb[0].mxu0 %v2942
  %v3144 = vpop.f32.mrb[0].mxu0
  %v3145 = vadd.f32 0.0, %v3144
  %v3146 = vpop.f32.mrb[0].mxu0
  %v3147 = vpop.f32.mrb[0].mxu0
  %v3148 = vadd.f32 0.0, %v3147
  %v3149 = vpop.f32.mrb[0].mxu0
  %3150 = vmatprep.mubr.bf16.mxu0 %v2945
  %3151 = vmatmul.mubr.bf16.gmra.mrb[0].mxu0 %v2944
  %v3152 = vpop.f32.mrb[0].mxu0
  %v3153 = vadd.f32 0.0, %v3152
  %v3154 = vpop.f32.mrb[0].mxu0
  %v3155 = vpop.f32.mrb[0].mxu0
  %v3156 = vadd.f32 0.0, %v3155
  %v3157 = vpop.f32.mrb[0].mxu0
  %3158 = vmatprep.mubr.bf16.mxu0 %v2947
  %3159 = vmatmul.mubr.bf16.gmra.mrb[0].mxu0 %v2946
  %v3160 = vpop.f32.mrb[0].mxu0
  %v3161 = vadd.f32 0.0, %v3160
  %v3162 = vpop.f32.mrb[0].mxu0
  %v3163 = vpop.f32.mrb[0].mxu0
  %v3164 = vadd.f32 0.0, %v3163
  %v3165 = vpop.f32.mrb[0].mxu0
  %3166 = vmatprep.mubr.bf16.mxu0 %v2949
  %3167 = vmatmul.mubr.bf16.gmra.mrb[0].mxu0 %v2948
  %v3168 = vpop.f32.mrb[0].mxu0
  %v3169 = vadd.f32 0.0, %v3168
  %v3170 = vpop.f32.mrb[0].mxu0
  %v3171 = vpop.f32.mrb[0].mxu0
  %v3172 = vadd.f32 0.0, %v3171
  %v3173 = vpop.f32.mrb[0].mxu0
  %3174 = vdwg.mxu0
  %v3175 = vadd.f32 %v2741, %v3113
  %v3176 = vadd.f32 %v2742, %v3116
  %v3177 = vadd.f32 %v2743, %v3121
  %v3178 = vadd.f32 %v2744, %v3124
  %v3179 = vadd.f32 %v2745, %v3129
  %v3180 = vadd.f32 %v2746, %v3132
  %v3181 = vadd.f32 %v2747, %v3137
  %v3182 = vadd.f32 %v2748, %v3140
  %v3183 = vadd.f32 %v2749, %v3145
  %v3184 = vadd.f32 %v2750, %v3148
  %v3185 = vadd.f32 %v2751, %v3153
  %v3186 = vadd.f32 %v2752, %v3156
  %v3187 = vadd.f32 %v2753, %v3161
  %v3188 = vadd.f32 %v2754, %v3164
  %v3189 = vadd.f32 %v2755, %v3169
  %v3190 = vadd.f32 %v2756, %v3172
  %v3191 = vld [vmem:[%s3 + $0x180] sm:$0xf]
  %v3192 = vld [vmem:[%s3 + $0x184] sm:$0xf]
  %v3193 = vld [vmem:[%s3 + $0x188] sm:$0xf]
  %v3194 = vld [vmem:[%s3 + $0x18c] sm:$0xf]
  %v3195 = vld [vmem:[%s3 + $0x190] sm:$0xf]
  %v3196 = vld [vmem:[%s3 + $0x194] sm:$0xf]
  %v3197 = vld [vmem:[%s3 + $0x198] sm:$0xf]
  %v3198 = vld [vmem:[%s3 + $0x19c] sm:$0xf]
  %v3199 = vld [vmem:[%s3 + $0x1a0] sm:$0xf]
  %v3200 = vld [vmem:[%s3 + $0x1a4] sm:$0xf]
  %v3201 = vld [vmem:[%s3 + $0x1a8] sm:$0xf]
  %v3202 = vld [vmem:[%s3 + $0x1ac] sm:$0xf]
  %v3203 = vld [vmem:[%s3 + $0x1b0] sm:$0xf]
  %v3204 = vld [vmem:[%s3 + $0x1b4] sm:$0xf]
  %v3205 = vld [vmem:[%s3 + $0x1b8] sm:$0xf]
  %v3206 = vld [vmem:[%s3 + $0x1bc] sm:$0xf]
  %v3223 = vunpack.c.l.b16 %v3191
  %v3224 = vunpack.c.l.b16 %v3192
  %v3225 = vunpack.c.l.b16 %v3193
  %v3226 = vunpack.c.l.b16 %v3194
  %v3227 = vunpack.c.l.b16 %v3195
  %v3228 = vunpack.c.l.b16 %v3196
  %v3229 = vunpack.c.l.b16 %v3197
  %v3230 = vunpack.c.l.b16 %v3198
  %v3231 = vunpack.c.l.b16 %v3199
  %v3232 = vunpack.c.l.b16 %v3200
  %v3233 = vunpack.c.l.b16 %v3201
  %v3234 = vunpack.c.l.b16 %v3202
  %v3235 = vunpack.c.l.b16 %v3203
  %v3236 = vunpack.c.l.b16 %v3204
  %v3237 = vunpack.c.l.b16 %v3205
  %v3238 = vunpack.c.l.b16 %v3206
  %v3239 = vpack.c.b16 %v3224, %v3223
  %v3240 = vpack.c.b16 %v3226, %v3225
  %v3241 = vpack.c.b16 %v3228, %v3227
  %v3242 = vpack.c.b16 %v3230, %v3229
  %v3243 = vpack.c.b16 %v3232, %v3231
  %v3244 = vpack.c.b16 %v3234, %v3233
  %v3245 = vpack.c.b16 %v3236, %v3235
  %v3246 = vpack.c.b16 %v3238, %v3237
  %3255 = vmatprep.subr.bf16.mxu0 %v564
  %3256 = vmatpush1.bf16.msra.mxu0 %v563
  %3257 = vmatprep.subr.bf16.mxu0 %v566
  %3258 = vmatpush1.bf16.msra.mxu0 %v565
  %3259 = vmatprep.subr.bf16.mxu0 %v568
  %3260 = vmatpush1.bf16.msra.mxu0 %v567
  %3261 = vmatprep.subr.bf16.mxu0 %v570
  %3262 = vmatpush1.bf16.msra.mxu0 %v569
  %3263 = vmatprep.subr.bf16.mxu0 %v572
  %3264 = vmatpush1.bf16.msra.mxu0 %v571
  %3265 = vmatprep.subr.bf16.mxu0 %v574
  %3266 = vmatpush1.bf16.msra.mxu0 %v573
  %3267 = vmatprep.subr.bf16.mxu0 %v576
  %3268 = vmatpush1.bf16.msra.mxu0 %v575
  %3269 = vmatprep.subr.bf16.mxu0 %v578
  %3270 = vmatpush1.bf16.msra.mxu0 %v577
  %3271 = vmatprep.subr.bf16.mxu0 0
  %3272 = vmatpush1.bf16.msra.mxu0 0
  %3273 = vmatprep.subr.bf16.mxu0 0
  %3274 = vmatpush1.bf16.msra.mxu0 0
  %3275 = vmatprep.subr.bf16.mxu0 0
  %3276 = vmatpush1.bf16.msra.mxu0 0
  %3277 = vmatprep.subr.bf16.mxu0 0
  %3278 = vmatpush1.bf16.msra.mxu0 0
  %3279 = vmatprep.subr.bf16.mxu0 0
  %3280 = vmatpush1.bf16.msra.mxu0 0
  %3281 = vmatprep.subr.bf16.mxu0 0
  %3282 = vmatpush1.bf16.msra.mxu0 0
  %3283 = vmatprep.subr.bf16.mxu0 0
  %3284 = vmatpush1.bf16.msra.mxu0 0
  %3285 = vmatprep.subr.bf16.mxu0 0
  %3286 = vmatpush1.bf16.msra.mxu0 0
  %3287 = vmatprep.mubr.bf16.mxu0 0
  %3288 = vmatmul.mubr.bf16.gmra.mrb[0].mxu0 %v3239
  %v3289 = vpop.f32.mrb[0].mxu0
  %v3290 = vadd.f32 0.0, %v3289
  %v3291 = vpop.f32.mrb[0].mxu0
  %v3292 = vadd.f32 0.0, %v3291
  %v3293 = vpop.f32.mrb[0].mxu0
  %v3294 = vadd.f32 0.0, %v3293
  %v3295 = vpop.f32.mrb[0].mxu0
  %v3296 = vadd.f32 0.0, %v3295
  %3297 = vmatprep.mubr.bf16.mxu0 0
  %3298 = vmatmul.mubr.bf16.gmra.mrb[0].mxu0 %v3240
  %v3299 = vpop.f32.mrb[0].mxu0
  %v3300 = vadd.f32 0.0, %v3299
  %v3301 = vpop.f32.mrb[0].mxu0
  %v3302 = vadd.f32 0.0, %v3301
  %v3303 = vpop.f32.mrb[0].mxu0
  %v3304 = vadd.f32 0.0, %v3303
  %v3305 = vpop.f32.mrb[0].mxu0
  %v3306 = vadd.f32 0.0, %v3305
  %3307 = vmatprep.mubr.bf16.mxu0 0
  %3308 = vmatmul.mubr.bf16.gmra.mrb[0].mxu0 %v3241
  %v3309 = vpop.f32.mrb[0].mxu0
  %v3310 = vadd.f32 0.0, %v3309
  %v3311 = vpop.f32.mrb[0].mxu0
  %v3312 = vadd.f32 0.0, %v3311
  %v3313 = vpop.f32.mrb[0].mxu0
  %v3314 = vadd.f32 0.0, %v3313
  %v3315 = vpop.f32.mrb[0].mxu0
  %v3316 = vadd.f32 0.0, %v3315
  %3317 = vmatprep.mubr.bf16.mxu0 0
  %3318 = vmatmul.mubr.bf16.gmra.mrb[0].mxu0 %v3242
  %v3319 = vpop.f32.mrb[0].mxu0
  %v3320 = vadd.f32 0.0, %v3319
  %v3321 = vpop.f32.mrb[0].mxu0
  %v3322 = vadd.f32 0.0, %v3321
  %v3323 = vpop.f32.mrb[0].mxu0
  %v3324 = vadd.f32 0.0, %v3323
  %v3325 = vpop.f32.mrb[0].mxu0
  %v3326 = vadd.f32 0.0, %v3325
  %3327 = vmatprep.mubr.bf16.mxu0 0
  %3328 = vmatmul.mubr.bf16.gmra.mrb[0].mxu0 %v3243
  %v3329 = vpop.f32.mrb[0].mxu0
  %v3330 = vadd.f32 0.0, %v3329
  %v3331 = vpop.f32.mrb[0].mxu0
  %v3332 = vadd.f32 0.0, %v3331
  %v3333 = vpop.f32.mrb[0].mxu0
  %v3334 = vadd.f32 0.0, %v3333
  %v3335 = vpop.f32.mrb[0].mxu0
  %v3336 = vadd.f32 0.0, %v3335
  %3337 = vmatprep.mubr.bf16.mxu0 0
  %3338 = vmatmul.mubr.bf16.gmra.mrb[0].mxu0 %v3244
  %v3339 = vpop.f32.mrb[0].mxu0
  %v3340 = vadd.f32 0.0, %v3339
  %v3341 = vpop.f32.mrb[0].mxu0
  %v3342 = vadd.f32 0.0, %v3341
  %v3343 = vpop.f32.mrb[0].mxu0
  %v3344 = vadd.f32 0.0, %v3343
  %v3345 = vpop.f32.mrb[0].mxu0
  %v3346 = vadd.f32 0.0, %v3345
  %3347 = vmatprep.mubr.bf16.mxu0 0
  %3348 = vmatmul.mubr.bf16.gmra.mrb[0].mxu0 %v3245
  %v3349 = vpop.f32.mrb[0].mxu0
  %v3350 = vadd.f32 0.0, %v3349
  %v3351 = vpop.f32.mrb[0].mxu0
  %v3352 = vadd.f32 0.0, %v3351
  %v3353 = vpop.f32.mrb[0].mxu0
  %v3354 = vadd.f32 0.0, %v3353
  %v3355 = vpop.f32.mrb[0].mxu0
  %v3356 = vadd.f32 0.0, %v3355
  %3357 = vmatprep.mubr.bf16.mxu0 0
  %3358 = vmatmul.mubr.bf16.gmra.mrb[0].mxu0 %v3246
  %v3359 = vpop.f32.mrb[0].mxu0
  %v3360 = vadd.f32 0.0, %v3359
  %v3361 = vpop.f32.mrb[0].mxu0
  %v3362 = vadd.f32 0.0, %v3361
  %v3363 = vpop.f32.mrb[0].mxu0
  %v3364 = vadd.f32 0.0, %v3363
  %v3365 = vpop.f32.mrb[0].mxu0
  %v3366 = vadd.f32 0.0, %v3365
  %3367 = vdwg.mxu0
  %v3368 = vpack.c.bf16 %v3294, %v3290
  %v3369 = vpack.c.bf16 %v3296, %v3292
  %v3370 = vpack.c.bf16 %v3304, %v3300
  %v3371 = vpack.c.bf16 %v3306, %v3302
  %v3372 = vpack.c.bf16 %v3314, %v3310
  %v3373 = vpack.c.bf16 %v3316, %v3312
  %v3374 = vpack.c.bf16 %v3324, %v3320
  %v3375 = vpack.c.bf16 %v3326, %v3322
  %v3376 = vpack.c.bf16 %v3334, %v3330
  %v3377 = vpack.c.bf16 %v3336, %v3332
  %v3378 = vpack.c.bf16 %v3344, %v3340
  %v3379 = vpack.c.bf16 %v3346, %v3342
  %v3380 = vpack.c.bf16 %v3354, %v3350
  %v3381 = vpack.c.bf16 %v3356, %v3352
  %v3382 = vpack.c.bf16 %v3364, %v3360
  %v3383 = vpack.c.bf16 %v3366, %v3362
  %v3384 = vld [vmem:[%s4 + $0x300] sm:$0xf]
  %v3385 = vld [vmem:[%s4 + $0x304] sm:$0xf]
  %v3386 = vld [vmem:[%s4 + $0x308] sm:$0xf]
  %v3387 = vld [vmem:[%s4 + $0x30c] sm:$0xf]
  %v3388 = vld [vmem:[%s4 + $0x310] sm:$0xf]
  %v3389 = vld [vmem:[%s4 + $0x314] sm:$0xf]
  %v3390 = vld [vmem:[%s4 + $0x318] sm:$0xf]
  %v3391 = vld [vmem:[%s4 + $0x31c] sm:$0xf]
  %v3392 = vld [vmem:[%s4 + $0x320] sm:$0xf]
  %v3393 = vld [vmem:[%s4 + $0x324] sm:$0xf]
  %v3394 = vld [vmem:[%s4 + $0x328] sm:$0xf]
  %v3395 = vld [vmem:[%s4 + $0x32c] sm:$0xf]
  %v3396 = vld [vmem:[%s4 + $0x330] sm:$0xf]
  %v3397 = vld [vmem:[%s4 + $0x334] sm:$0xf]
  %v3398 = vld [vmem:[%s4 + $0x338] sm:$0xf]
  %v3399 = vld [vmem:[%s4 + $0x33c] sm:$0xf]
  %v3400 = vld [vmem:[%s4 + $0x340] sm:$0xf]
  %v3401 = vld [vmem:[%s4 + $0x344] sm:$0xf]
  %v3402 = vld [vmem:[%s4 + $0x348] sm:$0xf]
  %v3403 = vld [vmem:[%s4 + $0x34c] sm:$0xf]
  %v3404 = vld [vmem:[%s4 + $0x350] sm:$0xf]
  %v3405 = vld [vmem:[%s4 + $0x354] sm:$0xf]
  %v3406 = vld [vmem:[%s4 + $0x358] sm:$0xf]
  %v3407 = vld [vmem:[%s4 + $0x35c] sm:$0xf]
  %v3408 = vld [vmem:[%s4 + $0x360] sm:$0xf]
  %v3409 = vld [vmem:[%s4 + $0x364] sm:$0xf]
  %v3410 = vld [vmem:[%s4 + $0x368] sm:$0xf]
  %v3411 = vld [vmem:[%s4 + $0x36c] sm:$0xf]
  %v3412 = vld [vmem:[%s4 + $0x370] sm:$0xf]
  %v3413 = vld [vmem:[%s4 + $0x374] sm:$0xf]
  %v3414 = vld [vmem:[%s4 + $0x378] sm:$0xf]
  %v3415 = vld [vmem:[%s4 + $0x37c] sm:$0xf]
  %v3448 = vunpack.c.l.b16 %v3384
  %v3449 = vunpack.c.l.b16 %v3385
  %v3450 = vunpack.c.l.b16 %v3386
  %v3451 = vunpack.c.l.b16 %v3387
  %v3452 = vunpack.c.l.b16 %v3388
  %v3453 = vunpack.c.l.b16 %v3389
  %v3454 = vunpack.c.l.b16 %v3390
  %v3455 = vunpack.c.l.b16 %v3391
  %v3456 = vunpack.c.l.b16 %v3392
  %v3457 = vunpack.c.l.b16 %v3393
  %v3458 = vunpack.c.l.b16 %v3394
  %v3459 = vunpack.c.l.b16 %v3395
  %v3460 = vunpack.c.l.b16 %v3396
  %v3461 = vunpack.c.l.b16 %v3397
  %v3462 = vunpack.c.l.b16 %v3398
  %v3463 = vunpack.c.l.b16 %v3399
  %v3464 = vunpack.c.l.b16 %v3400
  %v3465 = vunpack.c.l.b16 %v3401
  %v3466 = vunpack.c.l.b16 %v3402
  %v3467 = vunpack.c.l.b16 %v3403
  %v3468 = vunpack.c.l.b16 %v3404
  %v3469 = vunpack.c.l.b16 %v3405
  %v3470 = vunpack.c.l.b16 %v3406
  %v3471 = vunpack.c.l.b16 %v3407
  %v3472 = vunpack.c.l.b16 %v3408
  %v3473 = vunpack.c.l.b16 %v3409
  %v3474 = vunpack.c.l.b16 %v3410
  %v3475 = vunpack.c.l.b16 %v3411
  %v3476 = vunpack.c.l.b16 %v3412
  %v3477 = vunpack.c.l.b16 %v3413
  %v3478 = vunpack.c.l.b16 %v3414
  %v3479 = vunpack.c.l.b16 %v3415
  %v3480 = vpack.c.b16 %v3449, %v3448
  %v3481 = vpack.c.b16 %v3451, %v3450
  %v3482 = vpack.c.b16 %v3453, %v3452
  %v3483 = vpack.c.b16 %v3455, %v3454
  %v3484 = vpack.c.b16 %v3457, %v3456
  %v3485 = vpack.c.b16 %v3459, %v3458
  %v3486 = vpack.c.b16 %v3461, %v3460
  %v3487 = vpack.c.b16 %v3463, %v3462
  %v3488 = vpack.c.b16 %v3465, %v3464
  %v3489 = vpack.c.b16 %v3467, %v3466
  %v3490 = vpack.c.b16 %v3469, %v3468
  %v3491 = vpack.c.b16 %v3471, %v3470
  %v3492 = vpack.c.b16 %v3473, %v3472
  %v3493 = vpack.c.b16 %v3475, %v3474
  %v3494 = vpack.c.b16 %v3477, %v3476
  %v3495 = vpack.c.b16 %v3479, %v3478
  %3512 = vmatprep.subr.bf16.mxu0 0
  %3513 = vmatpush1.bf16.msra.mxu0 %v3480
  %3514 = vmatprep.subr.bf16.mxu0 0
  %3515 = vmatpush1.bf16.msra.mxu0 %v3481
  %3516 = vmatprep.subr.bf16.mxu0 0
  %3517 = vmatpush1.bf16.msra.mxu0 %v3482
  %3518 = vmatprep.subr.bf16.mxu0 0
  %3519 = vmatpush1.bf16.msra.mxu0 %v3483
  %3520 = vmatprep.subr.bf16.mxu0 0
  %3521 = vmatpush1.bf16.msra.mxu0 %v3484
  %3522 = vmatprep.subr.bf16.mxu0 0
  %3523 = vmatpush1.bf16.msra.mxu0 %v3485
  %3524 = vmatprep.subr.bf16.mxu0 0
  %3525 = vmatpush1.bf16.msra.mxu0 %v3486
  %3526 = vmatprep.subr.bf16.mxu0 0
  %3527 = vmatpush1.bf16.msra.mxu0 %v3487
  %3528 = vmatprep.subr.bf16.mxu0 0
  %3529 = vmatpush1.bf16.msra.mxu0 %v3488
  %3530 = vmatprep.subr.bf16.mxu0 0
  %3531 = vmatpush1.bf16.msra.mxu0 %v3489
  %3532 = vmatprep.subr.bf16.mxu0 0
  %3533 = vmatpush1.bf16.msra.mxu0 %v3490
  %3534 = vmatprep.subr.bf16.mxu0 0
  %3535 = vmatpush1.bf16.msra.mxu0 %v3491
  %3536 = vmatprep.subr.bf16.mxu0 0
  %3537 = vmatpush1.bf16.msra.mxu0 %v3492
  %3538 = vmatprep.subr.bf16.mxu0 0
  %3539 = vmatpush1.bf16.msra.mxu0 %v3493
  %3540 = vmatprep.subr.bf16.mxu0 0
  %3541 = vmatpush1.bf16.msra.mxu0 %v3494
  %3542 = vmatprep.subr.bf16.mxu0 0
  %3543 = vmatpush1.bf16.msra.mxu0 %v3495
  %3544 = vmatprep.mubr.bf16.mxu0 %v3369
  %3545 = vmatmul.mubr.bf16.gmra.mrb[0].mxu0 %v3368
  %v3546 = vpop.f32.mrb[0].mxu0
  %v3547 = vadd.f32 0.0, %v3546
  %v3548 = vpop.f32.mrb[0].mxu0
  %v3549 = vpop.f32.mrb[0].mxu0
  %v3550 = vadd.f32 0.0, %v3549
  %v3551 = vpop.f32.mrb[0].mxu0
  %3552 = vmatprep.mubr.bf16.mxu0 %v3371
  %3553 = vmatmul.mubr.bf16.gmra.mrb[0].mxu0 %v3370
  %v3554 = vpop.f32.mrb[0].mxu0
  %v3555 = vadd.f32 0.0, %v3554
  %v3556 = vpop.f32.mrb[0].mxu0
  %v3557 = vpop.f32.mrb[0].mxu0
  %v3558 = vadd.f32 0.0, %v3557
  %v3559 = vpop.f32.mrb[0].mxu0
  %3560 = vmatprep.mubr.bf16.mxu0 %v3373
  %3561 = vmatmul.mubr.bf16.gmra.mrb[0].mxu0 %v3372
  %v3562 = vpop.f32.mrb[0].mxu0
  %v3563 = vadd.f32 0.0, %v3562
  %v3564 = vpop.f32.mrb[0].mxu0
  %v3565 = vpop.f32.mrb[0].mxu0
  %v3566 = vadd.f32 0.0, %v3565
  %v3567 = vpop.f32.mrb[0].mxu0
  %3568 = vmatprep.mubr.bf16.mxu0 %v3375
  %3569 = vmatmul.mubr.bf16.gmra.mrb[0].mxu0 %v3374
  %v3570 = vpop.f32.mrb[0].mxu0
  %v3571 = vadd.f32 0.0, %v3570
  %v3572 = vpop.f32.mrb[0].mxu0
  %v3573 = vpop.f32.mrb[0].mxu0
  %v3574 = vadd.f32 0.0, %v3573
  %v3575 = vpop.f32.mrb[0].mxu0
  %3576 = vmatprep.mubr.bf16.mxu0 %v3377
  %3577 = vmatmul.mubr.bf16.gmra.mrb[0].mxu0 %v3376
  %v3578 = vpop.f32.mrb[0].mxu0
  %v3579 = vadd.f32 0.0, %v3578
  %v3580 = vpop.f32.mrb[0].mxu0
  %v3581 = vpop.f32.mrb[0].mxu0
  %v3582 = vadd.f32 0.0, %v3581
  %v3583 = vpop.f32.mrb[0].mxu0
  %3584 = vmatprep.mubr.bf16.mxu0 %v3379
  %3585 = vmatmul.mubr.bf16.gmra.mrb[0].mxu0 %v3378
  %v3586 = vpop.f32.mrb[0].mxu0
  %v3587 = vadd.f32 0.0, %v3586
  %v3588 = vpop.f32.mrb[0].mxu0
  %v3589 = vpop.f32.mrb[0].mxu0
  %v3590 = vadd.f32 0.0, %v3589
  %v3591 = vpop.f32.mrb[0].mxu0
  %3592 = vmatprep.mubr.bf16.mxu0 %v3381
  %3593 = vmatmul.mubr.bf16.gmra.mrb[0].mxu0 %v3380
  %v3594 = vpop.f32.mrb[0].mxu0
  %v3595 = vadd.f32 0.0, %v3594
  %v3596 = vpop.f32.mrb[0].mxu0
  %v3597 = vpop.f32.mrb[0].mxu0
  %v3598 = vadd.f32 0.0, %v3597
  %v3599 = vpop.f32.mrb[0].mxu0
  %3600 = vmatprep.mubr.bf16.mxu0 %v3383
  %3601 = vmatmul.mubr.bf16.gmra.mrb[0].mxu0 %v3382
  %v3602 = vpop.f32.mrb[0].mxu0
  %v3603 = vadd.f32 0.0, %v3602
  %v3604 = vpop.f32.mrb[0].mxu0
  %v3605 = vpop.f32.mrb[0].mxu0
  %v3606 = vadd.f32 0.0, %v3605
  %v3607 = vpop.f32.mrb[0].mxu0
  %3608 = vdwg.mxu0
  %v3609 = vadd.f32 %v3175, %v3547
  %v3610 = vadd.f32 %v3176, %v3550
  %v3611 = vadd.f32 %v3177, %v3555
  %v3612 = vadd.f32 %v3178, %v3558
  %v3613 = vadd.f32 %v3179, %v3563
  %v3614 = vadd.f32 %v3180, %v3566
  %v3615 = vadd.f32 %v3181, %v3571
  %v3616 = vadd.f32 %v3182, %v3574
  %v3617 = vadd.f32 %v3183, %v3579
  %v3618 = vadd.f32 %v3184, %v3582
  %v3619 = vadd.f32 %v3185, %v3587
  %v3620 = vadd.f32 %v3186, %v3590
  %v3621 = vadd.f32 %v3187, %v3595
  %v3622 = vadd.f32 %v3188, %v3598
  %v3623 = vadd.f32 %v3189, %v3603
  %v3624 = vadd.f32 %v3190, %v3606
  %v3625 = vld [vmem:[%s3 + $0x1c0] sm:$0xf]
  %v3626 = vld [vmem:[%s3 + $0x1c4] sm:$0xf]
  %v3627 = vld [vmem:[%s3 + $0x1c8] sm:$0xf]
  %v3628 = vld [vmem:[%s3 + $0x1cc] sm:$0xf]
  %v3629 = vld [vmem:[%s3 + $0x1d0] sm:$0xf]
  %v3630 = vld [vmem:[%s3 + $0x1d4] sm:$0xf]
  %v3631 = vld [vmem:[%s3 + $0x1d8] sm:$0xf]
  %v3632 = vld [vmem:[%s3 + $0x1dc] sm:$0xf]
  %v3633 = vld [vmem:[%s3 + $0x1e0] sm:$0xf]
  %v3634 = vld [vmem:[%s3 + $0x1e4] sm:$0xf]
  %v3635 = vld [vmem:[%s3 + $0x1e8] sm:$0xf]
  %v3636 = vld [vmem:[%s3 + $0x1ec] sm:$0xf]
  %v3637 = vld [vmem:[%s3 + $0x1f0] sm:$0xf]
  %v3638 = vld [vmem:[%s3 + $0x1f4] sm:$0xf]
  %v3639 = vld [vmem:[%s3 + $0x1f8] sm:$0xf]
  %v3640 = vld [vmem:[%s3 + $0x1fc] sm:$0xf]
  %v3657 = vunpack.c.l.b16 %v3625
  %v3658 = vunpack.c.l.b16 %v3626
  %v3659 = vunpack.c.l.b16 %v3627
  %v3660 = vunpack.c.l.b16 %v3628
  %v3661 = vunpack.c.l.b16 %v3629
  %v3662 = vunpack.c.l.b16 %v3630
  %v3663 = vunpack.c.l.b16 %v3631
  %v3664 = vunpack.c.l.b16 %v3632
  %v3665 = vunpack.c.l.b16 %v3633
  %v3666 = vunpack.c.l.b16 %v3634
  %v3667 = vunpack.c.l.b16 %v3635
  %v3668 = vunpack.c.l.b16 %v3636
  %v3669 = vunpack.c.l.b16 %v3637
  %v3670 = vunpack.c.l.b16 %v3638
  %v3671 = vunpack.c.l.b16 %v3639
  %v3672 = vunpack.c.l.b16 %v3640
  %v3673 = vpack.c.b16 %v3658, %v3657
  %v3674 = vpack.c.b16 %v3660, %v3659
  %v3675 = vpack.c.b16 %v3662, %v3661
  %v3676 = vpack.c.b16 %v3664, %v3663
  %v3677 = vpack.c.b16 %v3666, %v3665
  %v3678 = vpack.c.b16 %v3668, %v3667
  %v3679 = vpack.c.b16 %v3670, %v3669
  %v3680 = vpack.c.b16 %v3672, %v3671
  %3689 = vmatprep.subr.bf16.mxu0 %v564
  %3690 = vmatpush1.bf16.msra.mxu0 %v563
  %3691 = vmatprep.subr.bf16.mxu0 %v566
  %3692 = vmatpush1.bf16.msra.mxu0 %v565
  %3693 = vmatprep.subr.bf16.mxu0 %v568
  %3694 = vmatpush1.bf16.msra.mxu0 %v567
  %3695 = vmatprep.subr.bf16.mxu0 %v570
  %3696 = vmatpush1.bf16.msra.mxu0 %v569
  %3697 = vmatprep.subr.bf16.mxu0 %v572
  %3698 = vmatpush1.bf16.msra.mxu0 %v571
  %3699 = vmatprep.subr.bf16.mxu0 %v574
  %3700 = vmatpush1.bf16.msra.mxu0 %v573
  %3701 = vmatprep.subr.bf16.mxu0 %v576
  %3702 = vmatpush1.bf16.msra.mxu0 %v575
  %3703 = vmatprep.subr.bf16.mxu0 %v578
  %3704 = vmatpush1.bf16.msra.mxu0 %v577
  %3705 = vmatprep.subr.bf16.mxu0 0
  %3706 = vmatpush1.bf16.msra.mxu0 0
  %3707 = vmatprep.subr.bf16.mxu0 0
  %3708 = vmatpush1.bf16.msra.mxu0 0
  %3709 = vmatprep.subr.bf16.mxu0 0
  %3710 = vmatpush1.bf16.msra.mxu0 0
  %3711 = vmatprep.subr.bf16.mxu0 0
  %3712 = vmatpush1.bf16.msra.mxu0 0
  %3713 = vmatprep.subr.bf16.mxu0 0
  %3714 = vmatpush1.bf16.msra.mxu0 0
  %3715 = vmatprep.subr.bf16.mxu0 0
  %3716 = vmatpush1.bf16.msra.mxu0 0
  %3717 = vmatprep.subr.bf16.mxu0 0
  %3718 = vmatpush1.bf16.msra.mxu0 0
  %3719 = vmatprep.subr.bf16.mxu0 0
  %3720 = vmatpush1.bf16.msra.mxu0 0
  %3721 = vmatprep.mubr.bf16.mxu0 0
  %3722 = vmatmul.mubr.bf16.gmra.mrb[0].mxu0 %v3673
  %v3723 = vpop.f32.mrb[0].mxu0
  %v3724 = vadd.f32 0.0, %v3723
  %v3725 = vpop.f32.mrb[0].mxu0
  %v3726 = vadd.f32 0.0, %v3725
  %v3727 = vpop.f32.mrb[0].mxu0
  %v3728 = vadd.f32 0.0, %v3727
  %v3729 = vpop.f32.mrb[0].mxu0
  %v3730 = vadd.f32 0.0, %v3729
  %3731 = vmatprep.mubr.bf16.mxu0 0
  %3732 = vmatmul.mubr.bf16.gmra.mrb[0].mxu0 %v3674
  %v3733 = vpop.f32.mrb[0].mxu0
  %v3734 = vadd.f32 0.0, %v3733
  %v3735 = vpop.f32.mrb[0].mxu0
  %v3736 = vadd.f32 0.0, %v3735
  %v3737 = vpop.f32.mrb[0].mxu0
  %v3738 = vadd.f32 0.0, %v3737
  %v3739 = vpop.f32.mrb[0].mxu0
  %v3740 = vadd.f32 0.0, %v3739
  %3741 = vmatprep.mubr.bf16.mxu0 0
  %3742 = vmatmul.mubr.bf16.gmra.mrb[0].mxu0 %v3675
  %v3743 = vpop.f32.mrb[0].mxu0
  %v3744 = vadd.f32 0.0, %v3743
  %v3745 = vpop.f32.mrb[0].mxu0
  %v3746 = vadd.f32 0.0, %v3745
  %v3747 = vpop.f32.mrb[0].mxu0
  %v3748 = vadd.f32 0.0, %v3747
  %v3749 = vpop.f32.mrb[0].mxu0
  %v3750 = vadd.f32 0.0, %v3749
  %3751 = vmatprep.mubr.bf16.mxu0 0
  %3752 = vmatmul.mubr.bf16.gmra.mrb[0].mxu0 %v3676
  %v3753 = vpop.f32.mrb[0].mxu0
  %v3754 = vadd.f32 0.0, %v3753
  %v3755 = vpop.f32.mrb[0].mxu0
  %v3756 = vadd.f32 0.0, %v3755
  %v3757 = vpop.f32.mrb[0].mxu0
  %v3758 = vadd.f32 0.0, %v3757
  %v3759 = vpop.f32.mrb[0].mxu0
  %v3760 = vadd.f32 0.0, %v3759
  %3761 = vmatprep.mubr.bf16.mxu0 0
  %3762 = vmatmul.mubr.bf16.gmra.mrb[0].mxu0 %v3677
  %v3763 = vpop.f32.mrb[0].mxu0
  %v3764 = vadd.f32 0.0, %v3763
  %v3765 = vpop.f32.mrb[0].mxu0
  %v3766 = vadd.f32 0.0, %v3765
  %v3767 = vpop.f32.mrb[0].mxu0
  %v3768 = vadd.f32 0.0, %v3767
  %v3769 = vpop.f32.mrb[0].mxu0
  %v3770 = vadd.f32 0.0, %v3769
  %3771 = vmatprep.mubr.bf16.mxu0 0
  %3772 = vmatmul.mubr.bf16.gmra.mrb[0].mxu0 %v3678
  %v3773 = vpop.f32.mrb[0].mxu0
  %v3774 = vadd.f32 0.0, %v3773
  %v3775 = vpop.f32.mrb[0].mxu0
  %v3776 = vadd.f32 0.0, %v3775
  %v3777 = vpop.f32.mrb[0].mxu0
  %v3778 = vadd.f32 0.0, %v3777
  %v3779 = vpop.f32.mrb[0].mxu0
  %v3780 = vadd.f32 0.0, %v3779
  %3781 = vmatprep.mubr.bf16.mxu0 0
  %3782 = vmatmul.mubr.bf16.gmra.mrb[0].mxu0 %v3679
  %v3783 = vpop.f32.mrb[0].mxu0
  %v3784 = vadd.f32 0.0, %v3783
  %v3785 = vpop.f32.mrb[0].mxu0
  %v3786 = vadd.f32 0.0, %v3785
  %v3787 = vpop.f32.mrb[0].mxu0
  %v3788 = vadd.f32 0.0, %v3787
  %v3789 = vpop.f32.mrb[0].mxu0
  %v3790 = vadd.f32 0.0, %v3789
  %3791 = vmatprep.mubr.bf16.mxu0 0
  %3792 = vmatmul.mubr.bf16.gmra.mrb[0].mxu0 %v3680
  %v3793 = vpop.f32.mrb[0].mxu0
  %v3794 = vadd.f32 0.0, %v3793
  %v3795 = vpop.f32.mrb[0].mxu0
  %v3796 = vadd.f32 0.0, %v3795
  %v3797 = vpop.f32.mrb[0].mxu0
  %v3798 = vadd.f32 0.0, %v3797
  %v3799 = vpop.f32.mrb[0].mxu0
  %v3800 = vadd.f32 0.0, %v3799
  %3801 = vdwg.mxu0
  %v3802 = vpack.c.bf16 %v3728, %v3724
  %v3803 = vpack.c.bf16 %v3730, %v3726
  %v3804 = vpack.c.bf16 %v3738, %v3734
  %v3805 = vpack.c.bf16 %v3740, %v3736
  %v3806 = vpack.c.bf16 %v3748, %v3744
  %v3807 = vpack.c.bf16 %v3750, %v3746
  %v3808 = vpack.c.bf16 %v3758, %v3754
  %v3809 = vpack.c.bf16 %v3760, %v3756
  %v3810 = vpack.c.bf16 %v3768, %v3764
  %v3811 = vpack.c.bf16 %v3770, %v3766
  %v3812 = vpack.c.bf16 %v3778, %v3774
  %v3813 = vpack.c.bf16 %v3780, %v3776
  %v3814 = vpack.c.bf16 %v3788, %v3784
  %v3815 = vpack.c.bf16 %v3790, %v3786
  %v3816 = vpack.c.bf16 %v3798, %v3794
  %v3817 = vpack.c.bf16 %v3800, %v3796
  %v3818 = vld [vmem:[%s4 + $0x380] sm:$0xf]
  %v3819 = vld [vmem:[%s4 + $0x384] sm:$0xf]
  %v3820 = vld [vmem:[%s4 + $0x388] sm:$0xf]
  %v3821 = vld [vmem:[%s4 + $0x38c] sm:$0xf]
  %v3822 = vld [vmem:[%s4 + $0x390] sm:$0xf]
  %v3823 = vld [vmem:[%s4 + $0x394] sm:$0xf]
  %v3824 = vld [vmem:[%s4 + $0x398] sm:$0xf]
  %v3825 = vld [vmem:[%s4 + $0x39c] sm:$0xf]
  %v3826 = vld [vmem:[%s4 + $0x3a0] sm:$0xf]
  %v3827 = vld [vmem:[%s4 + $0x3a4] sm:$0xf]
  %v3828 = vld [vmem:[%s4 + $0x3a8] sm:$0xf]
  %v3829 = vld [vmem:[%s4 + $0x3ac] sm:$0xf]
  %v3830 = vld [vmem:[%s4 + $0x3b0] sm:$0xf]
  %v3831 = vld [vmem:[%s4 + $0x3b4] sm:$0xf]
  %v3832 = vld [vmem:[%s4 + $0x3b8] sm:$0xf]
  %v3833 = vld [vmem:[%s4 + $0x3bc] sm:$0xf]
  %v3834 = vld [vmem:[%s4 + $0x3c0] sm:$0xf]
  %v3835 = vld [vmem:[%s4 + $0x3c4] sm:$0xf]
  %v3836 = vld [vmem:[%s4 + $0x3c8] sm:$0xf]
  %v3837 = vld [vmem:[%s4 + $0x3cc] sm:$0xf]
  %v3838 = vld [vmem:[%s4 + $0x3d0] sm:$0xf]
  %v3839 = vld [vmem:[%s4 + $0x3d4] sm:$0xf]
  %v3840 = vld [vmem:[%s4 + $0x3d8] sm:$0xf]
  %v3841 = vld [vmem:[%s4 + $0x3dc] sm:$0xf]
  %v3842 = vld [vmem:[%s4 + $0x3e0] sm:$0xf]
  %v3843 = vld [vmem:[%s4 + $0x3e4] sm:$0xf]
  %v3844 = vld [vmem:[%s4 + $0x3e8] sm:$0xf]
  %v3845 = vld [vmem:[%s4 + $0x3ec] sm:$0xf]
  %v3846 = vld [vmem:[%s4 + $0x3f0] sm:$0xf]
  %v3847 = vld [vmem:[%s4 + $0x3f4] sm:$0xf]
  %v3848 = vld [vmem:[%s4 + $0x3f8] sm:$0xf]
  %v3849 = vld [vmem:[%s4 + $0x3fc] sm:$0xf]
  %v3882 = vunpack.c.l.b16 %v3818
  %v3883 = vunpack.c.l.b16 %v3819
  %v3884 = vunpack.c.l.b16 %v3820
  %v3885 = vunpack.c.l.b16 %v3821
  %v3886 = vunpack.c.l.b16 %v3822
  %v3887 = vunpack.c.l.b16 %v3823
  %v3888 = vunpack.c.l.b16 %v3824
  %v3889 = vunpack.c.l.b16 %v3825
  %v3890 = vunpack.c.l.b16 %v3826
  %v3891 = vunpack.c.l.b16 %v3827
  %v3892 = vunpack.c.l.b16 %v3828
  %v3893 = vunpack.c.l.b16 %v3829
  %v3894 = vunpack.c.l.b16 %v3830
  %v3895 = vunpack.c.l.b16 %v3831
  %v3896 = vunpack.c.l.b16 %v3832
  %v3897 = vunpack.c.l.b16 %v3833
  %v3898 = vunpack.c.l.b16 %v3834
  %v3899 = vunpack.c.l.b16 %v3835
  %v3900 = vunpack.c.l.b16 %v3836
  %v3901 = vunpack.c.l.b16 %v3837
  %v3902 = vunpack.c.l.b16 %v3838
  %v3903 = vunpack.c.l.b16 %v3839
  %v3904 = vunpack.c.l.b16 %v3840
  %v3905 = vunpack.c.l.b16 %v3841
  %v3906 = vunpack.c.l.b16 %v3842
  %v3907 = vunpack.c.l.b16 %v3843
  %v3908 = vunpack.c.l.b16 %v3844
  %v3909 = vunpack.c.l.b16 %v3845
  %v3910 = vunpack.c.l.b16 %v3846
  %v3911 = vunpack.c.l.b16 %v3847
  %v3912 = vunpack.c.l.b16 %v3848
  %v3913 = vunpack.c.l.b16 %v3849
  %v3914 = vpack.c.b16 %v3883, %v3882
  %v3915 = vpack.c.b16 %v3885, %v3884
  %v3916 = vpack.c.b16 %v3887, %v3886
  %v3917 = vpack.c.b16 %v3889, %v3888
  %v3918 = vpack.c.b16 %v3891, %v3890
  %v3919 = vpack.c.b16 %v3893, %v3892
  %v3920 = vpack.c.b16 %v3895, %v3894
  %v3921 = vpack.c.b16 %v3897, %v3896
  %v3922 = vpack.c.b16 %v3899, %v3898
  %v3923 = vpack.c.b16 %v3901, %v3900
  %v3924 = vpack.c.b16 %v3903, %v3902
  %v3925 = vpack.c.b16 %v3905, %v3904
  %v3926 = vpack.c.b16 %v3907, %v3906
  %v3927 = vpack.c.b16 %v3909, %v3908
  %v3928 = vpack.c.b16 %v3911, %v3910
  %v3929 = vpack.c.b16 %v3913, %v3912
  %3946 = vmatprep.subr.bf16.mxu0 0
  %3947 = vmatpush1.bf16.msra.mxu0 %v3914
  %3948 = vmatprep.subr.bf16.mxu0 0
  %3949 = vmatpush1.bf16.msra.mxu0 %v3915
  %3950 = vmatprep.subr.bf16.mxu0 0
  %3951 = vmatpush1.bf16.msra.mxu0 %v3916
  %3952 = vmatprep.subr.bf16.mxu0 0
  %3953 = vmatpush1.bf16.msra.mxu0 %v3917
  %3954 = vmatprep.subr.bf16.mxu0 0
  %3955 = vmatpush1.bf16.msra.mxu0 %v3918
  %3956 = vmatprep.subr.bf16.mxu0 0
  %3957 = vmatpush1.bf16.msra.mxu0 %v3919
  %3958 = vmatprep.subr.bf16.mxu0 0
  %3959 = vmatpush1.bf16.msra.mxu0 %v3920
  %3960 = vmatprep.subr.bf16.mxu0 0
  %3961 = vmatpush1.bf16.msra.mxu0 %v3921
  %3962 = vmatprep.subr.bf16.mxu0 0
  %3963 = vmatpush1.bf16.msra.mxu0 %v3922
  %3964 = vmatprep.subr.bf16.mxu0 0
  %3965 = vmatpush1.bf16.msra.mxu0 %v3923
  %3966 = vmatprep.subr.bf16.mxu0 0
  %3967 = vmatpush1.bf16.msra.mxu0 %v3924
  %3968 = vmatprep.subr.bf16.mxu0 0
  %3969 = vmatpush1.bf16.msra.mxu0 %v3925
  %3970 = vmatprep.subr.bf16.mxu0 0
  %3971 = vmatpush1.bf16.msra.mxu0 %v3926
  %3972 = vmatprep.subr.bf16.mxu0 0
  %3973 = vmatpush1.bf16.msra.mxu0 %v3927
  %3974 = vmatprep.subr.bf16.mxu0 0
  %3975 = vmatpush1.bf16.msra.mxu0 %v3928
  %3976 = vmatprep.subr.bf16.mxu0 0
  %3977 = vmatpush1.bf16.msra.mxu0 %v3929
  %3978 = vmatprep.mubr.bf16.mxu0 %v3803
  %3979 = vmatmul.mubr.bf16.gmra.mrb[0].mxu0 %v3802
  %v3980 = vpop.f32.mrb[0].mxu0
  %v3981 = vadd.f32 0.0, %v3980
  %v3982 = vpop.f32.mrb[0].mxu0
  %v3983 = vpop.f32.mrb[0].mxu0
  %v3984 = vadd.f32 0.0, %v3983
  %v3985 = vpop.f32.mrb[0].mxu0
  %3986 = vmatprep.mubr.bf16.mxu0 %v3805
  %3987 = vmatmul.mubr.bf16.gmra.mrb[0].mxu0 %v3804
  %v3988 = vpop.f32.mrb[0].mxu0
  %v3989 = vadd.f32 0.0, %v3988
  %v3990 = vpop.f32.mrb[0].mxu0
  %v3991 = vpop.f32.mrb[0].mxu0
  %v3992 = vadd.f32 0.0, %v3991
  %v3993 = vpop.f32.mrb[0].mxu0
  %3994 = vmatprep.mubr.bf16.mxu0 %v3807
  %3995 = vmatmul.mubr.bf16.gmra.mrb[0].mxu0 %v3806
  %v3996 = vpop.f32.mrb[0].mxu0
  %v3997 = vadd.f32 0.0, %v3996
  %v3998 = vpop.f32.mrb[0].mxu0
  %v3999 = vpop.f32.mrb[0].mxu0
  %v4000 = vadd.f32 0.0, %v3999
  %v4001 = vpop.f32.mrb[0].mxu0
  %4002 = vmatprep.mubr.bf16.mxu0 %v3809
  %4003 = vmatmul.mubr.bf16.gmra.mrb[0].mxu0 %v3808
  %v4004 = vpop.f32.mrb[0].mxu0
  %v4005 = vadd.f32 0.0, %v4004
  %v4006 = vpop.f32.mrb[0].mxu0
  %v4007 = vpop.f32.mrb[0].mxu0
  %v4008 = vadd.f32 0.0, %v4007
  %v4009 = vpop.f32.mrb[0].mxu0
  %4010 = vmatprep.mubr.bf16.mxu0 %v3811
  %4011 = vmatmul.mubr.bf16.gmra.mrb[0].mxu0 %v3810
  %v4012 = vpop.f32.mrb[0].mxu0
  %v4013 = vadd.f32 0.0, %v4012
  %v4014 = vpop.f32.mrb[0].mxu0
  %v4015 = vpop.f32.mrb[0].mxu0
  %v4016 = vadd.f32 0.0, %v4015
  %v4017 = vpop.f32.mrb[0].mxu0
  %4018 = vmatprep.mubr.bf16.mxu0 %v3813
  %4019 = vmatmul.mubr.bf16.gmra.mrb[0].mxu0 %v3812
  %v4020 = vpop.f32.mrb[0].mxu0
  %v4021 = vadd.f32 0.0, %v4020
  %v4022 = vpop.f32.mrb[0].mxu0
  %v4023 = vpop.f32.mrb[0].mxu0
  %v4024 = vadd.f32 0.0, %v4023
  %v4025 = vpop.f32.mrb[0].mxu0
  %4026 = vmatprep.mubr.bf16.mxu0 %v3815
  %4027 = vmatmul.mubr.bf16.gmra.mrb[0].mxu0 %v3814
  %v4028 = vpop.f32.mrb[0].mxu0
  %v4029 = vadd.f32 0.0, %v4028
  %v4030 = vpop.f32.mrb[0].mxu0
  %v4031 = vpop.f32.mrb[0].mxu0
  %v4032 = vadd.f32 0.0, %v4031
  %v4033 = vpop.f32.mrb[0].mxu0
  %4034 = vmatprep.mubr.bf16.mxu0 %v3817
  %4035 = vmatmul.mubr.bf16.gmra.mrb[0].mxu0 %v3816
  %v4036 = vpop.f32.mrb[0].mxu0
  %v4037 = vadd.f32 0.0, %v4036
  %v4038 = vpop.f32.mrb[0].mxu0
  %v4039 = vpop.f32.mrb[0].mxu0
  %v4040 = vadd.f32 0.0, %v4039
  %v4041 = vpop.f32.mrb[0].mxu0
  %4042 = vdwg.mxu0
  %v4043 = vadd.f32 %v3609, %v3981
  %v4044 = vadd.f32 %v3610, %v3984
  %v4045 = vadd.f32 %v3611, %v3989
  %v4046 = vadd.f32 %v3612, %v3992
  %v4047 = vadd.f32 %v3613, %v3997
  %v4048 = vadd.f32 %v3614, %v4000
  %v4049 = vadd.f32 %v3615, %v4005
  %v4050 = vadd.f32 %v3616, %v4008
  %v4051 = vadd.f32 %v3617, %v4013
  %v4052 = vadd.f32 %v3618, %v4016
  %v4053 = vadd.f32 %v3619, %v4021
  %v4054 = vadd.f32 %v3620, %v4024
  %v4055 = vadd.f32 %v3621, %v4029
  %v4056 = vadd.f32 %v3622, %v4032
  %v4057 = vadd.f32 %v3623, %v4037
  %v4058 = vadd.f32 %v3624, %v4040
  %vm4059 = vcmp.gt.f32.partialorder %v4043, 0.0
  %vm4060 = vcmp.gt.f32.partialorder %v4044, 0.0
  %vm4061 = vcmp.gt.f32.partialorder %v4045, 0.0
  %vm4062 = vcmp.gt.f32.partialorder %v4046, 0.0
  %vm4063 = vcmp.gt.f32.partialorder %v4047, 0.0
  %vm4064 = vcmp.gt.f32.partialorder %v4048, 0.0
  %vm4065 = vcmp.gt.f32.partialorder %v4049, 0.0
  %vm4066 = vcmp.gt.f32.partialorder %v4050, 0.0
  %vm4067 = vcmp.gt.f32.partialorder %v4051, 0.0
  %vm4068 = vcmp.gt.f32.partialorder %v4052, 0.0
  %vm4069 = vcmp.gt.f32.partialorder %v4053, 0.0
  %vm4070 = vcmp.gt.f32.partialorder %v4054, 0.0
  %vm4071 = vcmp.gt.f32.partialorder %v4055, 0.0
  %vm4072 = vcmp.gt.f32.partialorder %v4056, 0.0
  %vm4073 = vcmp.gt.f32.partialorder %v4057, 0.0
  %vm4074 = vcmp.gt.f32.partialorder %v4058, 0.0
  %v4075 = vmul.f32 %v4043, 0.2
  %v4076 = vmul.f32 %v4044, 0.2
  %v4077 = vmul.f32 %v4045, 0.2
  %v4078 = vmul.f32 %v4046, 0.2
  %v4079 = vmul.f32 %v4047, 0.2
  %v4080 = vmul.f32 %v4048, 0.2
  %v4081 = vmul.f32 %v4049, 0.2
  %v4082 = vmul.f32 %v4050, 0.2
  %v4083 = vmul.f32 %v4051, 0.2
  %v4084 = vmul.f32 %v4052, 0.2
  %v4085 = vmul.f32 %v4053, 0.2
  %v4086 = vmul.f32 %v4054, 0.2
  %v4087 = vmul.f32 %v4055, 0.2
  %v4088 = vmul.f32 %v4056, 0.2
  %v4089 = vmul.f32 %v4057, 0.2
  %v4090 = vmul.f32 %v4058, 0.2
  %v4091 = vsel %vm4059, %v4043, %v4075
  %v4092 = vsel %vm4060, %v4044, %v4076
  %v4093 = vsel %vm4061, %v4045, %v4077
  %v4094 = vsel %vm4062, %v4046, %v4078
  %v4095 = vsel %vm4063, %v4047, %v4079
  %v4096 = vsel %vm4064, %v4048, %v4080
  %v4097 = vsel %vm4065, %v4049, %v4081
  %v4098 = vsel %vm4066, %v4050, %v4082
  %v4099 = vsel %vm4067, %v4051, %v4083
  %v4100 = vsel %vm4068, %v4052, %v4084
  %v4101 = vsel %vm4069, %v4053, %v4085
  %v4102 = vsel %vm4070, %v4054, %v4086
  %v4103 = vsel %vm4071, %v4055, %v4087
  %v4104 = vsel %vm4072, %v4056, %v4088
  %v4105 = vsel %vm4073, %v4057, %v4089
  %v4106 = vsel %vm4074, %v4058, %v4090
  %v4107 = vpack.c.bf16 %v4092, %v4091
  %v4108 = vpack.c.bf16 %v4094, %v4093
  %v4109 = vpack.c.bf16 %v4096, %v4095
  %v4110 = vpack.c.bf16 %v4098, %v4097
  %v4111 = vpack.c.bf16 %v4100, %v4099
  %v4112 = vpack.c.bf16 %v4102, %v4101
  %v4113 = vpack.c.bf16 %v4104, %v4103
  %v4114 = vpack.c.bf16 %v4106, %v4105
  %v4115 = vld [vmem:[%s6] sm:$0xf]
  %v4116 = vld [vmem:[%s6 + $0x4] sm:$0xf]
  %v4117 = vld [vmem:[%s6 + $0x8] sm:$0xf]
  %v4118 = vld [vmem:[%s6 + $0xc] sm:$0xf]
  %v4119 = vld [vmem:[%s6 + $0x10] sm:$0xf]
  %v4120 = vld [vmem:[%s6 + $0x14] sm:$0xf]
  %v4121 = vld [vmem:[%s6 + $0x18] sm:$0xf]
  %v4122 = vld [vmem:[%s6 + $0x1c] sm:$0xf]
  %v4123 = vld [vmem:[%s6 + $0x20] sm:$0xf]
  %v4124 = vld [vmem:[%s6 + $0x24] sm:$0xf]
  %v4125 = vld [vmem:[%s6 + $0x28] sm:$0xf]
  %v4126 = vld [vmem:[%s6 + $0x2c] sm:$0xf]
  %v4127 = vld [vmem:[%s6 + $0x30] sm:$0xf]
  %v4128 = vld [vmem:[%s6 + $0x34] sm:$0xf]
  %v4129 = vld [vmem:[%s6 + $0x38] sm:$0xf]
  %v4130 = vld [vmem:[%s6 + $0x3c] sm:$0xf]
  %v4131 = vld [vmem:[%s6 + $0x40] sm:$0xf]
  %v4132 = vld [vmem:[%s6 + $0x44] sm:$0xf]
  %v4133 = vld [vmem:[%s6 + $0x48] sm:$0xf]
  %v4134 = vld [vmem:[%s6 + $0x4c] sm:$0xf]
  %v4135 = vld [vmem:[%s6 + $0x50] sm:$0xf]
  %v4136 = vld [vmem:[%s6 + $0x54] sm:$0xf]
  %v4137 = vld [vmem:[%s6 + $0x58] sm:$0xf]
  %v4138 = vld [vmem:[%s6 + $0x5c] sm:$0xf]
  %v4139 = vld [vmem:[%s6 + $0x60] sm:$0xf]
  %v4140 = vld [vmem:[%s6 + $0x64] sm:$0xf]
  %v4141 = vld [vmem:[%s6 + $0x68] sm:$0xf]
  %v4142 = vld [vmem:[%s6 + $0x6c] sm:$0xf]
  %v4143 = vld [vmem:[%s6 + $0x70] sm:$0xf]
  %v4144 = vld [vmem:[%s6 + $0x74] sm:$0xf]
  %v4145 = vld [vmem:[%s6 + $0x78] sm:$0xf]
  %v4146 = vld [vmem:[%s6 + $0x7c] sm:$0xf]
  %v4147 = vld [vmem:[%s6 + $0x80] sm:$0xf]
  %v4148 = vld [vmem:[%s6 + $0x84] sm:$0xf]
  %v4149 = vld [vmem:[%s6 + $0x88] sm:$0xf]
  %v4150 = vld [vmem:[%s6 + $0x8c] sm:$0xf]
  %v4151 = vld [vmem:[%s6 + $0x90] sm:$0xf]
  %v4152 = vld [vmem:[%s6 + $0x94] sm:$0xf]
  %v4153 = vld [vmem:[%s6 + $0x98] sm:$0xf]
  %v4154 = vld [vmem:[%s6 + $0x9c] sm:$0xf]
  %v4155 = vld [vmem:[%s6 + $0xa0] sm:$0xf]
  %v4156 = vld [vmem:[%s6 + $0xa4] sm:$0xf]
  %v4157 = vld [vmem:[%s6 + $0xa8] sm:$0xf]
  %v4158 = vld [vmem:[%s6 + $0xac] sm:$0xf]
  %v4159 = vld [vmem:[%s6 + $0xb0] sm:$0xf]
  %v4160 = vld [vmem:[%s6 + $0xb4] sm:$0xf]
  %v4161 = vld [vmem:[%s6 + $0xb8] sm:$0xf]
  %v4162 = vld [vmem:[%s6 + $0xbc] sm:$0xf]
  %v4163 = vld [vmem:[%s6 + $0xc0] sm:$0xf]
  %v4164 = vld [vmem:[%s6 + $0xc4] sm:$0xf]
  %v4165 = vld [vmem:[%s6 + $0xc8] sm:$0xf]
  %v4166 = vld [vmem:[%s6 + $0xcc] sm:$0xf]
  %v4167 = vld [vmem:[%s6 + $0xd0] sm:$0xf]
  %v4168 = vld [vmem:[%s6 + $0xd4] sm:$0xf]
  %v4223 = vunpack.c.l.b16 %v4115
  %v4224 = vunpack.c.l.b16 %v4116
  %v4225 = vunpack.c.l.b16 %v4117
  %v4226 = vunpack.c.l.b16 %v4118
  %v4227 = vunpack.c.l.b16 %v4119
  %v4228 = vunpack.c.l.b16 %v4120
  %v4229 = vunpack.c.l.b16 %v4121
  %v4230 = vunpack.c.l.b16 %v4122
  %v4231 = vunpack.c.l.b16 %v4123
  %v4232 = vunpack.c.l.b16 %v4124
  %v4233 = vunpack.c.l.b16 %v4125
  %v4234 = vunpack.c.l.b16 %v4126
  %v4235 = vunpack.c.l.b16 %v4127
  %v4236 = vunpack.c.l.b16 %v4128
  %v4237 = vunpack.c.l.b16 %v4129
  %v4238 = vunpack.c.l.b16 %v4130
  %v4239 = vunpack.c.l.b16 %v4131
  %v4240 = vunpack.c.l.b16 %v4132
  %v4241 = vunpack.c.l.b16 %v4133
  %v4242 = vunpack.c.l.b16 %v4134
  %v4243 = vunpack.c.l.b16 %v4135
  %v4244 = vunpack.c.l.b16 %v4136
  %v4245 = vunpack.c.l.b16 %v4137
  %v4246 = vunpack.c.l.b16 %v4138
  %v4247 = vunpack.c.l.b16 %v4139
  %v4248 = vunpack.c.l.b16 %v4140
  %v4249 = vunpack.c.l.b16 %v4141
  %v4250 = vunpack.c.l.b16 %v4142
  %v4251 = vunpack.c.l.b16 %v4143
  %v4252 = vunpack.c.l.b16 %v4144
  %v4253 = vunpack.c.l.b16 %v4145
  %v4254 = vunpack.c.l.b16 %v4146
  %v4255 = vunpack.c.l.b16 %v4147
  %v4256 = vunpack.c.l.b16 %v4148
  %v4257 = vunpack.c.l.b16 %v4149
  %v4258 = vunpack.c.l.b16 %v4150
  %v4259 = vunpack.c.l.b16 %v4151
  %v4260 = vunpack.c.l.b16 %v4152
  %v4261 = vunpack.c.l.b16 %v4153
  %v4262 = vunpack.c.l.b16 %v4154
  %v4263 = vunpack.c.l.b16 %v4155
  %v4264 = vunpack.c.l.b16 %v4156
  %v4265 = vunpack.c.l.b16 %v4157
  %v4266 = vunpack.c.l.b16 %v4158
  %v4267 = vunpack.c.l.b16 %v4159
  %v4268 = vunpack.c.l.b16 %v4160
  %v4269 = vunpack.c.l.b16 %v4161
  %v4270 = vunpack.c.l.b16 %v4162
  %v4271 = vunpack.c.l.b16 %v4163
  %v4272 = vunpack.c.l.b16 %v4164
  %v4273 = vunpack.c.l.b16 %v4165
  %v4274 = vunpack.c.l.b16 %v4166
  %v4275 = vunpack.c.l.b16 %v4167
  %v4276 = vunpack.c.l.b16 %v4168
  %v4277 = vpack.c.b16 %v4224, %v4223
  %v4278 = vpack.c.b16 %v4226, %v4225
  %v4279 = vpack.c.b16 %v4228, %v4227
  %v4280 = vpack.c.b16 %v4230, %v4229
  %v4281 = vpack.c.b16 %v4232, %v4231
  %v4282 = vpack.c.b16 %v4234, %v4233
  %v4283 = vpack.c.b16 %v4236, %v4235
  %v4284 = vpack.c.b16 %v4238, %v4237
  %v4285 = vpack.c.b16 %v4240, %v4239
  %v4286 = vpack.c.b16 %v4242, %v4241
  %v4287 = vpack.c.b16 %v4244, %v4243
  %v4288 = vpack.c.b16 %v4246, %v4245
  %v4289 = vpack.c.b16 %v4248, %v4247
  %v4290 = vpack.c.b16 %v4250, %v4249
  %v4291 = vpack.c.b16 %v4252, %v4251
  %v4292 = vpack.c.b16 %v4254, %v4253
  %v4293 = vpack.c.b16 %v4256, %v4255
  %v4294 = vpack.c.b16 %v4258, %v4257
  %v4295 = vpack.c.b16 %v4260, %v4259
  %v4296 = vpack.c.b16 %v4262, %v4261
  %v4297 = vpack.c.b16 %v4264, %v4263
  %v4298 = vpack.c.b16 %v4266, %v4265
  %v4299 = vpack.c.b16 %v4268, %v4267
  %v4300 = vpack.c.b16 %v4270, %v4269
  %v4301 = vpack.c.b16 %v4272, %v4271
  %v4302 = vpack.c.b16 %v4274, %v4273
  %v4303 = vpack.c.b16 %v4276, %v4275
  %4331 = vmatprep.subr.bf16.mxu0 0
  %4332 = vmatpush1.bf16.msra.mxu0 %v4107
  %4333 = vmatprep.subr.bf16.mxu0 0
  %4334 = vmatpush1.bf16.msra.mxu0 %v4108
  %4335 = vmatprep.subr.bf16.mxu0 0
  %4336 = vmatpush1.bf16.msra.mxu0 %v4109
  %4337 = vmatprep.subr.bf16.mxu0 0
  %4338 = vmatpush1.bf16.msra.mxu0 %v4110
  %4339 = vmatprep.subr.bf16.mxu0 0
  %4340 = vmatpush1.bf16.msra.mxu0 %v4111
  %4341 = vmatprep.subr.bf16.mxu0 0
  %4342 = vmatpush1.bf16.msra.mxu0 %v4112
  %4343 = vmatprep.subr.bf16.mxu0 0
  %4344 = vmatpush1.bf16.msra.mxu0 %v4113
  %4345 = vmatprep.subr.bf16.mxu0 0
  %4346 = vmatpush1.bf16.msra.mxu0 %v4114
  %4347 = vmatprep.subr.bf16.mxu0 0
  %4348 = vmatpush1.bf16.msra.mxu0 0
  %4349 = vmatprep.subr.bf16.mxu0 0
  %4350 = vmatpush1.bf16.msra.mxu0 0
  %4351 = vmatprep.subr.bf16.mxu0 0
  %4352 = vmatpush1.bf16.msra.mxu0 0
  %4353 = vmatprep.subr.bf16.mxu0 0
  %4354 = vmatpush1.bf16.msra.mxu0 0
  %4355 = vmatprep.subr.bf16.mxu0 0
  %4356 = vmatpush1.bf16.msra.mxu0 0
  %4357 = vmatprep.subr.bf16.mxu0 0
  %4358 = vmatpush1.bf16.msra.mxu0 0
  %4359 = vmatprep.subr.bf16.mxu0 0
  %4360 = vmatpush1.bf16.msra.mxu0 0
  %4361 = vmatprep.subr.bf16.mxu0 0
  %4362 = vmatpush1.bf16.msra.mxu0 0
  %4363 = vmatprep.mubr.bf16.mxu0 0
  %4364 = vmatmul.mubr.bf16.gmra.mrb[0].mxu0 %v4277
  %v4365 = vpop.f32.mrb[0].mxu0
  %v4366 = vadd.f32 0.0, %v4365
  %v4367 = vpop.f32.mrb[0].mxu0
  %v4368 = vpop.f32.mrb[0].mxu0
  %v4369 = vadd.f32 0.0, %v4368
  %v4370 = vpop.f32.mrb[0].mxu0
  %4371 = vmatprep.mubr.bf16.mxu0 0
  %4372 = vmatmul.mubr.bf16.gmra.mrb[0].mxu0 %v4278
  %v4373 = vpop.f32.mrb[0].mxu0
  %v4374 = vadd.f32 0.0, %v4373
  %v4375 = vpop.f32.mrb[0].mxu0
  %v4376 = vpop.f32.mrb[0].mxu0
  %v4377 = vadd.f32 0.0, %v4376
  %v4378 = vpop.f32.mrb[0].mxu0
  %4379 = vmatprep.mubr.bf16.mxu0 0
  %4380 = vmatmul.mubr.bf16.gmra.mrb[0].mxu0 %v4279
  %v4381 = vpop.f32.mrb[0].mxu0
  %v4382 = vadd.f32 0.0, %v4381
  %v4383 = vpop.f32.mrb[0].mxu0
  %v4384 = vpop.f32.mrb[0].mxu0
  %v4385 = vadd.f32 0.0, %v4384
  %v4386 = vpop.f32.mrb[0].mxu0
  %4387 = vmatprep.mubr.bf16.mxu0 0
  %4388 = vmatmul.mubr.bf16.gmra.mrb[0].mxu0 %v4280
  %v4389 = vpop.f32.mrb[0].mxu0
  %v4390 = vadd.f32 0.0, %v4389
  %v4391 = vpop.f32.mrb[0].mxu0
  %v4392 = vpop.f32.mrb[0].mxu0
  %v4393 = vadd.f32 0.0, %v4392
  %v4394 = vpop.f32.mrb[0].mxu0
  %4395 = vmatprep.mubr.bf16.mxu0 0
  %4396 = vmatmul.mubr.bf16.gmra.mrb[0].mxu0 %v4281
  %v4397 = vpop.f32.mrb[0].mxu0
  %v4398 = vadd.f32 0.0, %v4397
  %v4399 = vpop.f32.mrb[0].mxu0
  %v4400 = vpop.f32.mrb[0].mxu0
  %v4401 = vadd.f32 0.0, %v4400
  %v4402 = vpop.f32.mrb[0].mxu0
  %4403 = vmatprep.mubr.bf16.mxu0 0
  %4404 = vmatmul.mubr.bf16.gmra.mrb[0].mxu0 %v4282
  %v4405 = vpop.f32.mrb[0].mxu0
  %v4406 = vadd.f32 0.0, %v4405
  %v4407 = vpop.f32.mrb[0].mxu0
  %v4408 = vpop.f32.mrb[0].mxu0
  %v4409 = vadd.f32 0.0, %v4408
  %v4410 = vpop.f32.mrb[0].mxu0
  %4411 = vmatprep.mubr.bf16.mxu0 0
  %4412 = vmatmul.mubr.bf16.gmra.mrb[0].mxu0 %v4283
  %v4413 = vpop.f32.mrb[0].mxu0
  %v4414 = vadd.f32 0.0, %v4413
  %v4415 = vpop.f32.mrb[0].mxu0
  %v4416 = vpop.f32.mrb[0].mxu0
  %v4417 = vadd.f32 0.0, %v4416
  %v4418 = vpop.f32.mrb[0].mxu0
  %4419 = vmatprep.mubr.bf16.mxu0 0
  %4420 = vmatmul.mubr.bf16.gmra.mrb[0].mxu0 %v4284
  %v4421 = vpop.f32.mrb[0].mxu0
  %v4422 = vadd.f32 0.0, %v4421
  %v4423 = vpop.f32.mrb[0].mxu0
  %v4424 = vpop.f32.mrb[0].mxu0
  %v4425 = vadd.f32 0.0, %v4424
  %v4426 = vpop.f32.mrb[0].mxu0
  %4427 = vmatprep.mubr.bf16.mxu0 0
  %4428 = vmatmul.mubr.bf16.gmra.mrb[0].mxu0 %v4285
  %v4429 = vpop.f32.mrb[0].mxu0
  %v4430 = vadd.f32 0.0, %v4429
  %v4431 = vpop.f32.mrb[0].mxu0
  %v4432 = vpop.f32.mrb[0].mxu0
  %v4433 = vadd.f32 0.0, %v4432
  %v4434 = vpop.f32.mrb[0].mxu0
  %4435 = vmatprep.mubr.bf16.mxu0 0
  %4436 = vmatmul.mubr.bf16.gmra.mrb[0].mxu0 %v4286
  %v4437 = vpop.f32.mrb[0].mxu0
  %v4438 = vadd.f32 0.0, %v4437
  %v4439 = vpop.f32.mrb[0].mxu0
  %v4440 = vpop.f32.mrb[0].mxu0
  %v4441 = vadd.f32 0.0, %v4440
  %v4442 = vpop.f32.mrb[0].mxu0
  %4443 = vmatprep.mubr.bf16.mxu0 0
  %4444 = vmatmul.mubr.bf16.gmra.mrb[0].mxu0 %v4287
  %v4445 = vpop.f32.mrb[0].mxu0
  %v4446 = vadd.f32 0.0, %v4445
  %v4447 = vpop.f32.mrb[0].mxu0
  %v4448 = vpop.f32.mrb[0].mxu0
  %v4449 = vadd.f32 0.0, %v4448
  %v4450 = vpop.f32.mrb[0].mxu0
  %4451 = vmatprep.mubr.bf16.mxu0 0
  %4452 = vmatmul.mubr.bf16.gmra.mrb[0].mxu0 %v4288
  %v4453 = vpop.f32.mrb[0].mxu0
  %v4454 = vadd.f32 0.0, %v4453
  %v4455 = vpop.f32.mrb[0].mxu0
  %v4456 = vpop.f32.mrb[0].mxu0
  %v4457 = vadd.f32 0.0, %v4456
  %v4458 = vpop.f32.mrb[0].mxu0
  %4459 = vmatprep.mubr.bf16.mxu0 0
  %4460 = vmatmul.mubr.bf16.gmra.mrb[0].mxu0 %v4289
  %v4461 = vpop.f32.mrb[0].mxu0
  %v4462 = vadd.f32 0.0, %v4461
  %v4463 = vpop.f32.mrb[0].mxu0
  %v4464 = vpop.f32.mrb[0].mxu0
  %v4465 = vadd.f32 0.0, %v4464
  %v4466 = vpop.f32.mrb[0].mxu0
  %4467 = vmatprep.mubr.bf16.mxu0 0
  %4468 = vmatmul.mubr.bf16.gmra.mrb[0].mxu0 %v4290
  %v4469 = vpop.f32.mrb[0].mxu0
  %v4470 = vadd.f32 0.0, %v4469
  %v4471 = vpop.f32.mrb[0].mxu0
  %v4472 = vpop.f32.mrb[0].mxu0
  %v4473 = vadd.f32 0.0, %v4472
  %v4474 = vpop.f32.mrb[0].mxu0
  %4475 = vmatprep.mubr.bf16.mxu0 0
  %4476 = vmatmul.mubr.bf16.gmra.mrb[0].mxu0 %v4291
  %v4477 = vpop.f32.mrb[0].mxu0
  %v4478 = vadd.f32 0.0, %v4477
  %v4479 = vpop.f32.mrb[0].mxu0
  %v4480 = vpop.f32.mrb[0].mxu0
  %v4481 = vadd.f32 0.0, %v4480
  %v4482 = vpop.f32.mrb[0].mxu0
  %4483 = vmatprep.mubr.bf16.mxu0 0
  %4484 = vmatmul.mubr.bf16.gmra.mrb[0].mxu0 %v4292
  %v4485 = vpop.f32.mrb[0].mxu0
  %v4486 = vadd.f32 0.0, %v4485
  %v4487 = vpop.f32.mrb[0].mxu0
  %v4488 = vpop.f32.mrb[0].mxu0
  %v4489 = vadd.f32 0.0, %v4488
  %v4490 = vpop.f32.mrb[0].mxu0
  %4491 = vmatprep.mubr.bf16.mxu0 0
  %4492 = vmatmul.mubr.bf16.gmra.mrb[0].mxu0 %v4293
  %v4493 = vpop.f32.mrb[0].mxu0
  %v4494 = vadd.f32 0.0, %v4493
  %v4495 = vpop.f32.mrb[0].mxu0
  %v4496 = vpop.f32.mrb[0].mxu0
  %v4497 = vadd.f32 0.0, %v4496
  %v4498 = vpop.f32.mrb[0].mxu0
  %4499 = vmatprep.mubr.bf16.mxu0 0
  %4500 = vmatmul.mubr.bf16.gmra.mrb[0].mxu0 %v4294
  %v4501 = vpop.f32.mrb[0].mxu0
  %v4502 = vadd.f32 0.0, %v4501
  %v4503 = vpop.f32.mrb[0].mxu0
  %v4504 = vpop.f32.mrb[0].mxu0
  %v4505 = vadd.f32 0.0, %v4504
  %v4506 = vpop.f32.mrb[0].mxu0
  %4507 = vmatprep.mubr.bf16.mxu0 0
  %4508 = vmatmul.mubr.bf16.gmra.mrb[0].mxu0 %v4295
  %v4509 = vpop.f32.mrb[0].mxu0
  %v4510 = vadd.f32 0.0, %v4509
  %v4511 = vpop.f32.mrb[0].mxu0
  %v4512 = vpop.f32.mrb[0].mxu0
  %v4513 = vadd.f32 0.0, %v4512
  %v4514 = vpop.f32.mrb[0].mxu0
  %4515 = vmatprep.mubr.bf16.mxu0 0
  %4516 = vmatmul.mubr.bf16.gmra.mrb[0].mxu0 %v4296
  %v4517 = vpop.f32.mrb[0].mxu0
  %v4518 = vadd.f32 0.0, %v4517
  %v4519 = vpop.f32.mrb[0].mxu0
  %v4520 = vpop.f32.mrb[0].mxu0
  %v4521 = vadd.f32 0.0, %v4520
  %v4522 = vpop.f32.mrb[0].mxu0
  %4523 = vmatprep.mubr.bf16.mxu0 0
  %4524 = vmatmul.mubr.bf16.gmra.mrb[0].mxu0 %v4297
  %v4525 = vpop.f32.mrb[0].mxu0
  %v4526 = vadd.f32 0.0, %v4525
  %v4527 = vpop.f32.mrb[0].mxu0
  %v4528 = vpop.f32.mrb[0].mxu0
  %v4529 = vadd.f32 0.0, %v4528
  %v4530 = vpop.f32.mrb[0].mxu0
  %4531 = vmatprep.mubr.bf16.mxu0 0
  %4532 = vmatmul.mubr.bf16.gmra.mrb[0].mxu0 %v4298
  %v4533 = vpop.f32.mrb[0].mxu0
  %v4534 = vadd.f32 0.0, %v4533
  %v4535 = vpop.f32.mrb[0].mxu0
  %v4536 = vpop.f32.mrb[0].mxu0
  %v4537 = vadd.f32 0.0, %v4536
  %v4538 = vpop.f32.mrb[0].mxu0
  %4539 = vmatprep.mubr.bf16.mxu0 0
  %4540 = vmatmul.mubr.bf16.gmra.mrb[0].mxu0 %v4299
  %v4541 = vpop.f32.mrb[0].mxu0
  %v4542 = vadd.f32 0.0, %v4541
  %v4543 = vpop.f32.mrb[0].mxu0
  %v4544 = vpop.f32.mrb[0].mxu0
  %v4545 = vadd.f32 0.0, %v4544
  %v4546 = vpop.f32.mrb[0].mxu0
  %4547 = vmatprep.mubr.bf16.mxu0 0
  %4548 = vmatmul.mubr.bf16.gmra.mrb[0].mxu0 %v4300
  %v4549 = vpop.f32.mrb[0].mxu0
  %v4550 = vadd.f32 0.0, %v4549
  %v4551 = vpop.f32.mrb[0].mxu0
  %v4552 = vpop.f32.mrb[0].mxu0
  %v4553 = vadd.f32 0.0, %v4552
  %v4554 = vpop.f32.mrb[0].mxu0
  %4555 = vmatprep.mubr.bf16.mxu0 0
  %4556 = vmatmul.mubr.bf16.gmra.mrb[0].mxu0 %v4301
  %v4557 = vpop.f32.mrb[0].mxu0
  %v4558 = vadd.f32 0.0, %v4557
  %v4559 = vpop.f32.mrb[0].mxu0
  %v4560 = vpop.f32.mrb[0].mxu0
  %v4561 = vadd.f32 0.0, %v4560
  %v4562 = vpop.f32.mrb[0].mxu0
  %4563 = vmatprep.mubr.bf16.mxu0 0
  %4564 = vmatmul.mubr.bf16.gmra.mrb[0].mxu0 %v4302
  %v4565 = vpop.f32.mrb[0].mxu0
  %v4566 = vadd.f32 0.0, %v4565
  %v4567 = vpop.f32.mrb[0].mxu0
  %v4568 = vpop.f32.mrb[0].mxu0
  %v4569 = vadd.f32 0.0, %v4568
  %v4570 = vpop.f32.mrb[0].mxu0
  %4571 = vmatprep.mubr.bf16.mxu0 0
  %4572 = vmatmul.mubr.bf16.gmra.mrb[0].mxu0 %v4303
  %v4573 = vpop.f32.mrb[0].mxu0
  %v4574 = vadd.f32 0.0, %v4573
  %v4575 = vpop.f32.mrb[0].mxu0
  %v4576 = vpop.f32.mrb[0].mxu0
  %v4577 = vadd.f32 0.0, %v4576
  %v4578 = vpop.f32.mrb[0].mxu0
  %4579 = vdwg.mxu0
  %v4580 = vpack.c.bf16 %v4369, %v4366
  %v4581 = vpack.c.bf16 %v4377, %v4374
  %v4582 = vpack.c.bf16 %v4385, %v4382
  %v4583 = vpack.c.bf16 %v4393, %v4390
  %v4584 = vpack.c.bf16 %v4401, %v4398
  %v4585 = vpack.c.bf16 %v4409, %v4406
  %v4586 = vpack.c.bf16 %v4417, %v4414
  %v4587 = vpack.c.bf16 %v4425, %v4422
  %v4588 = vpack.c.bf16 %v4433, %v4430
  %v4589 = vpack.c.bf16 %v4441, %v4438
  %v4590 = vpack.c.bf16 %v4449, %v4446
  %v4591 = vpack.c.bf16 %v4457, %v4454
  %v4592 = vpack.c.bf16 %v4465, %v4462
  %v4593 = vpack.c.bf16 %v4473, %v4470
  %v4594 = vpack.c.bf16 %v4481, %v4478
  %v4595 = vpack.c.bf16 %v4489, %v4486
  %v4596 = vpack.c.bf16 %v4497, %v4494
  %v4597 = vpack.c.bf16 %v4505, %v4502
  %v4598 = vpack.c.bf16 %v4513, %v4510
  %v4599 = vpack.c.bf16 %v4521, %v4518
  %v4600 = vpack.c.bf16 %v4529, %v4526
  %v4601 = vpack.c.bf16 %v4537, %v4534
  %v4602 = vpack.c.bf16 %v4545, %v4542
  %v4603 = vpack.c.bf16 %v4553, %v4550
  %v4604 = vpack.c.bf16 %v4561, %v4558
  %v4605 = vpack.c.bf16 %v4569, %v4566
  %v4606 = vpack.c.bf16 %v4577, %v4574
  %v4607 = vld [vmem:[%s8] sm:$0x1]
  %v4609 = vlaneseq
  %v4610 = vshrl.u32 %v4609, 7
  %v4611 = vsub.s32 0, %v4610
  %v4612 = vrot.slane %v4607, %v4611
  %v4614 = vadd.f32 %v4612, 0.0
  %v4615 = vld [vmem:[%s7] sm:$0xf]
  %v4616 = vld [vmem:[%s7 + $0x4] sm:$0xf]
  %v4617 = vld [vmem:[%s7 + $0x8] sm:$0xf]
  %v4618 = vld [vmem:[%s7 + $0xc] sm:$0xf]
  %v4619 = vld [vmem:[%s7 + $0x10] sm:$0xf]
  %v4620 = vld [vmem:[%s7 + $0x14] sm:$0xf]
  %v4621 = vld [vmem:[%s7 + $0x18] sm:$0xf]
  %v4622 = vld [vmem:[%s7 + $0x1c] sm:$0xf]
  %v4631 = vunpack.c.l.b16 %v4615
  %v4632 = vunpack.c.l.b16 %v4616
  %v4633 = vunpack.c.l.b16 %v4617
  %v4634 = vunpack.c.l.b16 %v4618
  %v4635 = vunpack.c.l.b16 %v4619
  %v4636 = vunpack.c.l.b16 %v4620
  %v4637 = vunpack.c.l.b16 %v4621
  %v4638 = vunpack.c.l.b16 %v4622
  %v4639 = vpack.c.b16 %v4632, %v4631
  %v4640 = vpack.c.b16 %v4634, %v4633
  %v4641 = vpack.c.b16 %v4636, %v4635
  %v4642 = vpack.c.b16 %v4638, %v4637
  %vm4647 = vcmask 523264
  %v4649 = vsel %vm4647, %v4580, 0
  %4651 = vmatprep.subr.bf16.mxu0 0
  %4652 = vmatpush1.bf16.msra.mxu0 %v4639
  %4653 = vmatprep.subr.bf16.mxu0 0
  %4654 = vmatpush1.bf16.msra.mxu0 %v4640
  %4655 = vmatprep.subr.bf16.mxu0 0
  %4656 = vmatpush1.bf16.msra.mxu0 %v4641
  %4657 = vmatprep.subr.bf16.mxu0 0
  %4658 = vmatpush1.bf16.msra.mxu0 %v4642
  %4659 = vmatprep.subr.bf16.mxu0 0
  %4660 = vmatpush1.bf16.msra.mxu0 0
  %4661 = vmatprep.subr.bf16.mxu0 0
  %4662 = vmatpush1.bf16.msra.mxu0 0
  %4663 = vmatprep.subr.bf16.mxu0 0
  %4664 = vmatpush1.bf16.msra.mxu0 0
  %4665 = vmatprep.subr.bf16.mxu0 0
  %4666 = vmatpush1.bf16.msra.mxu0 0
  %4667 = vmatprep.subr.bf16.mxu0 0
  %4668 = vmatpush1.bf16.msra.mxu0 0
  %4669 = vmatprep.subr.bf16.mxu0 0
  %4670 = vmatpush1.bf16.msra.mxu0 0
  %4671 = vmatprep.subr.bf16.mxu0 0
  %4672 = vmatpush1.bf16.msra.mxu0 0
  %4673 = vmatprep.subr.bf16.mxu0 0
  %4674 = vmatpush1.bf16.msra.mxu0 0
  %4675 = vmatprep.subr.bf16.mxu0 0
  %4676 = vmatpush1.bf16.msra.mxu0 0
  %4677 = vmatprep.subr.bf16.mxu0 0
  %4678 = vmatpush1.bf16.msra.mxu0 0
  %4679 = vmatprep.subr.bf16.mxu0 0
  %4680 = vmatpush1.bf16.msra.mxu0 0
  %4681 = vmatprep.subr.bf16.mxu0 0
  %4682 = vmatpush1.bf16.msra.mxu0 0
  %4683 = vmatprep.mubr.bf16.mxu0 0
  %4684 = vmatmul.mubr.bf16.gmra.mrb[0].mxu0 %v4649
  %v4685 = vpop.f32.mrb[0].mxu0
  %v4686 = vadd.f32 0.0, %v4685
  %v4687 = vpop.f32.mrb[0].mxu0
  %v4688 = vpop.f32.mrb[0].mxu0
  %v4689 = vadd.f32 0.0, %v4688
  %v4690 = vpop.f32.mrb[0].mxu0
  %4691 = vdwg.mxu0
  %v4692 = vadd.f32 %v4614, %v4686
  %v4693 = vadd.f32 %v4614, %v4689
  %v4694 = vld [vmem:[%s7 + $0x20] sm:$0xf]
  %v4695 = vld [vmem:[%s7 + $0x24] sm:$0xf]
  %v4696 = vld [vmem:[%s7 + $0x28] sm:$0xf]
  %v4697 = vld [vmem:[%s7 + $0x2c] sm:$0xf]
  %v4698 = vld [vmem:[%s7 + $0x30] sm:$0xf]
  %v4699 = vld [vmem:[%s7 + $0x34] sm:$0xf]
  %v4700 = vld [vmem:[%s7 + $0x38] sm:$0xf]
  %v4701 = vld [vmem:[%s7 + $0x3c] sm:$0xf]
  %v4710 = vunpack.c.l.b16 %v4694
  %v4711 = vunpack.c.l.b16 %v4695
  %v4712 = vunpack.c.l.b16 %v4696
  %v4713 = vunpack.c.l.b16 %v4697
  %v4714 = vunpack.c.l.b16 %v4698
  %v4715 = vunpack.c.l.b16 %v4699
  %v4716 = vunpack.c.l.b16 %v4700
  %v4717 = vunpack.c.l.b16 %v4701
  %v4718 = vpack.c.b16 %v4711, %v4710
  %v4719 = vpack.c.b16 %v4713, %v4712
  %v4720 = vpack.c.b16 %v4715, %v4714
  %v4721 = vpack.c.b16 %v4717, %v4716
  %v4727 = vsel %vm4647, %v4581, 0
  %4729 = vmatprep.subr.bf16.mxu0 0
  %4730 = vmatpush1.bf16.msra.mxu0 %v4718
  %4731 = vmatprep.subr.bf16.mxu0 0
  %4732 = vmatpush1.bf16.msra.mxu0 %v4719
  %4733 = vmatprep.subr.bf16.mxu0 0
  %4734 = vmatpush1.bf16.msra.mxu0 %v4720
  %4735 = vmatprep.subr.bf16.mxu0 0
  %4736 = vmatpush1.bf16.msra.mxu0 %v4721
  %4737 = vmatprep.subr.bf16.mxu0 0
  %4738 = vmatpush1.bf16.msra.mxu0 0
  %4739 = vmatprep.subr.bf16.mxu0 0
  %4740 = vmatpush1.bf16.msra.mxu0 0
  %4741 = vmatprep.subr.bf16.mxu0 0
  %4742 = vmatpush1.bf16.msra.mxu0 0
  %4743 = vmatprep.subr.bf16.mxu0 0
  %4744 = vmatpush1.bf16.msra.mxu0 0
  %4745 = vmatprep.subr.bf16.mxu0 0
  %4746 = vmatpush1.bf16.msra.mxu0 0
  %4747 = vmatprep.subr.bf16.mxu0 0
  %4748 = vmatpush1.bf16.msra.mxu0 0
  %4749 = vmatprep.subr.bf16.mxu0 0
  %4750 = vmatpush1.bf16.msra.mxu0 0
  %4751 = vmatprep.subr.bf16.mxu0 0
  %4752 = vmatpush1.bf16.msra.mxu0 0
  %4753 = vmatprep.subr.bf16.mxu0 0
  %4754 = vmatpush1.bf16.msra.mxu0 0
  %4755 = vmatprep.subr.bf16.mxu0 0
  %4756 = vmatpush1.bf16.msra.mxu0 0
  %4757 = vmatprep.subr.bf16.mxu0 0
  %4758 = vmatpush1.bf16.msra.mxu0 0
  %4759 = vmatprep.subr.bf16.mxu0 0
  %4760 = vmatpush1.bf16.msra.mxu0 0
  %4761 = vmatprep.mubr.bf16.mxu0 0
  %4762 = vmatmul.mubr.bf16.gmra.mrb[0].mxu0 %v4727
  %v4763 = vpop.f32.mrb[0].mxu0
  %v4764 = vadd.f32 0.0, %v4763
  %v4765 = vpop.f32.mrb[0].mxu0
  %v4766 = vpop.f32.mrb[0].mxu0
  %v4767 = vadd.f32 0.0, %v4766
  %v4768 = vpop.f32.mrb[0].mxu0
  %4769 = vdwg.mxu0
  %v4770 = vadd.f32 %v4692, %v4764
  %v4771 = vadd.f32 %v4693, %v4767
  %v4772 = vld [vmem:[%s7 + $0x40] sm:$0xf]
  %v4773 = vld [vmem:[%s7 + $0x44] sm:$0xf]
  %v4774 = vld [vmem:[%s7 + $0x48] sm:$0xf]
  %v4775 = vld [vmem:[%s7 + $0x4c] sm:$0xf]
  %v4776 = vld [vmem:[%s7 + $0x50] sm:$0xf]
  %v4777 = vld [vmem:[%s7 + $0x54] sm:$0xf]
  %v4778 = vld [vmem:[%s7 + $0x58] sm:$0xf]
  %v4779 = vld [vmem:[%s7 + $0x5c] sm:$0xf]
  %v4788 = vunpack.c.l.b16 %v4772
  %v4789 = vunpack.c.l.b16 %v4773
  %v4790 = vunpack.c.l.b16 %v4774
  %v4791 = vunpack.c.l.b16 %v4775
  %v4792 = vunpack.c.l.b16 %v4776
  %v4793 = vunpack.c.l.b16 %v4777
  %v4794 = vunpack.c.l.b16 %v4778
  %v4795 = vunpack.c.l.b16 %v4779
  %v4796 = vpack.c.b16 %v4789, %v4788
  %v4797 = vpack.c.b16 %v4791, %v4790
  %v4798 = vpack.c.b16 %v4793, %v4792
  %v4799 = vpack.c.b16 %v4795, %v4794
  %v4805 = vsel %vm4647, %v4582, 0
  %4807 = vmatprep.subr.bf16.mxu0 0
  %4808 = vmatpush1.bf16.msra.mxu0 %v4796
  %4809 = vmatprep.subr.bf16.mxu0 0
  %4810 = vmatpush1.bf16.msra.mxu0 %v4797
  %4811 = vmatprep.subr.bf16.mxu0 0
  %4812 = vmatpush1.bf16.msra.mxu0 %v4798
  %4813 = vmatprep.subr.bf16.mxu0 0
  %4814 = vmatpush1.bf16.msra.mxu0 %v4799
  %4815 = vmatprep.subr.bf16.mxu0 0
  %4816 = vmatpush1.bf16.msra.mxu0 0
  %4817 = vmatprep.subr.bf16.mxu0 0
  %4818 = vmatpush1.bf16.msra.mxu0 0
  %4819 = vmatprep.subr.bf16.mxu0 0
  %4820 = vmatpush1.bf16.msra.mxu0 0
  %4821 = vmatprep.subr.bf16.mxu0 0
  %4822 = vmatpush1.bf16.msra.mxu0 0
  %4823 = vmatprep.subr.bf16.mxu0 0
  %4824 = vmatpush1.bf16.msra.mxu0 0
  %4825 = vmatprep.subr.bf16.mxu0 0
  %4826 = vmatpush1.bf16.msra.mxu0 0
  %4827 = vmatprep.subr.bf16.mxu0 0
  %4828 = vmatpush1.bf16.msra.mxu0 0
  %4829 = vmatprep.subr.bf16.mxu0 0
  %4830 = vmatpush1.bf16.msra.mxu0 0
  %4831 = vmatprep.subr.bf16.mxu0 0
  %4832 = vmatpush1.bf16.msra.mxu0 0
  %4833 = vmatprep.subr.bf16.mxu0 0
  %4834 = vmatpush1.bf16.msra.mxu0 0
  %4835 = vmatprep.subr.bf16.mxu0 0
  %4836 = vmatpush1.bf16.msra.mxu0 0
  %4837 = vmatprep.subr.bf16.mxu0 0
  %4838 = vmatpush1.bf16.msra.mxu0 0
  %4839 = vmatprep.mubr.bf16.mxu0 0
  %4840 = vmatmul.mubr.bf16.gmra.mrb[0].mxu0 %v4805
  %v4841 = vpop.f32.mrb[0].mxu0
  %v4842 = vadd.f32 0.0, %v4841
  %v4843 = vpop.f32.mrb[0].mxu0
  %v4844 = vpop.f32.mrb[0].mxu0
  %v4845 = vadd.f32 0.0, %v4844
  %v4846 = vpop.f32.mrb[0].mxu0
  %4847 = vdwg.mxu0
  %v4848 = vadd.f32 %v4770, %v4842
  %v4849 = vadd.f32 %v4771, %v4845
  %v4850 = vld [vmem:[%s7 + $0x60] sm:$0xf]
  %v4851 = vld [vmem:[%s7 + $0x64] sm:$0xf]
  %v4852 = vld [vmem:[%s7 + $0x68] sm:$0xf]
  %v4853 = vld [vmem:[%s7 + $0x6c] sm:$0xf]
  %v4854 = vld [vmem:[%s7 + $0x70] sm:$0xf]
  %v4855 = vld [vmem:[%s7 + $0x74] sm:$0xf]
  %v4856 = vld [vmem:[%s7 + $0x78] sm:$0xf]
  %v4857 = vld [vmem:[%s7 + $0x7c] sm:$0xf]
  %v4866 = vunpack.c.l.b16 %v4850
  %v4867 = vunpack.c.l.b16 %v4851
  %v4868 = vunpack.c.l.b16 %v4852
  %v4869 = vunpack.c.l.b16 %v4853
  %v4870 = vunpack.c.l.b16 %v4854
  %v4871 = vunpack.c.l.b16 %v4855
  %v4872 = vunpack.c.l.b16 %v4856
  %v4873 = vunpack.c.l.b16 %v4857
  %v4874 = vpack.c.b16 %v4867, %v4866
  %v4875 = vpack.c.b16 %v4869, %v4868
  %v4876 = vpack.c.b16 %v4871, %v4870
  %v4877 = vpack.c.b16 %v4873, %v4872
  %v4883 = vsel %vm4647, %v4583, 0
  %4885 = vmatprep.subr.bf16.mxu0 0
  %4886 = vmatpush1.bf16.msra.mxu0 %v4874
  %4887 = vmatprep.subr.bf16.mxu0 0
  %4888 = vmatpush1.bf16.msra.mxu0 %v4875
  %4889 = vmatprep.subr.bf16.mxu0 0
  %4890 = vmatpush1.bf16.msra.mxu0 %v4876
  %4891 = vmatprep.subr.bf16.mxu0 0
  %4892 = vmatpush1.bf16.msra.mxu0 %v4877
  %4893 = vmatprep.subr.bf16.mxu0 0
  %4894 = vmatpush1.bf16.msra.mxu0 0
  %4895 = vmatprep.subr.bf16.mxu0 0
  %4896 = vmatpush1.bf16.msra.mxu0 0
  %4897 = vmatprep.subr.bf16.mxu0 0
  %4898 = vmatpush1.bf16.msra.mxu0 0
  %4899 = vmatprep.subr.bf16.mxu0 0
  %4900 = vmatpush1.bf16.msra.mxu0 0
  %4901 = vmatprep.subr.bf16.mxu0 0
  %4902 = vmatpush1.bf16.msra.mxu0 0
  %4903 = vmatprep.subr.bf16.mxu0 0
  %4904 = vmatpush1.bf16.msra.mxu0 0
  %4905 = vmatprep.subr.bf16.mxu0 0
  %4906 = vmatpush1.bf16.msra.mxu0 0
  %4907 = vmatprep.subr.bf16.mxu0 0
  %4908 = vmatpush1.bf16.msra.mxu0 0
  %4909 = vmatprep.subr.bf16.mxu0 0
  %4910 = vmatpush1.bf16.msra.mxu0 0
  %4911 = vmatprep.subr.bf16.mxu0 0
  %4912 = vmatpush1.bf16.msra.mxu0 0
  %4913 = vmatprep.subr.bf16.mxu0 0
  %4914 = vmatpush1.bf16.msra.mxu0 0
  %4915 = vmatprep.subr.bf16.mxu0 0
  %4916 = vmatpush1.bf16.msra.mxu0 0
  %4917 = vmatprep.mubr.bf16.mxu0 0
  %4918 = vmatmul.mubr.bf16.gmra.mrb[0].mxu0 %v4883
  %v4919 = vpop.f32.mrb[0].mxu0
  %v4920 = vadd.f32 0.0, %v4919
  %v4921 = vpop.f32.mrb[0].mxu0
  %v4922 = vpop.f32.mrb[0].mxu0
  %v4923 = vadd.f32 0.0, %v4922
  %v4924 = vpop.f32.mrb[0].mxu0
  %4925 = vdwg.mxu0
  %v4926 = vadd.f32 %v4848, %v4920
  %v4927 = vadd.f32 %v4849, %v4923
  %v4928 = vld [vmem:[%s7 + $0x80] sm:$0xf]
  %v4929 = vld [vmem:[%s7 + $0x84] sm:$0xf]
  %v4930 = vld [vmem:[%s7 + $0x88] sm:$0xf]
  %v4931 = vld [vmem:[%s7 + $0x8c] sm:$0xf]
  %v4932 = vld [vmem:[%s7 + $0x90] sm:$0xf]
  %v4933 = vld [vmem:[%s7 + $0x94] sm:$0xf]
  %v4934 = vld [vmem:[%s7 + $0x98] sm:$0xf]
  %v4935 = vld [vmem:[%s7 + $0x9c] sm:$0xf]
  %v4944 = vunpack.c.l.b16 %v4928
  %v4945 = vunpack.c.l.b16 %v4929
  %v4946 = vunpack.c.l.b16 %v4930
  %v4947 = vunpack.c.l.b16 %v4931
  %v4948 = vunpack.c.l.b16 %v4932
  %v4949 = vunpack.c.l.b16 %v4933
  %v4950 = vunpack.c.l.b16 %v4934
  %v4951 = vunpack.c.l.b16 %v4935
  %v4952 = vpack.c.b16 %v4945, %v4944
  %v4953 = vpack.c.b16 %v4947, %v4946
  %v4954 = vpack.c.b16 %v4949, %v4948
  %v4955 = vpack.c.b16 %v4951, %v4950
  %v4961 = vsel %vm4647, %v4584, 0
  %4963 = vmatprep.subr.bf16.mxu0 0
  %4964 = vmatpush1.bf16.msra.mxu0 %v4952
  %4965 = vmatprep.subr.bf16.mxu0 0
  %4966 = vmatpush1.bf16.msra.mxu0 %v4953
  %4967 = vmatprep.subr.bf16.mxu0 0
  %4968 = vmatpush1.bf16.msra.mxu0 %v4954
  %4969 = vmatprep.subr.bf16.mxu0 0
  %4970 = vmatpush1.bf16.msra.mxu0 %v4955
  %4971 = vmatprep.subr.bf16.mxu0 0
  %4972 = vmatpush1.bf16.msra.mxu0 0
  %4973 = vmatprep.subr.bf16.mxu0 0
  %4974 = vmatpush1.bf16.msra.mxu0 0
  %4975 = vmatprep.subr.bf16.mxu0 0
  %4976 = vmatpush1.bf16.msra.mxu0 0
  %4977 = vmatprep.subr.bf16.mxu0 0
  %4978 = vmatpush1.bf16.msra.mxu0 0
  %4979 = vmatprep.subr.bf16.mxu0 0
  %4980 = vmatpush1.bf16.msra.mxu0 0
  %4981 = vmatprep.subr.bf16.mxu0 0
  %4982 = vmatpush1.bf16.msra.mxu0 0
  %4983 = vmatprep.subr.bf16.mxu0 0
  %4984 = vmatpush1.bf16.msra.mxu0 0
  %4985 = vmatprep.subr.bf16.mxu0 0
  %4986 = vmatpush1.bf16.msra.mxu0 0
  %4987 = vmatprep.subr.bf16.mxu0 0
  %4988 = vmatpush1.bf16.msra.mxu0 0
  %4989 = vmatprep.subr.bf16.mxu0 0
  %4990 = vmatpush1.bf16.msra.mxu0 0
  %4991 = vmatprep.subr.bf16.mxu0 0
  %4992 = vmatpush1.bf16.msra.mxu0 0
  %4993 = vmatprep.subr.bf16.mxu0 0
  %4994 = vmatpush1.bf16.msra.mxu0 0
  %4995 = vmatprep.mubr.bf16.mxu0 0
  %4996 = vmatmul.mubr.bf16.gmra.mrb[0].mxu0 %v4961
  %v4997 = vpop.f32.mrb[0].mxu0
  %v4998 = vadd.f32 0.0, %v4997
  %v4999 = vpop.f32.mrb[0].mxu0
  %v5000 = vpop.f32.mrb[0].mxu0
  %v5001 = vadd.f32 0.0, %v5000
  %v5002 = vpop.f32.mrb[0].mxu0
  %5003 = vdwg.mxu0
  %v5004 = vadd.f32 %v4926, %v4998
  %v5005 = vadd.f32 %v4927, %v5001
  %v5006 = vld [vmem:[%s7 + $0xa0] sm:$0xf]
  %v5007 = vld [vmem:[%s7 + $0xa4] sm:$0xf]
  %v5008 = vld [vmem:[%s7 + $0xa8] sm:$0xf]
  %v5009 = vld [vmem:[%s7 + $0xac] sm:$0xf]
  %v5010 = vld [vmem:[%s7 + $0xb0] sm:$0xf]
  %v5011 = vld [vmem:[%s7 + $0xb4] sm:$0xf]
  %v5012 = vld [vmem:[%s7 + $0xb8] sm:$0xf]
  %v5013 = vld [vmem:[%s7 + $0xbc] sm:$0xf]
  %v5022 = vunpack.c.l.b16 %v5006
  %v5023 = vunpack.c.l.b16 %v5007
  %v5024 = vunpack.c.l.b16 %v5008
  %v5025 = vunpack.c.l.b16 %v5009
  %v5026 = vunpack.c.l.b16 %v5010
  %v5027 = vunpack.c.l.b16 %v5011
  %v5028 = vunpack.c.l.b16 %v5012
  %v5029 = vunpack.c.l.b16 %v5013
  %v5030 = vpack.c.b16 %v5023, %v5022
  %v5031 = vpack.c.b16 %v5025, %v5024
  %v5032 = vpack.c.b16 %v5027, %v5026
  %v5033 = vpack.c.b16 %v5029, %v5028
  %v5039 = vsel %vm4647, %v4585, 0
  %5041 = vmatprep.subr.bf16.mxu0 0
  %5042 = vmatpush1.bf16.msra.mxu0 %v5030
  %5043 = vmatprep.subr.bf16.mxu0 0
  %5044 = vmatpush1.bf16.msra.mxu0 %v5031
  %5045 = vmatprep.subr.bf16.mxu0 0
  %5046 = vmatpush1.bf16.msra.mxu0 %v5032
  %5047 = vmatprep.subr.bf16.mxu0 0
  %5048 = vmatpush1.bf16.msra.mxu0 %v5033
  %5049 = vmatprep.subr.bf16.mxu0 0
  %5050 = vmatpush1.bf16.msra.mxu0 0
  %5051 = vmatprep.subr.bf16.mxu0 0
  %5052 = vmatpush1.bf16.msra.mxu0 0
  %5053 = vmatprep.subr.bf16.mxu0 0
  %5054 = vmatpush1.bf16.msra.mxu0 0
  %5055 = vmatprep.subr.bf16.mxu0 0
  %5056 = vmatpush1.bf16.msra.mxu0 0
  %5057 = vmatprep.subr.bf16.mxu0 0
  %5058 = vmatpush1.bf16.msra.mxu0 0
  %5059 = vmatprep.subr.bf16.mxu0 0
  %5060 = vmatpush1.bf16.msra.mxu0 0
  %5061 = vmatprep.subr.bf16.mxu0 0
  %5062 = vmatpush1.bf16.msra.mxu0 0
  %5063 = vmatprep.subr.bf16.mxu0 0
  %5064 = vmatpush1.bf16.msra.mxu0 0
  %5065 = vmatprep.subr.bf16.mxu0 0
  %5066 = vmatpush1.bf16.msra.mxu0 0
  %5067 = vmatprep.subr.bf16.mxu0 0
  %5068 = vmatpush1.bf16.msra.mxu0 0
  %5069 = vmatprep.subr.bf16.mxu0 0
  %5070 = vmatpush1.bf16.msra.mxu0 0
  %5071 = vmatprep.subr.bf16.mxu0 0
  %5072 = vmatpush1.bf16.msra.mxu0 0
  %5073 = vmatprep.mubr.bf16.mxu0 0
  %5074 = vmatmul.mubr.bf16.gmra.mrb[0].mxu0 %v5039
  %v5075 = vpop.f32.mrb[0].mxu0
  %v5076 = vadd.f32 0.0, %v5075
  %v5077 = vpop.f32.mrb[0].mxu0
  %v5078 = vpop.f32.mrb[0].mxu0
  %v5079 = vadd.f32 0.0, %v5078
  %v5080 = vpop.f32.mrb[0].mxu0
  %5081 = vdwg.mxu0
  %v5082 = vadd.f32 %v5004, %v5076
  %v5083 = vadd.f32 %v5005, %v5079
  %v5084 = vld [vmem:[%s7 + $0xc0] sm:$0xf]
  %v5085 = vld [vmem:[%s7 + $0xc4] sm:$0xf]
  %v5086 = vld [vmem:[%s7 + $0xc8] sm:$0xf]
  %v5087 = vld [vmem:[%s7 + $0xcc] sm:$0xf]
  %v5088 = vld [vmem:[%s7 + $0xd0] sm:$0xf]
  %v5089 = vld [vmem:[%s7 + $0xd4] sm:$0xf]
  %v5090 = vld [vmem:[%s7 + $0xd8] sm:$0xf]
  %v5091 = vld [vmem:[%s7 + $0xdc] sm:$0xf]
  %v5100 = vunpack.c.l.b16 %v5084
  %v5101 = vunpack.c.l.b16 %v5085
  %v5102 = vunpack.c.l.b16 %v5086
  %v5103 = vunpack.c.l.b16 %v5087
  %v5104 = vunpack.c.l.b16 %v5088
  %v5105 = vunpack.c.l.b16 %v5089
  %v5106 = vunpack.c.l.b16 %v5090
  %v5107 = vunpack.c.l.b16 %v5091
  %v5108 = vpack.c.b16 %v5101, %v5100
  %v5109 = vpack.c.b16 %v5103, %v5102
  %v5110 = vpack.c.b16 %v5105, %v5104
  %v5111 = vpack.c.b16 %v5107, %v5106
  %v5117 = vsel %vm4647, %v4586, 0
  %5119 = vmatprep.subr.bf16.mxu0 0
  %5120 = vmatpush1.bf16.msra.mxu0 %v5108
  %5121 = vmatprep.subr.bf16.mxu0 0
  %5122 = vmatpush1.bf16.msra.mxu0 %v5109
  %5123 = vmatprep.subr.bf16.mxu0 0
  %5124 = vmatpush1.bf16.msra.mxu0 %v5110
  %5125 = vmatprep.subr.bf16.mxu0 0
  %5126 = vmatpush1.bf16.msra.mxu0 %v5111
  %5127 = vmatprep.subr.bf16.mxu0 0
  %5128 = vmatpush1.bf16.msra.mxu0 0
  %5129 = vmatprep.subr.bf16.mxu0 0
  %5130 = vmatpush1.bf16.msra.mxu0 0
  %5131 = vmatprep.subr.bf16.mxu0 0
  %5132 = vmatpush1.bf16.msra.mxu0 0
  %5133 = vmatprep.subr.bf16.mxu0 0
  %5134 = vmatpush1.bf16.msra.mxu0 0
  %5135 = vmatprep.subr.bf16.mxu0 0
  %5136 = vmatpush1.bf16.msra.mxu0 0
  %5137 = vmatprep.subr.bf16.mxu0 0
  %5138 = vmatpush1.bf16.msra.mxu0 0
  %5139 = vmatprep.subr.bf16.mxu0 0
  %5140 = vmatpush1.bf16.msra.mxu0 0
  %5141 = vmatprep.subr.bf16.mxu0 0
  %5142 = vmatpush1.bf16.msra.mxu0 0
  %5143 = vmatprep.subr.bf16.mxu0 0
  %5144 = vmatpush1.bf16.msra.mxu0 0
  %5145 = vmatprep.subr.bf16.mxu0 0
  %5146 = vmatpush1.bf16.msra.mxu0 0
  %5147 = vmatprep.subr.bf16.mxu0 0
  %5148 = vmatpush1.bf16.msra.mxu0 0
  %5149 = vmatprep.subr.bf16.mxu0 0
  %5150 = vmatpush1.bf16.msra.mxu0 0
  %5151 = vmatprep.mubr.bf16.mxu0 0
  %5152 = vmatmul.mubr.bf16.gmra.mrb[0].mxu0 %v5117
  %v5153 = vpop.f32.mrb[0].mxu0
  %v5154 = vadd.f32 0.0, %v5153
  %v5155 = vpop.f32.mrb[0].mxu0
  %v5156 = vpop.f32.mrb[0].mxu0
  %v5157 = vadd.f32 0.0, %v5156
  %v5158 = vpop.f32.mrb[0].mxu0
  %5159 = vdwg.mxu0
  %v5160 = vadd.f32 %v5082, %v5154
  %v5161 = vadd.f32 %v5083, %v5157
  %v5162 = vld [vmem:[%s7 + $0xe0] sm:$0xf]
  %v5163 = vld [vmem:[%s7 + $0xe4] sm:$0xf]
  %v5164 = vld [vmem:[%s7 + $0xe8] sm:$0xf]
  %v5165 = vld [vmem:[%s7 + $0xec] sm:$0xf]
  %v5166 = vld [vmem:[%s7 + $0xf0] sm:$0xf]
  %v5167 = vld [vmem:[%s7 + $0xf4] sm:$0xf]
  %v5168 = vld [vmem:[%s7 + $0xf8] sm:$0xf]
  %v5169 = vld [vmem:[%s7 + $0xfc] sm:$0xf]
  %v5178 = vunpack.c.l.b16 %v5162
  %v5179 = vunpack.c.l.b16 %v5163
  %v5180 = vunpack.c.l.b16 %v5164
  %v5181 = vunpack.c.l.b16 %v5165
  %v5182 = vunpack.c.l.b16 %v5166
  %v5183 = vunpack.c.l.b16 %v5167
  %v5184 = vunpack.c.l.b16 %v5168
  %v5185 = vunpack.c.l.b16 %v5169
  %v5186 = vpack.c.b16 %v5179, %v5178
  %v5187 = vpack.c.b16 %v5181, %v5180
  %v5188 = vpack.c.b16 %v5183, %v5182
  %v5189 = vpack.c.b16 %v5185, %v5184
  %v5195 = vsel %vm4647, %v4587, 0
  %5197 = vmatprep.subr.bf16.mxu0 0
  %5198 = vmatpush1.bf16.msra.mxu0 %v5186
  %5199 = vmatprep.subr.bf16.mxu0 0
  %5200 = vmatpush1.bf16.msra.mxu0 %v5187
  %5201 = vmatprep.subr.bf16.mxu0 0
  %5202 = vmatpush1.bf16.msra.mxu0 %v5188
  %5203 = vmatprep.subr.bf16.mxu0 0
  %5204 = vmatpush1.bf16.msra.mxu0 %v5189
  %5205 = vmatprep.subr.bf16.mxu0 0
  %5206 = vmatpush1.bf16.msra.mxu0 0
  %5207 = vmatprep.subr.bf16.mxu0 0
  %5208 = vmatpush1.bf16.msra.mxu0 0
  %5209 = vmatprep.subr.bf16.mxu0 0
  %5210 = vmatpush1.bf16.msra.mxu0 0
  %5211 = vmatprep.subr.bf16.mxu0 0
  %5212 = vmatpush1.bf16.msra.mxu0 0
  %5213 = vmatprep.subr.bf16.mxu0 0
  %5214 = vmatpush1.bf16.msra.mxu0 0
  %5215 = vmatprep.subr.bf16.mxu0 0
  %5216 = vmatpush1.bf16.msra.mxu0 0
  %5217 = vmatprep.subr.bf16.mxu0 0
  %5218 = vmatpush1.bf16.msra.mxu0 0
  %5219 = vmatprep.subr.bf16.mxu0 0
  %5220 = vmatpush1.bf16.msra.mxu0 0
  %5221 = vmatprep.subr.bf16.mxu0 0
  %5222 = vmatpush1.bf16.msra.mxu0 0
  %5223 = vmatprep.subr.bf16.mxu0 0
  %5224 = vmatpush1.bf16.msra.mxu0 0
  %5225 = vmatprep.subr.bf16.mxu0 0
  %5226 = vmatpush1.bf16.msra.mxu0 0
  %5227 = vmatprep.subr.bf16.mxu0 0
  %5228 = vmatpush1.bf16.msra.mxu0 0
  %5229 = vmatprep.mubr.bf16.mxu0 0
  %5230 = vmatmul.mubr.bf16.gmra.mrb[0].mxu0 %v5195
  %v5231 = vpop.f32.mrb[0].mxu0
  %v5232 = vadd.f32 0.0, %v5231
  %v5233 = vpop.f32.mrb[0].mxu0
  %v5234 = vpop.f32.mrb[0].mxu0
  %v5235 = vadd.f32 0.0, %v5234
  %v5236 = vpop.f32.mrb[0].mxu0
  %5237 = vdwg.mxu0
  %v5238 = vadd.f32 %v5160, %v5232
  %v5239 = vadd.f32 %v5161, %v5235
  %v5240 = vld [vmem:[%s7 + $0x100] sm:$0xf]
  %v5241 = vld [vmem:[%s7 + $0x104] sm:$0xf]
  %v5242 = vld [vmem:[%s7 + $0x108] sm:$0xf]
  %v5243 = vld [vmem:[%s7 + $0x10c] sm:$0xf]
  %v5244 = vld [vmem:[%s7 + $0x110] sm:$0xf]
  %v5245 = vld [vmem:[%s7 + $0x114] sm:$0xf]
  %v5246 = vld [vmem:[%s7 + $0x118] sm:$0xf]
  %v5247 = vld [vmem:[%s7 + $0x11c] sm:$0xf]
  %v5256 = vunpack.c.l.b16 %v5240
  %v5257 = vunpack.c.l.b16 %v5241
  %v5258 = vunpack.c.l.b16 %v5242
  %v5259 = vunpack.c.l.b16 %v5243
  %v5260 = vunpack.c.l.b16 %v5244
  %v5261 = vunpack.c.l.b16 %v5245
  %v5262 = vunpack.c.l.b16 %v5246
  %v5263 = vunpack.c.l.b16 %v5247
  %v5264 = vpack.c.b16 %v5257, %v5256
  %v5265 = vpack.c.b16 %v5259, %v5258
  %v5266 = vpack.c.b16 %v5261, %v5260
  %v5267 = vpack.c.b16 %v5263, %v5262
  %v5273 = vsel %vm4647, %v4588, 0
  %5275 = vmatprep.subr.bf16.mxu0 0
  %5276 = vmatpush1.bf16.msra.mxu0 %v5264
  %5277 = vmatprep.subr.bf16.mxu0 0
  %5278 = vmatpush1.bf16.msra.mxu0 %v5265
  %5279 = vmatprep.subr.bf16.mxu0 0
  %5280 = vmatpush1.bf16.msra.mxu0 %v5266
  %5281 = vmatprep.subr.bf16.mxu0 0
  %5282 = vmatpush1.bf16.msra.mxu0 %v5267
  %5283 = vmatprep.subr.bf16.mxu0 0
  %5284 = vmatpush1.bf16.msra.mxu0 0
  %5285 = vmatprep.subr.bf16.mxu0 0
  %5286 = vmatpush1.bf16.msra.mxu0 0
  %5287 = vmatprep.subr.bf16.mxu0 0
  %5288 = vmatpush1.bf16.msra.mxu0 0
  %5289 = vmatprep.subr.bf16.mxu0 0
  %5290 = vmatpush1.bf16.msra.mxu0 0
  %5291 = vmatprep.subr.bf16.mxu0 0
  %5292 = vmatpush1.bf16.msra.mxu0 0
  %5293 = vmatprep.subr.bf16.mxu0 0
  %5294 = vmatpush1.bf16.msra.mxu0 0
  %5295 = vmatprep.subr.bf16.mxu0 0
  %5296 = vmatpush1.bf16.msra.mxu0 0
  %5297 = vmatprep.subr.bf16.mxu0 0
  %5298 = vmatpush1.bf16.msra.mxu0 0
  %5299 = vmatprep.subr.bf16.mxu0 0
  %5300 = vmatpush1.bf16.msra.mxu0 0
  %5301 = vmatprep.subr.bf16.mxu0 0
  %5302 = vmatpush1.bf16.msra.mxu0 0
  %5303 = vmatprep.subr.bf16.mxu0 0
  %5304 = vmatpush1.bf16.msra.mxu0 0
  %5305 = vmatprep.subr.bf16.mxu0 0
  %5306 = vmatpush1.bf16.msra.mxu0 0
  %5307 = vmatprep.mubr.bf16.mxu0 0
  %5308 = vmatmul.mubr.bf16.gmra.mrb[0].mxu0 %v5273
  %v5309 = vpop.f32.mrb[0].mxu0
  %v5310 = vadd.f32 0.0, %v5309
  %v5311 = vpop.f32.mrb[0].mxu0
  %v5312 = vpop.f32.mrb[0].mxu0
  %v5313 = vadd.f32 0.0, %v5312
  %v5314 = vpop.f32.mrb[0].mxu0
  %5315 = vdwg.mxu0
  %v5316 = vadd.f32 %v5238, %v5310
  %v5317 = vadd.f32 %v5239, %v5313
  %v5318 = vld [vmem:[%s7 + $0x120] sm:$0xf]
  %v5319 = vld [vmem:[%s7 + $0x124] sm:$0xf]
  %v5320 = vld [vmem:[%s7 + $0x128] sm:$0xf]
  %v5321 = vld [vmem:[%s7 + $0x12c] sm:$0xf]
  %v5322 = vld [vmem:[%s7 + $0x130] sm:$0xf]
  %v5323 = vld [vmem:[%s7 + $0x134] sm:$0xf]
  %v5324 = vld [vmem:[%s7 + $0x138] sm:$0xf]
  %v5325 = vld [vmem:[%s7 + $0x13c] sm:$0xf]
  %v5334 = vunpack.c.l.b16 %v5318
  %v5335 = vunpack.c.l.b16 %v5319
  %v5336 = vunpack.c.l.b16 %v5320
  %v5337 = vunpack.c.l.b16 %v5321
  %v5338 = vunpack.c.l.b16 %v5322
  %v5339 = vunpack.c.l.b16 %v5323
  %v5340 = vunpack.c.l.b16 %v5324
  %v5341 = vunpack.c.l.b16 %v5325
  %v5342 = vpack.c.b16 %v5335, %v5334
  %v5343 = vpack.c.b16 %v5337, %v5336
  %v5344 = vpack.c.b16 %v5339, %v5338
  %v5345 = vpack.c.b16 %v5341, %v5340
  %v5351 = vsel %vm4647, %v4589, 0
  %5353 = vmatprep.subr.bf16.mxu0 0
  %5354 = vmatpush1.bf16.msra.mxu0 %v5342
  %5355 = vmatprep.subr.bf16.mxu0 0
  %5356 = vmatpush1.bf16.msra.mxu0 %v5343
  %5357 = vmatprep.subr.bf16.mxu0 0
  %5358 = vmatpush1.bf16.msra.mxu0 %v5344
  %5359 = vmatprep.subr.bf16.mxu0 0
  %5360 = vmatpush1.bf16.msra.mxu0 %v5345
  %5361 = vmatprep.subr.bf16.mxu0 0
  %5362 = vmatpush1.bf16.msra.mxu0 0
  %5363 = vmatprep.subr.bf16.mxu0 0
  %5364 = vmatpush1.bf16.msra.mxu0 0
  %5365 = vmatprep.subr.bf16.mxu0 0
  %5366 = vmatpush1.bf16.msra.mxu0 0
  %5367 = vmatprep.subr.bf16.mxu0 0
  %5368 = vmatpush1.bf16.msra.mxu0 0
  %5369 = vmatprep.subr.bf16.mxu0 0
  %5370 = vmatpush1.bf16.msra.mxu0 0
  %5371 = vmatprep.subr.bf16.mxu0 0
  %5372 = vmatpush1.bf16.msra.mxu0 0
  %5373 = vmatprep.subr.bf16.mxu0 0
  %5374 = vmatpush1.bf16.msra.mxu0 0
  %5375 = vmatprep.subr.bf16.mxu0 0
  %5376 = vmatpush1.bf16.msra.mxu0 0
  %5377 = vmatprep.subr.bf16.mxu0 0
  %5378 = vmatpush1.bf16.msra.mxu0 0
  %5379 = vmatprep.subr.bf16.mxu0 0
  %5380 = vmatpush1.bf16.msra.mxu0 0
  %5381 = vmatprep.subr.bf16.mxu0 0
  %5382 = vmatpush1.bf16.msra.mxu0 0
  %5383 = vmatprep.subr.bf16.mxu0 0
  %5384 = vmatpush1.bf16.msra.mxu0 0
  %5385 = vmatprep.mubr.bf16.mxu0 0
  %5386 = vmatmul.mubr.bf16.gmra.mrb[0].mxu0 %v5351
  %v5387 = vpop.f32.mrb[0].mxu0
  %v5388 = vadd.f32 0.0, %v5387
  %v5389 = vpop.f32.mrb[0].mxu0
  %v5390 = vpop.f32.mrb[0].mxu0
  %v5391 = vadd.f32 0.0, %v5390
  %v5392 = vpop.f32.mrb[0].mxu0
  %5393 = vdwg.mxu0
  %v5394 = vadd.f32 %v5316, %v5388
  %v5395 = vadd.f32 %v5317, %v5391
  %v5396 = vld [vmem:[%s7 + $0x140] sm:$0xf]
  %v5397 = vld [vmem:[%s7 + $0x144] sm:$0xf]
  %v5398 = vld [vmem:[%s7 + $0x148] sm:$0xf]
  %v5399 = vld [vmem:[%s7 + $0x14c] sm:$0xf]
  %v5400 = vld [vmem:[%s7 + $0x150] sm:$0xf]
  %v5401 = vld [vmem:[%s7 + $0x154] sm:$0xf]
  %v5402 = vld [vmem:[%s7 + $0x158] sm:$0xf]
  %v5403 = vld [vmem:[%s7 + $0x15c] sm:$0xf]
  %v5412 = vunpack.c.l.b16 %v5396
  %v5413 = vunpack.c.l.b16 %v5397
  %v5414 = vunpack.c.l.b16 %v5398
  %v5415 = vunpack.c.l.b16 %v5399
  %v5416 = vunpack.c.l.b16 %v5400
  %v5417 = vunpack.c.l.b16 %v5401
  %v5418 = vunpack.c.l.b16 %v5402
  %v5419 = vunpack.c.l.b16 %v5403
  %v5420 = vpack.c.b16 %v5413, %v5412
  %v5421 = vpack.c.b16 %v5415, %v5414
  %v5422 = vpack.c.b16 %v5417, %v5416
  %v5423 = vpack.c.b16 %v5419, %v5418
  %v5429 = vsel %vm4647, %v4590, 0
  %5431 = vmatprep.subr.bf16.mxu0 0
  %5432 = vmatpush1.bf16.msra.mxu0 %v5420
  %5433 = vmatprep.subr.bf16.mxu0 0
  %5434 = vmatpush1.bf16.msra.mxu0 %v5421
  %5435 = vmatprep.subr.bf16.mxu0 0
  %5436 = vmatpush1.bf16.msra.mxu0 %v5422
  %5437 = vmatprep.subr.bf16.mxu0 0
  %5438 = vmatpush1.bf16.msra.mxu0 %v5423
  %5439 = vmatprep.subr.bf16.mxu0 0
  %5440 = vmatpush1.bf16.msra.mxu0 0
  %5441 = vmatprep.subr.bf16.mxu0 0
  %5442 = vmatpush1.bf16.msra.mxu0 0
  %5443 = vmatprep.subr.bf16.mxu0 0
  %5444 = vmatpush1.bf16.msra.mxu0 0
  %5445 = vmatprep.subr.bf16.mxu0 0
  %5446 = vmatpush1.bf16.msra.mxu0 0
  %5447 = vmatprep.subr.bf16.mxu0 0
  %5448 = vmatpush1.bf16.msra.mxu0 0
  %5449 = vmatprep.subr.bf16.mxu0 0
  %5450 = vmatpush1.bf16.msra.mxu0 0
  %5451 = vmatprep.subr.bf16.mxu0 0
  %5452 = vmatpush1.bf16.msra.mxu0 0
  %5453 = vmatprep.subr.bf16.mxu0 0
  %5454 = vmatpush1.bf16.msra.mxu0 0
  %5455 = vmatprep.subr.bf16.mxu0 0
  %5456 = vmatpush1.bf16.msra.mxu0 0
  %5457 = vmatprep.subr.bf16.mxu0 0
  %5458 = vmatpush1.bf16.msra.mxu0 0
  %5459 = vmatprep.subr.bf16.mxu0 0
  %5460 = vmatpush1.bf16.msra.mxu0 0
  %5461 = vmatprep.subr.bf16.mxu0 0
  %5462 = vmatpush1.bf16.msra.mxu0 0
  %5463 = vmatprep.mubr.bf16.mxu0 0
  %5464 = vmatmul.mubr.bf16.gmra.mrb[0].mxu0 %v5429
  %v5465 = vpop.f32.mrb[0].mxu0
  %v5466 = vadd.f32 0.0, %v5465
  %v5467 = vpop.f32.mrb[0].mxu0
  %v5468 = vpop.f32.mrb[0].mxu0
  %v5469 = vadd.f32 0.0, %v5468
  %v5470 = vpop.f32.mrb[0].mxu0
  %5471 = vdwg.mxu0
  %v5472 = vadd.f32 %v5394, %v5466
  %v5473 = vadd.f32 %v5395, %v5469
  %v5474 = vld [vmem:[%s7 + $0x160] sm:$0xf]
  %v5475 = vld [vmem:[%s7 + $0x164] sm:$0xf]
  %v5476 = vld [vmem:[%s7 + $0x168] sm:$0xf]
  %v5477 = vld [vmem:[%s7 + $0x16c] sm:$0xf]
  %v5478 = vld [vmem:[%s7 + $0x170] sm:$0xf]
  %v5479 = vld [vmem:[%s7 + $0x174] sm:$0xf]
  %v5480 = vld [vmem:[%s7 + $0x178] sm:$0xf]
  %v5481 = vld [vmem:[%s7 + $0x17c] sm:$0xf]
  %v5490 = vunpack.c.l.b16 %v5474
  %v5491 = vunpack.c.l.b16 %v5475
  %v5492 = vunpack.c.l.b16 %v5476
  %v5493 = vunpack.c.l.b16 %v5477
  %v5494 = vunpack.c.l.b16 %v5478
  %v5495 = vunpack.c.l.b16 %v5479
  %v5496 = vunpack.c.l.b16 %v5480
  %v5497 = vunpack.c.l.b16 %v5481
  %v5498 = vpack.c.b16 %v5491, %v5490
  %v5499 = vpack.c.b16 %v5493, %v5492
  %v5500 = vpack.c.b16 %v5495, %v5494
  %v5501 = vpack.c.b16 %v5497, %v5496
  %v5507 = vsel %vm4647, %v4591, 0
  %5509 = vmatprep.subr.bf16.mxu0 0
  %5510 = vmatpush1.bf16.msra.mxu0 %v5498
  %5511 = vmatprep.subr.bf16.mxu0 0
  %5512 = vmatpush1.bf16.msra.mxu0 %v5499
  %5513 = vmatprep.subr.bf16.mxu0 0
  %5514 = vmatpush1.bf16.msra.mxu0 %v5500
  %5515 = vmatprep.subr.bf16.mxu0 0
  %5516 = vmatpush1.bf16.msra.mxu0 %v5501
  %5517 = vmatprep.subr.bf16.mxu0 0
  %5518 = vmatpush1.bf16.msra.mxu0 0
  %5519 = vmatprep.subr.bf16.mxu0 0
  %5520 = vmatpush1.bf16.msra.mxu0 0
  %5521 = vmatprep.subr.bf16.mxu0 0
  %5522 = vmatpush1.bf16.msra.mxu0 0
  %5523 = vmatprep.subr.bf16.mxu0 0
  %5524 = vmatpush1.bf16.msra.mxu0 0
  %5525 = vmatprep.subr.bf16.mxu0 0
  %5526 = vmatpush1.bf16.msra.mxu0 0
  %5527 = vmatprep.subr.bf16.mxu0 0
  %5528 = vmatpush1.bf16.msra.mxu0 0
  %5529 = vmatprep.subr.bf16.mxu0 0
  %5530 = vmatpush1.bf16.msra.mxu0 0
  %5531 = vmatprep.subr.bf16.mxu0 0
  %5532 = vmatpush1.bf16.msra.mxu0 0
  %5533 = vmatprep.subr.bf16.mxu0 0
  %5534 = vmatpush1.bf16.msra.mxu0 0
  %5535 = vmatprep.subr.bf16.mxu0 0
  %5536 = vmatpush1.bf16.msra.mxu0 0
  %5537 = vmatprep.subr.bf16.mxu0 0
  %5538 = vmatpush1.bf16.msra.mxu0 0
  %5539 = vmatprep.subr.bf16.mxu0 0
  %5540 = vmatpush1.bf16.msra.mxu0 0
  %5541 = vmatprep.mubr.bf16.mxu0 0
  %5542 = vmatmul.mubr.bf16.gmra.mrb[0].mxu0 %v5507
  %v5543 = vpop.f32.mrb[0].mxu0
  %v5544 = vadd.f32 0.0, %v5543
  %v5545 = vpop.f32.mrb[0].mxu0
  %v5546 = vpop.f32.mrb[0].mxu0
  %v5547 = vadd.f32 0.0, %v5546
  %v5548 = vpop.f32.mrb[0].mxu0
  %5549 = vdwg.mxu0
  %v5550 = vadd.f32 %v5472, %v5544
  %v5551 = vadd.f32 %v5473, %v5547
  %v5552 = vld [vmem:[%s7 + $0x180] sm:$0xf]
  %v5553 = vld [vmem:[%s7 + $0x184] sm:$0xf]
  %v5554 = vld [vmem:[%s7 + $0x188] sm:$0xf]
  %v5555 = vld [vmem:[%s7 + $0x18c] sm:$0xf]
  %v5556 = vld [vmem:[%s7 + $0x190] sm:$0xf]
  %v5557 = vld [vmem:[%s7 + $0x194] sm:$0xf]
  %v5558 = vld [vmem:[%s7 + $0x198] sm:$0xf]
  %v5559 = vld [vmem:[%s7 + $0x19c] sm:$0xf]
  %v5568 = vunpack.c.l.b16 %v5552
  %v5569 = vunpack.c.l.b16 %v5553
  %v5570 = vunpack.c.l.b16 %v5554
  %v5571 = vunpack.c.l.b16 %v5555
  %v5572 = vunpack.c.l.b16 %v5556
  %v5573 = vunpack.c.l.b16 %v5557
  %v5574 = vunpack.c.l.b16 %v5558
  %v5575 = vunpack.c.l.b16 %v5559
  %v5576 = vpack.c.b16 %v5569, %v5568
  %v5577 = vpack.c.b16 %v5571, %v5570
  %v5578 = vpack.c.b16 %v5573, %v5572
  %v5579 = vpack.c.b16 %v5575, %v5574
  %v5585 = vsel %vm4647, %v4592, 0
  %5587 = vmatprep.subr.bf16.mxu0 0
  %5588 = vmatpush1.bf16.msra.mxu0 %v5576
  %5589 = vmatprep.subr.bf16.mxu0 0
  %5590 = vmatpush1.bf16.msra.mxu0 %v5577
  %5591 = vmatprep.subr.bf16.mxu0 0
  %5592 = vmatpush1.bf16.msra.mxu0 %v5578
  %5593 = vmatprep.subr.bf16.mxu0 0
  %5594 = vmatpush1.bf16.msra.mxu0 %v5579
  %5595 = vmatprep.subr.bf16.mxu0 0
  %5596 = vmatpush1.bf16.msra.mxu0 0
  %5597 = vmatprep.subr.bf16.mxu0 0
  %5598 = vmatpush1.bf16.msra.mxu0 0
  %5599 = vmatprep.subr.bf16.mxu0 0
  %5600 = vmatpush1.bf16.msra.mxu0 0
  %5601 = vmatprep.subr.bf16.mxu0 0
  %5602 = vmatpush1.bf16.msra.mxu0 0
  %5603 = vmatprep.subr.bf16.mxu0 0
  %5604 = vmatpush1.bf16.msra.mxu0 0
  %5605 = vmatprep.subr.bf16.mxu0 0
  %5606 = vmatpush1.bf16.msra.mxu0 0
  %5607 = vmatprep.subr.bf16.mxu0 0
  %5608 = vmatpush1.bf16.msra.mxu0 0
  %5609 = vmatprep.subr.bf16.mxu0 0
  %5610 = vmatpush1.bf16.msra.mxu0 0
  %5611 = vmatprep.subr.bf16.mxu0 0
  %5612 = vmatpush1.bf16.msra.mxu0 0
  %5613 = vmatprep.subr.bf16.mxu0 0
  %5614 = vmatpush1.bf16.msra.mxu0 0
  %5615 = vmatprep.subr.bf16.mxu0 0
  %5616 = vmatpush1.bf16.msra.mxu0 0
  %5617 = vmatprep.subr.bf16.mxu0 0
  %5618 = vmatpush1.bf16.msra.mxu0 0
  %5619 = vmatprep.mubr.bf16.mxu0 0
  %5620 = vmatmul.mubr.bf16.gmra.mrb[0].mxu0 %v5585
  %v5621 = vpop.f32.mrb[0].mxu0
  %v5622 = vadd.f32 0.0, %v5621
  %v5623 = vpop.f32.mrb[0].mxu0
  %v5624 = vpop.f32.mrb[0].mxu0
  %v5625 = vadd.f32 0.0, %v5624
  %v5626 = vpop.f32.mrb[0].mxu0
  %5627 = vdwg.mxu0
  %v5628 = vadd.f32 %v5550, %v5622
  %v5629 = vadd.f32 %v5551, %v5625
  %v5630 = vld [vmem:[%s7 + $0x1a0] sm:$0xf]
  %v5631 = vld [vmem:[%s7 + $0x1a4] sm:$0xf]
  %v5632 = vld [vmem:[%s7 + $0x1a8] sm:$0xf]
  %v5633 = vld [vmem:[%s7 + $0x1ac] sm:$0xf]
  %v5634 = vld [vmem:[%s7 + $0x1b0] sm:$0xf]
  %v5635 = vld [vmem:[%s7 + $0x1b4] sm:$0xf]
  %v5636 = vld [vmem:[%s7 + $0x1b8] sm:$0xf]
  %v5637 = vld [vmem:[%s7 + $0x1bc] sm:$0xf]
  %v5646 = vunpack.c.l.b16 %v5630
  %v5647 = vunpack.c.l.b16 %v5631
  %v5648 = vunpack.c.l.b16 %v5632
  %v5649 = vunpack.c.l.b16 %v5633
  %v5650 = vunpack.c.l.b16 %v5634
  %v5651 = vunpack.c.l.b16 %v5635
  %v5652 = vunpack.c.l.b16 %v5636
  %v5653 = vunpack.c.l.b16 %v5637
  %v5654 = vpack.c.b16 %v5647, %v5646
  %v5655 = vpack.c.b16 %v5649, %v5648
  %v5656 = vpack.c.b16 %v5651, %v5650
  %v5657 = vpack.c.b16 %v5653, %v5652
  %v5663 = vsel %vm4647, %v4593, 0
  %5665 = vmatprep.subr.bf16.mxu0 0
  %5666 = vmatpush1.bf16.msra.mxu0 %v5654
  %5667 = vmatprep.subr.bf16.mxu0 0
  %5668 = vmatpush1.bf16.msra.mxu0 %v5655
  %5669 = vmatprep.subr.bf16.mxu0 0
  %5670 = vmatpush1.bf16.msra.mxu0 %v5656
  %5671 = vmatprep.subr.bf16.mxu0 0
  %5672 = vmatpush1.bf16.msra.mxu0 %v5657
  %5673 = vmatprep.subr.bf16.mxu0 0
  %5674 = vmatpush1.bf16.msra.mxu0 0
  %5675 = vmatprep.subr.bf16.mxu0 0
  %5676 = vmatpush1.bf16.msra.mxu0 0
  %5677 = vmatprep.subr.bf16.mxu0 0
  %5678 = vmatpush1.bf16.msra.mxu0 0
  %5679 = vmatprep.subr.bf16.mxu0 0
  %5680 = vmatpush1.bf16.msra.mxu0 0
  %5681 = vmatprep.subr.bf16.mxu0 0
  %5682 = vmatpush1.bf16.msra.mxu0 0
  %5683 = vmatprep.subr.bf16.mxu0 0
  %5684 = vmatpush1.bf16.msra.mxu0 0
  %5685 = vmatprep.subr.bf16.mxu0 0
  %5686 = vmatpush1.bf16.msra.mxu0 0
  %5687 = vmatprep.subr.bf16.mxu0 0
  %5688 = vmatpush1.bf16.msra.mxu0 0
  %5689 = vmatprep.subr.bf16.mxu0 0
  %5690 = vmatpush1.bf16.msra.mxu0 0
  %5691 = vmatprep.subr.bf16.mxu0 0
  %5692 = vmatpush1.bf16.msra.mxu0 0
  %5693 = vmatprep.subr.bf16.mxu0 0
  %5694 = vmatpush1.bf16.msra.mxu0 0
  %5695 = vmatprep.subr.bf16.mxu0 0
  %5696 = vmatpush1.bf16.msra.mxu0 0
  %5697 = vmatprep.mubr.bf16.mxu0 0
  %5698 = vmatmul.mubr.bf16.gmra.mrb[0].mxu0 %v5663
  %v5699 = vpop.f32.mrb[0].mxu0
  %v5700 = vadd.f32 0.0, %v5699
  %v5701 = vpop.f32.mrb[0].mxu0
  %v5702 = vpop.f32.mrb[0].mxu0
  %v5703 = vadd.f32 0.0, %v5702
  %v5704 = vpop.f32.mrb[0].mxu0
  %5705 = vdwg.mxu0
  %v5706 = vadd.f32 %v5628, %v5700
  %v5707 = vadd.f32 %v5629, %v5703
  %v5708 = vld [vmem:[%s7 + $0x1c0] sm:$0xf]
  %v5709 = vld [vmem:[%s7 + $0x1c4] sm:$0xf]
  %v5710 = vld [vmem:[%s7 + $0x1c8] sm:$0xf]
  %v5711 = vld [vmem:[%s7 + $0x1cc] sm:$0xf]
  %v5712 = vld [vmem:[%s7 + $0x1d0] sm:$0xf]
  %v5713 = vld [vmem:[%s7 + $0x1d4] sm:$0xf]
  %v5714 = vld [vmem:[%s7 + $0x1d8] sm:$0xf]
  %v5715 = vld [vmem:[%s7 + $0x1dc] sm:$0xf]
  %v5724 = vunpack.c.l.b16 %v5708
  %v5725 = vunpack.c.l.b16 %v5709
  %v5726 = vunpack.c.l.b16 %v5710
  %v5727 = vunpack.c.l.b16 %v5711
  %v5728 = vunpack.c.l.b16 %v5712
  %v5729 = vunpack.c.l.b16 %v5713
  %v5730 = vunpack.c.l.b16 %v5714
  %v5731 = vunpack.c.l.b16 %v5715
  %v5732 = vpack.c.b16 %v5725, %v5724
  %v5733 = vpack.c.b16 %v5727, %v5726
  %v5734 = vpack.c.b16 %v5729, %v5728
  %v5735 = vpack.c.b16 %v5731, %v5730
  %v5741 = vsel %vm4647, %v4594, 0
  %5743 = vmatprep.subr.bf16.mxu0 0
  %5744 = vmatpush1.bf16.msra.mxu0 %v5732
  %5745 = vmatprep.subr.bf16.mxu0 0
  %5746 = vmatpush1.bf16.msra.mxu0 %v5733
  %5747 = vmatprep.subr.bf16.mxu0 0
  %5748 = vmatpush1.bf16.msra.mxu0 %v5734
  %5749 = vmatprep.subr.bf16.mxu0 0
  %5750 = vmatpush1.bf16.msra.mxu0 %v5735
  %5751 = vmatprep.subr.bf16.mxu0 0
  %5752 = vmatpush1.bf16.msra.mxu0 0
  %5753 = vmatprep.subr.bf16.mxu0 0
  %5754 = vmatpush1.bf16.msra.mxu0 0
  %5755 = vmatprep.subr.bf16.mxu0 0
  %5756 = vmatpush1.bf16.msra.mxu0 0
  %5757 = vmatprep.subr.bf16.mxu0 0
  %5758 = vmatpush1.bf16.msra.mxu0 0
  %5759 = vmatprep.subr.bf16.mxu0 0
  %5760 = vmatpush1.bf16.msra.mxu0 0
  %5761 = vmatprep.subr.bf16.mxu0 0
  %5762 = vmatpush1.bf16.msra.mxu0 0
  %5763 = vmatprep.subr.bf16.mxu0 0
  %5764 = vmatpush1.bf16.msra.mxu0 0
  %5765 = vmatprep.subr.bf16.mxu0 0
  %5766 = vmatpush1.bf16.msra.mxu0 0
  %5767 = vmatprep.subr.bf16.mxu0 0
  %5768 = vmatpush1.bf16.msra.mxu0 0
  %5769 = vmatprep.subr.bf16.mxu0 0
  %5770 = vmatpush1.bf16.msra.mxu0 0
  %5771 = vmatprep.subr.bf16.mxu0 0
  %5772 = vmatpush1.bf16.msra.mxu0 0
  %5773 = vmatprep.subr.bf16.mxu0 0
  %5774 = vmatpush1.bf16.msra.mxu0 0
  %5775 = vmatprep.mubr.bf16.mxu0 0
  %5776 = vmatmul.mubr.bf16.gmra.mrb[0].mxu0 %v5741
  %v5777 = vpop.f32.mrb[0].mxu0
  %v5778 = vadd.f32 0.0, %v5777
  %v5779 = vpop.f32.mrb[0].mxu0
  %v5780 = vpop.f32.mrb[0].mxu0
  %v5781 = vadd.f32 0.0, %v5780
  %v5782 = vpop.f32.mrb[0].mxu0
  %5783 = vdwg.mxu0
  %v5784 = vadd.f32 %v5706, %v5778
  %v5785 = vadd.f32 %v5707, %v5781
  %v5786 = vld [vmem:[%s7 + $0x1e0] sm:$0xf]
  %v5787 = vld [vmem:[%s7 + $0x1e4] sm:$0xf]
  %v5788 = vld [vmem:[%s7 + $0x1e8] sm:$0xf]
  %v5789 = vld [vmem:[%s7 + $0x1ec] sm:$0xf]
  %v5790 = vld [vmem:[%s7 + $0x1f0] sm:$0xf]
  %v5791 = vld [vmem:[%s7 + $0x1f4] sm:$0xf]
  %v5792 = vld [vmem:[%s7 + $0x1f8] sm:$0xf]
  %v5793 = vld [vmem:[%s7 + $0x1fc] sm:$0xf]
  %v5802 = vunpack.c.l.b16 %v5786
  %v5803 = vunpack.c.l.b16 %v5787
  %v5804 = vunpack.c.l.b16 %v5788
  %v5805 = vunpack.c.l.b16 %v5789
  %v5806 = vunpack.c.l.b16 %v5790
  %v5807 = vunpack.c.l.b16 %v5791
  %v5808 = vunpack.c.l.b16 %v5792
  %v5809 = vunpack.c.l.b16 %v5793
  %v5810 = vpack.c.b16 %v5803, %v5802
  %v5811 = vpack.c.b16 %v5805, %v5804
  %v5812 = vpack.c.b16 %v5807, %v5806
  %v5813 = vpack.c.b16 %v5809, %v5808
  %v5819 = vsel %vm4647, %v4595, 0
  %5821 = vmatprep.subr.bf16.mxu0 0
  %5822 = vmatpush1.bf16.msra.mxu0 %v5810
  %5823 = vmatprep.subr.bf16.mxu0 0
  %5824 = vmatpush1.bf16.msra.mxu0 %v5811
  %5825 = vmatprep.subr.bf16.mxu0 0
  %5826 = vmatpush1.bf16.msra.mxu0 %v5812
  %5827 = vmatprep.subr.bf16.mxu0 0
  %5828 = vmatpush1.bf16.msra.mxu0 %v5813
  %5829 = vmatprep.subr.bf16.mxu0 0
  %5830 = vmatpush1.bf16.msra.mxu0 0
  %5831 = vmatprep.subr.bf16.mxu0 0
  %5832 = vmatpush1.bf16.msra.mxu0 0
  %5833 = vmatprep.subr.bf16.mxu0 0
  %5834 = vmatpush1.bf16.msra.mxu0 0
  %5835 = vmatprep.subr.bf16.mxu0 0
  %5836 = vmatpush1.bf16.msra.mxu0 0
  %5837 = vmatprep.subr.bf16.mxu0 0
  %5838 = vmatpush1.bf16.msra.mxu0 0
  %5839 = vmatprep.subr.bf16.mxu0 0
  %5840 = vmatpush1.bf16.msra.mxu0 0
  %5841 = vmatprep.subr.bf16.mxu0 0
  %5842 = vmatpush1.bf16.msra.mxu0 0
  %5843 = vmatprep.subr.bf16.mxu0 0
  %5844 = vmatpush1.bf16.msra.mxu0 0
  %5845 = vmatprep.subr.bf16.mxu0 0
  %5846 = vmatpush1.bf16.msra.mxu0 0
  %5847 = vmatprep.subr.bf16.mxu0 0
  %5848 = vmatpush1.bf16.msra.mxu0 0
  %5849 = vmatprep.subr.bf16.mxu0 0
  %5850 = vmatpush1.bf16.msra.mxu0 0
  %5851 = vmatprep.subr.bf16.mxu0 0
  %5852 = vmatpush1.bf16.msra.mxu0 0
  %5853 = vmatprep.mubr.bf16.mxu0 0
  %5854 = vmatmul.mubr.bf16.gmra.mrb[0].mxu0 %v5819
  %v5855 = vpop.f32.mrb[0].mxu0
  %v5856 = vadd.f32 0.0, %v5855
  %v5857 = vpop.f32.mrb[0].mxu0
  %v5858 = vpop.f32.mrb[0].mxu0
  %v5859 = vadd.f32 0.0, %v5858
  %v5860 = vpop.f32.mrb[0].mxu0
  %5861 = vdwg.mxu0
  %v5862 = vadd.f32 %v5784, %v5856
  %v5863 = vadd.f32 %v5785, %v5859
  %v5864 = vld [vmem:[%s7 + $0x200] sm:$0xf]
  %v5865 = vld [vmem:[%s7 + $0x204] sm:$0xf]
  %v5866 = vld [vmem:[%s7 + $0x208] sm:$0xf]
  %v5867 = vld [vmem:[%s7 + $0x20c] sm:$0xf]
  %v5868 = vld [vmem:[%s7 + $0x210] sm:$0xf]
  %v5869 = vld [vmem:[%s7 + $0x214] sm:$0xf]
  %v5870 = vld [vmem:[%s7 + $0x218] sm:$0xf]
  %v5871 = vld [vmem:[%s7 + $0x21c] sm:$0xf]
  %v5880 = vunpack.c.l.b16 %v5864
  %v5881 = vunpack.c.l.b16 %v5865
  %v5882 = vunpack.c.l.b16 %v5866
  %v5883 = vunpack.c.l.b16 %v5867
  %v5884 = vunpack.c.l.b16 %v5868
  %v5885 = vunpack.c.l.b16 %v5869
  %v5886 = vunpack.c.l.b16 %v5870
  %v5887 = vunpack.c.l.b16 %v5871
  %v5888 = vpack.c.b16 %v5881, %v5880
  %v5889 = vpack.c.b16 %v5883, %v5882
  %v5890 = vpack.c.b16 %v5885, %v5884
  %v5891 = vpack.c.b16 %v5887, %v5886
  %v5897 = vsel %vm4647, %v4596, 0
  %5899 = vmatprep.subr.bf16.mxu0 0
  %5900 = vmatpush1.bf16.msra.mxu0 %v5888
  %5901 = vmatprep.subr.bf16.mxu0 0
  %5902 = vmatpush1.bf16.msra.mxu0 %v5889
  %5903 = vmatprep.subr.bf16.mxu0 0
  %5904 = vmatpush1.bf16.msra.mxu0 %v5890
  %5905 = vmatprep.subr.bf16.mxu0 0
  %5906 = vmatpush1.bf16.msra.mxu0 %v5891
  %5907 = vmatprep.subr.bf16.mxu0 0
  %5908 = vmatpush1.bf16.msra.mxu0 0
  %5909 = vmatprep.subr.bf16.mxu0 0
  %5910 = vmatpush1.bf16.msra.mxu0 0
  %5911 = vmatprep.subr.bf16.mxu0 0
  %5912 = vmatpush1.bf16.msra.mxu0 0
  %5913 = vmatprep.subr.bf16.mxu0 0
  %5914 = vmatpush1.bf16.msra.mxu0 0
  %5915 = vmatprep.subr.bf16.mxu0 0
  %5916 = vmatpush1.bf16.msra.mxu0 0
  %5917 = vmatprep.subr.bf16.mxu0 0
  %5918 = vmatpush1.bf16.msra.mxu0 0
  %5919 = vmatprep.subr.bf16.mxu0 0
  %5920 = vmatpush1.bf16.msra.mxu0 0
  %5921 = vmatprep.subr.bf16.mxu0 0
  %5922 = vmatpush1.bf16.msra.mxu0 0
  %5923 = vmatprep.subr.bf16.mxu0 0
  %5924 = vmatpush1.bf16.msra.mxu0 0
  %5925 = vmatprep.subr.bf16.mxu0 0
  %5926 = vmatpush1.bf16.msra.mxu0 0
  %5927 = vmatprep.subr.bf16.mxu0 0
  %5928 = vmatpush1.bf16.msra.mxu0 0
  %5929 = vmatprep.subr.bf16.mxu0 0
  %5930 = vmatpush1.bf16.msra.mxu0 0
  %5931 = vmatprep.mubr.bf16.mxu0 0
  %5932 = vmatmul.mubr.bf16.gmra.mrb[0].mxu0 %v5897
  %v5933 = vpop.f32.mrb[0].mxu0
  %v5934 = vadd.f32 0.0, %v5933
  %v5935 = vpop.f32.mrb[0].mxu0
  %v5936 = vpop.f32.mrb[0].mxu0
  %v5937 = vadd.f32 0.0, %v5936
  %v5938 = vpop.f32.mrb[0].mxu0
  %5939 = vdwg.mxu0
  %v5940 = vadd.f32 %v5862, %v5934
  %v5941 = vadd.f32 %v5863, %v5937
  %v5942 = vld [vmem:[%s7 + $0x220] sm:$0xf]
  %v5943 = vld [vmem:[%s7 + $0x224] sm:$0xf]
  %v5944 = vld [vmem:[%s7 + $0x228] sm:$0xf]
  %v5945 = vld [vmem:[%s7 + $0x22c] sm:$0xf]
  %v5946 = vld [vmem:[%s7 + $0x230] sm:$0xf]
  %v5947 = vld [vmem:[%s7 + $0x234] sm:$0xf]
  %v5948 = vld [vmem:[%s7 + $0x238] sm:$0xf]
  %v5949 = vld [vmem:[%s7 + $0x23c] sm:$0xf]
  %v5958 = vunpack.c.l.b16 %v5942
  %v5959 = vunpack.c.l.b16 %v5943
  %v5960 = vunpack.c.l.b16 %v5944
  %v5961 = vunpack.c.l.b16 %v5945
  %v5962 = vunpack.c.l.b16 %v5946
  %v5963 = vunpack.c.l.b16 %v5947
  %v5964 = vunpack.c.l.b16 %v5948
  %v5965 = vunpack.c.l.b16 %v5949
  %v5966 = vpack.c.b16 %v5959, %v5958
  %v5967 = vpack.c.b16 %v5961, %v5960
  %v5968 = vpack.c.b16 %v5963, %v5962
  %v5969 = vpack.c.b16 %v5965, %v5964
  %v5975 = vsel %vm4647, %v4597, 0
  %5977 = vmatprep.subr.bf16.mxu0 0
  %5978 = vmatpush1.bf16.msra.mxu0 %v5966
  %5979 = vmatprep.subr.bf16.mxu0 0
  %5980 = vmatpush1.bf16.msra.mxu0 %v5967
  %5981 = vmatprep.subr.bf16.mxu0 0
  %5982 = vmatpush1.bf16.msra.mxu0 %v5968
  %5983 = vmatprep.subr.bf16.mxu0 0
  %5984 = vmatpush1.bf16.msra.mxu0 %v5969
  %5985 = vmatprep.subr.bf16.mxu0 0
  %5986 = vmatpush1.bf16.msra.mxu0 0
  %5987 = vmatprep.subr.bf16.mxu0 0
  %5988 = vmatpush1.bf16.msra.mxu0 0
  %5989 = vmatprep.subr.bf16.mxu0 0
  %5990 = vmatpush1.bf16.msra.mxu0 0
  %5991 = vmatprep.subr.bf16.mxu0 0
  %5992 = vmatpush1.bf16.msra.mxu0 0
  %5993 = vmatprep.subr.bf16.mxu0 0
  %5994 = vmatpush1.bf16.msra.mxu0 0
  %5995 = vmatprep.subr.bf16.mxu0 0
  %5996 = vmatpush1.bf16.msra.mxu0 0
  %5997 = vmatprep.subr.bf16.mxu0 0
  %5998 = vmatpush1.bf16.msra.mxu0 0
  %5999 = vmatprep.subr.bf16.mxu0 0
  %6000 = vmatpush1.bf16.msra.mxu0 0
  %6001 = vmatprep.subr.bf16.mxu0 0
  %6002 = vmatpush1.bf16.msra.mxu0 0
  %6003 = vmatprep.subr.bf16.mxu0 0
  %6004 = vmatpush1.bf16.msra.mxu0 0
  %6005 = vmatprep.subr.bf16.mxu0 0
  %6006 = vmatpush1.bf16.msra.mxu0 0
  %6007 = vmatprep.subr.bf16.mxu0 0
  %6008 = vmatpush1.bf16.msra.mxu0 0
  %6009 = vmatprep.mubr.bf16.mxu0 0
  %6010 = vmatmul.mubr.bf16.gmra.mrb[0].mxu0 %v5975
  %v6011 = vpop.f32.mrb[0].mxu0
  %v6012 = vadd.f32 0.0, %v6011
  %v6013 = vpop.f32.mrb[0].mxu0
  %v6014 = vpop.f32.mrb[0].mxu0
  %v6015 = vadd.f32 0.0, %v6014
  %v6016 = vpop.f32.mrb[0].mxu0
  %6017 = vdwg.mxu0
  %v6018 = vadd.f32 %v5940, %v6012
  %v6019 = vadd.f32 %v5941, %v6015
  %v6020 = vld [vmem:[%s7 + $0x240] sm:$0xf]
  %v6021 = vld [vmem:[%s7 + $0x244] sm:$0xf]
  %v6022 = vld [vmem:[%s7 + $0x248] sm:$0xf]
  %v6023 = vld [vmem:[%s7 + $0x24c] sm:$0xf]
  %v6024 = vld [vmem:[%s7 + $0x250] sm:$0xf]
  %v6025 = vld [vmem:[%s7 + $0x254] sm:$0xf]
  %v6026 = vld [vmem:[%s7 + $0x258] sm:$0xf]
  %v6027 = vld [vmem:[%s7 + $0x25c] sm:$0xf]
  %v6036 = vunpack.c.l.b16 %v6020
  %v6037 = vunpack.c.l.b16 %v6021
  %v6038 = vunpack.c.l.b16 %v6022
  %v6039 = vunpack.c.l.b16 %v6023
  %v6040 = vunpack.c.l.b16 %v6024
  %v6041 = vunpack.c.l.b16 %v6025
  %v6042 = vunpack.c.l.b16 %v6026
  %v6043 = vunpack.c.l.b16 %v6027
  %v6044 = vpack.c.b16 %v6037, %v6036
  %v6045 = vpack.c.b16 %v6039, %v6038
  %v6046 = vpack.c.b16 %v6041, %v6040
  %v6047 = vpack.c.b16 %v6043, %v6042
  %v6053 = vsel %vm4647, %v4598, 0
  %6055 = vmatprep.subr.bf16.mxu0 0
  %6056 = vmatpush1.bf16.msra.mxu0 %v6044
  %6057 = vmatprep.subr.bf16.mxu0 0
  %6058 = vmatpush1.bf16.msra.mxu0 %v6045
  %6059 = vmatprep.subr.bf16.mxu0 0
  %6060 = vmatpush1.bf16.msra.mxu0 %v6046
  %6061 = vmatprep.subr.bf16.mxu0 0
  %6062 = vmatpush1.bf16.msra.mxu0 %v6047
  %6063 = vmatprep.subr.bf16.mxu0 0
  %6064 = vmatpush1.bf16.msra.mxu0 0
  %6065 = vmatprep.subr.bf16.mxu0 0
  %6066 = vmatpush1.bf16.msra.mxu0 0
  %6067 = vmatprep.subr.bf16.mxu0 0
  %6068 = vmatpush1.bf16.msra.mxu0 0
  %6069 = vmatprep.subr.bf16.mxu0 0
  %6070 = vmatpush1.bf16.msra.mxu0 0
  %6071 = vmatprep.subr.bf16.mxu0 0
  %6072 = vmatpush1.bf16.msra.mxu0 0
  %6073 = vmatprep.subr.bf16.mxu0 0
  %6074 = vmatpush1.bf16.msra.mxu0 0
  %6075 = vmatprep.subr.bf16.mxu0 0
  %6076 = vmatpush1.bf16.msra.mxu0 0
  %6077 = vmatprep.subr.bf16.mxu0 0
  %6078 = vmatpush1.bf16.msra.mxu0 0
  %6079 = vmatprep.subr.bf16.mxu0 0
  %6080 = vmatpush1.bf16.msra.mxu0 0
  %6081 = vmatprep.subr.bf16.mxu0 0
  %6082 = vmatpush1.bf16.msra.mxu0 0
  %6083 = vmatprep.subr.bf16.mxu0 0
  %6084 = vmatpush1.bf16.msra.mxu0 0
  %6085 = vmatprep.subr.bf16.mxu0 0
  %6086 = vmatpush1.bf16.msra.mxu0 0
  %6087 = vmatprep.mubr.bf16.mxu0 0
  %6088 = vmatmul.mubr.bf16.gmra.mrb[0].mxu0 %v6053
  %v6089 = vpop.f32.mrb[0].mxu0
  %v6090 = vadd.f32 0.0, %v6089
  %v6091 = vpop.f32.mrb[0].mxu0
  %v6092 = vpop.f32.mrb[0].mxu0
  %v6093 = vadd.f32 0.0, %v6092
  %v6094 = vpop.f32.mrb[0].mxu0
  %6095 = vdwg.mxu0
  %v6096 = vadd.f32 %v6018, %v6090
  %v6097 = vadd.f32 %v6019, %v6093
  %v6098 = vld [vmem:[%s7 + $0x260] sm:$0xf]
  %v6099 = vld [vmem:[%s7 + $0x264] sm:$0xf]
  %v6100 = vld [vmem:[%s7 + $0x268] sm:$0xf]
  %v6101 = vld [vmem:[%s7 + $0x26c] sm:$0xf]
  %v6102 = vld [vmem:[%s7 + $0x270] sm:$0xf]
  %v6103 = vld [vmem:[%s7 + $0x274] sm:$0xf]
  %v6104 = vld [vmem:[%s7 + $0x278] sm:$0xf]
  %v6105 = vld [vmem:[%s7 + $0x27c] sm:$0xf]
  %v6114 = vunpack.c.l.b16 %v6098
  %v6115 = vunpack.c.l.b16 %v6099
  %v6116 = vunpack.c.l.b16 %v6100
  %v6117 = vunpack.c.l.b16 %v6101
  %v6118 = vunpack.c.l.b16 %v6102
  %v6119 = vunpack.c.l.b16 %v6103
  %v6120 = vunpack.c.l.b16 %v6104
  %v6121 = vunpack.c.l.b16 %v6105
  %v6122 = vpack.c.b16 %v6115, %v6114
  %v6123 = vpack.c.b16 %v6117, %v6116
  %v6124 = vpack.c.b16 %v6119, %v6118
  %v6125 = vpack.c.b16 %v6121, %v6120
  %v6131 = vsel %vm4647, %v4599, 0
  %6133 = vmatprep.subr.bf16.mxu0 0
  %6134 = vmatpush1.bf16.msra.mxu0 %v6122
  %6135 = vmatprep.subr.bf16.mxu0 0
  %6136 = vmatpush1.bf16.msra.mxu0 %v6123
  %6137 = vmatprep.subr.bf16.mxu0 0
  %6138 = vmatpush1.bf16.msra.mxu0 %v6124
  %6139 = vmatprep.subr.bf16.mxu0 0
  %6140 = vmatpush1.bf16.msra.mxu0 %v6125
  %6141 = vmatprep.subr.bf16.mxu0 0
  %6142 = vmatpush1.bf16.msra.mxu0 0
  %6143 = vmatprep.subr.bf16.mxu0 0
  %6144 = vmatpush1.bf16.msra.mxu0 0
  %6145 = vmatprep.subr.bf16.mxu0 0
  %6146 = vmatpush1.bf16.msra.mxu0 0
  %6147 = vmatprep.subr.bf16.mxu0 0
  %6148 = vmatpush1.bf16.msra.mxu0 0
  %6149 = vmatprep.subr.bf16.mxu0 0
  %6150 = vmatpush1.bf16.msra.mxu0 0
  %6151 = vmatprep.subr.bf16.mxu0 0
  %6152 = vmatpush1.bf16.msra.mxu0 0
  %6153 = vmatprep.subr.bf16.mxu0 0
  %6154 = vmatpush1.bf16.msra.mxu0 0
  %6155 = vmatprep.subr.bf16.mxu0 0
  %6156 = vmatpush1.bf16.msra.mxu0 0
  %6157 = vmatprep.subr.bf16.mxu0 0
  %6158 = vmatpush1.bf16.msra.mxu0 0
  %6159 = vmatprep.subr.bf16.mxu0 0
  %6160 = vmatpush1.bf16.msra.mxu0 0
  %6161 = vmatprep.subr.bf16.mxu0 0
  %6162 = vmatpush1.bf16.msra.mxu0 0
  %6163 = vmatprep.subr.bf16.mxu0 0
  %6164 = vmatpush1.bf16.msra.mxu0 0
  %6165 = vmatprep.mubr.bf16.mxu0 0
  %6166 = vmatmul.mubr.bf16.gmra.mrb[0].mxu0 %v6131
  %v6167 = vpop.f32.mrb[0].mxu0
  %v6168 = vadd.f32 0.0, %v6167
  %v6169 = vpop.f32.mrb[0].mxu0
  %v6170 = vpop.f32.mrb[0].mxu0
  %v6171 = vadd.f32 0.0, %v6170
  %v6172 = vpop.f32.mrb[0].mxu0
  %6173 = vdwg.mxu0
  %v6174 = vadd.f32 %v6096, %v6168
  %v6175 = vadd.f32 %v6097, %v6171
  %v6176 = vld [vmem:[%s7 + $0x280] sm:$0xf]
  %v6177 = vld [vmem:[%s7 + $0x284] sm:$0xf]
  %v6178 = vld [vmem:[%s7 + $0x288] sm:$0xf]
  %v6179 = vld [vmem:[%s7 + $0x28c] sm:$0xf]
  %v6180 = vld [vmem:[%s7 + $0x290] sm:$0xf]
  %v6181 = vld [vmem:[%s7 + $0x294] sm:$0xf]
  %v6182 = vld [vmem:[%s7 + $0x298] sm:$0xf]
  %v6183 = vld [vmem:[%s7 + $0x29c] sm:$0xf]
  %v6192 = vunpack.c.l.b16 %v6176
  %v6193 = vunpack.c.l.b16 %v6177
  %v6194 = vunpack.c.l.b16 %v6178
  %v6195 = vunpack.c.l.b16 %v6179
  %v6196 = vunpack.c.l.b16 %v6180
  %v6197 = vunpack.c.l.b16 %v6181
  %v6198 = vunpack.c.l.b16 %v6182
  %v6199 = vunpack.c.l.b16 %v6183
  %v6200 = vpack.c.b16 %v6193, %v6192
  %v6201 = vpack.c.b16 %v6195, %v6194
  %v6202 = vpack.c.b16 %v6197, %v6196
  %v6203 = vpack.c.b16 %v6199, %v6198
  %v6209 = vsel %vm4647, %v4600, 0
  %6211 = vmatprep.subr.bf16.mxu0 0
  %6212 = vmatpush1.bf16.msra.mxu0 %v6200
  %6213 = vmatprep.subr.bf16.mxu0 0
  %6214 = vmatpush1.bf16.msra.mxu0 %v6201
  %6215 = vmatprep.subr.bf16.mxu0 0
  %6216 = vmatpush1.bf16.msra.mxu0 %v6202
  %6217 = vmatprep.subr.bf16.mxu0 0
  %6218 = vmatpush1.bf16.msra.mxu0 %v6203
  %6219 = vmatprep.subr.bf16.mxu0 0
  %6220 = vmatpush1.bf16.msra.mxu0 0
  %6221 = vmatprep.subr.bf16.mxu0 0
  %6222 = vmatpush1.bf16.msra.mxu0 0
  %6223 = vmatprep.subr.bf16.mxu0 0
  %6224 = vmatpush1.bf16.msra.mxu0 0
  %6225 = vmatprep.subr.bf16.mxu0 0
  %6226 = vmatpush1.bf16.msra.mxu0 0
  %6227 = vmatprep.subr.bf16.mxu0 0
  %6228 = vmatpush1.bf16.msra.mxu0 0
  %6229 = vmatprep.subr.bf16.mxu0 0
  %6230 = vmatpush1.bf16.msra.mxu0 0
  %6231 = vmatprep.subr.bf16.mxu0 0
  %6232 = vmatpush1.bf16.msra.mxu0 0
  %6233 = vmatprep.subr.bf16.mxu0 0
  %6234 = vmatpush1.bf16.msra.mxu0 0
  %6235 = vmatprep.subr.bf16.mxu0 0
  %6236 = vmatpush1.bf16.msra.mxu0 0
  %6237 = vmatprep.subr.bf16.mxu0 0
  %6238 = vmatpush1.bf16.msra.mxu0 0
  %6239 = vmatprep.subr.bf16.mxu0 0
  %6240 = vmatpush1.bf16.msra.mxu0 0
  %6241 = vmatprep.subr.bf16.mxu0 0
  %6242 = vmatpush1.bf16.msra.mxu0 0
  %6243 = vmatprep.mubr.bf16.mxu0 0
  %6244 = vmatmul.mubr.bf16.gmra.mrb[0].mxu0 %v6209
  %v6245 = vpop.f32.mrb[0].mxu0
  %v6246 = vadd.f32 0.0, %v6245
  %v6247 = vpop.f32.mrb[0].mxu0
  %v6248 = vpop.f32.mrb[0].mxu0
  %v6249 = vadd.f32 0.0, %v6248
  %v6250 = vpop.f32.mrb[0].mxu0
  %6251 = vdwg.mxu0
  %v6252 = vadd.f32 %v6174, %v6246
  %v6253 = vadd.f32 %v6175, %v6249
  %v6254 = vld [vmem:[%s7 + $0x2a0] sm:$0xf]
  %v6255 = vld [vmem:[%s7 + $0x2a4] sm:$0xf]
  %v6256 = vld [vmem:[%s7 + $0x2a8] sm:$0xf]
  %v6257 = vld [vmem:[%s7 + $0x2ac] sm:$0xf]
  %v6258 = vld [vmem:[%s7 + $0x2b0] sm:$0xf]
  %v6259 = vld [vmem:[%s7 + $0x2b4] sm:$0xf]
  %v6260 = vld [vmem:[%s7 + $0x2b8] sm:$0xf]
  %v6261 = vld [vmem:[%s7 + $0x2bc] sm:$0xf]
  %v6270 = vunpack.c.l.b16 %v6254
  %v6271 = vunpack.c.l.b16 %v6255
  %v6272 = vunpack.c.l.b16 %v6256
  %v6273 = vunpack.c.l.b16 %v6257
  %v6274 = vunpack.c.l.b16 %v6258
  %v6275 = vunpack.c.l.b16 %v6259
  %v6276 = vunpack.c.l.b16 %v6260
  %v6277 = vunpack.c.l.b16 %v6261
  %v6278 = vpack.c.b16 %v6271, %v6270
  %v6279 = vpack.c.b16 %v6273, %v6272
  %v6280 = vpack.c.b16 %v6275, %v6274
  %v6281 = vpack.c.b16 %v6277, %v6276
  %v6287 = vsel %vm4647, %v4601, 0
  %6289 = vmatprep.subr.bf16.mxu0 0
  %6290 = vmatpush1.bf16.msra.mxu0 %v6278
  %6291 = vmatprep.subr.bf16.mxu0 0
  %6292 = vmatpush1.bf16.msra.mxu0 %v6279
  %6293 = vmatprep.subr.bf16.mxu0 0
  %6294 = vmatpush1.bf16.msra.mxu0 %v6280
  %6295 = vmatprep.subr.bf16.mxu0 0
  %6296 = vmatpush1.bf16.msra.mxu0 %v6281
  %6297 = vmatprep.subr.bf16.mxu0 0
  %6298 = vmatpush1.bf16.msra.mxu0 0
  %6299 = vmatprep.subr.bf16.mxu0 0
  %6300 = vmatpush1.bf16.msra.mxu0 0
  %6301 = vmatprep.subr.bf16.mxu0 0
  %6302 = vmatpush1.bf16.msra.mxu0 0
  %6303 = vmatprep.subr.bf16.mxu0 0
  %6304 = vmatpush1.bf16.msra.mxu0 0
  %6305 = vmatprep.subr.bf16.mxu0 0
  %6306 = vmatpush1.bf16.msra.mxu0 0
  %6307 = vmatprep.subr.bf16.mxu0 0
  %6308 = vmatpush1.bf16.msra.mxu0 0
  %6309 = vmatprep.subr.bf16.mxu0 0
  %6310 = vmatpush1.bf16.msra.mxu0 0
  %6311 = vmatprep.subr.bf16.mxu0 0
  %6312 = vmatpush1.bf16.msra.mxu0 0
  %6313 = vmatprep.subr.bf16.mxu0 0
  %6314 = vmatpush1.bf16.msra.mxu0 0
  %6315 = vmatprep.subr.bf16.mxu0 0
  %6316 = vmatpush1.bf16.msra.mxu0 0
  %6317 = vmatprep.subr.bf16.mxu0 0
  %6318 = vmatpush1.bf16.msra.mxu0 0
  %6319 = vmatprep.subr.bf16.mxu0 0
  %6320 = vmatpush1.bf16.msra.mxu0 0
  %6321 = vmatprep.mubr.bf16.mxu0 0
  %6322 = vmatmul.mubr.bf16.gmra.mrb[0].mxu0 %v6287
  %v6323 = vpop.f32.mrb[0].mxu0
  %v6324 = vadd.f32 0.0, %v6323
  %v6325 = vpop.f32.mrb[0].mxu0
  %v6326 = vpop.f32.mrb[0].mxu0
  %v6327 = vadd.f32 0.0, %v6326
  %v6328 = vpop.f32.mrb[0].mxu0
  %6329 = vdwg.mxu0
  %v6330 = vadd.f32 %v6252, %v6324
  %v6331 = vadd.f32 %v6253, %v6327
  %v6332 = vld [vmem:[%s7 + $0x2c0] sm:$0xf]
  %v6333 = vld [vmem:[%s7 + $0x2c4] sm:$0xf]
  %v6334 = vld [vmem:[%s7 + $0x2c8] sm:$0xf]
  %v6335 = vld [vmem:[%s7 + $0x2cc] sm:$0xf]
  %v6336 = vld [vmem:[%s7 + $0x2d0] sm:$0xf]
  %v6337 = vld [vmem:[%s7 + $0x2d4] sm:$0xf]
  %v6338 = vld [vmem:[%s7 + $0x2d8] sm:$0xf]
  %v6339 = vld [vmem:[%s7 + $0x2dc] sm:$0xf]
  %v6348 = vunpack.c.l.b16 %v6332
  %v6349 = vunpack.c.l.b16 %v6333
  %v6350 = vunpack.c.l.b16 %v6334
  %v6351 = vunpack.c.l.b16 %v6335
  %v6352 = vunpack.c.l.b16 %v6336
  %v6353 = vunpack.c.l.b16 %v6337
  %v6354 = vunpack.c.l.b16 %v6338
  %v6355 = vunpack.c.l.b16 %v6339
  %v6356 = vpack.c.b16 %v6349, %v6348
  %v6357 = vpack.c.b16 %v6351, %v6350
  %v6358 = vpack.c.b16 %v6353, %v6352
  %v6359 = vpack.c.b16 %v6355, %v6354
  %v6365 = vsel %vm4647, %v4602, 0
  %6367 = vmatprep.subr.bf16.mxu0 0
  %6368 = vmatpush1.bf16.msra.mxu0 %v6356
  %6369 = vmatprep.subr.bf16.mxu0 0
  %6370 = vmatpush1.bf16.msra.mxu0 %v6357
  %6371 = vmatprep.subr.bf16.mxu0 0
  %6372 = vmatpush1.bf16.msra.mxu0 %v6358
  %6373 = vmatprep.subr.bf16.mxu0 0
  %6374 = vmatpush1.bf16.msra.mxu0 %v6359
  %6375 = vmatprep.subr.bf16.mxu0 0
  %6376 = vmatpush1.bf16.msra.mxu0 0
  %6377 = vmatprep.subr.bf16.mxu0 0
  %6378 = vmatpush1.bf16.msra.mxu0 0
  %6379 = vmatprep.subr.bf16.mxu0 0
  %6380 = vmatpush1.bf16.msra.mxu0 0
  %6381 = vmatprep.subr.bf16.mxu0 0
  %6382 = vmatpush1.bf16.msra.mxu0 0
  %6383 = vmatprep.subr.bf16.mxu0 0
  %6384 = vmatpush1.bf16.msra.mxu0 0
  %6385 = vmatprep.subr.bf16.mxu0 0
  %6386 = vmatpush1.bf16.msra.mxu0 0
  %6387 = vmatprep.subr.bf16.mxu0 0
  %6388 = vmatpush1.bf16.msra.mxu0 0
  %6389 = vmatprep.subr.bf16.mxu0 0
  %6390 = vmatpush1.bf16.msra.mxu0 0
  %6391 = vmatprep.subr.bf16.mxu0 0
  %6392 = vmatpush1.bf16.msra.mxu0 0
  %6393 = vmatprep.subr.bf16.mxu0 0
  %6394 = vmatpush1.bf16.msra.mxu0 0
  %6395 = vmatprep.subr.bf16.mxu0 0
  %6396 = vmatpush1.bf16.msra.mxu0 0
  %6397 = vmatprep.subr.bf16.mxu0 0
  %6398 = vmatpush1.bf16.msra.mxu0 0
  %6399 = vmatprep.mubr.bf16.mxu0 0
  %6400 = vmatmul.mubr.bf16.gmra.mrb[0].mxu0 %v6365
  %v6401 = vpop.f32.mrb[0].mxu0
  %v6402 = vadd.f32 0.0, %v6401
  %v6403 = vpop.f32.mrb[0].mxu0
  %v6404 = vpop.f32.mrb[0].mxu0
  %v6405 = vadd.f32 0.0, %v6404
  %v6406 = vpop.f32.mrb[0].mxu0
  %6407 = vdwg.mxu0
  %v6408 = vadd.f32 %v6330, %v6402
  %v6409 = vadd.f32 %v6331, %v6405
  %v6410 = vld [vmem:[%s7 + $0x2e0] sm:$0xf]
  %v6411 = vld [vmem:[%s7 + $0x2e4] sm:$0xf]
  %v6412 = vld [vmem:[%s7 + $0x2e8] sm:$0xf]
  %v6413 = vld [vmem:[%s7 + $0x2ec] sm:$0xf]
  %v6414 = vld [vmem:[%s7 + $0x2f0] sm:$0xf]
  %v6415 = vld [vmem:[%s7 + $0x2f4] sm:$0xf]
  %v6416 = vld [vmem:[%s7 + $0x2f8] sm:$0xf]
  %v6417 = vld [vmem:[%s7 + $0x2fc] sm:$0xf]
  %v6426 = vunpack.c.l.b16 %v6410
  %v6427 = vunpack.c.l.b16 %v6411
  %v6428 = vunpack.c.l.b16 %v6412
  %v6429 = vunpack.c.l.b16 %v6413
  %v6430 = vunpack.c.l.b16 %v6414
  %v6431 = vunpack.c.l.b16 %v6415
  %v6432 = vunpack.c.l.b16 %v6416
  %v6433 = vunpack.c.l.b16 %v6417
  %v6434 = vpack.c.b16 %v6427, %v6426
  %v6435 = vpack.c.b16 %v6429, %v6428
  %v6436 = vpack.c.b16 %v6431, %v6430
  %v6437 = vpack.c.b16 %v6433, %v6432
  %v6443 = vsel %vm4647, %v4603, 0
  %6445 = vmatprep.subr.bf16.mxu0 0
  %6446 = vmatpush1.bf16.msra.mxu0 %v6434
  %6447 = vmatprep.subr.bf16.mxu0 0
  %6448 = vmatpush1.bf16.msra.mxu0 %v6435
  %6449 = vmatprep.subr.bf16.mxu0 0
  %6450 = vmatpush1.bf16.msra.mxu0 %v6436
  %6451 = vmatprep.subr.bf16.mxu0 0
  %6452 = vmatpush1.bf16.msra.mxu0 %v6437
  %6453 = vmatprep.subr.bf16.mxu0 0
  %6454 = vmatpush1.bf16.msra.mxu0 0
  %6455 = vmatprep.subr.bf16.mxu0 0
  %6456 = vmatpush1.bf16.msra.mxu0 0
  %6457 = vmatprep.subr.bf16.mxu0 0
  %6458 = vmatpush1.bf16.msra.mxu0 0
  %6459 = vmatprep.subr.bf16.mxu0 0
  %6460 = vmatpush1.bf16.msra.mxu0 0
  %6461 = vmatprep.subr.bf16.mxu0 0
  %6462 = vmatpush1.bf16.msra.mxu0 0
  %6463 = vmatprep.subr.bf16.mxu0 0
  %6464 = vmatpush1.bf16.msra.mxu0 0
  %6465 = vmatprep.subr.bf16.mxu0 0
  %6466 = vmatpush1.bf16.msra.mxu0 0
  %6467 = vmatprep.subr.bf16.mxu0 0
  %6468 = vmatpush1.bf16.msra.mxu0 0
  %6469 = vmatprep.subr.bf16.mxu0 0
  %6470 = vmatpush1.bf16.msra.mxu0 0
  %6471 = vmatprep.subr.bf16.mxu0 0
  %6472 = vmatpush1.bf16.msra.mxu0 0
  %6473 = vmatprep.subr.bf16.mxu0 0
  %6474 = vmatpush1.bf16.msra.mxu0 0
  %6475 = vmatprep.subr.bf16.mxu0 0
  %6476 = vmatpush1.bf16.msra.mxu0 0
  %6477 = vmatprep.mubr.bf16.mxu0 0
  %6478 = vmatmul.mubr.bf16.gmra.mrb[0].mxu0 %v6443
  %v6479 = vpop.f32.mrb[0].mxu0
  %v6480 = vadd.f32 0.0, %v6479
  %v6481 = vpop.f32.mrb[0].mxu0
  %v6482 = vpop.f32.mrb[0].mxu0
  %v6483 = vadd.f32 0.0, %v6482
  %v6484 = vpop.f32.mrb[0].mxu0
  %6485 = vdwg.mxu0
  %v6486 = vadd.f32 %v6408, %v6480
  %v6487 = vadd.f32 %v6409, %v6483
  %v6488 = vld [vmem:[%s7 + $0x300] sm:$0xf]
  %v6489 = vld [vmem:[%s7 + $0x304] sm:$0xf]
  %v6490 = vld [vmem:[%s7 + $0x308] sm:$0xf]
  %v6491 = vld [vmem:[%s7 + $0x30c] sm:$0xf]
  %v6492 = vld [vmem:[%s7 + $0x310] sm:$0xf]
  %v6493 = vld [vmem:[%s7 + $0x314] sm:$0xf]
  %v6494 = vld [vmem:[%s7 + $0x318] sm:$0xf]
  %v6495 = vld [vmem:[%s7 + $0x31c] sm:$0xf]
  %v6504 = vunpack.c.l.b16 %v6488
  %v6505 = vunpack.c.l.b16 %v6489
  %v6506 = vunpack.c.l.b16 %v6490
  %v6507 = vunpack.c.l.b16 %v6491
  %v6508 = vunpack.c.l.b16 %v6492
  %v6509 = vunpack.c.l.b16 %v6493
  %v6510 = vunpack.c.l.b16 %v6494
  %v6511 = vunpack.c.l.b16 %v6495
  %v6512 = vpack.c.b16 %v6505, %v6504
  %v6513 = vpack.c.b16 %v6507, %v6506
  %v6514 = vpack.c.b16 %v6509, %v6508
  %v6515 = vpack.c.b16 %v6511, %v6510
  %v6521 = vsel %vm4647, %v4604, 0
  %6523 = vmatprep.subr.bf16.mxu0 0
  %6524 = vmatpush1.bf16.msra.mxu0 %v6512
  %6525 = vmatprep.subr.bf16.mxu0 0
  %6526 = vmatpush1.bf16.msra.mxu0 %v6513
  %6527 = vmatprep.subr.bf16.mxu0 0
  %6528 = vmatpush1.bf16.msra.mxu0 %v6514
  %6529 = vmatprep.subr.bf16.mxu0 0
  %6530 = vmatpush1.bf16.msra.mxu0 %v6515
  %6531 = vmatprep.subr.bf16.mxu0 0
  %6532 = vmatpush1.bf16.msra.mxu0 0
  %6533 = vmatprep.subr.bf16.mxu0 0
  %6534 = vmatpush1.bf16.msra.mxu0 0
  %6535 = vmatprep.subr.bf16.mxu0 0
  %6536 = vmatpush1.bf16.msra.mxu0 0
  %6537 = vmatprep.subr.bf16.mxu0 0
  %6538 = vmatpush1.bf16.msra.mxu0 0
  %6539 = vmatprep.subr.bf16.mxu0 0
  %6540 = vmatpush1.bf16.msra.mxu0 0
  %6541 = vmatprep.subr.bf16.mxu0 0
  %6542 = vmatpush1.bf16.msra.mxu0 0
  %6543 = vmatprep.subr.bf16.mxu0 0
  %6544 = vmatpush1.bf16.msra.mxu0 0
  %6545 = vmatprep.subr.bf16.mxu0 0
  %6546 = vmatpush1.bf16.msra.mxu0 0
  %6547 = vmatprep.subr.bf16.mxu0 0
  %6548 = vmatpush1.bf16.msra.mxu0 0
  %6549 = vmatprep.subr.bf16.mxu0 0
  %6550 = vmatpush1.bf16.msra.mxu0 0
  %6551 = vmatprep.subr.bf16.mxu0 0
  %6552 = vmatpush1.bf16.msra.mxu0 0
  %6553 = vmatprep.subr.bf16.mxu0 0
  %6554 = vmatpush1.bf16.msra.mxu0 0
  %6555 = vmatprep.mubr.bf16.mxu0 0
  %6556 = vmatmul.mubr.bf16.gmra.mrb[0].mxu0 %v6521
  %v6557 = vpop.f32.mrb[0].mxu0
  %v6558 = vadd.f32 0.0, %v6557
  %v6559 = vpop.f32.mrb[0].mxu0
  %v6560 = vpop.f32.mrb[0].mxu0
  %v6561 = vadd.f32 0.0, %v6560
  %v6562 = vpop.f32.mrb[0].mxu0
  %6563 = vdwg.mxu0
  %v6564 = vadd.f32 %v6486, %v6558
  %v6565 = vadd.f32 %v6487, %v6561
  %v6566 = vld [vmem:[%s7 + $0x320] sm:$0xf]
  %v6567 = vld [vmem:[%s7 + $0x324] sm:$0xf]
  %v6568 = vld [vmem:[%s7 + $0x328] sm:$0xf]
  %v6569 = vld [vmem:[%s7 + $0x32c] sm:$0xf]
  %v6570 = vld [vmem:[%s7 + $0x330] sm:$0xf]
  %v6571 = vld [vmem:[%s7 + $0x334] sm:$0xf]
  %v6572 = vld [vmem:[%s7 + $0x338] sm:$0xf]
  %v6573 = vld [vmem:[%s7 + $0x33c] sm:$0xf]
  %v6582 = vunpack.c.l.b16 %v6566
  %v6583 = vunpack.c.l.b16 %v6567
  %v6584 = vunpack.c.l.b16 %v6568
  %v6585 = vunpack.c.l.b16 %v6569
  %v6586 = vunpack.c.l.b16 %v6570
  %v6587 = vunpack.c.l.b16 %v6571
  %v6588 = vunpack.c.l.b16 %v6572
  %v6589 = vunpack.c.l.b16 %v6573
  %v6590 = vpack.c.b16 %v6583, %v6582
  %v6591 = vpack.c.b16 %v6585, %v6584
  %v6592 = vpack.c.b16 %v6587, %v6586
  %v6593 = vpack.c.b16 %v6589, %v6588
  %v6599 = vsel %vm4647, %v4605, 0
  %6601 = vmatprep.subr.bf16.mxu0 0
  %6602 = vmatpush1.bf16.msra.mxu0 %v6590
  %6603 = vmatprep.subr.bf16.mxu0 0
  %6604 = vmatpush1.bf16.msra.mxu0 %v6591
  %6605 = vmatprep.subr.bf16.mxu0 0
  %6606 = vmatpush1.bf16.msra.mxu0 %v6592
  %6607 = vmatprep.subr.bf16.mxu0 0
  %6608 = vmatpush1.bf16.msra.mxu0 %v6593
  %6609 = vmatprep.subr.bf16.mxu0 0
  %6610 = vmatpush1.bf16.msra.mxu0 0
  %6611 = vmatprep.subr.bf16.mxu0 0
  %6612 = vmatpush1.bf16.msra.mxu0 0
  %6613 = vmatprep.subr.bf16.mxu0 0
  %6614 = vmatpush1.bf16.msra.mxu0 0
  %6615 = vmatprep.subr.bf16.mxu0 0
  %6616 = vmatpush1.bf16.msra.mxu0 0
  %6617 = vmatprep.subr.bf16.mxu0 0
  %6618 = vmatpush1.bf16.msra.mxu0 0
  %6619 = vmatprep.subr.bf16.mxu0 0
  %6620 = vmatpush1.bf16.msra.mxu0 0
  %6621 = vmatprep.subr.bf16.mxu0 0
  %6622 = vmatpush1.bf16.msra.mxu0 0
  %6623 = vmatprep.subr.bf16.mxu0 0
  %6624 = vmatpush1.bf16.msra.mxu0 0
  %6625 = vmatprep.subr.bf16.mxu0 0
  %6626 = vmatpush1.bf16.msra.mxu0 0
  %6627 = vmatprep.subr.bf16.mxu0 0
  %6628 = vmatpush1.bf16.msra.mxu0 0
  %6629 = vmatprep.subr.bf16.mxu0 0
  %6630 = vmatpush1.bf16.msra.mxu0 0
  %6631 = vmatprep.subr.bf16.mxu0 0
  %6632 = vmatpush1.bf16.msra.mxu0 0
  %6633 = vmatprep.mubr.bf16.mxu0 0
  %6634 = vmatmul.mubr.bf16.gmra.mrb[0].mxu0 %v6599
  %v6635 = vpop.f32.mrb[0].mxu0
  %v6636 = vadd.f32 0.0, %v6635
  %v6637 = vpop.f32.mrb[0].mxu0
  %v6638 = vpop.f32.mrb[0].mxu0
  %v6639 = vadd.f32 0.0, %v6638
  %v6640 = vpop.f32.mrb[0].mxu0
  %6641 = vdwg.mxu0
  %v6642 = vadd.f32 %v6564, %v6636
  %v6643 = vadd.f32 %v6565, %v6639
  %v6644 = vld [vmem:[%s7 + $0x340] sm:$0xf]
  %v6645 = vld [vmem:[%s7 + $0x344] sm:$0xf]
  %v6646 = vld [vmem:[%s7 + $0x348] sm:$0xf]
  %v6647 = vld [vmem:[%s7 + $0x34c] sm:$0xf]
  %v6648 = vld [vmem:[%s7 + $0x350] sm:$0xf]
  %v6649 = vld [vmem:[%s7 + $0x354] sm:$0xf]
  %v6650 = vld [vmem:[%s7 + $0x358] sm:$0xf]
  %v6651 = vld [vmem:[%s7 + $0x35c] sm:$0xf]
  %v6660 = vunpack.c.l.b16 %v6644
  %v6661 = vunpack.c.l.b16 %v6645
  %v6662 = vunpack.c.l.b16 %v6646
  %v6663 = vunpack.c.l.b16 %v6647
  %v6664 = vunpack.c.l.b16 %v6648
  %v6665 = vunpack.c.l.b16 %v6649
  %v6666 = vunpack.c.l.b16 %v6650
  %v6667 = vunpack.c.l.b16 %v6651
  %v6668 = vpack.c.b16 %v6661, %v6660
  %v6669 = vpack.c.b16 %v6663, %v6662
  %v6670 = vpack.c.b16 %v6665, %v6664
  %v6671 = vpack.c.b16 %v6667, %v6666
  %v6677 = vsel %vm4647, %v4606, 0
  %6679 = vmatprep.subr.bf16.mxu0 0
  %6680 = vmatpush1.bf16.msra.mxu0 %v6668
  %6681 = vmatprep.subr.bf16.mxu0 0
  %6682 = vmatpush1.bf16.msra.mxu0 %v6669
  %6683 = vmatprep.subr.bf16.mxu0 0
  %6684 = vmatpush1.bf16.msra.mxu0 %v6670
  %6685 = vmatprep.subr.bf16.mxu0 0
  %6686 = vmatpush1.bf16.msra.mxu0 %v6671
  %6687 = vmatprep.subr.bf16.mxu0 0
  %6688 = vmatpush1.bf16.msra.mxu0 0
  %6689 = vmatprep.subr.bf16.mxu0 0
  %6690 = vmatpush1.bf16.msra.mxu0 0
  %6691 = vmatprep.subr.bf16.mxu0 0
  %6692 = vmatpush1.bf16.msra.mxu0 0
  %6693 = vmatprep.subr.bf16.mxu0 0
  %6694 = vmatpush1.bf16.msra.mxu0 0
  %6695 = vmatprep.subr.bf16.mxu0 0
  %6696 = vmatpush1.bf16.msra.mxu0 0
  %6697 = vmatprep.subr.bf16.mxu0 0
  %6698 = vmatpush1.bf16.msra.mxu0 0
  %6699 = vmatprep.subr.bf16.mxu0 0
  %6700 = vmatpush1.bf16.msra.mxu0 0
  %6701 = vmatprep.subr.bf16.mxu0 0
  %6702 = vmatpush1.bf16.msra.mxu0 0
  %6703 = vmatprep.subr.bf16.mxu0 0
  %6704 = vmatpush1.bf16.msra.mxu0 0
  %6705 = vmatprep.subr.bf16.mxu0 0
  %6706 = vmatpush1.bf16.msra.mxu0 0
  %6707 = vmatprep.subr.bf16.mxu0 0
  %6708 = vmatpush1.bf16.msra.mxu0 0
  %6709 = vmatprep.subr.bf16.mxu0 0
  %6710 = vmatpush1.bf16.msra.mxu0 0
  %6711 = vmatprep.mubr.bf16.mxu0 0
  %6712 = vmatmul.mubr.bf16.gmra.mrb[0].mxu0 %v6677
  %v6713 = vpop.f32.mrb[0].mxu0
  %v6714 = vadd.f32 0.0, %v6713
  %v6715 = vpop.f32.mrb[0].mxu0
  %v6716 = vpop.f32.mrb[0].mxu0
  %v6717 = vadd.f32 0.0, %v6716
  %v6718 = vpop.f32.mrb[0].mxu0
  %6719 = vdwg.mxu0
  %v6720 = vadd.f32 %v6642, %v6714
  %v6721 = vadd.f32 %v6643, %v6717
  %vm6722 = vcmp.gt.f32.partialorder %v6720, 0.0
  %vm6723 = vcmp.gt.f32.partialorder %v6721, 0.0
  %v6724 = vmul.f32 %v6720, 0.2
  %v6725 = vmul.f32 %v6721, 0.2
  %v6726 = vsel %vm6722, %v6720, %v6724
  %v6727 = vsel %vm6723, %v6721, %v6725
  %v6728 = vpack.c.bf16 %v6727, %v6726
  %v6729 = vld [vmem:[%s9] sm:$0xf]
  %v6730 = vld [vmem:[%s9 + $0x4] sm:$0xf]
  %v6731 = vld [vmem:[%s9 + $0x8] sm:$0xf]
  %v6732 = vld [vmem:[%s9 + $0xc] sm:$0xf]
  %v6733 = vld [vmem:[%s9 + $0x10] sm:$0xf]
  %v6734 = vld [vmem:[%s9 + $0x14] sm:$0xf]
  %v6735 = vld [vmem:[%s9 + $0x18] sm:$0xf]
  %v6736 = vld [vmem:[%s9 + $0x1c] sm:$0xf]
  %v6745 = vunpack.c.l.b16 %v6729
  %v6746 = vunpack.c.l.b16 %v6730
  %v6747 = vunpack.c.l.b16 %v6731
  %v6748 = vunpack.c.l.b16 %v6732
  %v6749 = vunpack.c.l.b16 %v6733
  %v6750 = vunpack.c.l.b16 %v6734
  %v6751 = vunpack.c.l.b16 %v6735
  %v6752 = vunpack.c.l.b16 %v6736
  %v6753 = vpack.c.b16 %v6746, %v6745
  %v6754 = vpack.c.b16 %v6748, %v6747
  %v6755 = vpack.c.b16 %v6750, %v6749
  %v6756 = vpack.c.b16 %v6752, %v6751
  %vm6757 = vcmask 130048
  %v6759 = vsel %vm6757, %v6753, 0
  %v6762 = vsel %vm6757, %v6754, 0
  %v6765 = vsel %vm6757, %v6755, 0
  %v6768 = vsel %vm6757, %v6756, 0
  %6770 = vmatprep.subr.bf16.mxu0 0
  %6771 = vmatpush1.bf16.msra.mxu0 %v6728
  %6772 = vmatprep.subr.bf16.mxu0 0
  %6773 = vmatpush1.bf16.msra.mxu0 0
  %6774 = vmatprep.subr.bf16.mxu0 0
  %6775 = vmatpush1.bf16.msra.mxu0 0
  %6776 = vmatprep.subr.bf16.mxu0 0
  %6777 = vmatpush1.bf16.msra.mxu0 0
  %6778 = vmatprep.subr.bf16.mxu0 0
  %6779 = vmatpush1.bf16.msra.mxu0 0
  %6780 = vmatprep.subr.bf16.mxu0 0
  %6781 = vmatpush1.bf16.msra.mxu0 0
  %6782 = vmatprep.subr.bf16.mxu0 0
  %6783 = vmatpush1.bf16.msra.mxu0 0
  %6784 = vmatprep.subr.bf16.mxu0 0
  %6785 = vmatpush1.bf16.msra.mxu0 0
  %6786 = vmatprep.subr.bf16.mxu0 0
  %6787 = vmatpush1.bf16.msra.mxu0 0
  %6788 = vmatprep.subr.bf16.mxu0 0
  %6789 = vmatpush1.bf16.msra.mxu0 0
  %6790 = vmatprep.subr.bf16.mxu0 0
  %6791 = vmatpush1.bf16.msra.mxu0 0
  %6792 = vmatprep.subr.bf16.mxu0 0
  %6793 = vmatpush1.bf16.msra.mxu0 0
  %6794 = vmatprep.subr.bf16.mxu0 0
  %6795 = vmatpush1.bf16.msra.mxu0 0
  %6796 = vmatprep.subr.bf16.mxu0 0
  %6797 = vmatpush1.bf16.msra.mxu0 0
  %6798 = vmatprep.subr.bf16.mxu0 0
  %6799 = vmatpush1.bf16.msra.mxu0 0
  %6800 = vmatprep.subr.bf16.mxu0 0
  %6801 = vmatpush1.bf16.msra.mxu0 0
  %6802 = vmatprep.mubr.bf16.mxu0 0
  %6803 = vmatmul.mubr.bf16.gmra.mrb[0].mxu0 %v6759
  %v6804 = vpop.f32.mrb[0].mxu0
  %v6805 = vadd.f32 0.0, %v6804
  %v6806 = vpop.f32.mrb[0].mxu0
  %v6807 = vpop.f32.mrb[0].mxu0
  %v6808 = vadd.f32 0.0, %v6807
  %v6809 = vpop.f32.mrb[0].mxu0
  %6810 = vmatprep.mubr.bf16.mxu0 0
  %6811 = vmatmul.mubr.bf16.gmra.mrb[0].mxu0 %v6762
  %v6812 = vpop.f32.mrb[0].mxu0
  %v6813 = vadd.f32 0.0, %v6812
  %v6814 = vpop.f32.mrb[0].mxu0
  %v6815 = vpop.f32.mrb[0].mxu0
  %v6816 = vadd.f32 0.0, %v6815
  %v6817 = vpop.f32.mrb[0].mxu0
  %6818 = vmatprep.mubr.bf16.mxu0 0
  %6819 = vmatmul.mubr.bf16.gmra.mrb[0].mxu0 %v6765
  %v6820 = vpop.f32.mrb[0].mxu0
  %v6821 = vadd.f32 0.0, %v6820
  %v6822 = vpop.f32.mrb[0].mxu0
  %v6823 = vpop.f32.mrb[0].mxu0
  %v6824 = vadd.f32 0.0, %v6823
  %v6825 = vpop.f32.mrb[0].mxu0
  %6826 = vmatprep.mubr.bf16.mxu0 0
  %6827 = vmatmul.mubr.bf16.gmra.mrb[0].mxu0 %v6768
  %v6828 = vpop.f32.mrb[0].mxu0
  %v6829 = vadd.f32 0.0, %v6828
  %v6830 = vpop.f32.mrb[0].mxu0
  %v6831 = vpop.f32.mrb[0].mxu0
  %v6832 = vadd.f32 0.0, %v6831
  %v6833 = vpop.f32.mrb[0].mxu0
  %6834 = vdwg.mxu0
  %v6835 = vld [vmem:[%s11] sm:$0x3]
  %v6837 = vlaneseq
  %v6838 = vshrl.u32 %v6837, 7
  %v6839 = vsub.s32 0, %v6838
  %v6840 = vrot.slane %v6835, %v6839
  %v6841 = vlaneseq
  %v6842 = vshrl.u32 %v6841, 7
  %v6843 = vsub.s32 1, %v6842
  %v6844 = vrot.slane %v6835, %v6843
  %v6847 = vadd.f32 %v6840, 0.0
  %v6848 = vadd.f32 %v6844, 0.0
  %v6849 = vpack.c.bf16 %v6805, %v6805
  %v6850 = vld [vmem:[%s10] sm:$0xff]
  %v6851 = vld [vmem:[%s10 + $0x8] sm:$0xff]
  %v6852 = vld [vmem:[%s10 + $0x10] sm:$0xff]
  %v6853 = vld [vmem:[%s10 + $0x18] sm:$0xff]
  %v6854 = vld [vmem:[%s10 + $0x20] sm:$0xff]
  %v6855 = vld [vmem:[%s10 + $0x28] sm:$0xff]
  %v6856 = vld [vmem:[%s10 + $0x30] sm:$0xff]
  %v6857 = vld [vmem:[%s10 + $0x38] sm:$0xff]
  %v6858 = vld [vmem:[%s10 + $0x40] sm:$0xff]
  %v6859 = vld [vmem:[%s10 + $0x48] sm:$0xff]
  %v6860 = vld [vmem:[%s10 + $0x50] sm:$0xff]
  %v6861 = vld [vmem:[%s10 + $0x58] sm:$0xff]
  %v6862 = vld [vmem:[%s10 + $0x60] sm:$0xff]
  %v6863 = vld [vmem:[%s10 + $0x68] sm:$0xff]
  %v6864 = vld [vmem:[%s10 + $0x70] sm:$0xff]
  %v6865 = vld [vmem:[%s10 + $0x78] sm:$0xff]
  %v6882 = vunpack.c.l.b16 %v6850
  %v6883 = vunpack.c.h.b16 %v6850
  %v6884 = vunpack.c.l.b16 %v6851
  %v6885 = vunpack.c.h.b16 %v6851
  %v6886 = vunpack.c.l.b16 %v6852
  %v6887 = vunpack.c.h.b16 %v6852
  %v6888 = vunpack.c.l.b16 %v6853
  %v6889 = vunpack.c.h.b16 %v6853
  %v6890 = vunpack.c.l.b16 %v6854
  %v6891 = vunpack.c.h.b16 %v6854
  %v6892 = vunpack.c.l.b16 %v6855
  %v6893 = vunpack.c.h.b16 %v6855
  %v6894 = vunpack.c.l.b16 %v6856
  %v6895 = vunpack.c.h.b16 %v6856
  %v6896 = vunpack.c.l.b16 %v6857
  %v6897 = vunpack.c.h.b16 %v6857
  %v6898 = vunpack.c.l.b16 %v6858
  %v6899 = vunpack.c.h.b16 %v6858
  %v6900 = vunpack.c.l.b16 %v6859
  %v6901 = vunpack.c.h.b16 %v6859
  %v6902 = vunpack.c.l.b16 %v6860
  %v6903 = vunpack.c.h.b16 %v6860
  %v6904 = vunpack.c.l.b16 %v6861
  %v6905 = vunpack.c.h.b16 %v6861
  %v6906 = vunpack.c.l.b16 %v6862
  %v6907 = vunpack.c.h.b16 %v6862
  %v6908 = vunpack.c.l.b16 %v6863
  %v6909 = vunpack.c.h.b16 %v6863
  %v6910 = vunpack.c.l.b16 %v6864
  %v6911 = vunpack.c.h.b16 %v6864
  %v6912 = vunpack.c.l.b16 %v6865
  %v6913 = vunpack.c.h.b16 %v6865
  %v6914 = vpack.c.b16 %v6884, %v6882
  %v6915 = vpack.c.b16 %v6885, %v6883
  %v6916 = vpack.c.b16 %v6888, %v6886
  %v6917 = vpack.c.b16 %v6889, %v6887
  %v6918 = vpack.c.b16 %v6892, %v6890
  %v6919 = vpack.c.b16 %v6893, %v6891
  %v6920 = vpack.c.b16 %v6896, %v6894
  %v6921 = vpack.c.b16 %v6897, %v6895
  %v6922 = vpack.c.b16 %v6900, %v6898
  %v6923 = vpack.c.b16 %v6901, %v6899
  %v6924 = vpack.c.b16 %v6904, %v6902
  %v6925 = vpack.c.b16 %v6905, %v6903
  %v6926 = vpack.c.b16 %v6908, %v6906
  %v6927 = vpack.c.b16 %v6909, %v6907
  %v6928 = vpack.c.b16 %v6912, %v6910
  %v6929 = vpack.c.b16 %v6913, %v6911
  %6946 = vmatprep.subr.bf16.mxu0 %v6915
  %6947 = vmatpush1.bf16.msra.mxu0 %v6914
  %6948 = vmatprep.subr.bf16.mxu0 %v6917
  %6949 = vmatpush1.bf16.msra.mxu0 %v6916
  %6950 = vmatprep.subr.bf16.mxu0 %v6919
  %6951 = vmatpush1.bf16.msra.mxu0 %v6918
  %6952 = vmatprep.subr.bf16.mxu0 %v6921
  %6953 = vmatpush1.bf16.msra.mxu0 %v6920
  %6954 = vmatprep.subr.bf16.mxu0 %v6923
  %6955 = vmatpush1.bf16.msra.mxu0 %v6922
  %6956 = vmatprep.subr.bf16.mxu0 %v6925
  %6957 = vmatpush1.bf16.msra.mxu0 %v6924
  %6958 = vmatprep.subr.bf16.mxu0 %v6927
  %6959 = vmatpush1.bf16.msra.mxu0 %v6926
  %6960 = vmatprep.subr.bf16.mxu0 %v6929
  %6961 = vmatpush1.bf16.msra.mxu0 %v6928
  %6962 = vmatprep.subr.bf16.mxu0 0
  %6963 = vmatpush1.bf16.msra.mxu0 0
  %6964 = vmatprep.subr.bf16.mxu0 0
  %6965 = vmatpush1.bf16.msra.mxu0 0
  %6966 = vmatprep.subr.bf16.mxu0 0
  %6967 = vmatpush1.bf16.msra.mxu0 0
  %6968 = vmatprep.subr.bf16.mxu0 0
  %6969 = vmatpush1.bf16.msra.mxu0 0
  %6970 = vmatprep.subr.bf16.mxu0 0
  %6971 = vmatpush1.bf16.msra.mxu0 0
  %6972 = vmatprep.subr.bf16.mxu0 0
  %6973 = vmatpush1.bf16.msra.mxu0 0
  %6974 = vmatprep.subr.bf16.mxu0 0
  %6975 = vmatpush1.bf16.msra.mxu0 0
  %6976 = vmatprep.subr.bf16.mxu0 0
  %6977 = vmatpush1.bf16.msra.mxu0 0
  %6978 = vmatprep.mubr.bf16.mxu0 0
  %6979 = vmatmul.mubr.bf16.gmra.mrb[0].mxu0 %v6849
  %v6980 = vpop.f32.mrb[0].mxu0
  %v6981 = vadd.f32 0.0, %v6980
  %v6982 = vpop.f32.mrb[0].mxu0
  %v6983 = vadd.f32 0.0, %v6982
  %v6984 = vpop.f32.mrb[0].mxu0
  %v6985 = vpop.f32.mrb[0].mxu0
  %6986 = vdwg.mxu0
  %v6987 = vadd.f32 %v6847, %v6981
  %v6988 = vadd.f32 %v6848, %v6983
  %v6989 = vpack.c.bf16 %v6808, %v6808
  %v6990 = vld [vmem:[%s10 + $0x80] sm:$0xff]
  %v6991 = vld [vmem:[%s10 + $0x88] sm:$0xff]
  %v6992 = vld [vmem:[%s10 + $0x90] sm:$0xff]
  %v6993 = vld [vmem:[%s10 + $0x98] sm:$0xff]
  %v6994 = vld [vmem:[%s10 + $0xa0] sm:$0xff]
  %v6995 = vld [vmem:[%s10 + $0xa8] sm:$0xff]
  %v6996 = vld [vmem:[%s10 + $0xb0] sm:$0xff]
  %v6997 = vld [vmem:[%s10 + $0xb8] sm:$0xff]
  %v6998 = vld [vmem:[%s10 + $0xc0] sm:$0xff]
  %v6999 = vld [vmem:[%s10 + $0xc8] sm:$0xff]
  %v7000 = vld [vmem:[%s10 + $0xd0] sm:$0xff]
  %v7001 = vld [vmem:[%s10 + $0xd8] sm:$0xff]
  %v7002 = vld [vmem:[%s10 + $0xe0] sm:$0xff]
  %v7003 = vld [vmem:[%s10 + $0xe8] sm:$0xff]
  %v7004 = vld [vmem:[%s10 + $0xf0] sm:$0xff]
  %v7005 = vld [vmem:[%s10 + $0xf8] sm:$0xff]
  %v7022 = vunpack.c.l.b16 %v6990
  %v7023 = vunpack.c.h.b16 %v6990
  %v7024 = vunpack.c.l.b16 %v6991
  %v7025 = vunpack.c.h.b16 %v6991
  %v7026 = vunpack.c.l.b16 %v6992
  %v7027 = vunpack.c.h.b16 %v6992
  %v7028 = vunpack.c.l.b16 %v6993
  %v7029 = vunpack.c.h.b16 %v6993
  %v7030 = vunpack.c.l.b16 %v6994
  %v7031 = vunpack.c.h.b16 %v6994
  %v7032 = vunpack.c.l.b16 %v6995
  %v7033 = vunpack.c.h.b16 %v6995
  %v7034 = vunpack.c.l.b16 %v6996
  %v7035 = vunpack.c.h.b16 %v6996
  %v7036 = vunpack.c.l.b16 %v6997
  %v7037 = vunpack.c.h.b16 %v6997
  %v7038 = vunpack.c.l.b16 %v6998
  %v7039 = vunpack.c.h.b16 %v6998
  %v7040 = vunpack.c.l.b16 %v6999
  %v7041 = vunpack.c.h.b16 %v6999
  %v7042 = vunpack.c.l.b16 %v7000
  %v7043 = vunpack.c.h.b16 %v7000
  %v7044 = vunpack.c.l.b16 %v7001
  %v7045 = vunpack.c.h.b16 %v7001
  %v7046 = vunpack.c.l.b16 %v7002
  %v7047 = vunpack.c.h.b16 %v7002
  %v7048 = vunpack.c.l.b16 %v7003
  %v7049 = vunpack.c.h.b16 %v7003
  %v7050 = vunpack.c.l.b16 %v7004
  %v7051 = vunpack.c.h.b16 %v7004
  %v7052 = vunpack.c.l.b16 %v7005
  %v7053 = vunpack.c.h.b16 %v7005
  %v7054 = vpack.c.b16 %v7024, %v7022
  %v7055 = vpack.c.b16 %v7025, %v7023
  %v7056 = vpack.c.b16 %v7028, %v7026
  %v7057 = vpack.c.b16 %v7029, %v7027
  %v7058 = vpack.c.b16 %v7032, %v7030
  %v7059 = vpack.c.b16 %v7033, %v7031
  %v7060 = vpack.c.b16 %v7036, %v7034
  %v7061 = vpack.c.b16 %v7037, %v7035
  %v7062 = vpack.c.b16 %v7040, %v7038
  %v7063 = vpack.c.b16 %v7041, %v7039
  %v7064 = vpack.c.b16 %v7044, %v7042
  %v7065 = vpack.c.b16 %v7045, %v7043
  %v7066 = vpack.c.b16 %v7048, %v7046
  %v7067 = vpack.c.b16 %v7049, %v7047
  %v7068 = vpack.c.b16 %v7052, %v7050
  %v7069 = vpack.c.b16 %v7053, %v7051
  %7086 = vmatprep.subr.bf16.mxu0 %v7055
  %7087 = vmatpush1.bf16.msra.mxu0 %v7054
  %7088 = vmatprep.subr.bf16.mxu0 %v7057
  %7089 = vmatpush1.bf16.msra.mxu0 %v7056
  %7090 = vmatprep.subr.bf16.mxu0 %v7059
  %7091 = vmatpush1.bf16.msra.mxu0 %v7058
  %7092 = vmatprep.subr.bf16.mxu0 %v7061
  %7093 = vmatpush1.bf16.msra.mxu0 %v7060
  %7094 = vmatprep.subr.bf16.mxu0 %v7063
  %7095 = vmatpush1.bf16.msra.mxu0 %v7062
  %7096 = vmatprep.subr.bf16.mxu0 %v7065
  %7097 = vmatpush1.bf16.msra.mxu0 %v7064
  %7098 = vmatprep.subr.bf16.mxu0 %v7067
  %7099 = vmatpush1.bf16.msra.mxu0 %v7066
  %7100 = vmatprep.subr.bf16.mxu0 %v7069
  %7101 = vmatpush1.bf16.msra.mxu0 %v7068
  %7102 = vmatprep.subr.bf16.mxu0 0
  %7103 = vmatpush1.bf16.msra.mxu0 0
  %7104 = vmatprep.subr.bf16.mxu0 0
  %7105 = vmatpush1.bf16.msra.mxu0 0
  %7106 = vmatprep.subr.bf16.mxu0 0
  %7107 = vmatpush1.bf16.msra.mxu0 0
  %7108 = vmatprep.subr.bf16.mxu0 0
  %7109 = vmatpush1.bf16.msra.mxu0 0
  %7110 = vmatprep.subr.bf16.mxu0 0
  %7111 = vmatpush1.bf16.msra.mxu0 0
  %7112 = vmatprep.subr.bf16.mxu0 0
  %7113 = vmatpush1.bf16.msra.mxu0 0
  %7114 = vmatprep.subr.bf16.mxu0 0
  %7115 = vmatpush1.bf16.msra.mxu0 0
  %7116 = vmatprep.subr.bf16.mxu0 0
  %7117 = vmatpush1.bf16.msra.mxu0 0
  %7118 = vmatprep.mubr.bf16.mxu0 0
  %7119 = vmatmul.mubr.bf16.gmra.mrb[0].mxu0 %v6989
  %v7120 = vpop.f32.mrb[0].mxu0
  %v7121 = vadd.f32 0.0, %v7120
  %v7122 = vpop.f32.mrb[0].mxu0
  %v7123 = vadd.f32 0.0, %v7122
  %v7124 = vpop.f32.mrb[0].mxu0
  %v7125 = vpop.f32.mrb[0].mxu0
  %7126 = vdwg.mxu0
  %v7127 = vadd.f32 %v6987, %v7121
  %v7128 = vadd.f32 %v6988, %v7123
  %v7129 = vpack.c.bf16 %v6813, %v6813
  %v7130 = vld [vmem:[%s10 + $0x100] sm:$0xff]
  %v7131 = vld [vmem:[%s10 + $0x108] sm:$0xff]
  %v7132 = vld [vmem:[%s10 + $0x110] sm:$0xff]
  %v7133 = vld [vmem:[%s10 + $0x118] sm:$0xff]
  %v7134 = vld [vmem:[%s10 + $0x120] sm:$0xff]
  %v7135 = vld [vmem:[%s10 + $0x128] sm:$0xff]
  %v7136 = vld [vmem:[%s10 + $0x130] sm:$0xff]
  %v7137 = vld [vmem:[%s10 + $0x138] sm:$0xff]
  %v7138 = vld [vmem:[%s10 + $0x140] sm:$0xff]
  %v7139 = vld [vmem:[%s10 + $0x148] sm:$0xff]
  %v7140 = vld [vmem:[%s10 + $0x150] sm:$0xff]
  %v7141 = vld [vmem:[%s10 + $0x158] sm:$0xff]
  %v7142 = vld [vmem:[%s10 + $0x160] sm:$0xff]
  %v7143 = vld [vmem:[%s10 + $0x168] sm:$0xff]
  %v7144 = vld [vmem:[%s10 + $0x170] sm:$0xff]
  %v7145 = vld [vmem:[%s10 + $0x178] sm:$0xff]
  %v7162 = vunpack.c.l.b16 %v7130
  %v7163 = vunpack.c.h.b16 %v7130
  %v7164 = vunpack.c.l.b16 %v7131
  %v7165 = vunpack.c.h.b16 %v7131
  %v7166 = vunpack.c.l.b16 %v7132
  %v7167 = vunpack.c.h.b16 %v7132
  %v7168 = vunpack.c.l.b16 %v7133
  %v7169 = vunpack.c.h.b16 %v7133
  %v7170 = vunpack.c.l.b16 %v7134
  %v7171 = vunpack.c.h.b16 %v7134
  %v7172 = vunpack.c.l.b16 %v7135
  %v7173 = vunpack.c.h.b16 %v7135
  %v7174 = vunpack.c.l.b16 %v7136
  %v7175 = vunpack.c.h.b16 %v7136
  %v7176 = vunpack.c.l.b16 %v7137
  %v7177 = vunpack.c.h.b16 %v7137
  %v7178 = vunpack.c.l.b16 %v7138
  %v7179 = vunpack.c.h.b16 %v7138
  %v7180 = vunpack.c.l.b16 %v7139
  %v7181 = vunpack.c.h.b16 %v7139
  %v7182 = vunpack.c.l.b16 %v7140
  %v7183 = vunpack.c.h.b16 %v7140
  %v7184 = vunpack.c.l.b16 %v7141
  %v7185 = vunpack.c.h.b16 %v7141
  %v7186 = vunpack.c.l.b16 %v7142
  %v7187 = vunpack.c.h.b16 %v7142
  %v7188 = vunpack.c.l.b16 %v7143
  %v7189 = vunpack.c.h.b16 %v7143
  %v7190 = vunpack.c.l.b16 %v7144
  %v7191 = vunpack.c.h.b16 %v7144
  %v7192 = vunpack.c.l.b16 %v7145
  %v7193 = vunpack.c.h.b16 %v7145
  %v7194 = vpack.c.b16 %v7164, %v7162
  %v7195 = vpack.c.b16 %v7165, %v7163
  %v7196 = vpack.c.b16 %v7168, %v7166
  %v7197 = vpack.c.b16 %v7169, %v7167
  %v7198 = vpack.c.b16 %v7172, %v7170
  %v7199 = vpack.c.b16 %v7173, %v7171
  %v7200 = vpack.c.b16 %v7176, %v7174
  %v7201 = vpack.c.b16 %v7177, %v7175
  %v7202 = vpack.c.b16 %v7180, %v7178
  %v7203 = vpack.c.b16 %v7181, %v7179
  %v7204 = vpack.c.b16 %v7184, %v7182
  %v7205 = vpack.c.b16 %v7185, %v7183
  %v7206 = vpack.c.b16 %v7188, %v7186
  %v7207 = vpack.c.b16 %v7189, %v7187
  %v7208 = vpack.c.b16 %v7192, %v7190
  %v7209 = vpack.c.b16 %v7193, %v7191
  %7226 = vmatprep.subr.bf16.mxu0 %v7195
  %7227 = vmatpush1.bf16.msra.mxu0 %v7194
  %7228 = vmatprep.subr.bf16.mxu0 %v7197
  %7229 = vmatpush1.bf16.msra.mxu0 %v7196
  %7230 = vmatprep.subr.bf16.mxu0 %v7199
  %7231 = vmatpush1.bf16.msra.mxu0 %v7198
  %7232 = vmatprep.subr.bf16.mxu0 %v7201
  %7233 = vmatpush1.bf16.msra.mxu0 %v7200
  %7234 = vmatprep.subr.bf16.mxu0 %v7203
  %7235 = vmatpush1.bf16.msra.mxu0 %v7202
  %7236 = vmatprep.subr.bf16.mxu0 %v7205
  %7237 = vmatpush1.bf16.msra.mxu0 %v7204
  %7238 = vmatprep.subr.bf16.mxu0 %v7207
  %7239 = vmatpush1.bf16.msra.mxu0 %v7206
  %7240 = vmatprep.subr.bf16.mxu0 %v7209
  %7241 = vmatpush1.bf16.msra.mxu0 %v7208
  %7242 = vmatprep.subr.bf16.mxu0 0
  %7243 = vmatpush1.bf16.msra.mxu0 0
  %7244 = vmatprep.subr.bf16.mxu0 0
  %7245 = vmatpush1.bf16.msra.mxu0 0
  %7246 = vmatprep.subr.bf16.mxu0 0
  %7247 = vmatpush1.bf16.msra.mxu0 0
  %7248 = vmatprep.subr.bf16.mxu0 0
  %7249 = vmatpush1.bf16.msra.mxu0 0
  %7250 = vmatprep.subr.bf16.mxu0 0
  %7251 = vmatpush1.bf16.msra.mxu0 0
  %7252 = vmatprep.subr.bf16.mxu0 0
  %7253 = vmatpush1.bf16.msra.mxu0 0
  %7254 = vmatprep.subr.bf16.mxu0 0
  %7255 = vmatpush1.bf16.msra.mxu0 0
  %7256 = vmatprep.subr.bf16.mxu0 0
  %7257 = vmatpush1.bf16.msra.mxu0 0
  %7258 = vmatprep.mubr.bf16.mxu0 0
  %7259 = vmatmul.mubr.bf16.gmra.mrb[0].mxu0 %v7129
  %v7260 = vpop.f32.mrb[0].mxu0
  %v7261 = vadd.f32 0.0, %v7260
  %v7262 = vpop.f32.mrb[0].mxu0
  %v7263 = vadd.f32 0.0, %v7262
  %v7264 = vpop.f32.mrb[0].mxu0
  %v7265 = vpop.f32.mrb[0].mxu0
  %7266 = vdwg.mxu0
  %v7267 = vadd.f32 %v7127, %v7261
  %v7268 = vadd.f32 %v7128, %v7263
  %v7269 = vpack.c.bf16 %v6816, %v6816
  %v7270 = vld [vmem:[%s10 + $0x180] sm:$0xff]
  %v7271 = vld [vmem:[%s10 + $0x188] sm:$0xff]
  %v7272 = vld [vmem:[%s10 + $0x190] sm:$0xff]
  %v7273 = vld [vmem:[%s10 + $0x198] sm:$0xff]
  %v7274 = vld [vmem:[%s10 + $0x1a0] sm:$0xff]
  %v7275 = vld [vmem:[%s10 + $0x1a8] sm:$0xff]
  %v7276 = vld [vmem:[%s10 + $0x1b0] sm:$0xff]
  %v7277 = vld [vmem:[%s10 + $0x1b8] sm:$0xff]
  %v7278 = vld [vmem:[%s10 + $0x1c0] sm:$0xff]
  %v7279 = vld [vmem:[%s10 + $0x1c8] sm:$0xff]
  %v7280 = vld [vmem:[%s10 + $0x1d0] sm:$0xff]
  %v7281 = vld [vmem:[%s10 + $0x1d8] sm:$0xff]
  %v7282 = vld [vmem:[%s10 + $0x1e0] sm:$0xff]
  %v7283 = vld [vmem:[%s10 + $0x1e8] sm:$0xff]
  %v7284 = vld [vmem:[%s10 + $0x1f0] sm:$0xff]
  %v7285 = vld [vmem:[%s10 + $0x1f8] sm:$0xff]
  %v7302 = vunpack.c.l.b16 %v7270
  %v7303 = vunpack.c.h.b16 %v7270
  %v7304 = vunpack.c.l.b16 %v7271
  %v7305 = vunpack.c.h.b16 %v7271
  %v7306 = vunpack.c.l.b16 %v7272
  %v7307 = vunpack.c.h.b16 %v7272
  %v7308 = vunpack.c.l.b16 %v7273
  %v7309 = vunpack.c.h.b16 %v7273
  %v7310 = vunpack.c.l.b16 %v7274
  %v7311 = vunpack.c.h.b16 %v7274
  %v7312 = vunpack.c.l.b16 %v7275
  %v7313 = vunpack.c.h.b16 %v7275
  %v7314 = vunpack.c.l.b16 %v7276
  %v7315 = vunpack.c.h.b16 %v7276
  %v7316 = vunpack.c.l.b16 %v7277
  %v7317 = vunpack.c.h.b16 %v7277
  %v7318 = vunpack.c.l.b16 %v7278
  %v7319 = vunpack.c.h.b16 %v7278
  %v7320 = vunpack.c.l.b16 %v7279
  %v7321 = vunpack.c.h.b16 %v7279
  %v7322 = vunpack.c.l.b16 %v7280
  %v7323 = vunpack.c.h.b16 %v7280
  %v7324 = vunpack.c.l.b16 %v7281
  %v7325 = vunpack.c.h.b16 %v7281
  %v7326 = vunpack.c.l.b16 %v7282
  %v7327 = vunpack.c.h.b16 %v7282
  %v7328 = vunpack.c.l.b16 %v7283
  %v7329 = vunpack.c.h.b16 %v7283
  %v7330 = vunpack.c.l.b16 %v7284
  %v7331 = vunpack.c.h.b16 %v7284
  %v7332 = vunpack.c.l.b16 %v7285
  %v7333 = vunpack.c.h.b16 %v7285
  %v7334 = vpack.c.b16 %v7304, %v7302
  %v7335 = vpack.c.b16 %v7305, %v7303
  %v7336 = vpack.c.b16 %v7308, %v7306
  %v7337 = vpack.c.b16 %v7309, %v7307
  %v7338 = vpack.c.b16 %v7312, %v7310
  %v7339 = vpack.c.b16 %v7313, %v7311
  %v7340 = vpack.c.b16 %v7316, %v7314
  %v7341 = vpack.c.b16 %v7317, %v7315
  %v7342 = vpack.c.b16 %v7320, %v7318
  %v7343 = vpack.c.b16 %v7321, %v7319
  %v7344 = vpack.c.b16 %v7324, %v7322
  %v7345 = vpack.c.b16 %v7325, %v7323
  %v7346 = vpack.c.b16 %v7328, %v7326
  %v7347 = vpack.c.b16 %v7329, %v7327
  %v7348 = vpack.c.b16 %v7332, %v7330
  %v7349 = vpack.c.b16 %v7333, %v7331
  %7366 = vmatprep.subr.bf16.mxu0 %v7335
  %7367 = vmatpush1.bf16.msra.mxu0 %v7334
  %7368 = vmatprep.subr.bf16.mxu0 %v7337
  %7369 = vmatpush1.bf16.msra.mxu0 %v7336
  %7370 = vmatprep.subr.bf16.mxu0 %v7339
  %7371 = vmatpush1.bf16.msra.mxu0 %v7338
  %7372 = vmatprep.subr.bf16.mxu0 %v7341
  %7373 = vmatpush1.bf16.msra.mxu0 %v7340
  %7374 = vmatprep.subr.bf16.mxu0 %v7343
  %7375 = vmatpush1.bf16.msra.mxu0 %v7342
  %7376 = vmatprep.subr.bf16.mxu0 %v7345
  %7377 = vmatpush1.bf16.msra.mxu0 %v7344
  %7378 = vmatprep.subr.bf16.mxu0 %v7347
  %7379 = vmatpush1.bf16.msra.mxu0 %v7346
  %7380 = vmatprep.subr.bf16.mxu0 %v7349
  %7381 = vmatpush1.bf16.msra.mxu0 %v7348
  %7382 = vmatprep.subr.bf16.mxu0 0
  %7383 = vmatpush1.bf16.msra.mxu0 0
  %7384 = vmatprep.subr.bf16.mxu0 0
  %7385 = vmatpush1.bf16.msra.mxu0 0
  %7386 = vmatprep.subr.bf16.mxu0 0
  %7387 = vmatpush1.bf16.msra.mxu0 0
  %7388 = vmatprep.subr.bf16.mxu0 0
  %7389 = vmatpush1.bf16.msra.mxu0 0
  %7390 = vmatprep.subr.bf16.mxu0 0
  %7391 = vmatpush1.bf16.msra.mxu0 0
  %7392 = vmatprep.subr.bf16.mxu0 0
  %7393 = vmatpush1.bf16.msra.mxu0 0
  %7394 = vmatprep.subr.bf16.mxu0 0
  %7395 = vmatpush1.bf16.msra.mxu0 0
  %7396 = vmatprep.subr.bf16.mxu0 0
  %7397 = vmatpush1.bf16.msra.mxu0 0
  %7398 = vmatprep.mubr.bf16.mxu0 0
  %7399 = vmatmul.mubr.bf16.gmra.mrb[0].mxu0 %v7269
  %v7400 = vpop.f32.mrb[0].mxu0
  %v7401 = vadd.f32 0.0, %v7400
  %v7402 = vpop.f32.mrb[0].mxu0
  %v7403 = vadd.f32 0.0, %v7402
  %v7404 = vpop.f32.mrb[0].mxu0
  %v7405 = vpop.f32.mrb[0].mxu0
  %7406 = vdwg.mxu0
  %v7407 = vadd.f32 %v7267, %v7401
  %v7408 = vadd.f32 %v7268, %v7403
  %v7409 = vpack.c.bf16 %v6821, %v6821
  %v7410 = vld [vmem:[%s10 + $0x200] sm:$0xff]
  %v7411 = vld [vmem:[%s10 + $0x208] sm:$0xff]
  %v7412 = vld [vmem:[%s10 + $0x210] sm:$0xff]
  %v7413 = vld [vmem:[%s10 + $0x218] sm:$0xff]
  %v7414 = vld [vmem:[%s10 + $0x220] sm:$0xff]
  %v7415 = vld [vmem:[%s10 + $0x228] sm:$0xff]
  %v7416 = vld [vmem:[%s10 + $0x230] sm:$0xff]
  %v7417 = vld [vmem:[%s10 + $0x238] sm:$0xff]
  %v7418 = vld [vmem:[%s10 + $0x240] sm:$0xff]
  %v7419 = vld [vmem:[%s10 + $0x248] sm:$0xff]
  %v7420 = vld [vmem:[%s10 + $0x250] sm:$0xff]
  %v7421 = vld [vmem:[%s10 + $0x258] sm:$0xff]
  %v7422 = vld [vmem:[%s10 + $0x260] sm:$0xff]
  %v7423 = vld [vmem:[%s10 + $0x268] sm:$0xff]
  %v7424 = vld [vmem:[%s10 + $0x270] sm:$0xff]
  %v7425 = vld [vmem:[%s10 + $0x278] sm:$0xff]
  %v7442 = vunpack.c.l.b16 %v7410
  %v7443 = vunpack.c.h.b16 %v7410
  %v7444 = vunpack.c.l.b16 %v7411
  %v7445 = vunpack.c.h.b16 %v7411
  %v7446 = vunpack.c.l.b16 %v7412
  %v7447 = vunpack.c.h.b16 %v7412
  %v7448 = vunpack.c.l.b16 %v7413
  %v7449 = vunpack.c.h.b16 %v7413
  %v7450 = vunpack.c.l.b16 %v7414
  %v7451 = vunpack.c.h.b16 %v7414
  %v7452 = vunpack.c.l.b16 %v7415
  %v7453 = vunpack.c.h.b16 %v7415
  %v7454 = vunpack.c.l.b16 %v7416
  %v7455 = vunpack.c.h.b16 %v7416
  %v7456 = vunpack.c.l.b16 %v7417
  %v7457 = vunpack.c.h.b16 %v7417
  %v7458 = vunpack.c.l.b16 %v7418
  %v7459 = vunpack.c.h.b16 %v7418
  %v7460 = vunpack.c.l.b16 %v7419
  %v7461 = vunpack.c.h.b16 %v7419
  %v7462 = vunpack.c.l.b16 %v7420
  %v7463 = vunpack.c.h.b16 %v7420
  %v7464 = vunpack.c.l.b16 %v7421
  %v7465 = vunpack.c.h.b16 %v7421
  %v7466 = vunpack.c.l.b16 %v7422
  %v7467 = vunpack.c.h.b16 %v7422
  %v7468 = vunpack.c.l.b16 %v7423
  %v7469 = vunpack.c.h.b16 %v7423
  %v7470 = vunpack.c.l.b16 %v7424
  %v7471 = vunpack.c.h.b16 %v7424
  %v7472 = vunpack.c.l.b16 %v7425
  %v7473 = vunpack.c.h.b16 %v7425
  %v7474 = vpack.c.b16 %v7444, %v7442
  %v7475 = vpack.c.b16 %v7445, %v7443
  %v7476 = vpack.c.b16 %v7448, %v7446
  %v7477 = vpack.c.b16 %v7449, %v7447
  %v7478 = vpack.c.b16 %v7452, %v7450
  %v7479 = vpack.c.b16 %v7453, %v7451
  %v7480 = vpack.c.b16 %v7456, %v7454
  %v7481 = vpack.c.b16 %v7457, %v7455
  %v7482 = vpack.c.b16 %v7460, %v7458
  %v7483 = vpack.c.b16 %v7461, %v7459
  %v7484 = vpack.c.b16 %v7464, %v7462
  %v7485 = vpack.c.b16 %v7465, %v7463
  %v7486 = vpack.c.b16 %v7468, %v7466
  %v7487 = vpack.c.b16 %v7469, %v7467
  %v7488 = vpack.c.b16 %v7472, %v7470
  %v7489 = vpack.c.b16 %v7473, %v7471
  %7506 = vmatprep.subr.bf16.mxu0 %v7475
  %7507 = vmatpush1.bf16.msra.mxu0 %v7474
  %7508 = vmatprep.subr.bf16.mxu0 %v7477
  %7509 = vmatpush1.bf16.msra.mxu0 %v7476
  %7510 = vmatprep.subr.bf16.mxu0 %v7479
  %7511 = vmatpush1.bf16.msra.mxu0 %v7478
  %7512 = vmatprep.subr.bf16.mxu0 %v7481
  %7513 = vmatpush1.bf16.msra.mxu0 %v7480
  %7514 = vmatprep.subr.bf16.mxu0 %v7483
  %7515 = vmatpush1.bf16.msra.mxu0 %v7482
  %7516 = vmatprep.subr.bf16.mxu0 %v7485
  %7517 = vmatpush1.bf16.msra.mxu0 %v7484
  %7518 = vmatprep.subr.bf16.mxu0 %v7487
  %7519 = vmatpush1.bf16.msra.mxu0 %v7486
  %7520 = vmatprep.subr.bf16.mxu0 %v7489
  %7521 = vmatpush1.bf16.msra.mxu0 %v7488
  %7522 = vmatprep.subr.bf16.mxu0 0
  %7523 = vmatpush1.bf16.msra.mxu0 0
  %7524 = vmatprep.subr.bf16.mxu0 0
  %7525 = vmatpush1.bf16.msra.mxu0 0
  %7526 = vmatprep.subr.bf16.mxu0 0
  %7527 = vmatpush1.bf16.msra.mxu0 0
  %7528 = vmatprep.subr.bf16.mxu0 0
  %7529 = vmatpush1.bf16.msra.mxu0 0
  %7530 = vmatprep.subr.bf16.mxu0 0
  %7531 = vmatpush1.bf16.msra.mxu0 0
  %7532 = vmatprep.subr.bf16.mxu0 0
  %7533 = vmatpush1.bf16.msra.mxu0 0
  %7534 = vmatprep.subr.bf16.mxu0 0
  %7535 = vmatpush1.bf16.msra.mxu0 0
  %7536 = vmatprep.subr.bf16.mxu0 0
  %7537 = vmatpush1.bf16.msra.mxu0 0
  %7538 = vmatprep.mubr.bf16.mxu0 0
  %7539 = vmatmul.mubr.bf16.gmra.mrb[0].mxu0 %v7409
  %v7540 = vpop.f32.mrb[0].mxu0
  %v7541 = vadd.f32 0.0, %v7540
  %v7542 = vpop.f32.mrb[0].mxu0
  %v7543 = vadd.f32 0.0, %v7542
  %v7544 = vpop.f32.mrb[0].mxu0
  %v7545 = vpop.f32.mrb[0].mxu0
  %7546 = vdwg.mxu0
  %v7547 = vadd.f32 %v7407, %v7541
  %v7548 = vadd.f32 %v7408, %v7543
  %v7549 = vpack.c.bf16 %v6824, %v6824
  %v7550 = vld [vmem:[%s10 + $0x280] sm:$0xff]
  %v7551 = vld [vmem:[%s10 + $0x288] sm:$0xff]
  %v7552 = vld [vmem:[%s10 + $0x290] sm:$0xff]
  %v7553 = vld [vmem:[%s10 + $0x298] sm:$0xff]
  %v7554 = vld [vmem:[%s10 + $0x2a0] sm:$0xff]
  %v7555 = vld [vmem:[%s10 + $0x2a8] sm:$0xff]
  %v7556 = vld [vmem:[%s10 + $0x2b0] sm:$0xff]
  %v7557 = vld [vmem:[%s10 + $0x2b8] sm:$0xff]
  %v7558 = vld [vmem:[%s10 + $0x2c0] sm:$0xff]
  %v7559 = vld [vmem:[%s10 + $0x2c8] sm:$0xff]
  %v7560 = vld [vmem:[%s10 + $0x2d0] sm:$0xff]
  %v7561 = vld [vmem:[%s10 + $0x2d8] sm:$0xff]
  %v7562 = vld [vmem:[%s10 + $0x2e0] sm:$0xff]
  %v7563 = vld [vmem:[%s10 + $0x2e8] sm:$0xff]
  %v7564 = vld [vmem:[%s10 + $0x2f0] sm:$0xff]
  %v7565 = vld [vmem:[%s10 + $0x2f8] sm:$0xff]
  %v7582 = vunpack.c.l.b16 %v7550
  %v7583 = vunpack.c.h.b16 %v7550
  %v7584 = vunpack.c.l.b16 %v7551
  %v7585 = vunpack.c.h.b16 %v7551
  %v7586 = vunpack.c.l.b16 %v7552
  %v7587 = vunpack.c.h.b16 %v7552
  %v7588 = vunpack.c.l.b16 %v7553
  %v7589 = vunpack.c.h.b16 %v7553
  %v7590 = vunpack.c.l.b16 %v7554
  %v7591 = vunpack.c.h.b16 %v7554
  %v7592 = vunpack.c.l.b16 %v7555
  %v7593 = vunpack.c.h.b16 %v7555
  %v7594 = vunpack.c.l.b16 %v7556
  %v7595 = vunpack.c.h.b16 %v7556
  %v7596 = vunpack.c.l.b16 %v7557
  %v7597 = vunpack.c.h.b16 %v7557
  %v7598 = vunpack.c.l.b16 %v7558
  %v7599 = vunpack.c.h.b16 %v7558
  %v7600 = vunpack.c.l.b16 %v7559
  %v7601 = vunpack.c.h.b16 %v7559
  %v7602 = vunpack.c.l.b16 %v7560
  %v7603 = vunpack.c.h.b16 %v7560
  %v7604 = vunpack.c.l.b16 %v7561
  %v7605 = vunpack.c.h.b16 %v7561
  %v7606 = vunpack.c.l.b16 %v7562
  %v7607 = vunpack.c.h.b16 %v7562
  %v7608 = vunpack.c.l.b16 %v7563
  %v7609 = vunpack.c.h.b16 %v7563
  %v7610 = vunpack.c.l.b16 %v7564
  %v7611 = vunpack.c.h.b16 %v7564
  %v7612 = vunpack.c.l.b16 %v7565
  %v7613 = vunpack.c.h.b16 %v7565
  %v7614 = vpack.c.b16 %v7584, %v7582
  %v7615 = vpack.c.b16 %v7585, %v7583
  %v7616 = vpack.c.b16 %v7588, %v7586
  %v7617 = vpack.c.b16 %v7589, %v7587
  %v7618 = vpack.c.b16 %v7592, %v7590
  %v7619 = vpack.c.b16 %v7593, %v7591
  %v7620 = vpack.c.b16 %v7596, %v7594
  %v7621 = vpack.c.b16 %v7597, %v7595
  %v7622 = vpack.c.b16 %v7600, %v7598
  %v7623 = vpack.c.b16 %v7601, %v7599
  %v7624 = vpack.c.b16 %v7604, %v7602
  %v7625 = vpack.c.b16 %v7605, %v7603
  %v7626 = vpack.c.b16 %v7608, %v7606
  %v7627 = vpack.c.b16 %v7609, %v7607
  %v7628 = vpack.c.b16 %v7612, %v7610
  %v7629 = vpack.c.b16 %v7613, %v7611
  %7646 = vmatprep.subr.bf16.mxu0 %v7615
  %7647 = vmatpush1.bf16.msra.mxu0 %v7614
  %7648 = vmatprep.subr.bf16.mxu0 %v7617
  %7649 = vmatpush1.bf16.msra.mxu0 %v7616
  %7650 = vmatprep.subr.bf16.mxu0 %v7619
  %7651 = vmatpush1.bf16.msra.mxu0 %v7618
  %7652 = vmatprep.subr.bf16.mxu0 %v7621
  %7653 = vmatpush1.bf16.msra.mxu0 %v7620
  %7654 = vmatprep.subr.bf16.mxu0 %v7623
  %7655 = vmatpush1.bf16.msra.mxu0 %v7622
  %7656 = vmatprep.subr.bf16.mxu0 %v7625
  %7657 = vmatpush1.bf16.msra.mxu0 %v7624
  %7658 = vmatprep.subr.bf16.mxu0 %v7627
  %7659 = vmatpush1.bf16.msra.mxu0 %v7626
  %7660 = vmatprep.subr.bf16.mxu0 %v7629
  %7661 = vmatpush1.bf16.msra.mxu0 %v7628
  %7662 = vmatprep.subr.bf16.mxu0 0
  %7663 = vmatpush1.bf16.msra.mxu0 0
  %7664 = vmatprep.subr.bf16.mxu0 0
  %7665 = vmatpush1.bf16.msra.mxu0 0
  %7666 = vmatprep.subr.bf16.mxu0 0
  %7667 = vmatpush1.bf16.msra.mxu0 0
  %7668 = vmatprep.subr.bf16.mxu0 0
  %7669 = vmatpush1.bf16.msra.mxu0 0
  %7670 = vmatprep.subr.bf16.mxu0 0
  %7671 = vmatpush1.bf16.msra.mxu0 0
  %7672 = vmatprep.subr.bf16.mxu0 0
  %7673 = vmatpush1.bf16.msra.mxu0 0
  %7674 = vmatprep.subr.bf16.mxu0 0
  %7675 = vmatpush1.bf16.msra.mxu0 0
  %7676 = vmatprep.subr.bf16.mxu0 0
  %7677 = vmatpush1.bf16.msra.mxu0 0
  %7678 = vmatprep.mubr.bf16.mxu0 0
  %7679 = vmatmul.mubr.bf16.gmra.mrb[0].mxu0 %v7549
  %v7680 = vpop.f32.mrb[0].mxu0
  %v7681 = vadd.f32 0.0, %v7680
  %v7682 = vpop.f32.mrb[0].mxu0
  %v7683 = vadd.f32 0.0, %v7682
  %v7684 = vpop.f32.mrb[0].mxu0
  %v7685 = vpop.f32.mrb[0].mxu0
  %7686 = vdwg.mxu0
  %v7687 = vadd.f32 %v7547, %v7681
  %v7688 = vadd.f32 %v7548, %v7683
  %v7689 = vpack.c.bf16 %v6829, %v6829
  %v7690 = vld [vmem:[%s10 + $0x300] sm:$0xff]
  %v7691 = vld [vmem:[%s10 + $0x308] sm:$0xff]
  %v7692 = vld [vmem:[%s10 + $0x310] sm:$0xff]
  %v7693 = vld [vmem:[%s10 + $0x318] sm:$0xff]
  %v7694 = vld [vmem:[%s10 + $0x320] sm:$0xff]
  %v7695 = vld [vmem:[%s10 + $0x328] sm:$0xff]
  %v7696 = vld [vmem:[%s10 + $0x330] sm:$0xff]
  %v7697 = vld [vmem:[%s10 + $0x338] sm:$0xff]
  %v7698 = vld [vmem:[%s10 + $0x340] sm:$0xff]
  %v7699 = vld [vmem:[%s10 + $0x348] sm:$0xff]
  %v7700 = vld [vmem:[%s10 + $0x350] sm:$0xff]
  %v7701 = vld [vmem:[%s10 + $0x358] sm:$0xff]
  %v7702 = vld [vmem:[%s10 + $0x360] sm:$0xff]
  %v7703 = vld [vmem:[%s10 + $0x368] sm:$0xff]
  %v7704 = vld [vmem:[%s10 + $0x370] sm:$0xff]
  %v7705 = vld [vmem:[%s10 + $0x378] sm:$0xff]
  %v7722 = vunpack.c.l.b16 %v7690
  %v7723 = vunpack.c.h.b16 %v7690
  %v7724 = vunpack.c.l.b16 %v7691
  %v7725 = vunpack.c.h.b16 %v7691
  %v7726 = vunpack.c.l.b16 %v7692
  %v7727 = vunpack.c.h.b16 %v7692
  %v7728 = vunpack.c.l.b16 %v7693
  %v7729 = vunpack.c.h.b16 %v7693
  %v7730 = vunpack.c.l.b16 %v7694
  %v7731 = vunpack.c.h.b16 %v7694
  %v7732 = vunpack.c.l.b16 %v7695
  %v7733 = vunpack.c.h.b16 %v7695
  %v7734 = vunpack.c.l.b16 %v7696
  %v7735 = vunpack.c.h.b16 %v7696
  %v7736 = vunpack.c.l.b16 %v7697
  %v7737 = vunpack.c.h.b16 %v7697
  %v7738 = vunpack.c.l.b16 %v7698
  %v7739 = vunpack.c.h.b16 %v7698
  %v7740 = vunpack.c.l.b16 %v7699
  %v7741 = vunpack.c.h.b16 %v7699
  %v7742 = vunpack.c.l.b16 %v7700
  %v7743 = vunpack.c.h.b16 %v7700
  %v7744 = vunpack.c.l.b16 %v7701
  %v7745 = vunpack.c.h.b16 %v7701
  %v7746 = vunpack.c.l.b16 %v7702
  %v7747 = vunpack.c.h.b16 %v7702
  %v7748 = vunpack.c.l.b16 %v7703
  %v7749 = vunpack.c.h.b16 %v7703
  %v7750 = vunpack.c.l.b16 %v7704
  %v7751 = vunpack.c.h.b16 %v7704
  %v7752 = vunpack.c.l.b16 %v7705
  %v7753 = vunpack.c.h.b16 %v7705
  %v7754 = vpack.c.b16 %v7724, %v7722
  %v7755 = vpack.c.b16 %v7725, %v7723
  %v7756 = vpack.c.b16 %v7728, %v7726
  %v7757 = vpack.c.b16 %v7729, %v7727
  %v7758 = vpack.c.b16 %v7732, %v7730
  %v7759 = vpack.c.b16 %v7733, %v7731
  %v7760 = vpack.c.b16 %v7736, %v7734
  %v7761 = vpack.c.b16 %v7737, %v7735
  %v7762 = vpack.c.b16 %v7740, %v7738
  %v7763 = vpack.c.b16 %v7741, %v7739
  %v7764 = vpack.c.b16 %v7744, %v7742
  %v7765 = vpack.c.b16 %v7745, %v7743
  %v7766 = vpack.c.b16 %v7748, %v7746
  %v7767 = vpack.c.b16 %v7749, %v7747
  %v7768 = vpack.c.b16 %v7752, %v7750
  %v7769 = vpack.c.b16 %v7753, %v7751
  %7786 = vmatprep.subr.bf16.mxu0 %v7755
  %7787 = vmatpush1.bf16.msra.mxu0 %v7754
  %7788 = vmatprep.subr.bf16.mxu0 %v7757
  %7789 = vmatpush1.bf16.msra.mxu0 %v7756
  %7790 = vmatprep.subr.bf16.mxu0 %v7759
  %7791 = vmatpush1.bf16.msra.mxu0 %v7758
  %7792 = vmatprep.subr.bf16.mxu0 %v7761
  %7793 = vmatpush1.bf16.msra.mxu0 %v7760
  %7794 = vmatprep.subr.bf16.mxu0 %v7763
  %7795 = vmatpush1.bf16.msra.mxu0 %v7762
  %7796 = vmatprep.subr.bf16.mxu0 %v7765
  %7797 = vmatpush1.bf16.msra.mxu0 %v7764
  %7798 = vmatprep.subr.bf16.mxu0 %v7767
  %7799 = vmatpush1.bf16.msra.mxu0 %v7766
  %7800 = vmatprep.subr.bf16.mxu0 %v7769
  %7801 = vmatpush1.bf16.msra.mxu0 %v7768
  %7802 = vmatprep.subr.bf16.mxu0 0
  %7803 = vmatpush1.bf16.msra.mxu0 0
  %7804 = vmatprep.subr.bf16.mxu0 0
  %7805 = vmatpush1.bf16.msra.mxu0 0
  %7806 = vmatprep.subr.bf16.mxu0 0
  %7807 = vmatpush1.bf16.msra.mxu0 0
  %7808 = vmatprep.subr.bf16.mxu0 0
  %7809 = vmatpush1.bf16.msra.mxu0 0
  %7810 = vmatprep.subr.bf16.mxu0 0
  %7811 = vmatpush1.bf16.msra.mxu0 0
  %7812 = vmatprep.subr.bf16.mxu0 0
  %7813 = vmatpush1.bf16.msra.mxu0 0
  %7814 = vmatprep.subr.bf16.mxu0 0
  %7815 = vmatpush1.bf16.msra.mxu0 0
  %7816 = vmatprep.subr.bf16.mxu0 0
  %7817 = vmatpush1.bf16.msra.mxu0 0
  %7818 = vmatprep.mubr.bf16.mxu0 0
  %7819 = vmatmul.mubr.bf16.gmra.mrb[0].mxu0 %v7689
  %v7820 = vpop.f32.mrb[0].mxu0
  %v7821 = vadd.f32 0.0, %v7820
  %v7822 = vpop.f32.mrb[0].mxu0
  %v7823 = vadd.f32 0.0, %v7822
  %v7824 = vpop.f32.mrb[0].mxu0
  %v7825 = vpop.f32.mrb[0].mxu0
  %7826 = vdwg.mxu0
  %v7827 = vadd.f32 %v7687, %v7821
  %v7828 = vadd.f32 %v7688, %v7823
  %v7829 = vpack.c.bf16 %v6832, %v6832
  %v7830 = vld [vmem:[%s10 + $0x380] sm:$0xff]
  %v7831 = vld [vmem:[%s10 + $0x388] sm:$0xff]
  %v7832 = vld [vmem:[%s10 + $0x390] sm:$0xff]
  %v7833 = vld [vmem:[%s10 + $0x398] sm:$0xff]
  %v7834 = vld [vmem:[%s10 + $0x3a0] sm:$0xff]
  %v7835 = vld [vmem:[%s10 + $0x3a8] sm:$0xff]
  %v7836 = vld [vmem:[%s10 + $0x3b0] sm:$0xff]
  %v7837 = vld [vmem:[%s10 + $0x3b8] sm:$0xff]
  %v7838 = vld [vmem:[%s10 + $0x3c0] sm:$0xff]
  %v7839 = vld [vmem:[%s10 + $0x3c8] sm:$0xff]
  %v7840 = vld [vmem:[%s10 + $0x3d0] sm:$0xff]
  %v7841 = vld [vmem:[%s10 + $0x3d8] sm:$0xff]
  %v7842 = vld [vmem:[%s10 + $0x3e0] sm:$0xff]
  %v7843 = vld [vmem:[%s10 + $0x3e8] sm:$0xff]
  %v7844 = vld [vmem:[%s10 + $0x3f0] sm:$0xff]
  %v7845 = vld [vmem:[%s10 + $0x3f8] sm:$0xff]
  %v7862 = vunpack.c.l.b16 %v7830
  %v7863 = vunpack.c.h.b16 %v7830
  %v7864 = vunpack.c.l.b16 %v7831
  %v7865 = vunpack.c.h.b16 %v7831
  %v7866 = vunpack.c.l.b16 %v7832
  %v7867 = vunpack.c.h.b16 %v7832
  %v7868 = vunpack.c.l.b16 %v7833
  %v7869 = vunpack.c.h.b16 %v7833
  %v7870 = vunpack.c.l.b16 %v7834
  %v7871 = vunpack.c.h.b16 %v7834
  %v7872 = vunpack.c.l.b16 %v7835
  %v7873 = vunpack.c.h.b16 %v7835
  %v7874 = vunpack.c.l.b16 %v7836
  %v7875 = vunpack.c.h.b16 %v7836
  %v7876 = vunpack.c.l.b16 %v7837
  %v7877 = vunpack.c.h.b16 %v7837
  %v7878 = vunpack.c.l.b16 %v7838
  %v7879 = vunpack.c.h.b16 %v7838
  %v7880 = vunpack.c.l.b16 %v7839
  %v7881 = vunpack.c.h.b16 %v7839
  %v7882 = vunpack.c.l.b16 %v7840
  %v7883 = vunpack.c.h.b16 %v7840
  %v7884 = vunpack.c.l.b16 %v7841
  %v7885 = vunpack.c.h.b16 %v7841
  %v7886 = vunpack.c.l.b16 %v7842
  %v7887 = vunpack.c.h.b16 %v7842
  %v7888 = vunpack.c.l.b16 %v7843
  %v7889 = vunpack.c.h.b16 %v7843
  %v7890 = vunpack.c.l.b16 %v7844
  %v7891 = vunpack.c.h.b16 %v7844
  %v7892 = vunpack.c.l.b16 %v7845
  %v7893 = vunpack.c.h.b16 %v7845
  %v7894 = vpack.c.b16 %v7864, %v7862
  %v7895 = vpack.c.b16 %v7865, %v7863
  %v7896 = vpack.c.b16 %v7868, %v7866
  %v7897 = vpack.c.b16 %v7869, %v7867
  %v7898 = vpack.c.b16 %v7872, %v7870
  %v7899 = vpack.c.b16 %v7873, %v7871
  %v7900 = vpack.c.b16 %v7876, %v7874
  %v7901 = vpack.c.b16 %v7877, %v7875
  %v7902 = vpack.c.b16 %v7880, %v7878
  %v7903 = vpack.c.b16 %v7881, %v7879
  %v7904 = vpack.c.b16 %v7884, %v7882
  %v7905 = vpack.c.b16 %v7885, %v7883
  %v7906 = vpack.c.b16 %v7888, %v7886
  %v7907 = vpack.c.b16 %v7889, %v7887
  %v7908 = vpack.c.b16 %v7892, %v7890
  %v7909 = vpack.c.b16 %v7893, %v7891
  %7926 = vmatprep.subr.bf16.mxu0 %v7895
  %7927 = vmatpush1.bf16.msra.mxu0 %v7894
  %7928 = vmatprep.subr.bf16.mxu0 %v7897
  %7929 = vmatpush1.bf16.msra.mxu0 %v7896
  %7930 = vmatprep.subr.bf16.mxu0 %v7899
  %7931 = vmatpush1.bf16.msra.mxu0 %v7898
  %7932 = vmatprep.subr.bf16.mxu0 %v7901
  %7933 = vmatpush1.bf16.msra.mxu0 %v7900
  %7934 = vmatprep.subr.bf16.mxu0 %v7903
  %7935 = vmatpush1.bf16.msra.mxu0 %v7902
  %7936 = vmatprep.subr.bf16.mxu0 %v7905
  %7937 = vmatpush1.bf16.msra.mxu0 %v7904
  %7938 = vmatprep.subr.bf16.mxu0 %v7907
  %7939 = vmatpush1.bf16.msra.mxu0 %v7906
  %7940 = vmatprep.subr.bf16.mxu0 %v7909
  %7941 = vmatpush1.bf16.msra.mxu0 %v7908
  %7942 = vmatprep.subr.bf16.mxu0 0
  %7943 = vmatpush1.bf16.msra.mxu0 0
  %7944 = vmatprep.subr.bf16.mxu0 0
  %7945 = vmatpush1.bf16.msra.mxu0 0
  %7946 = vmatprep.subr.bf16.mxu0 0
  %7947 = vmatpush1.bf16.msra.mxu0 0
  %7948 = vmatprep.subr.bf16.mxu0 0
  %7949 = vmatpush1.bf16.msra.mxu0 0
  %7950 = vmatprep.subr.bf16.mxu0 0
  %7951 = vmatpush1.bf16.msra.mxu0 0
  %7952 = vmatprep.subr.bf16.mxu0 0
  %7953 = vmatpush1.bf16.msra.mxu0 0
  %7954 = vmatprep.subr.bf16.mxu0 0
  %7955 = vmatpush1.bf16.msra.mxu0 0
  %7956 = vmatprep.subr.bf16.mxu0 0
  %7957 = vmatpush1.bf16.msra.mxu0 0
  %7958 = vmatprep.mubr.bf16.mxu0 0
  %7959 = vmatmul.mubr.bf16.gmra.mrb[0].mxu0 %v7829
  %v7960 = vpop.f32.mrb[0].mxu0
  %v7961 = vadd.f32 0.0, %v7960
  %v7962 = vpop.f32.mrb[0].mxu0
  %v7963 = vadd.f32 0.0, %v7962
  %v7964 = vpop.f32.mrb[0].mxu0
  %v7965 = vpop.f32.mrb[0].mxu0
  %7966 = vdwg.mxu0
  %v7967 = vadd.f32 %v7827, %v7961
  %v7968 = vadd.f32 %v7828, %v7963
  %vm7969 = vcmp.gt.f32.partialorder %v7967, 0.0
  %vm7970 = vcmp.gt.f32.partialorder %v7968, 0.0
  %v7971 = vmul.f32 %v7967, 0.2
  %v7972 = vmul.f32 %v7968, 0.2
  %v7973 = vsel %vm7969, %v7967, %v7971
  %v7974 = vsel %vm7970, %v7968, %v7972
  %v7975 = vpack.c.bf16 %v7973, %v7973
  %v7976 = vpack.c.bf16 %v7974, %v7974
  %v7977 = vld [vmem:[%s12] sm:$0xff]
  %v7978 = vld [vmem:[%s12 + $0x8] sm:$0xff]
  %v7979 = vld [vmem:[%s12 + $0x10] sm:$0xff]
  %v7980 = vld [vmem:[%s12 + $0x18] sm:$0xff]
  %v7981 = vld [vmem:[%s12 + $0x20] sm:$0xff]
  %v7982 = vld [vmem:[%s12 + $0x28] sm:$0xff]
  %v7983 = vld [vmem:[%s12 + $0x30] sm:$0xff]
  %v7984 = vld [vmem:[%s12 + $0x38] sm:$0xff]
  %v7985 = vld [vmem:[%s12 + $0x40] sm:$0xff]
  %v7986 = vld [vmem:[%s12 + $0x48] sm:$0xff]
  %v7987 = vld [vmem:[%s12 + $0x50] sm:$0xff]
  %v7988 = vld [vmem:[%s12 + $0x58] sm:$0xff]
  %v7989 = vld [vmem:[%s12 + $0x60] sm:$0xff]
  %v7990 = vld [vmem:[%s12 + $0x68] sm:$0xff]
  %v7991 = vld [vmem:[%s12 + $0x70] sm:$0xff]
  %v7992 = vld [vmem:[%s12 + $0x78] sm:$0xff]
  %v7993 = vld [vmem:[%s12 + $0x80] sm:$0xff]
  %v7994 = vld [vmem:[%s12 + $0x88] sm:$0xff]
  %v7995 = vld [vmem:[%s12 + $0x90] sm:$0xff]
  %v7996 = vld [vmem:[%s12 + $0x98] sm:$0xff]
  %v7997 = vld [vmem:[%s12 + $0xa0] sm:$0xff]
  %v7998 = vld [vmem:[%s12 + $0xa8] sm:$0xff]
  %v7999 = vld [vmem:[%s12 + $0xb0] sm:$0xff]
  %v8000 = vld [vmem:[%s12 + $0xb8] sm:$0xff]
  %v8001 = vld [vmem:[%s12 + $0xc0] sm:$0xff]
  %v8002 = vld [vmem:[%s12 + $0xc8] sm:$0xff]
  %v8003 = vld [vmem:[%s12 + $0xd0] sm:$0xff]
  %v8004 = vld [vmem:[%s12 + $0xd8] sm:$0xff]
  %v8005 = vld [vmem:[%s12 + $0xe0] sm:$0xff]
  %v8006 = vld [vmem:[%s12 + $0xe8] sm:$0xff]
  %v8007 = vld [vmem:[%s12 + $0xf0] sm:$0xff]
  %v8008 = vld [vmem:[%s12 + $0xf8] sm:$0xff]
  %v8009 = vld [vmem:[%s12 + $0x100] sm:$0xff]
  %v8010 = vld [vmem:[%s12 + $0x108] sm:$0xff]
  %v8011 = vld [vmem:[%s12 + $0x110] sm:$0xff]
  %v8012 = vld [vmem:[%s12 + $0x118] sm:$0xff]
  %v8013 = vld [vmem:[%s12 + $0x120] sm:$0xff]
  %v8014 = vld [vmem:[%s12 + $0x128] sm:$0xff]
  %v8015 = vld [vmem:[%s12 + $0x130] sm:$0xff]
  %v8016 = vld [vmem:[%s12 + $0x138] sm:$0xff]
  %v8017 = vld [vmem:[%s12 + $0x140] sm:$0xff]
  %v8018 = vld [vmem:[%s12 + $0x148] sm:$0xff]
  %v8019 = vld [vmem:[%s12 + $0x150] sm:$0xff]
  %v8020 = vld [vmem:[%s12 + $0x158] sm:$0xff]
  %v8021 = vld [vmem:[%s12 + $0x160] sm:$0xff]
  %v8022 = vld [vmem:[%s12 + $0x168] sm:$0xff]
  %v8023 = vld [vmem:[%s12 + $0x170] sm:$0xff]
  %v8024 = vld [vmem:[%s12 + $0x178] sm:$0xff]
  %v8025 = vld [vmem:[%s12 + $0x180] sm:$0xff]
  %v8026 = vld [vmem:[%s12 + $0x188] sm:$0xff]
  %v8027 = vld [vmem:[%s12 + $0x190] sm:$0xff]
  %v8028 = vld [vmem:[%s12 + $0x198] sm:$0xff]
  %v8029 = vld [vmem:[%s12 + $0x1a0] sm:$0xff]
  %v8030 = vld [vmem:[%s12 + $0x1a8] sm:$0xff]
  %v8031 = vld [vmem:[%s12 + $0x1b0] sm:$0xff]
  %v8032 = vld [vmem:[%s12 + $0x1b8] sm:$0xff]
  %v8033 = vld [vmem:[%s12 + $0x1c0] sm:$0xff]
  %v8034 = vld [vmem:[%s12 + $0x1c8] sm:$0xff]
  %v8035 = vld [vmem:[%s12 + $0x1d0] sm:$0xff]
  %v8036 = vld [vmem:[%s12 + $0x1d8] sm:$0xff]
  %v8037 = vld [vmem:[%s12 + $0x1e0] sm:$0xff]
  %v8038 = vld [vmem:[%s12 + $0x1e8] sm:$0xff]
  %v8039 = vld [vmem:[%s12 + $0x1f0] sm:$0xff]
  %v8040 = vld [vmem:[%s12 + $0x1f8] sm:$0xff]
  %v8041 = vld [vmem:[%s13] sm:$0xf]
  %v8043 = vlaneseq
  %v8044 = vshrl.u32 %v8043, 7
  %v8045 = vsub.s32 0, %v8044
  %v8046 = vrot.slane %v8041, %v8045
  %v8047 = vlaneseq
  %v8048 = vshrl.u32 %v8047, 7
  %v8049 = vsub.s32 1, %v8048
  %v8050 = vrot.slane %v8041, %v8049
  %v8051 = vlaneseq
  %v8052 = vshrl.u32 %v8051, 7
  %v8053 = vsub.s32 2, %v8052
  %v8054 = vrot.slane %v8041, %v8053
  %v8055 = vlaneseq
  %v8056 = vshrl.u32 %v8055, 7
  %v8057 = vsub.s32 3, %v8056
  %v8058 = vrot.slane %v8041, %v8057
  %v8127 = vunpack.c.l.b16 %v7977
  %v8128 = vunpack.c.h.b16 %v7977
  %v8129 = vunpack.c.l.b16 %v7978
  %v8130 = vunpack.c.h.b16 %v7978
  %v8131 = vunpack.c.l.b16 %v7979
  %v8132 = vunpack.c.h.b16 %v7979
  %v8133 = vunpack.c.l.b16 %v7980
  %v8134 = vunpack.c.h.b16 %v7980
  %v8135 = vunpack.c.l.b16 %v7981
  %v8136 = vunpack.c.h.b16 %v7981
  %v8137 = vunpack.c.l.b16 %v7982
  %v8138 = vunpack.c.h.b16 %v7982
  %v8139 = vunpack.c.l.b16 %v7983
  %v8140 = vunpack.c.h.b16 %v7983
  %v8141 = vunpack.c.l.b16 %v7984
  %v8142 = vunpack.c.h.b16 %v7984
  %v8143 = vunpack.c.l.b16 %v7985
  %v8144 = vunpack.c.h.b16 %v7985
  %v8145 = vunpack.c.l.b16 %v7986
  %v8146 = vunpack.c.h.b16 %v7986
  %v8147 = vunpack.c.l.b16 %v7987
  %v8148 = vunpack.c.h.b16 %v7987
  %v8149 = vunpack.c.l.b16 %v7988
  %v8150 = vunpack.c.h.b16 %v7988
  %v8151 = vunpack.c.l.b16 %v7989
  %v8152 = vunpack.c.h.b16 %v7989
  %v8153 = vunpack.c.l.b16 %v7990
  %v8154 = vunpack.c.h.b16 %v7990
  %v8155 = vunpack.c.l.b16 %v7991
  %v8156 = vunpack.c.h.b16 %v7991
  %v8157 = vunpack.c.l.b16 %v7992
  %v8158 = vunpack.c.h.b16 %v7992
  %v8159 = vunpack.c.l.b16 %v7993
  %v8160 = vunpack.c.h.b16 %v7993
  %v8161 = vunpack.c.l.b16 %v7994
  %v8162 = vunpack.c.h.b16 %v7994
  %v8163 = vunpack.c.l.b16 %v7995
  %v8164 = vunpack.c.h.b16 %v7995
  %v8165 = vunpack.c.l.b16 %v7996
  %v8166 = vunpack.c.h.b16 %v7996
  %v8167 = vunpack.c.l.b16 %v7997
  %v8168 = vunpack.c.h.b16 %v7997
  %v8169 = vunpack.c.l.b16 %v7998
  %v8170 = vunpack.c.h.b16 %v7998
  %v8171 = vunpack.c.l.b16 %v7999
  %v8172 = vunpack.c.h.b16 %v7999
  %v8173 = vunpack.c.l.b16 %v8000
  %v8174 = vunpack.c.h.b16 %v8000
  %v8175 = vunpack.c.l.b16 %v8001
  %v8176 = vunpack.c.h.b16 %v8001
  %v8177 = vunpack.c.l.b16 %v8002
  %v8178 = vunpack.c.h.b16 %v8002
  %v8179 = vunpack.c.l.b16 %v8003
  %v8180 = vunpack.c.h.b16 %v8003
  %v8181 = vunpack.c.l.b16 %v8004
  %v8182 = vunpack.c.h.b16 %v8004
  %v8183 = vunpack.c.l.b16 %v8005
  %v8184 = vunpack.c.h.b16 %v8005
  %v8185 = vunpack.c.l.b16 %v8006
  %v8186 = vunpack.c.h.b16 %v8006
  %v8187 = vunpack.c.l.b16 %v8007
  %v8188 = vunpack.c.h.b16 %v8007
  %v8189 = vunpack.c.l.b16 %v8008
  %v8190 = vunpack.c.h.b16 %v8008
  %v8191 = vunpack.c.l.b16 %v8009
  %v8192 = vunpack.c.h.b16 %v8009
  %v8193 = vunpack.c.l.b16 %v8010
  %v8194 = vunpack.c.h.b16 %v8010
  %v8195 = vunpack.c.l.b16 %v8011
  %v8196 = vunpack.c.h.b16 %v8011
  %v8197 = vunpack.c.l.b16 %v8012
  %v8198 = vunpack.c.h.b16 %v8012
  %v8199 = vunpack.c.l.b16 %v8013
  %v8200 = vunpack.c.h.b16 %v8013
  %v8201 = vunpack.c.l.b16 %v8014
  %v8202 = vunpack.c.h.b16 %v8014
  %v8203 = vunpack.c.l.b16 %v8015
  %v8204 = vunpack.c.h.b16 %v8015
  %v8205 = vunpack.c.l.b16 %v8016
  %v8206 = vunpack.c.h.b16 %v8016
  %v8207 = vunpack.c.l.b16 %v8017
  %v8208 = vunpack.c.h.b16 %v8017
  %v8209 = vunpack.c.l.b16 %v8018
  %v8210 = vunpack.c.h.b16 %v8018
  %v8211 = vunpack.c.l.b16 %v8019
  %v8212 = vunpack.c.h.b16 %v8019
  %v8213 = vunpack.c.l.b16 %v8020
  %v8214 = vunpack.c.h.b16 %v8020
  %v8215 = vunpack.c.l.b16 %v8021
  %v8216 = vunpack.c.h.b16 %v8021
  %v8217 = vunpack.c.l.b16 %v8022
  %v8218 = vunpack.c.h.b16 %v8022
  %v8219 = vunpack.c.l.b16 %v8023
  %v8220 = vunpack.c.h.b16 %v8023
  %v8221 = vunpack.c.l.b16 %v8024
  %v8222 = vunpack.c.h.b16 %v8024
  %v8223 = vunpack.c.l.b16 %v8025
  %v8224 = vunpack.c.h.b16 %v8025
  %v8225 = vunpack.c.l.b16 %v8026
  %v8226 = vunpack.c.h.b16 %v8026
  %v8227 = vunpack.c.l.b16 %v8027
  %v8228 = vunpack.c.h.b16 %v8027
  %v8229 = vunpack.c.l.b16 %v8028
  %v8230 = vunpack.c.h.b16 %v8028
  %v8231 = vunpack.c.l.b16 %v8029
  %v8232 = vunpack.c.h.b16 %v8029
  %v8233 = vunpack.c.l.b16 %v8030
  %v8234 = vunpack.c.h.b16 %v8030
  %v8235 = vunpack.c.l.b16 %v8031
  %v8236 = vunpack.c.h.b16 %v8031
  %v8237 = vunpack.c.l.b16 %v8032
  %v8238 = vunpack.c.h.b16 %v8032
  %v8239 = vunpack.c.l.b16 %v8033
  %v8240 = vunpack.c.h.b16 %v8033
  %v8241 = vunpack.c.l.b16 %v8034
  %v8242 = vunpack.c.h.b16 %v8034
  %v8243 = vunpack.c.l.b16 %v8035
  %v8244 = vunpack.c.h.b16 %v8035
  %v8245 = vunpack.c.l.b16 %v8036
  %v8246 = vunpack.c.h.b16 %v8036
  %v8247 = vunpack.c.l.b16 %v8037
  %v8248 = vunpack.c.h.b16 %v8037
  %v8249 = vunpack.c.l.b16 %v8038
  %v8250 = vunpack.c.h.b16 %v8038
  %v8251 = vunpack.c.l.b16 %v8039
  %v8252 = vunpack.c.h.b16 %v8039
  %v8253 = vunpack.c.l.b16 %v8040
  %v8254 = vunpack.c.h.b16 %v8040
  %v8255 = vpack.c.b16 %v8131, %v8127
  %v8256 = vpack.c.b16 %v8132, %v8128
  %v8257 = vpack.c.b16 %v8133, %v8129
  %v8258 = vpack.c.b16 %v8134, %v8130
  %v8259 = vpack.c.b16 %v8139, %v8135
  %v8260 = vpack.c.b16 %v8140, %v8136
  %v8261 = vpack.c.b16 %v8141, %v8137
  %v8262 = vpack.c.b16 %v8142, %v8138
  %v8263 = vpack.c.b16 %v8147, %v8143
  %v8264 = vpack.c.b16 %v8148, %v8144
  %v8265 = vpack.c.b16 %v8149, %v8145
  %v8266 = vpack.c.b16 %v8150, %v8146
  %v8267 = vpack.c.b16 %v8155, %v8151
  %v8268 = vpack.c.b16 %v8156, %v8152
  %v8269 = vpack.c.b16 %v8157, %v8153
  %v8270 = vpack.c.b16 %v8158, %v8154
  %v8271 = vpack.c.b16 %v8163, %v8159
  %v8272 = vpack.c.b16 %v8164, %v8160
  %v8273 = vpack.c.b16 %v8165, %v8161
  %v8274 = vpack.c.b16 %v8166, %v8162
  %v8275 = vpack.c.b16 %v8171, %v8167
  %v8276 = vpack.c.b16 %v8172, %v8168
  %v8277 = vpack.c.b16 %v8173, %v8169
  %v8278 = vpack.c.b16 %v8174, %v8170
  %v8279 = vpack.c.b16 %v8179, %v8175
  %v8280 = vpack.c.b16 %v8180, %v8176
  %v8281 = vpack.c.b16 %v8181, %v8177
  %v8282 = vpack.c.b16 %v8182, %v8178
  %v8283 = vpack.c.b16 %v8187, %v8183
  %v8284 = vpack.c.b16 %v8188, %v8184
  %v8285 = vpack.c.b16 %v8189, %v8185
  %v8286 = vpack.c.b16 %v8190, %v8186
  %v8287 = vpack.c.b16 %v8195, %v8191
  %v8288 = vpack.c.b16 %v8196, %v8192
  %v8289 = vpack.c.b16 %v8197, %v8193
  %v8290 = vpack.c.b16 %v8198, %v8194
  %v8291 = vpack.c.b16 %v8203, %v8199
  %v8292 = vpack.c.b16 %v8204, %v8200
  %v8293 = vpack.c.b16 %v8205, %v8201
  %v8294 = vpack.c.b16 %v8206, %v8202
  %v8295 = vpack.c.b16 %v8211, %v8207
  %v8296 = vpack.c.b16 %v8212, %v8208
  %v8297 = vpack.c.b16 %v8213, %v8209
  %v8298 = vpack.c.b16 %v8214, %v8210
  %v8299 = vpack.c.b16 %v8219, %v8215
  %v8300 = vpack.c.b16 %v8220, %v8216
  %v8301 = vpack.c.b16 %v8221, %v8217
  %v8302 = vpack.c.b16 %v8222, %v8218
  %v8303 = vpack.c.b16 %v8227, %v8223
  %v8304 = vpack.c.b16 %v8228, %v8224
  %v8305 = vpack.c.b16 %v8229, %v8225
  %v8306 = vpack.c.b16 %v8230, %v8226
  %v8307 = vpack.c.b16 %v8235, %v8231
  %v8308 = vpack.c.b16 %v8236, %v8232
  %v8309 = vpack.c.b16 %v8237, %v8233
  %v8310 = vpack.c.b16 %v8238, %v8234
  %v8311 = vpack.c.b16 %v8243, %v8239
  %v8312 = vpack.c.b16 %v8244, %v8240
  %v8313 = vpack.c.b16 %v8245, %v8241
  %v8314 = vpack.c.b16 %v8246, %v8242
  %v8315 = vpack.c.b16 %v8251, %v8247
  %v8316 = vpack.c.b16 %v8252, %v8248
  %v8317 = vpack.c.b16 %v8253, %v8249
  %v8318 = vpack.c.b16 %v8254, %v8250
  %8383 = vmatprep.subr.bf16.mxu0 %v8256
  %8384 = vmatpush1.bf16.msra.mxu0 %v8255
  %8385 = vmatprep.subr.bf16.mxu0 %v8260
  %8386 = vmatpush1.bf16.msra.mxu0 %v8259
  %8387 = vmatprep.subr.bf16.mxu0 %v8264
  %8388 = vmatpush1.bf16.msra.mxu0 %v8263
  %8389 = vmatprep.subr.bf16.mxu0 %v8268
  %8390 = vmatpush1.bf16.msra.mxu0 %v8267
  %8391 = vmatprep.subr.bf16.mxu0 %v8272
  %8392 = vmatpush1.bf16.msra.mxu0 %v8271
  %8393 = vmatprep.subr.bf16.mxu0 %v8276
  %8394 = vmatpush1.bf16.msra.mxu0 %v8275
  %8395 = vmatprep.subr.bf16.mxu0 %v8280
  %8396 = vmatpush1.bf16.msra.mxu0 %v8279
  %8397 = vmatprep.subr.bf16.mxu0 %v8284
  %8398 = vmatpush1.bf16.msra.mxu0 %v8283
  %8399 = vmatprep.subr.bf16.mxu0 %v8288
  %8400 = vmatpush1.bf16.msra.mxu0 %v8287
  %8401 = vmatprep.subr.bf16.mxu0 %v8292
  %8402 = vmatpush1.bf16.msra.mxu0 %v8291
  %8403 = vmatprep.subr.bf16.mxu0 %v8296
  %8404 = vmatpush1.bf16.msra.mxu0 %v8295
  %8405 = vmatprep.subr.bf16.mxu0 %v8300
  %8406 = vmatpush1.bf16.msra.mxu0 %v8299
  %8407 = vmatprep.subr.bf16.mxu0 %v8304
  %8408 = vmatpush1.bf16.msra.mxu0 %v8303
  %8409 = vmatprep.subr.bf16.mxu0 %v8308
  %8410 = vmatpush1.bf16.msra.mxu0 %v8307
  %8411 = vmatprep.subr.bf16.mxu0 %v8312
  %8412 = vmatpush1.bf16.msra.mxu0 %v8311
  %8413 = vmatprep.subr.bf16.mxu0 %v8316
  %8414 = vmatpush1.bf16.msra.mxu0 %v8315
  %8415 = vmatprep.mubr.bf16.mxu0 %v7976
  %8416 = vmatmul.mubr.bf16.gmra.mrb[0].mxu0 %v7975
  %v8417 = vpop.f32.mrb[0].mxu0
  %v8418 = vadd.f32 %v8046, %v8417
  %v8419 = vpop.f32.mrb[0].mxu0
  %v8420 = vadd.f32 %v8050, %v8419
  %v8421 = vpop.f32.mrb[0].mxu0
  %v8422 = vpop.f32.mrb[0].mxu0
  %8423 = vdwg.mxu0
  %8424 = vmatprep.subr.bf16.mxu0 %v8258
  %8425 = vmatpush1.bf16.msra.mxu0 %v8257
  %8426 = vmatprep.subr.bf16.mxu0 %v8262
  %8427 = vmatpush1.bf16.msra.mxu0 %v8261
  %8428 = vmatprep.subr.bf16.mxu0 %v8266
  %8429 = vmatpush1.bf16.msra.mxu0 %v8265
  %8430 = vmatprep.subr.bf16.mxu0 %v8270
  %8431 = vmatpush1.bf16.msra.mxu0 %v8269
  %8432 = vmatprep.subr.bf16.mxu0 %v8274
  %8433 = vmatpush1.bf16.msra.mxu0 %v8273
  %8434 = vmatprep.subr.bf16.mxu0 %v8278
  %8435 = vmatpush1.bf16.msra.mxu0 %v8277
  %8436 = vmatprep.subr.bf16.mxu0 %v8282
  %8437 = vmatpush1.bf16.msra.mxu0 %v8281
  %8438 = vmatprep.subr.bf16.mxu0 %v8286
  %8439 = vmatpush1.bf16.msra.mxu0 %v8285
  %8440 = vmatprep.subr.bf16.mxu0 %v8290
  %8441 = vmatpush1.bf16.msra.mxu0 %v8289
  %8442 = vmatprep.subr.bf16.mxu0 %v8294
  %8443 = vmatpush1.bf16.msra.mxu0 %v8293
  %8444 = vmatprep.subr.bf16.mxu0 %v8298
  %8445 = vmatpush1.bf16.msra.mxu0 %v8297
  %8446 = vmatprep.subr.bf16.mxu0 %v8302
  %8447 = vmatpush1.bf16.msra.mxu0 %v8301
  %8448 = vmatprep.subr.bf16.mxu0 %v8306
  %8449 = vmatpush1.bf16.msra.mxu0 %v8305
  %8450 = vmatprep.subr.bf16.mxu0 %v8310
  %8451 = vmatpush1.bf16.msra.mxu0 %v8309
  %8452 = vmatprep.subr.bf16.mxu0 %v8314
  %8453 = vmatpush1.bf16.msra.mxu0 %v8313
  %8454 = vmatprep.subr.bf16.mxu0 %v8318
  %8455 = vmatpush1.bf16.msra.mxu0 %v8317
  %8456 = vmatprep.mubr.bf16.mxu0 %v7976
  %8457 = vmatmul.mubr.bf16.gmra.mrb[0].mxu0 %v7975
  %v8458 = vpop.f32.mrb[0].mxu0
  %v8459 = vadd.f32 %v8054, %v8458
  %v8460 = vpop.f32.mrb[0].mxu0
  %v8461 = vadd.f32 %v8058, %v8460
  %v8462 = vpop.f32.mrb[0].mxu0
  %v8463 = vpop.f32.mrb[0].mxu0
  %8464 = vdwg.mxu0
  %vm8465 = vcmp.gt.f32.partialorder %v8418, 0.0
  %vm8466 = vcmp.gt.f32.partialorder %v8420, 0.0
  %vm8467 = vcmp.gt.f32.partialorder %v8459, 0.0
  %vm8468 = vcmp.gt.f32.partialorder %v8461, 0.0
  %v8469 = vmul.f32 %v8418, 0.2
  %v8470 = vmul.f32 %v8420, 0.2
  %v8471 = vmul.f32 %v8459, 0.2
  %v8472 = vmul.f32 %v8461, 0.2
  %v8473 = vsel %vm8465, %v8418, %v8469
  %v8474 = vsel %vm8466, %v8420, %v8470
  %v8475 = vsel %vm8467, %v8459, %v8471
  %v8476 = vsel %vm8468, %v8461, %v8472
  %v8477 = vpack.c.bf16 %v8473, %v8473
  %v8478 = vpack.c.bf16 %v8474, %v8474
  %v8479 = vpack.c.bf16 %v8475, %v8475
  %v8480 = vpack.c.bf16 %v8476, %v8476
  %v8481 = vld [vmem:[%s14] sm:$0xf]
  %v8482 = vld [vmem:[%s14 + $0x4] sm:$0xf]
  %v8483 = vld [vmem:[%s14 + $0x8] sm:$0xf]
  %v8484 = vld [vmem:[%s14 + $0xc] sm:$0xf]
  %v8485 = vld [vmem:[%s14 + $0x10] sm:$0xf]
  %v8486 = vld [vmem:[%s14 + $0x14] sm:$0xf]
  %v8487 = vld [vmem:[%s14 + $0x18] sm:$0xf]
  %v8488 = vld [vmem:[%s14 + $0x1c] sm:$0xf]
  %v8489 = vld [vmem:[%s14 + $0x20] sm:$0xf]
  %v8490 = vld [vmem:[%s14 + $0x24] sm:$0xf]
  %v8491 = vld [vmem:[%s14 + $0x28] sm:$0xf]
  %v8492 = vld [vmem:[%s14 + $0x2c] sm:$0xf]
  %v8493 = vld [vmem:[%s14 + $0x30] sm:$0xf]
  %v8494 = vld [vmem:[%s14 + $0x34] sm:$0xf]
  %v8495 = vld [vmem:[%s14 + $0x38] sm:$0xf]
  %v8496 = vld [vmem:[%s14 + $0x3c] sm:$0xf]
  %v8497 = vld [vmem:[%s14 + $0x40] sm:$0xf]
  %v8498 = vld [vmem:[%s14 + $0x44] sm:$0xf]
  %v8499 = vld [vmem:[%s14 + $0x48] sm:$0xf]
  %v8500 = vld [vmem:[%s14 + $0x4c] sm:$0xf]
  %v8501 = vld [vmem:[%s14 + $0x50] sm:$0xf]
  %v8502 = vld [vmem:[%s14 + $0x54] sm:$0xf]
  %v8503 = vld [vmem:[%s14 + $0x58] sm:$0xf]
  %v8504 = vld [vmem:[%s14 + $0x5c] sm:$0xf]
  %v8505 = vld [vmem:[%s14 + $0x60] sm:$0xf]
  %v8506 = vld [vmem:[%s14 + $0x64] sm:$0xf]
  %v8507 = vld [vmem:[%s14 + $0x68] sm:$0xf]
  %v8508 = vld [vmem:[%s14 + $0x6c] sm:$0xf]
  %v8509 = vld [vmem:[%s14 + $0x70] sm:$0xf]
  %v8510 = vld [vmem:[%s14 + $0x74] sm:$0xf]
  %v8511 = vld [vmem:[%s14 + $0x78] sm:$0xf]
  %v8512 = vld [vmem:[%s14 + $0x7c] sm:$0xf]
  %v8513 = vld [vmem:[%s14 + $0x80] sm:$0xf]
  %v8514 = vld [vmem:[%s14 + $0x84] sm:$0xf]
  %v8515 = vld [vmem:[%s14 + $0x88] sm:$0xf]
  %v8516 = vld [vmem:[%s14 + $0x8c] sm:$0xf]
  %v8517 = vld [vmem:[%s14 + $0x90] sm:$0xf]
  %v8518 = vld [vmem:[%s14 + $0x94] sm:$0xf]
  %v8519 = vld [vmem:[%s14 + $0x98] sm:$0xf]
  %v8520 = vld [vmem:[%s14 + $0x9c] sm:$0xf]
  %v8521 = vld [vmem:[%s14 + $0xa0] sm:$0xf]
  %v8522 = vld [vmem:[%s14 + $0xa4] sm:$0xf]
  %v8523 = vld [vmem:[%s14 + $0xa8] sm:$0xf]
  %v8524 = vld [vmem:[%s14 + $0xac] sm:$0xf]
  %v8525 = vld [vmem:[%s14 + $0xb0] sm:$0xf]
  %v8526 = vld [vmem:[%s14 + $0xb4] sm:$0xf]
  %v8527 = vld [vmem:[%s14 + $0xb8] sm:$0xf]
  %v8528 = vld [vmem:[%s14 + $0xbc] sm:$0xf]
  %v8529 = vld [vmem:[%s14 + $0xc0] sm:$0xf]
  %v8530 = vld [vmem:[%s14 + $0xc4] sm:$0xf]
  %v8531 = vld [vmem:[%s14 + $0xc8] sm:$0xf]
  %v8532 = vld [vmem:[%s14 + $0xcc] sm:$0xf]
  %v8533 = vld [vmem:[%s14 + $0xd0] sm:$0xf]
  %v8534 = vld [vmem:[%s14 + $0xd4] sm:$0xf]
  %v8535 = vld [vmem:[%s14 + $0xd8] sm:$0xf]
  %v8536 = vld [vmem:[%s14 + $0xdc] sm:$0xf]
  %v8537 = vld [vmem:[%s14 + $0xe0] sm:$0xf]
  %v8538 = vld [vmem:[%s14 + $0xe4] sm:$0xf]
  %v8539 = vld [vmem:[%s14 + $0xe8] sm:$0xf]
  %v8540 = vld [vmem:[%s14 + $0xec] sm:$0xf]
  %v8541 = vld [vmem:[%s14 + $0xf0] sm:$0xf]
  %v8542 = vld [vmem:[%s14 + $0xf4] sm:$0xf]
  %v8543 = vld [vmem:[%s14 + $0xf8] sm:$0xf]
  %v8544 = vld [vmem:[%s14 + $0xfc] sm:$0xf]
  %v8545 = vld [vmem:[%s15] sm:$0x1]
  %v8547 = vlaneseq
  %v8548 = vshrl.u32 %v8547, 7
  %v8549 = vsub.s32 0, %v8548
  %v8550 = vrot.slane %v8545, %v8549
  %v8616 = vunpack.c.l.b16 %v8481
  %v8617 = vunpack.c.l.b16 %v8482
  %v8618 = vunpack.c.l.b16 %v8483
  %v8619 = vunpack.c.l.b16 %v8484
  %v8620 = vunpack.c.l.b16 %v8485
  %v8621 = vunpack.c.l.b16 %v8486
  %v8622 = vunpack.c.l.b16 %v8487
  %v8623 = vunpack.c.l.b16 %v8488
  %v8624 = vunpack.c.l.b16 %v8489
  %v8625 = vunpack.c.l.b16 %v8490
  %v8626 = vunpack.c.l.b16 %v8491
  %v8627 = vunpack.c.l.b16 %v8492
  %v8628 = vunpack.c.l.b16 %v8493
  %v8629 = vunpack.c.l.b16 %v8494
  %v8630 = vunpack.c.l.b16 %v8495
  %v8631 = vunpack.c.l.b16 %v8496
  %v8632 = vunpack.c.l.b16 %v8497
  %v8633 = vunpack.c.l.b16 %v8498
  %v8634 = vunpack.c.l.b16 %v8499
  %v8635 = vunpack.c.l.b16 %v8500
  %v8636 = vunpack.c.l.b16 %v8501
  %v8637 = vunpack.c.l.b16 %v8502
  %v8638 = vunpack.c.l.b16 %v8503
  %v8639 = vunpack.c.l.b16 %v8504
  %v8640 = vunpack.c.l.b16 %v8505
  %v8641 = vunpack.c.l.b16 %v8506
  %v8642 = vunpack.c.l.b16 %v8507
  %v8643 = vunpack.c.l.b16 %v8508
  %v8644 = vunpack.c.l.b16 %v8509
  %v8645 = vunpack.c.l.b16 %v8510
  %v8646 = vunpack.c.l.b16 %v8511
  %v8647 = vunpack.c.l.b16 %v8512
  %v8648 = vunpack.c.l.b16 %v8513
  %v8649 = vunpack.c.l.b16 %v8514
  %v8650 = vunpack.c.l.b16 %v8515
  %v8651 = vunpack.c.l.b16 %v8516
  %v8652 = vunpack.c.l.b16 %v8517
  %v8653 = vunpack.c.l.b16 %v8518
  %v8654 = vunpack.c.l.b16 %v8519
  %v8655 = vunpack.c.l.b16 %v8520
  %v8656 = vunpack.c.l.b16 %v8521
  %v8657 = vunpack.c.l.b16 %v8522
  %v8658 = vunpack.c.l.b16 %v8523
  %v8659 = vunpack.c.l.b16 %v8524
  %v8660 = vunpack.c.l.b16 %v8525
  %v8661 = vunpack.c.l.b16 %v8526
  %v8662 = vunpack.c.l.b16 %v8527
  %v8663 = vunpack.c.l.b16 %v8528
  %v8664 = vunpack.c.l.b16 %v8529
  %v8665 = vunpack.c.l.b16 %v8530
  %v8666 = vunpack.c.l.b16 %v8531
  %v8667 = vunpack.c.l.b16 %v8532
  %v8668 = vunpack.c.l.b16 %v8533
  %v8669 = vunpack.c.l.b16 %v8534
  %v8670 = vunpack.c.l.b16 %v8535
  %v8671 = vunpack.c.l.b16 %v8536
  %v8672 = vunpack.c.l.b16 %v8537
  %v8673 = vunpack.c.l.b16 %v8538
  %v8674 = vunpack.c.l.b16 %v8539
  %v8675 = vunpack.c.l.b16 %v8540
  %v8676 = vunpack.c.l.b16 %v8541
  %v8677 = vunpack.c.l.b16 %v8542
  %v8678 = vunpack.c.l.b16 %v8543
  %v8679 = vunpack.c.l.b16 %v8544
  %v8680 = vpack.c.b16 %v8617, %v8616
  %v8681 = vpack.c.b16 %v8619, %v8618
  %v8682 = vpack.c.b16 %v8621, %v8620
  %v8683 = vpack.c.b16 %v8623, %v8622
  %v8684 = vpack.c.b16 %v8625, %v8624
  %v8685 = vpack.c.b16 %v8627, %v8626
  %v8686 = vpack.c.b16 %v8629, %v8628
  %v8687 = vpack.c.b16 %v8631, %v8630
  %v8688 = vpack.c.b16 %v8633, %v8632
  %v8689 = vpack.c.b16 %v8635, %v8634
  %v8690 = vpack.c.b16 %v8637, %v8636
  %v8691 = vpack.c.b16 %v8639, %v8638
  %v8692 = vpack.c.b16 %v8641, %v8640
  %v8693 = vpack.c.b16 %v8643, %v8642
  %v8694 = vpack.c.b16 %v8645, %v8644
  %v8695 = vpack.c.b16 %v8647, %v8646
  %v8696 = vpack.c.b16 %v8649, %v8648
  %v8697 = vpack.c.b16 %v8651, %v8650
  %v8698 = vpack.c.b16 %v8653, %v8652
  %v8699 = vpack.c.b16 %v8655, %v8654
  %v8700 = vpack.c.b16 %v8657, %v8656
  %v8701 = vpack.c.b16 %v8659, %v8658
  %v8702 = vpack.c.b16 %v8661, %v8660
  %v8703 = vpack.c.b16 %v8663, %v8662
  %v8704 = vpack.c.b16 %v8665, %v8664
  %v8705 = vpack.c.b16 %v8667, %v8666
  %v8706 = vpack.c.b16 %v8669, %v8668
  %v8707 = vpack.c.b16 %v8671, %v8670
  %v8708 = vpack.c.b16 %v8673, %v8672
  %v8709 = vpack.c.b16 %v8675, %v8674
  %v8710 = vpack.c.b16 %v8677, %v8676
  %v8711 = vpack.c.b16 %v8679, %v8678
  %8744 = vmatprep.subr.bf16.mxu0 0
  %8745 = vmatpush1.bf16.msra.mxu0 %v8680
  %8746 = vmatprep.subr.bf16.mxu0 0
  %8747 = vmatpush1.bf16.msra.mxu0 %v8681
  %8748 = vmatprep.subr.bf16.mxu0 0
  %8749 = vmatpush1.bf16.msra.mxu0 %v8682
  %8750 = vmatprep.subr.bf16.mxu0 0
  %8751 = vmatpush1.bf16.msra.mxu0 %v8683
  %8752 = vmatprep.subr.bf16.mxu0 0
  %8753 = vmatpush1.bf16.msra.mxu0 %v8684
  %8754 = vmatprep.subr.bf16.mxu0 0
  %8755 = vmatpush1.bf16.msra.mxu0 %v8685
  %8756 = vmatprep.subr.bf16.mxu0 0
  %8757 = vmatpush1.bf16.msra.mxu0 %v8686
  %8758 = vmatprep.subr.bf16.mxu0 0
  %8759 = vmatpush1.bf16.msra.mxu0 %v8687
  %8760 = vmatprep.subr.bf16.mxu0 0
  %8761 = vmatpush1.bf16.msra.mxu0 %v8688
  %8762 = vmatprep.subr.bf16.mxu0 0
  %8763 = vmatpush1.bf16.msra.mxu0 %v8689
  %8764 = vmatprep.subr.bf16.mxu0 0
  %8765 = vmatpush1.bf16.msra.mxu0 %v8690
  %8766 = vmatprep.subr.bf16.mxu0 0
  %8767 = vmatpush1.bf16.msra.mxu0 %v8691
  %8768 = vmatprep.subr.bf16.mxu0 0
  %8769 = vmatpush1.bf16.msra.mxu0 %v8692
  %8770 = vmatprep.subr.bf16.mxu0 0
  %8771 = vmatpush1.bf16.msra.mxu0 %v8693
  %8772 = vmatprep.subr.bf16.mxu0 0
  %8773 = vmatpush1.bf16.msra.mxu0 %v8694
  %8774 = vmatprep.subr.bf16.mxu0 0
  %8775 = vmatpush1.bf16.msra.mxu0 %v8695
  %8776 = vmatprep.mubr.bf16.mxu0 %v8478
  %8777 = vmatmul.mubr.bf16.gmra.mrb[0].mxu0 %v8477
  %v8778 = vpop.f32.mrb[0].mxu0
  %v8779 = vadd.f32 %v8550, %v8778
  %v8780 = vpop.f32.mrb[0].mxu0
  %v8781 = vpop.f32.mrb[0].mxu0
  %v8782 = vpop.f32.mrb[0].mxu0
  %8783 = vdwg.mxu0
  %8784 = vmatprep.subr.bf16.mxu0 0
  %8785 = vmatpush1.bf16.msra.mxu0 %v8696
  %8786 = vmatprep.subr.bf16.mxu0 0
  %8787 = vmatpush1.bf16.msra.mxu0 %v8697
  %8788 = vmatprep.subr.bf16.mxu0 0
  %8789 = vmatpush1.bf16.msra.mxu0 %v8698
  %8790 = vmatprep.subr.bf16.mxu0 0
  %8791 = vmatpush1.bf16.msra.mxu0 %v8699
  %8792 = vmatprep.subr.bf16.mxu0 0
  %8793 = vmatpush1.bf16.msra.mxu0 %v8700
  %8794 = vmatprep.subr.bf16.mxu0 0
  %8795 = vmatpush1.bf16.msra.mxu0 %v8701
  %8796 = vmatprep.subr.bf16.mxu0 0
  %8797 = vmatpush1.bf16.msra.mxu0 %v8702
  %8798 = vmatprep.subr.bf16.mxu0 0
  %8799 = vmatpush1.bf16.msra.mxu0 %v8703
  %8800 = vmatprep.subr.bf16.mxu0 0
  %8801 = vmatpush1.bf16.msra.mxu0 %v8704
  %8802 = vmatprep.subr.bf16.mxu0 0
  %8803 = vmatpush1.bf16.msra.mxu0 %v8705
  %8804 = vmatprep.subr.bf16.mxu0 0
  %8805 = vmatpush1.bf16.msra.mxu0 %v8706
  %8806 = vmatprep.subr.bf16.mxu0 0
  %8807 = vmatpush1.bf16.msra.mxu0 %v8707
  %8808 = vmatprep.subr.bf16.mxu0 0
  %8809 = vmatpush1.bf16.msra.mxu0 %v8708
  %8810 = vmatprep.subr.bf16.mxu0 0
  %8811 = vmatpush1.bf16.msra.mxu0 %v8709
  %8812 = vmatprep.subr.bf16.mxu0 0
  %8813 = vmatpush1.bf16.msra.mxu0 %v8710
  %8814 = vmatprep.subr.bf16.mxu0 0
  %8815 = vmatpush1.bf16.msra.mxu0 %v8711
  %8816 = vmatprep.mubr.bf16.mxu0 %v8480
  %8817 = vmatmul.mubr.bf16.gmra.mrb[0].mxu0 %v8479
  %v8818 = vpop.f32.mrb[0].mxu0
  %v8819 = vadd.f32 %v8779, %v8818
  %v8820 = vpop.f32.mrb[0].mxu0
  %v8821 = vpop.f32.mrb[0].mxu0
  %v8822 = vpop.f32.mrb[0].mxu0
  %8823 = vdwg.mxu0
  %v8824 = vxor.u32 %v8819, 2147483648
  %v8825 = vmul.f32 %v8824, 1.442695
  %v8826 = vpow.pop %v8825
  %v8827 = vadd.f32 %v8826, 1.0
  %v8828 = vrcp.pop %v8827
  %v8829 = vmul.f32 1.0, %v8828
  %8830 = vst [vmem:[%s16] sm:$0xff] %v8829
  // Predicated region
  $region66: #{discriminator_forward.1} parent=0 // pred_check
    _
  $region67: #{discriminator_forward.1} parent=0 // pred_check_branch
    %8832 = sbr.rel (0) target = $region69
  $region68: #{discriminator_forward.1} parent=0 // pred_region
    _
  $region69: #{discriminator_forward.1} parent=0 // pred_fallthru
    _
  // Predicated region
  $region70: #{discriminator_forward.1} parent=0 // pred_check
    _
  $region71: #{discriminator_forward.1} parent=0 // pred_check_branch
    %8834 = sbr.rel (0) target = $region73
  $region72: #{discriminator_forward.1} parent=0 // pred_region
    _
  $region73: #{discriminator_forward.1} parent=0 // pred_fallthru
    _

</llo_original>
